<compile_context>
chip_gen: v7x
topology: tpu7x:2x2x1
jax: 0.10.0
libtpu: 0.0.40
codegen_flags: <defaults>
</compile_context>

<pallas_src>
import jax
import jax.numpy as jnp
from jax import lax
from jax.experimental import pallas as pl
from jax.experimental.pallas import tpu as pltpu  # noqa: F401  (TPU backend namespace)


# ---------------------------------------------------------------------------
# The single fused Pallas kernel
# ---------------------------------------------------------------------------
def _lenet_kernel(patches_ref, w1_ref, b1_ref, w2_ref, b2_ref,
                  wf1_ref, bf1_ref, wf2_ref, bf2_ref, wf3_ref, bf3_ref,
                  out_ref):
    f32 = jnp.float32
    B = out_ref.shape[0]
    nb = 144 * B            # rows per pool1 corner block (12*12 spatial, batch-fastest)
    n2 = 92 * B             # conv2 output rows actually needed downstream (flat idx <= 91)
    nm = 79 * B             # pool2 rows actually read by fc1 (flat idx <= 78)

    # ---- conv1 + ReLU : one MXU GEMM (4*144*B, 32) @ (32, 128), lane-dense ----
    h1 = jnp.dot(patches_ref[...], w1_ref[...], preferred_element_type=f32)
    h1 = jnp.maximum(h1 + b1_ref[...], 0.0)                       # (576B, 128)

    # ---- maxpool1: patch rows were pre-grouped into the 4 pool-window corners ----
    p1 = jnp.maximum(jnp.maximum(h1[0:nb], h1[nb:2 * nb]),
                     jnp.maximum(h1[2 * nb:3 * nb], h1[3 * nb:4 * nb]))
    p1 = p1[:, :8]            # (144B, 8): 6 real channels + 2 zero-pad, row=(i*12+j)*B+b

    # ---- conv2 + ReLU: 25 shifted-row GEMMs, K=8, 128-wide (16 real) output ----
    acc2 = jnp.zeros((n2, 128), f32)
    for kh in range(5):
        for kw in range(5):
            shift = (kh * 12 + kw) * B                # pure row shift in this layout
            acc2 = acc2 + jnp.dot(p1[shift:shift + n2, :],
                                  w2_ref[kh * 5 + kw],
                                  preferred_element_type=f32)
    h2 = jnp.maximum(acc2 + b2_ref[...], 0.0)                     # (92B, 128), row=f*B+b

    # ---- maxpool2: max of 4 row-shifted slices (spatial offsets +0,+1,+12,+13) ----
    m = jnp.maximum(jnp.maximum(h2[0:nm], h2[B:B + nm]),
                    jnp.maximum(h2[12 * B:12 * B + nm], h2[13 * B:13 * B + nm]))

    # ---- fc1 + ReLU: sum over the 16 pooled spatial positions (NCHW flatten folded
    #      into the per-position weight taps) ----
    accf = jnp.zeros((B, 128), f32)
    for i in range(4):
        for j in range(4):
            r = (24 * i + 2 * j) * B
            accf = accf + jnp.dot(m[r:r + B, :16], wf1_ref[i * 4 + j],
                                  preferred_element_type=f32)
    y = jnp.maximum(accf + bf1_ref[...], 0.0)                     # (B, 128): 120 real

    # ---- fc2 + ReLU, fc3 + ReLU (all lane-dense 128-wide) ----
    y = jnp.maximum(jnp.dot(y, wf2_ref[...], preferred_element_type=f32) + bf2_ref[...], 0.0)
    y = jnp.maximum(jnp.dot(y, wf3_ref[...], preferred_element_type=f32) + bf3_ref[...], 0.0)
    out_ref[...] = y


def _full_spec(shape):
    nd = len(shape)
    return pl.BlockSpec(shape, lambda *_: (0,) * nd)


# ---------------------------------------------------------------------------
# Wrapper-side glue (XLA): input im2col + one-time weight packing
# ---------------------------------------------------------------------------
def _conv1_patches(x):
    """x: (B,1,28,28) -> (4*144*B, 32) conv1 im2col patches.

    Rows are ordered (pool-corner (di,dj), i, j, b) with batch fastest, so that
    inside the kernel maxpool1 is a max over 4 contiguous row blocks and all
    later stages are pure row shifts.  K is zero-padded 25 -> 32.
    """
    B = x.shape[0]
    x2 = x[:, 0]                                                  # (B, 28, 28)
    taps = [x2[:, kh:kh + 24, kw:kw + 24] for kh in range(5) for kw in range(5)]
    pat = jnp.stack(taps, axis=-1)                                # (B, 24, 24, 25)
    pat = pat.reshape(B, 12, 2, 12, 2, 25)                        # (b, i, di, j, dj, t)
    pat = pat.transpose(2, 4, 1, 3, 0, 5)                         # (di, dj, i, j, b, t)
    pat = pat.reshape(4 * 144 * B, 25)
    return jnp.pad(pat, ((0, 0), (0, 7)))                         # (576B, 32)


def pack_params(p):
    """One-time (outside jit) packing of torch-layout params into lane-dense,
    pre-transposed matrices the kernel consumes directly."""
    # conv1: (6,1,5,5) -> (tap, oc) padded to (32, 128)
    w1 = p["w1"].reshape(6, 25).T
    w1 = jnp.pad(w1, ((0, 7), (0, 122)))
    b1 = jnp.pad(p["b1"], (0, 122)).reshape(1, 128)
    # conv2: (16,6,5,5) -> 25 taps of (c, oc), padded to (25, 8, 128)
    w2 = p["w2"].transpose(2, 3, 1, 0).reshape(25, 6, 16)
    w2 = jnp.pad(w2, ((0, 0), (0, 2), (0, 112)))
    b2 = jnp.pad(p["b2"], (0, 112)).reshape(1, 128)
    # fc1: fold torch's NCHW flatten into 16 per-spatial-position taps (c, out)
    wf1 = p["fw1"].reshape(120, 16, 4, 4).transpose(2, 3, 1, 0).reshape(16, 16, 120)
    wf1 = jnp.pad(wf1, ((0, 0), (0, 0), (0, 8)))                  # (16, 16, 128)
    bf1 = jnp.pad(p["fb1"], (0, 8)).reshape(1, 128)
    # fc2 / fc3: pre-transposed (in, out), padded to (128, 128)
    wf2 = jnp.pad(p["fw2"].T, ((0, 8), (0, 44)))
    bf2 = jnp.pad(p["fb2"], (0, 44)).reshape(1, 128)
    wf3 = jnp.pad(p["fw3"].T, ((0, 44), (0, 118)))
    bf3 = jnp.pad(p["fb3"], (0, 118)).reshape(1, 128)
    return dict(w1=w1, b1=b1, w2=w2, b2=b2, wf1=wf1, bf1=bf1,
                wf2=wf2, bf2=bf2, wf3=wf3, bf3=bf3)


def inequality_model_forward(x, pk):
    """x: (B,1,28,28), pk: packed params -> (B, 10)."""
    B = x.shape[0]
    patches = _conv1_patches(x)
    inputs = (patches, pk["w1"], pk["b1"], pk["w2"], pk["b2"],
              pk["wf1"], pk["bf1"], pk["wf2"], pk["bf2"], pk["wf3"], pk["bf3"])
    out = pl.pallas_call(
        _lenet_kernel,
        out_shape=jax.ShapeDtypeStruct((B, 128), jnp.float32),
        in_specs=[_full_spec(a.shape) for a in inputs],
        out_specs=_full_spec((B, 128)),
    )(*inputs)
    return out[:, :10]


# ---------------------------------------------------------------------------
# Parameters + pure-JAX reference (for a correctness check)
# ---------------------------------------------------------------------------
def init_params(key):
    ks = jax.random.split(key, 10)
    p = {}
    p["w1"] = 0.1 * jax.random.normal(ks[0], (6, 1, 5, 5), jnp.float32)
    p["b1"] = 0.1 * jax.random.normal(ks[1], (6,), jnp.float32)
    p["w2"] = 0.1 * jax.random.normal(ks[2], (16, 6, 5, 5), jnp.float32)
    p["b2"] = 0.1 * jax.random.normal(ks[3], (16,), jnp.float32)
    p["fw1"] = 0.1 * jax.random.normal(ks[4], (120, 256), jnp.float32)  # torch Linear: (out, in)
    p["fb1"] = 0.1 * jax.random.normal(ks[5], (120,), jnp.float32)
    p["fw2"] = 0.1 * jax.random.normal(ks[6], (84, 120), jnp.float32)
    p["fb2"] = 0.1 * jax.random.normal(ks[7], (84,), jnp.float32)
    p["fw3"] = 0.1 * jax.random.normal(ks[8], (10, 84), jnp.float32)
    p["fb3"] = 0.1 * jax.random.normal(ks[9], (10,), jnp.float32)
    return p


def reference_forward(x, p):
    """Plain-JAX (no Pallas) reference matching the PyTorch module."""
    with jax.default_matmul_precision("highest"):
        dn = ("NCHW", "OIHW", "NCHW")
        y = lax.conv_general_dilated(x, p["w1"], (1, 1), "VALID", dimension_numbers=dn)
        y = jax.nn.relu(y + p["b1"][None, :, None, None])
        y = lax.reduce_window(y, -jnp.inf, lax.max, (1, 1, 2, 2), (1, 1, 2, 2), "VALID")
        y = lax.conv_general_dilated(y, p["w2"], (1, 1), "VALID", dimension_numbers=dn)
        y = jax.nn.relu(y + p["b2"][None, :, None, None])
        y = lax.reduce_window(y, -jnp.inf, lax.max, (1, 1, 2, 2), (1, 1, 2, 2), "VALID")
        y = y.reshape(y.shape[0], -1)
        y = jax.nn.relu(y @ p["fw1"].T + p["fb1"])
        y = jax.nn.relu(y @ p["fw2"].T + p["fb2"])
        y = jax.nn.relu(y @ p["fw3"].T + p["fb3"])
        return y


if __name__ == "__main__":
    key = jax.random.PRNGKey(0)
    kx, kp = jax.random.split(key)
    # Input must be (B, 1, 28, 28) so the flattened feature size is 16*4*4 = 256.
    x = jax.random.normal(kx, (2, 1, 28, 28), jnp.float32)
    params = init_params(kp)
    packed = pack_params(params)              # one-time packing, outside jit

    fwd = jax.jit(inequality_model_forward)
    out = jax.block_until_ready(fwd(x, packed))
    assert out.shape == (2, 10), out.shape

    ref = jax.block_until_ready(reference_forward(x, params))
    err = float(jnp.max(jnp.abs(out - ref)))
    assert err < 1e-3, f"max abs err {err}"
    print("KERNEL_OK")
</pallas_src>

<mosaic_0001>
module attributes {stable_mosaic.version = 11 : i64} {
  func.func @_lenet_kernel(%arg0: memref<1152x32xf32, #tpu.memory_space<vmem>>, %arg1: memref<32x128xf32, #tpu.memory_space<vmem>>, %arg2: memref<1x128xf32, #tpu.memory_space<vmem>>, %arg3: memref<25x8x128xf32, #tpu.memory_space<vmem>>, %arg4: memref<1x128xf32, #tpu.memory_space<vmem>>, %arg5: memref<16x16x128xf32, #tpu.memory_space<vmem>>, %arg6: memref<1x128xf32, #tpu.memory_space<vmem>>, %arg7: memref<128x128xf32, #tpu.memory_space<vmem>>, %arg8: memref<1x128xf32, #tpu.memory_space<vmem>>, %arg9: memref<128x128xf32, #tpu.memory_space<vmem>>, %arg10: memref<1x128xf32, #tpu.memory_space<vmem>>, %arg11: memref<2x128xf32, #tpu.memory_space<vmem>>) attributes {dimension_semantics = [], scalar_prefetch = 0 : i64, scratch_operands = 0 : i64, tpu.core_type = #tpu.core_type<tc>} {
    %c0 = arith.constant 0 : index
    %c0_0 = arith.constant 0 : index
    %0 = vector.load %arg0[%c0, %c0_0] : memref<1152x32xf32, #tpu.memory_space<vmem>>, vector<1152x32xf32>
    %c0_1 = arith.constant 0 : index
    %c0_2 = arith.constant 0 : index
    %1 = vector.load %arg1[%c0_1, %c0_2] : memref<32x128xf32, #tpu.memory_space<vmem>>, vector<32x128xf32>
    %cst = arith.constant dense<0.000000e+00> : vector<1152x128xf32>
    %2 = tpu.matmul %0, %1, %cst {dimension_numbers = #tpu.dot_dimension_numbers<[1], [0], [0], [1], [0, 0, 1, 1], [], []>} : vector<1152x32xf32>, vector<32x128xf32>, vector<1152x128xf32> -> vector<1152x128xf32>
    %c0_3 = arith.constant 0 : index
    %c0_4 = arith.constant 0 : index
    %3 = vector.load %arg2[%c0_3, %c0_4] : memref<1x128xf32, #tpu.memory_space<vmem>>, vector<1x128xf32>
    %4 = vector.broadcast %3 : vector<1x128xf32> to vector<1152x128xf32>
    %5 = arith.addf %2, %4 : vector<1152x128xf32>
    %cst_5 = arith.constant 0.000000e+00 : f32
    %6 = vector.broadcast %cst_5 : f32 to vector<1152x128xf32>
    %7 = arith.maximumf %5, %6 : vector<1152x128xf32>
    %8 = vector.extract_strided_slice %7 {offsets = [0, 0], sizes = [288, 128], strides = [1, 1]} : vector<1152x128xf32> to vector<288x128xf32>
    %9 = vector.extract_strided_slice %7 {offsets = [288, 0], sizes = [288, 128], strides = [1, 1]} : vector<1152x128xf32> to vector<288x128xf32>
    %10 = arith.maximumf %8, %9 : vector<288x128xf32>
    %11 = vector.extract_strided_slice %7 {offsets = [576, 0], sizes = [288, 128], strides = [1, 1]} : vector<1152x128xf32> to vector<288x128xf32>
    %12 = vector.extract_strided_slice %7 {offsets = [864, 0], sizes = [288, 128], strides = [1, 1]} : vector<1152x128xf32> to vector<288x128xf32>
    %13 = arith.maximumf %11, %12 : vector<288x128xf32>
    %14 = arith.maximumf %10, %13 : vector<288x128xf32>
    %15 = vector.extract_strided_slice %14 {offsets = [0, 0], sizes = [288, 8], strides = [1, 1]} : vector<288x128xf32> to vector<288x8xf32>
    %cst_6 = arith.constant 0.000000e+00 : f32
    %16 = vector.broadcast %cst_6 : f32 to vector<184x128xf32>
    %17 = vector.extract_strided_slice %15 {offsets = [0, 0], sizes = [184, 8], strides = [1, 1]} : vector<288x8xf32> to vector<184x8xf32>
    %c0_7 = arith.constant 0 : index
    %c0_8 = arith.constant 0 : index
    %c0_9 = arith.constant 0 : index
    %18 = vector.load %arg3[%c0_7, %c0_8, %c0_9] : memref<25x8x128xf32, #tpu.memory_space<vmem>>, vector<1x8x128xf32>
    %19 = vector.shape_cast %18 : vector<1x8x128xf32> to vector<8x128xf32>
    %cst_10 = arith.constant dense<0.000000e+00> : vector<184x128xf32>
    %20 = tpu.matmul %17, %19, %cst_10 {dimension_numbers = #tpu.dot_dimension_numbers<[1], [0], [0], [1], [0, 0, 1, 1], [], []>} : vector<184x8xf32>, vector<8x128xf32>, vector<184x128xf32> -> vector<184x128xf32>
    %21 = arith.addf %16, %20 : vector<184x128xf32>
    %22 = vector.extract_strided_slice %15 {offsets = [2, 0], sizes = [184, 8], strides = [1, 1]} : vector<288x8xf32> to vector<184x8xf32>
    %c1 = arith.constant 1 : index
    %c0_11 = arith.constant 0 : index
    %c0_12 = arith.constant 0 : index
    %23 = vector.load %arg3[%c1, %c0_11, %c0_12] : memref<25x8x128xf32, #tpu.memory_space<vmem>>, vector<1x8x128xf32>
    %24 = vector.shape_cast %23 : vector<1x8x128xf32> to vector<8x128xf32>
    %cst_13 = arith.constant dense<0.000000e+00> : vector<184x128xf32>
    %25 = tpu.matmul %22, %24, %cst_13 {dimension_numbers = #tpu.dot_dimension_numbers<[1], [0], [0], [1], [0, 0, 1, 1], [], []>} : vector<184x8xf32>, vector<8x128xf32>, vector<184x128xf32> -> vector<184x128xf32>
    %26 = arith.addf %21, %25 : vector<184x128xf32>
    %27 = vector.extract_strided_slice %15 {offsets = [4, 0], sizes = [184, 8], strides = [1, 1]} : vector<288x8xf32> to vector<184x8xf32>
    %c2 = arith.constant 2 : index
    %c0_14 = arith.constant 0 : index
    %c0_15 = arith.constant 0 : index
    %28 = vector.load %arg3[%c2, %c0_14, %c0_15] : memref<25x8x128xf32, #tpu.memory_space<vmem>>, vector<1x8x128xf32>
    %29 = vector.shape_cast %28 : vector<1x8x128xf32> to vector<8x128xf32>
    %cst_16 = arith.constant dense<0.000000e+00> : vector<184x128xf32>
    %30 = tpu.matmul %27, %29, %cst_16 {dimension_numbers = #tpu.dot_dimension_numbers<[1], [0], [0], [1], [0, 0, 1, 1], [], []>} : vector<184x8xf32>, vector<8x128xf32>, vector<184x128xf32> -> vector<184x128xf32>
    %31 = arith.addf %26, %30 : vector<184x128xf32>
    %32 = vector.extract_strided_slice %15 {offsets = [6, 0], sizes = [184, 8], strides = [1, 1]} : vector<288x8xf32> to vector<184x8xf32>
    %c3 = arith.constant 3 : index
    %c0_17 = arith.constant 0 : index
    %c0_18 = arith.constant 0 : index
    %33 = vector.load %arg3[%c3, %c0_17, %c0_18] : memref<25x8x128xf32, #tpu.memory_space<vmem>>, vector<1x8x128xf32>
    %34 = vector.shape_cast %33 : vector<1x8x128xf32> to vector<8x128xf32>
    %cst_19 = arith.constant dense<0.000000e+00> : vector<184x128xf32>
    %35 = tpu.matmul %32, %34, %cst_19 {dimension_numbers = #tpu.dot_dimension_numbers<[1], [0], [0], [1], [0, 0, 1, 1], [], []>} : vector<184x8xf32>, vector<8x128xf32>, vector<184x128xf32> -> vector<184x128xf32>
    %36 = arith.addf %31, %35 : vector<184x128xf32>
    %37 = vector.extract_strided_slice %15 {offsets = [8, 0], sizes = [184, 8], strides = [1, 1]} : vector<288x8xf32> to vector<184x8xf32>
    %c4 = arith.constant 4 : index
    %c0_20 = arith.constant 0 : index
    %c0_21 = arith.constant 0 : index
    %38 = vector.load %arg3[%c4, %c0_20, %c0_21] : memref<25x8x128xf32, #tpu.memory_space<vmem>>, vector<1x8x128xf32>
    %39 = vector.shape_cast %38 : vector<1x8x128xf32> to vector<8x128xf32>
    %cst_22 = arith.constant dense<0.000000e+00> : vector<184x128xf32>
    %40 = tpu.matmul %37, %39, %cst_22 {dimension_numbers = #tpu.dot_dimension_numbers<[1], [0], [0], [1], [0, 0, 1, 1], [], []>} : vector<184x8xf32>, vector<8x128xf32>, vector<184x128xf32> -> vector<184x128xf32>
    %41 = arith.addf %36, %40 : vector<184x128xf32>
    %42 = vector.extract_strided_slice %15 {offsets = [24, 0], sizes = [184, 8], strides = [1, 1]} : vector<288x8xf32> to vector<184x8xf32>
    %c5 = arith.constant 5 : index
    %c0_23 = arith.constant 0 : index
    %c0_24 = arith.constant 0 : index
    %43 = vector.load %arg3[%c5, %c0_23, %c0_24] : memref<25x8x128xf32, #tpu.memory_space<vmem>>, vector<1x8x128xf32>
    %44 = vector.shape_cast %43 : vector<1x8x128xf32> to vector<8x128xf32>
    %cst_25 = arith.constant dense<0.000000e+00> : vector<184x128xf32>
    %45 = tpu.matmul %42, %44, %cst_25 {dimension_numbers = #tpu.dot_dimension_numbers<[1], [0], [0], [1], [0, 0, 1, 1], [], []>} : vector<184x8xf32>, vector<8x128xf32>, vector<184x128xf32> -> vector<184x128xf32>
    %46 = arith.addf %41, %45 : vector<184x128xf32>
    %47 = vector.extract_strided_slice %15 {offsets = [26, 0], sizes = [184, 8], strides = [1, 1]} : vector<288x8xf32> to vector<184x8xf32>
    %c6 = arith.constant 6 : index
    %c0_26 = arith.constant 0 : index
    %c0_27 = arith.constant 0 : index
    %48 = vector.load %arg3[%c6, %c0_26, %c0_27] : memref<25x8x128xf32, #tpu.memory_space<vmem>>, vector<1x8x128xf32>
    %49 = vector.shape_cast %48 : vector<1x8x128xf32> to vector<8x128xf32>
    %cst_28 = arith.constant dense<0.000000e+00> : vector<184x128xf32>
    %50 = tpu.matmul %47, %49, %cst_28 {dimension_numbers = #tpu.dot_dimension_numbers<[1], [0], [0], [1], [0, 0, 1, 1], [], []>} : vector<184x8xf32>, vector<8x128xf32>, vector<184x128xf32> -> vector<184x128xf32>
    %51 = arith.addf %46, %50 : vector<184x128xf32>
    %52 = vector.extract_strided_slice %15 {offsets = [28, 0], sizes = [184, 8], strides = [1, 1]} : vector<288x8xf32> to vector<184x8xf32>
    %c7 = arith.constant 7 : index
    %c0_29 = arith.constant 0 : index
    %c0_30 = arith.constant 0 : index
    %53 = vector.load %arg3[%c7, %c0_29, %c0_30] : memref<25x8x128xf32, #tpu.memory_space<vmem>>, vector<1x8x128xf32>
    %54 = vector.shape_cast %53 : vector<1x8x128xf32> to vector<8x128xf32>
    %cst_31 = arith.constant dense<0.000000e+00> : vector<184x128xf32>
    %55 = tpu.matmul %52, %54, %cst_31 {dimension_numbers = #tpu.dot_dimension_numbers<[1], [0], [0], [1], [0, 0, 1, 1], [], []>} : vector<184x8xf32>, vector<8x128xf32>, vector<184x128xf32> -> vector<184x128xf32>
    %56 = arith.addf %51, %55 : vector<184x128xf32>
    %57 = vector.extract_strided_slice %15 {offsets = [30, 0], sizes = [184, 8], strides = [1, 1]} : vector<288x8xf32> to vector<184x8xf32>
    %c8 = arith.constant 8 : index
    %c0_32 = arith.constant 0 : index
    %c0_33 = arith.constant 0 : index
    %58 = vector.load %arg3[%c8, %c0_32, %c0_33] : memref<25x8x128xf32, #tpu.memory_space<vmem>>, vector<1x8x128xf32>
    %59 = vector.shape_cast %58 : vector<1x8x128xf32> to vector<8x128xf32>
    %cst_34 = arith.constant dense<0.000000e+00> : vector<184x128xf32>
    %60 = tpu.matmul %57, %59, %cst_34 {dimension_numbers = #tpu.dot_dimension_numbers<[1], [0], [0], [1], [0, 0, 1, 1], [], []>} : vector<184x8xf32>, vector<8x128xf32>, vector<184x128xf32> -> vector<184x128xf32>
    %61 = arith.addf %56, %60 : vector<184x128xf32>
    %62 = vector.extract_strided_slice %15 {offsets = [32, 0], sizes = [184, 8], strides = [1, 1]} : vector<288x8xf32> to vector<184x8xf32>
    %c9 = arith.constant 9 : index
    %c0_35 = arith.constant 0 : index
    %c0_36 = arith.constant 0 : index
    %63 = vector.load %arg3[%c9, %c0_35, %c0_36] : memref<25x8x128xf32, #tpu.memory_space<vmem>>, vector<1x8x128xf32>
    %64 = vector.shape_cast %63 : vector<1x8x128xf32> to vector<8x128xf32>
    %cst_37 = arith.constant dense<0.000000e+00> : vector<184x128xf32>
    %65 = tpu.matmul %62, %64, %cst_37 {dimension_numbers = #tpu.dot_dimension_numbers<[1], [0], [0], [1], [0, 0, 1, 1], [], []>} : vector<184x8xf32>, vector<8x128xf32>, vector<184x128xf32> -> vector<184x128xf32>
    %66 = arith.addf %61, %65 : vector<184x128xf32>
    %67 = vector.extract_strided_slice %15 {offsets = [48, 0], sizes = [184, 8], strides = [1, 1]} : vector<288x8xf32> to vector<184x8xf32>
    %c10 = arith.constant 10 : index
    %c0_38 = arith.constant 0 : index
    %c0_39 = arith.constant 0 : index
    %68 = vector.load %arg3[%c10, %c0_38, %c0_39] : memref<25x8x128xf32, #tpu.memory_space<vmem>>, vector<1x8x128xf32>
    %69 = vector.shape_cast %68 : vector<1x8x128xf32> to vector<8x128xf32>
    %cst_40 = arith.constant dense<0.000000e+00> : vector<184x128xf32>
    %70 = tpu.matmul %67, %69, %cst_40 {dimension_numbers = #tpu.dot_dimension_numbers<[1], [0], [0], [1], [0, 0, 1, 1], [], []>} : vector<184x8xf32>, vector<8x128xf32>, vector<184x128xf32> -> vector<184x128xf32>
    %71 = arith.addf %66, %70 : vector<184x128xf32>
    %72 = vector.extract_strided_slice %15 {offsets = [50, 0], sizes = [184, 8], strides = [1, 1]} : vector<288x8xf32> to vector<184x8xf32>
    %c11 = arith.constant 11 : index
    %c0_41 = arith.constant 0 : index
    %c0_42 = arith.constant 0 : index
    %73 = vector.load %arg3[%c11, %c0_41, %c0_42] : memref<25x8x128xf32, #tpu.memory_space<vmem>>, vector<1x8x128xf32>
    %74 = vector.shape_cast %73 : vector<1x8x128xf32> to vector<8x128xf32>
    %cst_43 = arith.constant dense<0.000000e+00> : vector<184x128xf32>
    %75 = tpu.matmul %72, %74, %cst_43 {dimension_numbers = #tpu.dot_dimension_numbers<[1], [0], [0], [1], [0, 0, 1, 1], [], []>} : vector<184x8xf32>, vector<8x128xf32>, vector<184x128xf32> -> vector<184x128xf32>
    %76 = arith.addf %71, %75 : vector<184x128xf32>
    %77 = vector.extract_strided_slice %15 {offsets = [52, 0], sizes = [184, 8], strides = [1, 1]} : vector<288x8xf32> to vector<184x8xf32>
    %c12 = arith.constant 12 : index
    %c0_44 = arith.constant 0 : index
    %c0_45 = arith.constant 0 : index
    %78 = vector.load %arg3[%c12, %c0_44, %c0_45] : memref<25x8x128xf32, #tpu.memory_space<vmem>>, vector<1x8x128xf32>
    %79 = vector.shape_cast %78 : vector<1x8x128xf32> to vector<8x128xf32>
    %cst_46 = arith.constant dense<0.000000e+00> : vector<184x128xf32>
    %80 = tpu.matmul %77, %79, %cst_46 {dimension_numbers = #tpu.dot_dimension_numbers<[1], [0], [0], [1], [0, 0, 1, 1], [], []>} : vector<184x8xf32>, vector<8x128xf32>, vector<184x128xf32> -> vector<184x128xf32>
    %81 = arith.addf %76, %80 : vector<184x128xf32>
    %82 = vector.extract_strided_slice %15 {offsets = [54, 0], sizes = [184, 8], strides = [1, 1]} : vector<288x8xf32> to vector<184x8xf32>
    %c13 = arith.constant 13 : index
    %c0_47 = arith.constant 0 : index
    %c0_48 = arith.constant 0 : index
    %83 = vector.load %arg3[%c13, %c0_47, %c0_48] : memref<25x8x128xf32, #tpu.memory_space<vmem>>, vector<1x8x128xf32>
    %84 = vector.shape_cast %83 : vector<1x8x128xf32> to vector<8x128xf32>
    %cst_49 = arith.constant dense<0.000000e+00> : vector<184x128xf32>
    %85 = tpu.matmul %82, %84, %cst_49 {dimension_numbers = #tpu.dot_dimension_numbers<[1], [0], [0], [1], [0, 0, 1, 1], [], []>} : vector<184x8xf32>, vector<8x128xf32>, vector<184x128xf32> -> vector<184x128xf32>
    %86 = arith.addf %81, %85 : vector<184x128xf32>
    %87 = vector.extract_strided_slice %15 {offsets = [56, 0], sizes = [184, 8], strides = [1, 1]} : vector<288x8xf32> to vector<184x8xf32>
    %c14 = arith.constant 14 : index
    %c0_50 = arith.constant 0 : index
    %c0_51 = arith.constant 0 : index
    %88 = vector.load %arg3[%c14, %c0_50, %c0_51] : memref<25x8x128xf32, #tpu.memory_space<vmem>>, vector<1x8x128xf32>
    %89 = vector.shape_cast %88 : vector<1x8x128xf32> to vector<8x128xf32>
    %cst_52 = arith.constant dense<0.000000e+00> : vector<184x128xf32>
    %90 = tpu.matmul %87, %89, %cst_52 {dimension_numbers = #tpu.dot_dimension_numbers<[1], [0], [0], [1], [0, 0, 1, 1], [], []>} : vector<184x8xf32>, vector<8x128xf32>, vector<184x128xf32> -> vector<184x128xf32>
    %91 = arith.addf %86, %90 : vector<184x128xf32>
    %92 = vector.extract_strided_slice %15 {offsets = [72, 0], sizes = [184, 8], strides = [1, 1]} : vector<288x8xf32> to vector<184x8xf32>
    %c15 = arith.constant 15 : index
    %c0_53 = arith.constant 0 : index
    %c0_54 = arith.constant 0 : index
    %93 = vector.load %arg3[%c15, %c0_53, %c0_54] : memref<25x8x128xf32, #tpu.memory_space<vmem>>, vector<1x8x128xf32>
    %94 = vector.shape_cast %93 : vector<1x8x128xf32> to vector<8x128xf32>
    %cst_55 = arith.constant dense<0.000000e+00> : vector<184x128xf32>
    %95 = tpu.matmul %92, %94, %cst_55 {dimension_numbers = #tpu.dot_dimension_numbers<[1], [0], [0], [1], [0, 0, 1, 1], [], []>} : vector<184x8xf32>, vector<8x128xf32>, vector<184x128xf32> -> vector<184x128xf32>
    %96 = arith.addf %91, %95 : vector<184x128xf32>
    %97 = vector.extract_strided_slice %15 {offsets = [74, 0], sizes = [184, 8], strides = [1, 1]} : vector<288x8xf32> to vector<184x8xf32>
    %c16 = arith.constant 16 : index
    %c0_56 = arith.constant 0 : index
    %c0_57 = arith.constant 0 : index
    %98 = vector.load %arg3[%c16, %c0_56, %c0_57] : memref<25x8x128xf32, #tpu.memory_space<vmem>>, vector<1x8x128xf32>
    %99 = vector.shape_cast %98 : vector<1x8x128xf32> to vector<8x128xf32>
    %cst_58 = arith.constant dense<0.000000e+00> : vector<184x128xf32>
    %100 = tpu.matmul %97, %99, %cst_58 {dimension_numbers = #tpu.dot_dimension_numbers<[1], [0], [0], [1], [0, 0, 1, 1], [], []>} : vector<184x8xf32>, vector<8x128xf32>, vector<184x128xf32> -> vector<184x128xf32>
    %101 = arith.addf %96, %100 : vector<184x128xf32>
    %102 = vector.extract_strided_slice %15 {offsets = [76, 0], sizes = [184, 8], strides = [1, 1]} : vector<288x8xf32> to vector<184x8xf32>
    %c17 = arith.constant 17 : index
    %c0_59 = arith.constant 0 : index
    %c0_60 = arith.constant 0 : index
    %103 = vector.load %arg3[%c17, %c0_59, %c0_60] : memref<25x8x128xf32, #tpu.memory_space<vmem>>, vector<1x8x128xf32>
    %104 = vector.shape_cast %103 : vector<1x8x128xf32> to vector<8x128xf32>
    %cst_61 = arith.constant dense<0.000000e+00> : vector<184x128xf32>
    %105 = tpu.matmul %102, %104, %cst_61 {dimension_numbers = #tpu.dot_dimension_numbers<[1], [0], [0], [1], [0, 0, 1, 1], [], []>} : vector<184x8xf32>, vector<8x128xf32>, vector<184x128xf32> -> vector<184x128xf32>
    %106 = arith.addf %101, %105 : vector<184x128xf32>
    %107 = vector.extract_strided_slice %15 {offsets = [78, 0], sizes = [184, 8], strides = [1, 1]} : vector<288x8xf32> to vector<184x8xf32>
    %c18 = arith.constant 18 : index
    %c0_62 = arith.constant 0 : index
    %c0_63 = arith.constant 0 : index
    %108 = vector.load %arg3[%c18, %c0_62, %c0_63] : memref<25x8x128xf32, #tpu.memory_space<vmem>>, vector<1x8x128xf32>
    %109 = vector.shape_cast %108 : vector<1x8x128xf32> to vector<8x128xf32>
    %cst_64 = arith.constant dense<0.000000e+00> : vector<184x128xf32>
    %110 = tpu.matmul %107, %109, %cst_64 {dimension_numbers = #tpu.dot_dimension_numbers<[1], [0], [0], [1], [0, 0, 1, 1], [], []>} : vector<184x8xf32>, vector<8x128xf32>, vector<184x128xf32> -> vector<184x128xf32>
    %111 = arith.addf %106, %110 : vector<184x128xf32>
    %112 = vector.extract_strided_slice %15 {offsets = [80, 0], sizes = [184, 8], strides = [1, 1]} : vector<288x8xf32> to vector<184x8xf32>
    %c19 = arith.constant 19 : index
    %c0_65 = arith.constant 0 : index
    %c0_66 = arith.constant 0 : index
    %113 = vector.load %arg3[%c19, %c0_65, %c0_66] : memref<25x8x128xf32, #tpu.memory_space<vmem>>, vector<1x8x128xf32>
    %114 = vector.shape_cast %113 : vector<1x8x128xf32> to vector<8x128xf32>
    %cst_67 = arith.constant dense<0.000000e+00> : vector<184x128xf32>
    %115 = tpu.matmul %112, %114, %cst_67 {dimension_numbers = #tpu.dot_dimension_numbers<[1], [0], [0], [1], [0, 0, 1, 1], [], []>} : vector<184x8xf32>, vector<8x128xf32>, vector<184x128xf32> -> vector<184x128xf32>
    %116 = arith.addf %111, %115 : vector<184x128xf32>
    %117 = vector.extract_strided_slice %15 {offsets = [96, 0], sizes = [184, 8], strides = [1, 1]} : vector<288x8xf32> to vector<184x8xf32>
    %c20 = arith.constant 20 : index
    %c0_68 = arith.constant 0 : index
    %c0_69 = arith.constant 0 : index
    %118 = vector.load %arg3[%c20, %c0_68, %c0_69] : memref<25x8x128xf32, #tpu.memory_space<vmem>>, vector<1x8x128xf32>
    %119 = vector.shape_cast %118 : vector<1x8x128xf32> to vector<8x128xf32>
    %cst_70 = arith.constant dense<0.000000e+00> : vector<184x128xf32>
    %120 = tpu.matmul %117, %119, %cst_70 {dimension_numbers = #tpu.dot_dimension_numbers<[1], [0], [0], [1], [0, 0, 1, 1], [], []>} : vector<184x8xf32>, vector<8x128xf32>, vector<184x128xf32> -> vector<184x128xf32>
    %121 = arith.addf %116, %120 : vector<184x128xf32>
    %122 = vector.extract_strided_slice %15 {offsets = [98, 0], sizes = [184, 8], strides = [1, 1]} : vector<288x8xf32> to vector<184x8xf32>
    %c21 = arith.constant 21 : index
    %c0_71 = arith.constant 0 : index
    %c0_72 = arith.constant 0 : index
    %123 = vector.load %arg3[%c21, %c0_71, %c0_72] : memref<25x8x128xf32, #tpu.memory_space<vmem>>, vector<1x8x128xf32>
    %124 = vector.shape_cast %123 : vector<1x8x128xf32> to vector<8x128xf32>
    %cst_73 = arith.constant dense<0.000000e+00> : vector<184x128xf32>
    %125 = tpu.matmul %122, %124, %cst_73 {dimension_numbers = #tpu.dot_dimension_numbers<[1], [0], [0], [1], [0, 0, 1, 1], [], []>} : vector<184x8xf32>, vector<8x128xf32>, vector<184x128xf32> -> vector<184x128xf32>
    %126 = arith.addf %121, %125 : vector<184x128xf32>
    %127 = vector.extract_strided_slice %15 {offsets = [100, 0], sizes = [184, 8], strides = [1, 1]} : vector<288x8xf32> to vector<184x8xf32>
    %c22 = arith.constant 22 : index
    %c0_74 = arith.constant 0 : index
    %c0_75 = arith.constant 0 : index
    %128 = vector.load %arg3[%c22, %c0_74, %c0_75] : memref<25x8x128xf32, #tpu.memory_space<vmem>>, vector<1x8x128xf32>
    %129 = vector.shape_cast %128 : vector<1x8x128xf32> to vector<8x128xf32>
    %cst_76 = arith.constant dense<0.000000e+00> : vector<184x128xf32>
    %130 = tpu.matmul %127, %129, %cst_76 {dimension_numbers = #tpu.dot_dimension_numbers<[1], [0], [0], [1], [0, 0, 1, 1], [], []>} : vector<184x8xf32>, vector<8x128xf32>, vector<184x128xf32> -> vector<184x128xf32>
    %131 = arith.addf %126, %130 : vector<184x128xf32>
    %132 = vector.extract_strided_slice %15 {offsets = [102, 0], sizes = [184, 8], strides = [1, 1]} : vector<288x8xf32> to vector<184x8xf32>
    %c23 = arith.constant 23 : index
    %c0_77 = arith.constant 0 : index
    %c0_78 = arith.constant 0 : index
    %133 = vector.load %arg3[%c23, %c0_77, %c0_78] : memref<25x8x128xf32, #tpu.memory_space<vmem>>, vector<1x8x128xf32>
    %134 = vector.shape_cast %133 : vector<1x8x128xf32> to vector<8x128xf32>
    %cst_79 = arith.constant dense<0.000000e+00> : vector<184x128xf32>
    %135 = tpu.matmul %132, %134, %cst_79 {dimension_numbers = #tpu.dot_dimension_numbers<[1], [0], [0], [1], [0, 0, 1, 1], [], []>} : vector<184x8xf32>, vector<8x128xf32>, vector<184x128xf32> -> vector<184x128xf32>
    %136 = arith.addf %131, %135 : vector<184x128xf32>
    %137 = vector.extract_strided_slice %15 {offsets = [104, 0], sizes = [184, 8], strides = [1, 1]} : vector<288x8xf32> to vector<184x8xf32>
    %c24 = arith.constant 24 : index
    %c0_80 = arith.constant 0 : index
    %c0_81 = arith.constant 0 : index
    %138 = vector.load %arg3[%c24, %c0_80, %c0_81] : memref<25x8x128xf32, #tpu.memory_space<vmem>>, vector<1x8x128xf32>
    %139 = vector.shape_cast %138 : vector<1x8x128xf32> to vector<8x128xf32>
    %cst_82 = arith.constant dense<0.000000e+00> : vector<184x128xf32>
    %140 = tpu.matmul %137, %139, %cst_82 {dimension_numbers = #tpu.dot_dimension_numbers<[1], [0], [0], [1], [0, 0, 1, 1], [], []>} : vector<184x8xf32>, vector<8x128xf32>, vector<184x128xf32> -> vector<184x128xf32>
    %141 = arith.addf %136, %140 : vector<184x128xf32>
    %c0_83 = arith.constant 0 : index
    %c0_84 = arith.constant 0 : index
    %142 = vector.load %arg4[%c0_83, %c0_84] : memref<1x128xf32, #tpu.memory_space<vmem>>, vector<1x128xf32>
    %143 = vector.broadcast %142 : vector<1x128xf32> to vector<184x128xf32>
    %144 = arith.addf %141, %143 : vector<184x128xf32>
    %cst_85 = arith.constant 0.000000e+00 : f32
    %145 = vector.broadcast %cst_85 : f32 to vector<184x128xf32>
    %146 = arith.maximumf %144, %145 : vector<184x128xf32>
    %147 = vector.extract_strided_slice %146 {offsets = [0, 0], sizes = [158, 128], strides = [1, 1]} : vector<184x128xf32> to vector<158x128xf32>
    %148 = vector.extract_strided_slice %146 {offsets = [2, 0], sizes = [158, 128], strides = [1, 1]} : vector<184x128xf32> to vector<158x128xf32>
    %149 = arith.maximumf %147, %148 : vector<158x128xf32>
    %150 = vector.extract_strided_slice %146 {offsets = [24, 0], sizes = [158, 128], strides = [1, 1]} : vector<184x128xf32> to vector<158x128xf32>
    %151 = vector.extract_strided_slice %146 {offsets = [26, 0], sizes = [158, 128], strides = [1, 1]} : vector<184x128xf32> to vector<158x128xf32>
    %152 = arith.maximumf %150, %151 : vector<158x128xf32>
    %153 = arith.maximumf %149, %152 : vector<158x128xf32>
    %cst_86 = arith.constant 0.000000e+00 : f32
    %154 = vector.broadcast %cst_86 : f32 to vector<2x128xf32>
    %155 = vector.extract_strided_slice %153 {offsets = [0, 0], sizes = [2, 16], strides = [1, 1]} : vector<158x128xf32> to vector<2x16xf32>
    %c0_87 = arith.constant 0 : index
    %c0_88 = arith.constant 0 : index
    %c0_89 = arith.constant 0 : index
    %156 = vector.load %arg5[%c0_87, %c0_88, %c0_89] : memref<16x16x128xf32, #tpu.memory_space<vmem>>, vector<1x16x128xf32>
    %157 = vector.shape_cast %156 : vector<1x16x128xf32> to vector<16x128xf32>
    %cst_90 = arith.constant dense<0.000000e+00> : vector<2x128xf32>
    %158 = tpu.matmul %155, %157, %cst_90 {dimension_numbers = #tpu.dot_dimension_numbers<[1], [0], [0], [1], [0, 0, 1, 1], [], []>} : vector<2x16xf32>, vector<16x128xf32>, vector<2x128xf32> -> vector<2x128xf32>
    %159 = arith.addf %154, %158 : vector<2x128xf32>
    %160 = vector.extract_strided_slice %153 {offsets = [4, 0], sizes = [2, 16], strides = [1, 1]} : vector<158x128xf32> to vector<2x16xf32>
    %c1_91 = arith.constant 1 : index
    %c0_92 = arith.constant 0 : index
    %c0_93 = arith.constant 0 : index
    %161 = vector.load %arg5[%c1_91, %c0_92, %c0_93] : memref<16x16x128xf32, #tpu.memory_space<vmem>>, vector<1x16x128xf32>
    %162 = vector.shape_cast %161 : vector<1x16x128xf32> to vector<16x128xf32>
    %cst_94 = arith.constant dense<0.000000e+00> : vector<2x128xf32>
    %163 = tpu.matmul %160, %162, %cst_94 {dimension_numbers = #tpu.dot_dimension_numbers<[1], [0], [0], [1], [0, 0, 1, 1], [], []>} : vector<2x16xf32>, vector<16x128xf32>, vector<2x128xf32> -> vector<2x128xf32>
    %164 = arith.addf %159, %163 : vector<2x128xf32>
    %165 = vector.extract_strided_slice %153 {offsets = [8, 0], sizes = [2, 16], strides = [1, 1]} : vector<158x128xf32> to vector<2x16xf32>
    %c2_95 = arith.constant 2 : index
    %c0_96 = arith.constant 0 : index
    %c0_97 = arith.constant 0 : index
    %166 = vector.load %arg5[%c2_95, %c0_96, %c0_97] : memref<16x16x128xf32, #tpu.memory_space<vmem>>, vector<1x16x128xf32>
    %167 = vector.shape_cast %166 : vector<1x16x128xf32> to vector<16x128xf32>
    %cst_98 = arith.constant dense<0.000000e+00> : vector<2x128xf32>
    %168 = tpu.matmul %165, %167, %cst_98 {dimension_numbers = #tpu.dot_dimension_numbers<[1], [0], [0], [1], [0, 0, 1, 1], [], []>} : vector<2x16xf32>, vector<16x128xf32>, vector<2x128xf32> -> vector<2x128xf32>
    %169 = arith.addf %164, %168 : vector<2x128xf32>
    %170 = vector.extract_strided_slice %153 {offsets = [12, 0], sizes = [2, 16], strides = [1, 1]} : vector<158x128xf32> to vector<2x16xf32>
    %c3_99 = arith.constant 3 : index
    %c0_100 = arith.constant 0 : index
    %c0_101 = arith.constant 0 : index
    %171 = vector.load %arg5[%c3_99, %c0_100, %c0_101] : memref<16x16x128xf32, #tpu.memory_space<vmem>>, vector<1x16x128xf32>
    %172 = vector.shape_cast %171 : vector<1x16x128xf32> to vector<16x128xf32>
    %cst_102 = arith.constant dense<0.000000e+00> : vector<2x128xf32>
    %173 = tpu.matmul %170, %172, %cst_102 {dimension_numbers = #tpu.dot_dimension_numbers<[1], [0], [0], [1], [0, 0, 1, 1], [], []>} : vector<2x16xf32>, vector<16x128xf32>, vector<2x128xf32> -> vector<2x128xf32>
    %174 = arith.addf %169, %173 : vector<2x128xf32>
    %175 = vector.extract_strided_slice %153 {offsets = [48, 0], sizes = [2, 16], strides = [1, 1]} : vector<158x128xf32> to vector<2x16xf32>
    %c4_103 = arith.constant 4 : index
    %c0_104 = arith.constant 0 : index
    %c0_105 = arith.constant 0 : index
    %176 = vector.load %arg5[%c4_103, %c0_104, %c0_105] : memref<16x16x128xf32, #tpu.memory_space<vmem>>, vector<1x16x128xf32>
    %177 = vector.shape_cast %176 : vector<1x16x128xf32> to vector<16x128xf32>
    %cst_106 = arith.constant dense<0.000000e+00> : vector<2x128xf32>
    %178 = tpu.matmul %175, %177, %cst_106 {dimension_numbers = #tpu.dot_dimension_numbers<[1], [0], [0], [1], [0, 0, 1, 1], [], []>} : vector<2x16xf32>, vector<16x128xf32>, vector<2x128xf32> -> vector<2x128xf32>
    %179 = arith.addf %174, %178 : vector<2x128xf32>
    %180 = vector.extract_strided_slice %153 {offsets = [52, 0], sizes = [2, 16], strides = [1, 1]} : vector<158x128xf32> to vector<2x16xf32>
    %c5_107 = arith.constant 5 : index
    %c0_108 = arith.constant 0 : index
    %c0_109 = arith.constant 0 : index
    %181 = vector.load %arg5[%c5_107, %c0_108, %c0_109] : memref<16x16x128xf32, #tpu.memory_space<vmem>>, vector<1x16x128xf32>
    %182 = vector.shape_cast %181 : vector<1x16x128xf32> to vector<16x128xf32>
    %cst_110 = arith.constant dense<0.000000e+00> : vector<2x128xf32>
    %183 = tpu.matmul %180, %182, %cst_110 {dimension_numbers = #tpu.dot_dimension_numbers<[1], [0], [0], [1], [0, 0, 1, 1], [], []>} : vector<2x16xf32>, vector<16x128xf32>, vector<2x128xf32> -> vector<2x128xf32>
    %184 = arith.addf %179, %183 : vector<2x128xf32>
    %185 = vector.extract_strided_slice %153 {offsets = [56, 0], sizes = [2, 16], strides = [1, 1]} : vector<158x128xf32> to vector<2x16xf32>
    %c6_111 = arith.constant 6 : index
    %c0_112 = arith.constant 0 : index
    %c0_113 = arith.constant 0 : index
    %186 = vector.load %arg5[%c6_111, %c0_112, %c0_113] : memref<16x16x128xf32, #tpu.memory_space<vmem>>, vector<1x16x128xf32>
    %187 = vector.shape_cast %186 : vector<1x16x128xf32> to vector<16x128xf32>
    %cst_114 = arith.constant dense<0.000000e+00> : vector<2x128xf32>
    %188 = tpu.matmul %185, %187, %cst_114 {dimension_numbers = #tpu.dot_dimension_numbers<[1], [0], [0], [1], [0, 0, 1, 1], [], []>} : vector<2x16xf32>, vector<16x128xf32>, vector<2x128xf32> -> vector<2x128xf32>
    %189 = arith.addf %184, %188 : vector<2x128xf32>
    %190 = vector.extract_strided_slice %153 {offsets = [60, 0], sizes = [2, 16], strides = [1, 1]} : vector<158x128xf32> to vector<2x16xf32>
    %c7_115 = arith.constant 7 : index
    %c0_116 = arith.constant 0 : index
    %c0_117 = arith.constant 0 : index
    %191 = vector.load %arg5[%c7_115, %c0_116, %c0_117] : memref<16x16x128xf32, #tpu.memory_space<vmem>>, vector<1x16x128xf32>
    %192 = vector.shape_cast %191 : vector<1x16x128xf32> to vector<16x128xf32>
    %cst_118 = arith.constant dense<0.000000e+00> : vector<2x128xf32>
    %193 = tpu.matmul %190, %192, %cst_118 {dimension_numbers = #tpu.dot_dimension_numbers<[1], [0], [0], [1], [0, 0, 1, 1], [], []>} : vector<2x16xf32>, vector<16x128xf32>, vector<2x128xf32> -> vector<2x128xf32>
    %194 = arith.addf %189, %193 : vector<2x128xf32>
    %195 = vector.extract_strided_slice %153 {offsets = [96, 0], sizes = [2, 16], strides = [1, 1]} : vector<158x128xf32> to vector<2x16xf32>
    %c8_119 = arith.constant 8 : index
    %c0_120 = arith.constant 0 : index
    %c0_121 = arith.constant 0 : index
    %196 = vector.load %arg5[%c8_119, %c0_120, %c0_121] : memref<16x16x128xf32, #tpu.memory_space<vmem>>, vector<1x16x128xf32>
    %197 = vector.shape_cast %196 : vector<1x16x128xf32> to vector<16x128xf32>
    %cst_122 = arith.constant dense<0.000000e+00> : vector<2x128xf32>
    %198 = tpu.matmul %195, %197, %cst_122 {dimension_numbers = #tpu.dot_dimension_numbers<[1], [0], [0], [1], [0, 0, 1, 1], [], []>} : vector<2x16xf32>, vector<16x128xf32>, vector<2x128xf32> -> vector<2x128xf32>
    %199 = arith.addf %194, %198 : vector<2x128xf32>
    %200 = vector.extract_strided_slice %153 {offsets = [100, 0], sizes = [2, 16], strides = [1, 1]} : vector<158x128xf32> to vector<2x16xf32>
    %c9_123 = arith.constant 9 : index
    %c0_124 = arith.constant 0 : index
    %c0_125 = arith.constant 0 : index
    %201 = vector.load %arg5[%c9_123, %c0_124, %c0_125] : memref<16x16x128xf32, #tpu.memory_space<vmem>>, vector<1x16x128xf32>
    %202 = vector.shape_cast %201 : vector<1x16x128xf32> to vector<16x128xf32>
    %cst_126 = arith.constant dense<0.000000e+00> : vector<2x128xf32>
    %203 = tpu.matmul %200, %202, %cst_126 {dimension_numbers = #tpu.dot_dimension_numbers<[1], [0], [0], [1], [0, 0, 1, 1], [], []>} : vector<2x16xf32>, vector<16x128xf32>, vector<2x128xf32> -> vector<2x128xf32>
    %204 = arith.addf %199, %203 : vector<2x128xf32>
    %205 = vector.extract_strided_slice %153 {offsets = [104, 0], sizes = [2, 16], strides = [1, 1]} : vector<158x128xf32> to vector<2x16xf32>
    %c10_127 = arith.constant 10 : index
    %c0_128 = arith.constant 0 : index
    %c0_129 = arith.constant 0 : index
    %206 = vector.load %arg5[%c10_127, %c0_128, %c0_129] : memref<16x16x128xf32, #tpu.memory_space<vmem>>, vector<1x16x128xf32>
    %207 = vector.shape_cast %206 : vector<1x16x128xf32> to vector<16x128xf32>
    %cst_130 = arith.constant dense<0.000000e+00> : vector<2x128xf32>
    %208 = tpu.matmul %205, %207, %cst_130 {dimension_numbers = #tpu.dot_dimension_numbers<[1], [0], [0], [1], [0, 0, 1, 1], [], []>} : vector<2x16xf32>, vector<16x128xf32>, vector<2x128xf32> -> vector<2x128xf32>
    %209 = arith.addf %204, %208 : vector<2x128xf32>
    %210 = vector.extract_strided_slice %153 {offsets = [108, 0], sizes = [2, 16], strides = [1, 1]} : vector<158x128xf32> to vector<2x16xf32>
    %c11_131 = arith.constant 11 : index
    %c0_132 = arith.constant 0 : index
    %c0_133 = arith.constant 0 : index
    %211 = vector.load %arg5[%c11_131, %c0_132, %c0_133] : memref<16x16x128xf32, #tpu.memory_space<vmem>>, vector<1x16x128xf32>
    %212 = vector.shape_cast %211 : vector<1x16x128xf32> to vector<16x128xf32>
    %cst_134 = arith.constant dense<0.000000e+00> : vector<2x128xf32>
    %213 = tpu.matmul %210, %212, %cst_134 {dimension_numbers = #tpu.dot_dimension_numbers<[1], [0], [0], [1], [0, 0, 1, 1], [], []>} : vector<2x16xf32>, vector<16x128xf32>, vector<2x128xf32> -> vector<2x128xf32>
    %214 = arith.addf %209, %213 : vector<2x128xf32>
    %215 = vector.extract_strided_slice %153 {offsets = [144, 0], sizes = [2, 16], strides = [1, 1]} : vector<158x128xf32> to vector<2x16xf32>
    %c12_135 = arith.constant 12 : index
    %c0_136 = arith.constant 0 : index
    %c0_137 = arith.constant 0 : index
    %216 = vector.load %arg5[%c12_135, %c0_136, %c0_137] : memref<16x16x128xf32, #tpu.memory_space<vmem>>, vector<1x16x128xf32>
    %217 = vector.shape_cast %216 : vector<1x16x128xf32> to vector<16x128xf32>
    %cst_138 = arith.constant dense<0.000000e+00> : vector<2x128xf32>
    %218 = tpu.matmul %215, %217, %cst_138 {dimension_numbers = #tpu.dot_dimension_numbers<[1], [0], [0], [1], [0, 0, 1, 1], [], []>} : vector<2x16xf32>, vector<16x128xf32>, vector<2x128xf32> -> vector<2x128xf32>
    %219 = arith.addf %214, %218 : vector<2x128xf32>
    %220 = vector.extract_strided_slice %153 {offsets = [148, 0], sizes = [2, 16], strides = [1, 1]} : vector<158x128xf32> to vector<2x16xf32>
    %c13_139 = arith.constant 13 : index
    %c0_140 = arith.constant 0 : index
    %c0_141 = arith.constant 0 : index
    %221 = vector.load %arg5[%c13_139, %c0_140, %c0_141] : memref<16x16x128xf32, #tpu.memory_space<vmem>>, vector<1x16x128xf32>
    %222 = vector.shape_cast %221 : vector<1x16x128xf32> to vector<16x128xf32>
    %cst_142 = arith.constant dense<0.000000e+00> : vector<2x128xf32>
    %223 = tpu.matmul %220, %222, %cst_142 {dimension_numbers = #tpu.dot_dimension_numbers<[1], [0], [0], [1], [0, 0, 1, 1], [], []>} : vector<2x16xf32>, vector<16x128xf32>, vector<2x128xf32> -> vector<2x128xf32>
    %224 = arith.addf %219, %223 : vector<2x128xf32>
    %225 = vector.extract_strided_slice %153 {offsets = [152, 0], sizes = [2, 16], strides = [1, 1]} : vector<158x128xf32> to vector<2x16xf32>
    %c14_143 = arith.constant 14 : index
    %c0_144 = arith.constant 0 : index
    %c0_145 = arith.constant 0 : index
    %226 = vector.load %arg5[%c14_143, %c0_144, %c0_145] : memref<16x16x128xf32, #tpu.memory_space<vmem>>, vector<1x16x128xf32>
    %227 = vector.shape_cast %226 : vector<1x16x128xf32> to vector<16x128xf32>
    %cst_146 = arith.constant dense<0.000000e+00> : vector<2x128xf32>
    %228 = tpu.matmul %225, %227, %cst_146 {dimension_numbers = #tpu.dot_dimension_numbers<[1], [0], [0], [1], [0, 0, 1, 1], [], []>} : vector<2x16xf32>, vector<16x128xf32>, vector<2x128xf32> -> vector<2x128xf32>
    %229 = arith.addf %224, %228 : vector<2x128xf32>
    %230 = vector.extract_strided_slice %153 {offsets = [156, 0], sizes = [2, 16], strides = [1, 1]} : vector<158x128xf32> to vector<2x16xf32>
    %c15_147 = arith.constant 15 : index
    %c0_148 = arith.constant 0 : index
    %c0_149 = arith.constant 0 : index
    %231 = vector.load %arg5[%c15_147, %c0_148, %c0_149] : memref<16x16x128xf32, #tpu.memory_space<vmem>>, vector<1x16x128xf32>
    %232 = vector.shape_cast %231 : vector<1x16x128xf32> to vector<16x128xf32>
    %cst_150 = arith.constant dense<0.000000e+00> : vector<2x128xf32>
    %233 = tpu.matmul %230, %232, %cst_150 {dimension_numbers = #tpu.dot_dimension_numbers<[1], [0], [0], [1], [0, 0, 1, 1], [], []>} : vector<2x16xf32>, vector<16x128xf32>, vector<2x128xf32> -> vector<2x128xf32>
    %234 = arith.addf %229, %233 : vector<2x128xf32>
    %c0_151 = arith.constant 0 : index
    %c0_152 = arith.constant 0 : index
    %235 = vector.load %arg6[%c0_151, %c0_152] : memref<1x128xf32, #tpu.memory_space<vmem>>, vector<1x128xf32>
    %236 = vector.broadcast %235 : vector<1x128xf32> to vector<2x128xf32>
    %237 = arith.addf %234, %236 : vector<2x128xf32>
    %cst_153 = arith.constant 0.000000e+00 : f32
    %238 = vector.broadcast %cst_153 : f32 to vector<2x128xf32>
    %239 = arith.maximumf %237, %238 : vector<2x128xf32>
    %c0_154 = arith.constant 0 : index
    %c0_155 = arith.constant 0 : index
    %240 = vector.load %arg7[%c0_154, %c0_155] : memref<128x128xf32, #tpu.memory_space<vmem>>, vector<128x128xf32>
    %cst_156 = arith.constant dense<0.000000e+00> : vector<2x128xf32>
    %241 = tpu.matmul %239, %240, %cst_156 {dimension_numbers = #tpu.dot_dimension_numbers<[1], [0], [0], [1], [0, 0, 1, 1], [], []>} : vector<2x128xf32>, vector<128x128xf32>, vector<2x128xf32> -> vector<2x128xf32>
    %c0_157 = arith.constant 0 : index
    %c0_158 = arith.constant 0 : index
    %242 = vector.load %arg8[%c0_157, %c0_158] : memref<1x128xf32, #tpu.memory_space<vmem>>, vector<1x128xf32>
    %243 = vector.broadcast %242 : vector<1x128xf32> to vector<2x128xf32>
    %244 = arith.addf %241, %243 : vector<2x128xf32>
    %cst_159 = arith.constant 0.000000e+00 : f32
    %245 = vector.broadcast %cst_159 : f32 to vector<2x128xf32>
    %246 = arith.maximumf %244, %245 : vector<2x128xf32>
    %c0_160 = arith.constant 0 : index
    %c0_161 = arith.constant 0 : index
    %247 = vector.load %arg9[%c0_160, %c0_161] : memref<128x128xf32, #tpu.memory_space<vmem>>, vector<128x128xf32>
    %cst_162 = arith.constant dense<0.000000e+00> : vector<2x128xf32>
    %248 = tpu.matmul %246, %247, %cst_162 {dimension_numbers = #tpu.dot_dimension_numbers<[1], [0], [0], [1], [0, 0, 1, 1], [], []>} : vector<2x128xf32>, vector<128x128xf32>, vector<2x128xf32> -> vector<2x128xf32>
    %c0_163 = arith.constant 0 : index
    %c0_164 = arith.constant 0 : index
    %249 = vector.load %arg10[%c0_163, %c0_164] : memref<1x128xf32, #tpu.memory_space<vmem>>, vector<1x128xf32>
    %250 = vector.broadcast %249 : vector<1x128xf32> to vector<2x128xf32>
    %251 = arith.addf %248, %250 : vector<2x128xf32>
    %cst_165 = arith.constant 0.000000e+00 : f32
    %252 = vector.broadcast %cst_165 : f32 to vector<2x128xf32>
    %253 = arith.maximumf %251, %252 : vector<2x128xf32>
    %c0_166 = arith.constant 0 : index
    %c0_167 = arith.constant 0 : index
    %254 = vector.load %arg11[%c0_166, %c0_167] : memref<2x128xf32, #tpu.memory_space<vmem>>, vector<2x128xf32>
    tpu.vector_store %arg11[%c0_166, %c0_167], %253 {strides = array<i32>} : memref<2x128xf32, #tpu.memory_space<vmem>>, vector<2x128xf32>,
    return
  }
}

</mosaic_0001>

<llo_original>
// kernel: inequality_model_forward.1
$region0: #{inequality_model_forward.1}
  #allocation0 [shape = 'u32[]', space=smem, size = 0x4, offset = 0x4, fixed_abs, tag = 'smem constant byte address 0x4 - core index']
  #allocation1 [shape = 'u32[144,128]{1,0:T(1,128)}', space=vmem, size = 0x12000, scoped, tag = 'internal scratch']
  %s0 = inlined_call_operand.vmem [shape: f32[1152,32], index: 0, kind: input, shape index: {}]
  %s1 = inlined_call_operand.vmem [shape: f32[32,128], index: 1, kind: input, shape index: {}]
  %s2 = inlined_call_operand.vmem [shape: f32[1,128], index: 2, kind: input, shape index: {}]
  %s3 = inlined_call_operand.vmem [shape: f32[25,8,128], index: 3, kind: input, shape index: {}]
  %s4 = inlined_call_operand.vmem [shape: f32[1,128], index: 4, kind: input, shape index: {}]
  %s5 = inlined_call_operand.vmem [shape: f32[16,16,128], index: 5, kind: input, shape index: {}]
  %s6 = inlined_call_operand.vmem [shape: f32[1,128], index: 6, kind: input, shape index: {}]
  %s7 = inlined_call_operand.vmem [shape: f32[128,128], index: 7, kind: input, shape index: {}]
  %s8 = inlined_call_operand.vmem [shape: f32[1,128], index: 8, kind: input, shape index: {}]
  %s9 = inlined_call_operand.vmem [shape: f32[128,128], index: 9, kind: input, shape index: {}]
  %s10 = inlined_call_operand.vmem [shape: f32[1,128], index: 10, kind: input, shape index: {}]
  %s11 = inlined_call_operand.hbm [shape: f32[2,128], index: 11, kind: output, shape index: {}]
  %s12 = sld [smem:[#allocation0]]
  $region54: #{inequality_model_forward.1} parent=0
    _
  %s14 = ssub.s32 1, %s12
  %s15 = scalar_select 0, %s14, %s12
  $region1: #{inequality_model_forward.1} parent=0
    #allocation2 [shape = 'u8[1024]{0}', space=vmem, size = 0x400, scoped, tag = 'output window, operand 0, single buffered']
    #allocation3 [shape = 's32[1]{0}', space=sflag, size = 0x4, scoped, tag = 'scoped memory for inequality_model_forward.1']
    %16 = vsyncpa [#allocation3], 0
    // Predicated region
    $region2: #{inequality_model_forward.1} parent=1 // pred_check
      _
    $region3: #{inequality_model_forward.1} parent=1 // pred_check_branch
      %18 = sbr.rel (0) target = $region5
    $region4: #{inequality_model_forward.1} parent=1 // pred_region
      _
    $region5: #{inequality_model_forward.1} parent=1 // pred_fallthru
      _
    // Predicated region
    $region6: #{inequality_model_forward.1} parent=1 // pred_check
      _
    $region7: #{inequality_model_forward.1} parent=1 // pred_check_branch
      %20 = sbr.rel (0) target = $region9
    $region8: #{inequality_model_forward.1} parent=1 // pred_region
      _
    $region9: #{inequality_model_forward.1} parent=1 // pred_fallthru
      _
    // Predicated region
    $region10: #{inequality_model_forward.1} parent=1 // pred_check
      _
    $region11: #{inequality_model_forward.1} parent=1 // pred_check_branch
      %22 = sbr.rel (0) target = $region13
    $region12: #{inequality_model_forward.1} parent=1 // pred_region
      _
    $region13: #{inequality_model_forward.1} parent=1 // pred_fallthru
      _
    // Predicated region
    $region14: #{inequality_model_forward.1} parent=1 // pred_check
      _
    $region15: #{inequality_model_forward.1} parent=1 // pred_check_branch
      %24 = sbr.rel (0) target = $region17
    $region16: #{inequality_model_forward.1} parent=1 // pred_region
      _
    $region17: #{inequality_model_forward.1} parent=1 // pred_fallthru
      _
    // Predicated region
    $region18: #{inequality_model_forward.1} parent=1 // pred_check
      _
    $region19: #{inequality_model_forward.1} parent=1 // pred_check_branch
      %26 = sbr.rel (0) target = $region21
    $region20: #{inequality_model_forward.1} parent=1 // pred_region
      _
    $region21: #{inequality_model_forward.1} parent=1 // pred_fallthru
      _
    // Predicated region
    $region22: #{inequality_model_forward.1} parent=1 // pred_check
      _
    $region23: #{inequality_model_forward.1} parent=1 // pred_check_branch
      %28 = sbr.rel (0) target = $region25
    $region24: #{inequality_model_forward.1} parent=1 // pred_region
      _
    $region25: #{inequality_model_forward.1} parent=1 // pred_fallthru
      _
    // Predicated region
    $region26: #{inequality_model_forward.1} parent=1 // pred_check
      _
    $region27: #{inequality_model_forward.1} parent=1 // pred_check_branch
      %30 = sbr.rel (0) target = $region29
    $region28: #{inequality_model_forward.1} parent=1 // pred_region
      _
    $region29: #{inequality_model_forward.1} parent=1 // pred_fallthru
      _
    // Predicated region
    $region30: #{inequality_model_forward.1} parent=1 // pred_check
      _
    $region31: #{inequality_model_forward.1} parent=1 // pred_check_branch
      %32 = sbr.rel (0) target = $region33
    $region32: #{inequality_model_forward.1} parent=1 // pred_region
      _
    $region33: #{inequality_model_forward.1} parent=1 // pred_fallthru
      _
    // Predicated region
    $region34: #{inequality_model_forward.1} parent=1 // pred_check
      _
    $region35: #{inequality_model_forward.1} parent=1 // pred_check_branch
      %34 = sbr.rel (0) target = $region37
    $region36: #{inequality_model_forward.1} parent=1 // pred_region
      _
    $region37: #{inequality_model_forward.1} parent=1 // pred_fallthru
      _
    // Predicated region
    $region38: #{inequality_model_forward.1} parent=1 // pred_check
      _
    $region39: #{inequality_model_forward.1} parent=1 // pred_check_branch
      %36 = sbr.rel (0) target = $region41
    $region40: #{inequality_model_forward.1} parent=1 // pred_region
      _
    $region41: #{inequality_model_forward.1} parent=1 // pred_fallthru
      _
    // Predicated region
    $region42: #{inequality_model_forward.1} parent=1 // pred_check
      _
    $region43: #{inequality_model_forward.1} parent=1 // pred_check_branch
      %38 = sbr.rel (0) target = $region45
    $region44: #{inequality_model_forward.1} parent=1 // pred_region
      _
    $region45: #{inequality_model_forward.1} parent=1 // pred_fallthru
      _
    %v39 = vld [vmem:[%s0] sm:$0xff]
    %v40 = vld [vmem:[%s0 + $0x8] sm:$0xff]
    %v41 = vld [vmem:[%s0 + $0x10] sm:$0xff]
    %v42 = vld [vmem:[%s0 + $0x18] sm:$0xff]
    %v43 = vld [vmem:[%s0 + $0x20] sm:$0xff]
    %v44 = vld [vmem:[%s0 + $0x28] sm:$0xff]
    %v45 = vld [vmem:[%s0 + $0x30] sm:$0xff]
    %v46 = vld [vmem:[%s0 + $0x38] sm:$0xff]
    %v47 = vld [vmem:[%s0 + $0x40] sm:$0xff]
    %v48 = vld [vmem:[%s0 + $0x48] sm:$0xff]
    %v49 = vld [vmem:[%s0 + $0x50] sm:$0xff]
    %v50 = vld [vmem:[%s0 + $0x58] sm:$0xff]
    %v51 = vld [vmem:[%s0 + $0x60] sm:$0xff]
    %v52 = vld [vmem:[%s0 + $0x68] sm:$0xff]
    %v53 = vld [vmem:[%s0 + $0x70] sm:$0xff]
    %v54 = vld [vmem:[%s0 + $0x78] sm:$0xff]
    %v55 = vld [vmem:[%s0 + $0x80] sm:$0xff]
    %v56 = vld [vmem:[%s0 + $0x88] sm:$0xff]
    %v57 = vld [vmem:[%s0 + $0x90] sm:$0xff]
    %v58 = vld [vmem:[%s0 + $0x98] sm:$0xff]
    %v59 = vld [vmem:[%s0 + $0xa0] sm:$0xff]
    %v60 = vld [vmem:[%s0 + $0xa8] sm:$0xff]
    %v61 = vld [vmem:[%s0 + $0xb0] sm:$0xff]
    %v62 = vld [vmem:[%s0 + $0xb8] sm:$0xff]
    %v63 = vld [vmem:[%s0 + $0xc0] sm:$0xff]
    %v64 = vld [vmem:[%s0 + $0xc8] sm:$0xff]
    %v65 = vld [vmem:[%s0 + $0xd0] sm:$0xff]
    %v66 = vld [vmem:[%s0 + $0xd8] sm:$0xff]
    %v67 = vld [vmem:[%s0 + $0xe0] sm:$0xff]
    %v68 = vld [vmem:[%s0 + $0xe8] sm:$0xff]
    %v69 = vld [vmem:[%s0 + $0xf0] sm:$0xff]
    %v70 = vld [vmem:[%s0 + $0xf8] sm:$0xff]
    %v71 = vld [vmem:[%s0 + $0x100] sm:$0xff]
    %v72 = vld [vmem:[%s0 + $0x108] sm:$0xff]
    %v73 = vld [vmem:[%s0 + $0x110] sm:$0xff]
    %v74 = vld [vmem:[%s0 + $0x118] sm:$0xff]
    %v75 = vld [vmem:[%s0 + $0x120] sm:$0xff]
    %v76 = vld [vmem:[%s0 + $0x128] sm:$0xff]
    %v77 = vld [vmem:[%s0 + $0x130] sm:$0xff]
    %v78 = vld [vmem:[%s0 + $0x138] sm:$0xff]
    %v79 = vld [vmem:[%s0 + $0x140] sm:$0xff]
    %v80 = vld [vmem:[%s0 + $0x148] sm:$0xff]
    %v81 = vld [vmem:[%s0 + $0x150] sm:$0xff]
    %v82 = vld [vmem:[%s0 + $0x158] sm:$0xff]
    %v83 = vld [vmem:[%s0 + $0x160] sm:$0xff]
    %v84 = vld [vmem:[%s0 + $0x168] sm:$0xff]
    %v85 = vld [vmem:[%s0 + $0x170] sm:$0xff]
    %v86 = vld [vmem:[%s0 + $0x178] sm:$0xff]
    %v87 = vld [vmem:[%s0 + $0x180] sm:$0xff]
    %v88 = vld [vmem:[%s0 + $0x188] sm:$0xff]
    %v89 = vld [vmem:[%s0 + $0x190] sm:$0xff]
    %v90 = vld [vmem:[%s0 + $0x198] sm:$0xff]
    %v91 = vld [vmem:[%s0 + $0x1a0] sm:$0xff]
    %v92 = vld [vmem:[%s0 + $0x1a8] sm:$0xff]
    %v93 = vld [vmem:[%s0 + $0x1b0] sm:$0xff]
    %v94 = vld [vmem:[%s0 + $0x1b8] sm:$0xff]
    %v95 = vld [vmem:[%s0 + $0x1c0] sm:$0xff]
    %v96 = vld [vmem:[%s0 + $0x1c8] sm:$0xff]
    %v97 = vld [vmem:[%s0 + $0x1d0] sm:$0xff]
    %v98 = vld [vmem:[%s0 + $0x1d8] sm:$0xff]
    %v99 = vld [vmem:[%s0 + $0x1e0] sm:$0xff]
    %v100 = vld [vmem:[%s0 + $0x1e8] sm:$0xff]
    %v101 = vld [vmem:[%s0 + $0x1f0] sm:$0xff]
    %v102 = vld [vmem:[%s0 + $0x1f8] sm:$0xff]
    %v103 = vld [vmem:[%s0 + $0x200] sm:$0xff]
    %v104 = vld [vmem:[%s0 + $0x208] sm:$0xff]
    %v105 = vld [vmem:[%s0 + $0x210] sm:$0xff]
    %v106 = vld [vmem:[%s0 + $0x218] sm:$0xff]
    %v107 = vld [vmem:[%s0 + $0x220] sm:$0xff]
    %v108 = vld [vmem:[%s0 + $0x228] sm:$0xff]
    %v109 = vld [vmem:[%s0 + $0x230] sm:$0xff]
    %v110 = vld [vmem:[%s0 + $0x238] sm:$0xff]
    %v111 = vld [vmem:[%s0 + $0x240] sm:$0xff]
    %v112 = vld [vmem:[%s0 + $0x248] sm:$0xff]
    %v113 = vld [vmem:[%s0 + $0x250] sm:$0xff]
    %v114 = vld [vmem:[%s0 + $0x258] sm:$0xff]
    %v115 = vld [vmem:[%s0 + $0x260] sm:$0xff]
    %v116 = vld [vmem:[%s0 + $0x268] sm:$0xff]
    %v117 = vld [vmem:[%s0 + $0x270] sm:$0xff]
    %v118 = vld [vmem:[%s0 + $0x278] sm:$0xff]
    %v119 = vld [vmem:[%s0 + $0x280] sm:$0xff]
    %v120 = vld [vmem:[%s0 + $0x288] sm:$0xff]
    %v121 = vld [vmem:[%s0 + $0x290] sm:$0xff]
    %v122 = vld [vmem:[%s0 + $0x298] sm:$0xff]
    %v123 = vld [vmem:[%s0 + $0x2a0] sm:$0xff]
    %v124 = vld [vmem:[%s0 + $0x2a8] sm:$0xff]
    %v125 = vld [vmem:[%s0 + $0x2b0] sm:$0xff]
    %v126 = vld [vmem:[%s0 + $0x2b8] sm:$0xff]
    %v127 = vld [vmem:[%s0 + $0x2c0] sm:$0xff]
    %v128 = vld [vmem:[%s0 + $0x2c8] sm:$0xff]
    %v129 = vld [vmem:[%s0 + $0x2d0] sm:$0xff]
    %v130 = vld [vmem:[%s0 + $0x2d8] sm:$0xff]
    %v131 = vld [vmem:[%s0 + $0x2e0] sm:$0xff]
    %v132 = vld [vmem:[%s0 + $0x2e8] sm:$0xff]
    %v133 = vld [vmem:[%s0 + $0x2f0] sm:$0xff]
    %v134 = vld [vmem:[%s0 + $0x2f8] sm:$0xff]
    %v135 = vld [vmem:[%s0 + $0x300] sm:$0xff]
    %v136 = vld [vmem:[%s0 + $0x308] sm:$0xff]
    %v137 = vld [vmem:[%s0 + $0x310] sm:$0xff]
    %v138 = vld [vmem:[%s0 + $0x318] sm:$0xff]
    %v139 = vld [vmem:[%s0 + $0x320] sm:$0xff]
    %v140 = vld [vmem:[%s0 + $0x328] sm:$0xff]
    %v141 = vld [vmem:[%s0 + $0x330] sm:$0xff]
    %v142 = vld [vmem:[%s0 + $0x338] sm:$0xff]
    %v143 = vld [vmem:[%s0 + $0x340] sm:$0xff]
    %v144 = vld [vmem:[%s0 + $0x348] sm:$0xff]
    %v145 = vld [vmem:[%s0 + $0x350] sm:$0xff]
    %v146 = vld [vmem:[%s0 + $0x358] sm:$0xff]
    %v147 = vld [vmem:[%s0 + $0x360] sm:$0xff]
    %v148 = vld [vmem:[%s0 + $0x368] sm:$0xff]
    %v149 = vld [vmem:[%s0 + $0x370] sm:$0xff]
    %v150 = vld [vmem:[%s0 + $0x378] sm:$0xff]
    %v151 = vld [vmem:[%s0 + $0x380] sm:$0xff]
    %v152 = vld [vmem:[%s0 + $0x388] sm:$0xff]
    %v153 = vld [vmem:[%s0 + $0x390] sm:$0xff]
    %v154 = vld [vmem:[%s0 + $0x398] sm:$0xff]
    %v155 = vld [vmem:[%s0 + $0x3a0] sm:$0xff]
    %v156 = vld [vmem:[%s0 + $0x3a8] sm:$0xff]
    %v157 = vld [vmem:[%s0 + $0x3b0] sm:$0xff]
    %v158 = vld [vmem:[%s0 + $0x3b8] sm:$0xff]
    %v159 = vld [vmem:[%s0 + $0x3c0] sm:$0xff]
    %v160 = vld [vmem:[%s0 + $0x3c8] sm:$0xff]
    %v161 = vld [vmem:[%s0 + $0x3d0] sm:$0xff]
    %v162 = vld [vmem:[%s0 + $0x3d8] sm:$0xff]
    %v163 = vld [vmem:[%s0 + $0x3e0] sm:$0xff]
    %v164 = vld [vmem:[%s0 + $0x3e8] sm:$0xff]
    %v165 = vld [vmem:[%s0 + $0x3f0] sm:$0xff]
    %v166 = vld [vmem:[%s0 + $0x3f8] sm:$0xff]
    %v167 = vld [vmem:[%s0 + $0x400] sm:$0xff]
    %v168 = vld [vmem:[%s0 + $0x408] sm:$0xff]
    %v169 = vld [vmem:[%s0 + $0x410] sm:$0xff]
    %v170 = vld [vmem:[%s0 + $0x418] sm:$0xff]
    %v171 = vld [vmem:[%s0 + $0x420] sm:$0xff]
    %v172 = vld [vmem:[%s0 + $0x428] sm:$0xff]
    %v173 = vld [vmem:[%s0 + $0x430] sm:$0xff]
    %v174 = vld [vmem:[%s0 + $0x438] sm:$0xff]
    %v175 = vld [vmem:[%s0 + $0x440] sm:$0xff]
    %v176 = vld [vmem:[%s0 + $0x448] sm:$0xff]
    %v177 = vld [vmem:[%s0 + $0x450] sm:$0xff]
    %v178 = vld [vmem:[%s0 + $0x458] sm:$0xff]
    %v179 = vld [vmem:[%s0 + $0x460] sm:$0xff]
    %v180 = vld [vmem:[%s0 + $0x468] sm:$0xff]
    %v181 = vld [vmem:[%s0 + $0x470] sm:$0xff]
    %v182 = vld [vmem:[%s0 + $0x478] sm:$0xff]
    %v183 = vld [vmem:[%s1] sm:$0xff]
    %v184 = vld [vmem:[%s1 + $0x8] sm:$0xff]
    %v185 = vld [vmem:[%s1 + $0x10] sm:$0xff]
    %v186 = vld [vmem:[%s1 + $0x18] sm:$0xff]
    %v187 = vld [vmem:[%s2] sm:$0x1]
    %v189 = vlaneseq
    %v190 = vshrl.u32 %v189, 7
    %v191 = vsub.s32 0, %v190
    %v192 = vrot.slane %v187, %v191
    %vm194 = vcmask 261120
    %v196 = vsel %vm194, %v39, 0
    %v199 = vsel %vm194, %v40, 0
    %v202 = vsel %vm194, %v41, 0
    %v205 = vsel %vm194, %v42, 0
    %v208 = vsel %vm194, %v43, 0
    %v211 = vsel %vm194, %v44, 0
    %v214 = vsel %vm194, %v45, 0
    %v217 = vsel %vm194, %v46, 0
    %v220 = vsel %vm194, %v47, 0
    %v223 = vsel %vm194, %v48, 0
    %v226 = vsel %vm194, %v49, 0
    %v229 = vsel %vm194, %v50, 0
    %v232 = vsel %vm194, %v51, 0
    %v235 = vsel %vm194, %v52, 0
    %v238 = vsel %vm194, %v53, 0
    %v241 = vsel %vm194, %v54, 0
    %v244 = vsel %vm194, %v55, 0
    %v247 = vsel %vm194, %v56, 0
    %v250 = vsel %vm194, %v57, 0
    %v253 = vsel %vm194, %v58, 0
    %v256 = vsel %vm194, %v59, 0
    %v259 = vsel %vm194, %v60, 0
    %v262 = vsel %vm194, %v61, 0
    %v265 = vsel %vm194, %v62, 0
    %v268 = vsel %vm194, %v63, 0
    %v271 = vsel %vm194, %v64, 0
    %v274 = vsel %vm194, %v65, 0
    %v277 = vsel %vm194, %v66, 0
    %v280 = vsel %vm194, %v67, 0
    %v283 = vsel %vm194, %v68, 0
    %v286 = vsel %vm194, %v69, 0
    %v289 = vsel %vm194, %v70, 0
    %v292 = vsel %vm194, %v71, 0
    %v295 = vsel %vm194, %v72, 0
    %v298 = vsel %vm194, %v73, 0
    %v301 = vsel %vm194, %v74, 0
    %v304 = vsel %vm194, %v75, 0
    %v307 = vsel %vm194, %v76, 0
    %v310 = vsel %vm194, %v77, 0
    %v313 = vsel %vm194, %v78, 0
    %v316 = vsel %vm194, %v79, 0
    %v319 = vsel %vm194, %v80, 0
    %v322 = vsel %vm194, %v81, 0
    %v325 = vsel %vm194, %v82, 0
    %v328 = vsel %vm194, %v83, 0
    %v331 = vsel %vm194, %v84, 0
    %v334 = vsel %vm194, %v85, 0
    %v337 = vsel %vm194, %v86, 0
    %v340 = vsel %vm194, %v87, 0
    %v343 = vsel %vm194, %v88, 0
    %v346 = vsel %vm194, %v89, 0
    %v349 = vsel %vm194, %v90, 0
    %v352 = vsel %vm194, %v91, 0
    %v355 = vsel %vm194, %v92, 0
    %v358 = vsel %vm194, %v93, 0
    %v361 = vsel %vm194, %v94, 0
    %v364 = vsel %vm194, %v95, 0
    %v367 = vsel %vm194, %v96, 0
    %v370 = vsel %vm194, %v97, 0
    %v373 = vsel %vm194, %v98, 0
    %v376 = vsel %vm194, %v99, 0
    %v379 = vsel %vm194, %v100, 0
    %v382 = vsel %vm194, %v101, 0
    %v385 = vsel %vm194, %v102, 0
    %v388 = vsel %vm194, %v103, 0
    %v391 = vsel %vm194, %v104, 0
    %v394 = vsel %vm194, %v105, 0
    %v397 = vsel %vm194, %v106, 0
    %v400 = vsel %vm194, %v107, 0
    %v403 = vsel %vm194, %v108, 0
    %v406 = vsel %vm194, %v109, 0
    %v409 = vsel %vm194, %v110, 0
    %v412 = vsel %vm194, %v111, 0
    %v415 = vsel %vm194, %v112, 0
    %v418 = vsel %vm194, %v113, 0
    %v421 = vsel %vm194, %v114, 0
    %v424 = vsel %vm194, %v115, 0
    %v427 = vsel %vm194, %v116, 0
    %v430 = vsel %vm194, %v117, 0
    %v433 = vsel %vm194, %v118, 0
    %v436 = vsel %vm194, %v119, 0
    %v439 = vsel %vm194, %v120, 0
    %v442 = vsel %vm194, %v121, 0
    %v445 = vsel %vm194, %v122, 0
    %v448 = vsel %vm194, %v123, 0
    %v451 = vsel %vm194, %v124, 0
    %v454 = vsel %vm194, %v125, 0
    %v457 = vsel %vm194, %v126, 0
    %v460 = vsel %vm194, %v127, 0
    %v463 = vsel %vm194, %v128, 0
    %v466 = vsel %vm194, %v129, 0
    %v469 = vsel %vm194, %v130, 0
    %v472 = vsel %vm194, %v131, 0
    %v475 = vsel %vm194, %v132, 0
    %v478 = vsel %vm194, %v133, 0
    %v481 = vsel %vm194, %v134, 0
    %v484 = vsel %vm194, %v135, 0
    %v487 = vsel %vm194, %v136, 0
    %v490 = vsel %vm194, %v137, 0
    %v493 = vsel %vm194, %v138, 0
    %v496 = vsel %vm194, %v139, 0
    %v499 = vsel %vm194, %v140, 0
    %v502 = vsel %vm194, %v141, 0
    %v505 = vsel %vm194, %v142, 0
    %v508 = vsel %vm194, %v143, 0
    %v511 = vsel %vm194, %v144, 0
    %v514 = vsel %vm194, %v145, 0
    %v517 = vsel %vm194, %v146, 0
    %v520 = vsel %vm194, %v147, 0
    %v523 = vsel %vm194, %v148, 0
    %v526 = vsel %vm194, %v149, 0
    %v529 = vsel %vm194, %v150, 0
    %v532 = vsel %vm194, %v151, 0
    %v535 = vsel %vm194, %v152, 0
    %v538 = vsel %vm194, %v153, 0
    %v541 = vsel %vm194, %v154, 0
    %v544 = vsel %vm194, %v155, 0
    %v547 = vsel %vm194, %v156, 0
    %v550 = vsel %vm194, %v157, 0
    %v553 = vsel %vm194, %v158, 0
    %v556 = vsel %vm194, %v159, 0
    %v559 = vsel %vm194, %v160, 0
    %v562 = vsel %vm194, %v161, 0
    %v565 = vsel %vm194, %v162, 0
    %v568 = vsel %vm194, %v163, 0
    %v571 = vsel %vm194, %v164, 0
    %v574 = vsel %vm194, %v165, 0
    %v577 = vsel %vm194, %v166, 0
    %v580 = vsel %vm194, %v167, 0
    %v583 = vsel %vm194, %v168, 0
    %v586 = vsel %vm194, %v169, 0
    %v589 = vsel %vm194, %v170, 0
    %v592 = vsel %vm194, %v171, 0
    %v595 = vsel %vm194, %v172, 0
    %v598 = vsel %vm194, %v173, 0
    %v601 = vsel %vm194, %v174, 0
    %v604 = vsel %vm194, %v175, 0
    %v607 = vsel %vm194, %v176, 0
    %v610 = vsel %vm194, %v177, 0
    %v613 = vsel %vm194, %v178, 0
    %v616 = vsel %vm194, %v179, 0
    %v619 = vsel %vm194, %v180, 0
    %v622 = vsel %vm194, %v181, 0
    %v625 = vsel %vm194, %v182, 0
    %627 = vmatprep.subr.mxu0 0.0
    %628 = vmatpush1.msra.mxu0 %v183
    %629 = vmatprep.subr.mxu0 0.0
    %630 = vmatpush1.msra.mxu0 %v184
    %631 = vmatprep.subr.mxu0 0.0
    %632 = vmatpush1.msra.mxu0 %v185
    %633 = vmatprep.subr.mxu0 0.0
    %634 = vmatpush1.msra.mxu0 %v186
    %635 = vmatprep.subr.mxu0 0.0
    %636 = vmatpush1.msra.mxu0 0.0
    %637 = vmatprep.subr.mxu0 0.0
    %638 = vmatpush1.msra.mxu0 0.0
    %639 = vmatprep.subr.mxu0 0.0
    %640 = vmatpush1.msra.mxu0 0.0
    %641 = vmatprep.subr.mxu0 0.0
    %642 = vmatpush1.msra.mxu0 0.0
    %643 = vmatprep.subr.mxu0 0.0
    %644 = vmatpush1.msra.mxu0 0.0
    %645 = vmatprep.subr.mxu0 0.0
    %646 = vmatpush1.msra.mxu0 0.0
    %647 = vmatprep.subr.mxu0 0.0
    %648 = vmatpush1.msra.mxu0 0.0
    %649 = vmatprep.subr.mxu0 0.0
    %650 = vmatpush1.msra.mxu0 0.0
    %651 = vmatprep.subr.mxu0 0.0
    %652 = vmatpush1.msra.mxu0 0.0
    %653 = vmatprep.subr.mxu0 0.0
    %654 = vmatpush1.msra.mxu0 0.0
    %655 = vmatprep.subr.mxu0 0.0
    %656 = vmatpush1.msra.mxu0 0.0
    %657 = vmatprep.subr.mxu0 0.0
    %658 = vmatpush1.msra.mxu0 0.0
    %659 = vmatprep.subr.mxu0 0.0
    %660 = vmatpush1.msra.mxu0 0.0
    %661 = vmatprep.subr.mxu0 0.0
    %662 = vmatpush1.msra.mxu0 0.0
    %663 = vmatprep.subr.mxu0 0.0
    %664 = vmatpush1.msra.mxu0 0.0
    %665 = vmatprep.subr.mxu0 0.0
    %666 = vmatpush1.msra.mxu0 0.0
    %667 = vmatprep.subr.mxu0 0.0
    %668 = vmatpush1.msra.mxu0 0.0
    %669 = vmatprep.subr.mxu0 0.0
    %670 = vmatpush1.msra.mxu0 0.0
    %671 = vmatprep.subr.mxu0 0.0
    %672 = vmatpush1.msra.mxu0 0.0
    %673 = vmatprep.subr.mxu0 0.0
    %674 = vmatpush1.msra.mxu0 0.0
    %675 = vmatprep.subr.mxu0 0.0
    %676 = vmatpush1.msra.mxu0 0.0
    %677 = vmatprep.subr.mxu0 0.0
    %678 = vmatpush1.msra.mxu0 0.0
    %679 = vmatprep.subr.mxu0 0.0
    %680 = vmatpush1.msra.mxu0 0.0
    %681 = vmatprep.subr.mxu0 0.0
    %682 = vmatpush1.msra.mxu0 0.0
    %683 = vmatprep.subr.mxu0 0.0
    %684 = vmatpush1.msra.mxu0 0.0
    %685 = vmatprep.subr.mxu0 0.0
    %686 = vmatpush1.msra.mxu0 0.0
    %687 = vmatprep.subr.mxu0 0.0
    %688 = vmatpush1.msra.mxu0 0.0
    %689 = vmatprep.subr.mxu0 0.0
    %690 = vmatpush1.msra.mxu0 0.0
    %691 = vmatprep.mubr.f32.mxu0 0.0
    %692 = vmatmul.mubr.f32.gmra.mrb[0].mxu0 %v196
    %v693 = vpop.f32.mrb[0].mxu0
    %v694 = vadd.f32 %v192, %v693
    %v695 = vpop.f32.mrb[0].mxu0
    %696 = vmatprep.mubr.f32.mxu0 0.0
    %697 = vmatmul.mubr.f32.gmra.mrb[0].mxu0 %v199
    %v698 = vpop.f32.mrb[0].mxu0
    %v699 = vadd.f32 %v192, %v698
    %v700 = vpop.f32.mrb[0].mxu0
    %701 = vmatprep.mubr.f32.mxu0 0.0
    %702 = vmatmul.mubr.f32.gmra.mrb[0].mxu0 %v202
    %v703 = vpop.f32.mrb[0].mxu0
    %v704 = vadd.f32 %v192, %v703
    %v705 = vpop.f32.mrb[0].mxu0
    %706 = vmatprep.mubr.f32.mxu0 0.0
    %707 = vmatmul.mubr.f32.gmra.mrb[0].mxu0 %v205
    %v708 = vpop.f32.mrb[0].mxu0
    %v709 = vadd.f32 %v192, %v708
    %v710 = vpop.f32.mrb[0].mxu0
    %711 = vmatprep.mubr.f32.mxu0 0.0
    %712 = vmatmul.mubr.f32.gmra.mrb[0].mxu0 %v208
    %v713 = vpop.f32.mrb[0].mxu0
    %v714 = vadd.f32 %v192, %v713
    %v715 = vpop.f32.mrb[0].mxu0
    %716 = vmatprep.mubr.f32.mxu0 0.0
    %717 = vmatmul.mubr.f32.gmra.mrb[0].mxu0 %v211
    %v718 = vpop.f32.mrb[0].mxu0
    %v719 = vadd.f32 %v192, %v718
    %v720 = vpop.f32.mrb[0].mxu0
    %721 = vmatprep.mubr.f32.mxu0 0.0
    %722 = vmatmul.mubr.f32.gmra.mrb[0].mxu0 %v214
    %v723 = vpop.f32.mrb[0].mxu0
    %v724 = vadd.f32 %v192, %v723
    %v725 = vpop.f32.mrb[0].mxu0
    %726 = vmatprep.mubr.f32.mxu0 0.0
    %727 = vmatmul.mubr.f32.gmra.mrb[0].mxu0 %v217
    %v728 = vpop.f32.mrb[0].mxu0
    %v729 = vadd.f32 %v192, %v728
    %v730 = vpop.f32.mrb[0].mxu0
    %731 = vmatprep.mubr.f32.mxu0 0.0
    %732 = vmatmul.mubr.f32.gmra.mrb[0].mxu0 %v220
    %v733 = vpop.f32.mrb[0].mxu0
    %v734 = vadd.f32 %v192, %v733
    %v735 = vpop.f32.mrb[0].mxu0
    %736 = vmatprep.mubr.f32.mxu0 0.0
    %737 = vmatmul.mubr.f32.gmra.mrb[0].mxu0 %v223
    %v738 = vpop.f32.mrb[0].mxu0
    %v739 = vadd.f32 %v192, %v738
    %v740 = vpop.f32.mrb[0].mxu0
    %741 = vmatprep.mubr.f32.mxu0 0.0
    %742 = vmatmul.mubr.f32.gmra.mrb[0].mxu0 %v226
    %v743 = vpop.f32.mrb[0].mxu0
    %v744 = vadd.f32 %v192, %v743
    %v745 = vpop.f32.mrb[0].mxu0
    %746 = vmatprep.mubr.f32.mxu0 0.0
    %747 = vmatmul.mubr.f32.gmra.mrb[0].mxu0 %v229
    %v748 = vpop.f32.mrb[0].mxu0
    %v749 = vadd.f32 %v192, %v748
    %v750 = vpop.f32.mrb[0].mxu0
    %751 = vmatprep.mubr.f32.mxu0 0.0
    %752 = vmatmul.mubr.f32.gmra.mrb[0].mxu0 %v232
    %v753 = vpop.f32.mrb[0].mxu0
    %v754 = vadd.f32 %v192, %v753
    %v755 = vpop.f32.mrb[0].mxu0
    %756 = vmatprep.mubr.f32.mxu0 0.0
    %757 = vmatmul.mubr.f32.gmra.mrb[0].mxu0 %v235
    %v758 = vpop.f32.mrb[0].mxu0
    %v759 = vadd.f32 %v192, %v758
    %v760 = vpop.f32.mrb[0].mxu0
    %761 = vmatprep.mubr.f32.mxu0 0.0
    %762 = vmatmul.mubr.f32.gmra.mrb[0].mxu0 %v238
    %v763 = vpop.f32.mrb[0].mxu0
    %v764 = vadd.f32 %v192, %v763
    %v765 = vpop.f32.mrb[0].mxu0
    %766 = vmatprep.mubr.f32.mxu0 0.0
    %767 = vmatmul.mubr.f32.gmra.mrb[0].mxu0 %v241
    %v768 = vpop.f32.mrb[0].mxu0
    %v769 = vadd.f32 %v192, %v768
    %v770 = vpop.f32.mrb[0].mxu0
    %771 = vmatprep.mubr.f32.mxu0 0.0
    %772 = vmatmul.mubr.f32.gmra.mrb[0].mxu0 %v244
    %v773 = vpop.f32.mrb[0].mxu0
    %v774 = vadd.f32 %v192, %v773
    %v775 = vpop.f32.mrb[0].mxu0
    %776 = vmatprep.mubr.f32.mxu0 0.0
    %777 = vmatmul.mubr.f32.gmra.mrb[0].mxu0 %v247
    %v778 = vpop.f32.mrb[0].mxu0
    %v779 = vadd.f32 %v192, %v778
    %v780 = vpop.f32.mrb[0].mxu0
    %781 = vmatprep.mubr.f32.mxu0 0.0
    %782 = vmatmul.mubr.f32.gmra.mrb[0].mxu0 %v250
    %v783 = vpop.f32.mrb[0].mxu0
    %v784 = vadd.f32 %v192, %v783
    %v785 = vpop.f32.mrb[0].mxu0
    %786 = vmatprep.mubr.f32.mxu0 0.0
    %787 = vmatmul.mubr.f32.gmra.mrb[0].mxu0 %v253
    %v788 = vpop.f32.mrb[0].mxu0
    %v789 = vadd.f32 %v192, %v788
    %v790 = vpop.f32.mrb[0].mxu0
    %791 = vmatprep.mubr.f32.mxu0 0.0
    %792 = vmatmul.mubr.f32.gmra.mrb[0].mxu0 %v256
    %v793 = vpop.f32.mrb[0].mxu0
    %v794 = vadd.f32 %v192, %v793
    %v795 = vpop.f32.mrb[0].mxu0
    %796 = vmatprep.mubr.f32.mxu0 0.0
    %797 = vmatmul.mubr.f32.gmra.mrb[0].mxu0 %v259
    %v798 = vpop.f32.mrb[0].mxu0
    %v799 = vadd.f32 %v192, %v798
    %v800 = vpop.f32.mrb[0].mxu0
    %801 = vmatprep.mubr.f32.mxu0 0.0
    %802 = vmatmul.mubr.f32.gmra.mrb[0].mxu0 %v262
    %v803 = vpop.f32.mrb[0].mxu0
    %v804 = vadd.f32 %v192, %v803
    %v805 = vpop.f32.mrb[0].mxu0
    %806 = vmatprep.mubr.f32.mxu0 0.0
    %807 = vmatmul.mubr.f32.gmra.mrb[0].mxu0 %v265
    %v808 = vpop.f32.mrb[0].mxu0
    %v809 = vadd.f32 %v192, %v808
    %v810 = vpop.f32.mrb[0].mxu0
    %811 = vmatprep.mubr.f32.mxu0 0.0
    %812 = vmatmul.mubr.f32.gmra.mrb[0].mxu0 %v268
    %v813 = vpop.f32.mrb[0].mxu0
    %v814 = vadd.f32 %v192, %v813
    %v815 = vpop.f32.mrb[0].mxu0
    %816 = vmatprep.mubr.f32.mxu0 0.0
    %817 = vmatmul.mubr.f32.gmra.mrb[0].mxu0 %v271
    %v818 = vpop.f32.mrb[0].mxu0
    %v819 = vadd.f32 %v192, %v818
    %v820 = vpop.f32.mrb[0].mxu0
    %821 = vmatprep.mubr.f32.mxu0 0.0
    %822 = vmatmul.mubr.f32.gmra.mrb[0].mxu0 %v274
    %v823 = vpop.f32.mrb[0].mxu0
    %v824 = vadd.f32 %v192, %v823
    %v825 = vpop.f32.mrb[0].mxu0
    %826 = vmatprep.mubr.f32.mxu0 0.0
    %827 = vmatmul.mubr.f32.gmra.mrb[0].mxu0 %v277
    %v828 = vpop.f32.mrb[0].mxu0
    %v829 = vadd.f32 %v192, %v828
    %v830 = vpop.f32.mrb[0].mxu0
    %831 = vmatprep.mubr.f32.mxu0 0.0
    %832 = vmatmul.mubr.f32.gmra.mrb[0].mxu0 %v280
    %v833 = vpop.f32.mrb[0].mxu0
    %v834 = vadd.f32 %v192, %v833
    %v835 = vpop.f32.mrb[0].mxu0
    %836 = vmatprep.mubr.f32.mxu0 0.0
    %837 = vmatmul.mubr.f32.gmra.mrb[0].mxu0 %v283
    %v838 = vpop.f32.mrb[0].mxu0
    %v839 = vadd.f32 %v192, %v838
    %v840 = vpop.f32.mrb[0].mxu0
    %841 = vmatprep.mubr.f32.mxu0 0.0
    %842 = vmatmul.mubr.f32.gmra.mrb[0].mxu0 %v286
    %v843 = vpop.f32.mrb[0].mxu0
    %v844 = vadd.f32 %v192, %v843
    %v845 = vpop.f32.mrb[0].mxu0
    %846 = vmatprep.mubr.f32.mxu0 0.0
    %847 = vmatmul.mubr.f32.gmra.mrb[0].mxu0 %v289
    %v848 = vpop.f32.mrb[0].mxu0
    %v849 = vadd.f32 %v192, %v848
    %v850 = vpop.f32.mrb[0].mxu0
    %851 = vmatprep.mubr.f32.mxu0 0.0
    %852 = vmatmul.mubr.f32.gmra.mrb[0].mxu0 %v292
    %v853 = vpop.f32.mrb[0].mxu0
    %v854 = vadd.f32 %v192, %v853
    %v855 = vpop.f32.mrb[0].mxu0
    %856 = vmatprep.mubr.f32.mxu0 0.0
    %857 = vmatmul.mubr.f32.gmra.mrb[0].mxu0 %v295
    %v858 = vpop.f32.mrb[0].mxu0
    %v859 = vadd.f32 %v192, %v858
    %v860 = vpop.f32.mrb[0].mxu0
    %861 = vmatprep.mubr.f32.mxu0 0.0
    %862 = vmatmul.mubr.f32.gmra.mrb[0].mxu0 %v298
    %v863 = vpop.f32.mrb[0].mxu0
    %v864 = vadd.f32 %v192, %v863
    %v865 = vpop.f32.mrb[0].mxu0
    %866 = vmatprep.mubr.f32.mxu0 0.0
    %867 = vmatmul.mubr.f32.gmra.mrb[0].mxu0 %v301
    %v868 = vpop.f32.mrb[0].mxu0
    %v869 = vadd.f32 %v192, %v868
    %v870 = vpop.f32.mrb[0].mxu0
    %871 = vmatprep.mubr.f32.mxu0 0.0
    %872 = vmatmul.mubr.f32.gmra.mrb[0].mxu0 %v304
    %v873 = vpop.f32.mrb[0].mxu0
    %v874 = vadd.f32 %v192, %v873
    %v875 = vpop.f32.mrb[0].mxu0
    %876 = vmatprep.mubr.f32.mxu0 0.0
    %877 = vmatmul.mubr.f32.gmra.mrb[0].mxu0 %v307
    %v878 = vpop.f32.mrb[0].mxu0
    %v879 = vadd.f32 %v192, %v878
    %v880 = vpop.f32.mrb[0].mxu0
    %881 = vmatprep.mubr.f32.mxu0 0.0
    %882 = vmatmul.mubr.f32.gmra.mrb[0].mxu0 %v310
    %v883 = vpop.f32.mrb[0].mxu0
    %v884 = vadd.f32 %v192, %v883
    %v885 = vpop.f32.mrb[0].mxu0
    %886 = vmatprep.mubr.f32.mxu0 0.0
    %887 = vmatmul.mubr.f32.gmra.mrb[0].mxu0 %v313
    %v888 = vpop.f32.mrb[0].mxu0
    %v889 = vadd.f32 %v192, %v888
    %v890 = vpop.f32.mrb[0].mxu0
    %891 = vmatprep.mubr.f32.mxu0 0.0
    %892 = vmatmul.mubr.f32.gmra.mrb[0].mxu0 %v316
    %v893 = vpop.f32.mrb[0].mxu0
    %v894 = vadd.f32 %v192, %v893
    %v895 = vpop.f32.mrb[0].mxu0
    %896 = vmatprep.mubr.f32.mxu0 0.0
    %897 = vmatmul.mubr.f32.gmra.mrb[0].mxu0 %v319
    %v898 = vpop.f32.mrb[0].mxu0
    %v899 = vadd.f32 %v192, %v898
    %v900 = vpop.f32.mrb[0].mxu0
    %901 = vmatprep.mubr.f32.mxu0 0.0
    %902 = vmatmul.mubr.f32.gmra.mrb[0].mxu0 %v322
    %v903 = vpop.f32.mrb[0].mxu0
    %v904 = vadd.f32 %v192, %v903
    %v905 = vpop.f32.mrb[0].mxu0
    %906 = vmatprep.mubr.f32.mxu0 0.0
    %907 = vmatmul.mubr.f32.gmra.mrb[0].mxu0 %v325
    %v908 = vpop.f32.mrb[0].mxu0
    %v909 = vadd.f32 %v192, %v908
    %v910 = vpop.f32.mrb[0].mxu0
    %911 = vmatprep.mubr.f32.mxu0 0.0
    %912 = vmatmul.mubr.f32.gmra.mrb[0].mxu0 %v328
    %v913 = vpop.f32.mrb[0].mxu0
    %v914 = vadd.f32 %v192, %v913
    %v915 = vpop.f32.mrb[0].mxu0
    %916 = vmatprep.mubr.f32.mxu0 0.0
    %917 = vmatmul.mubr.f32.gmra.mrb[0].mxu0 %v331
    %v918 = vpop.f32.mrb[0].mxu0
    %v919 = vadd.f32 %v192, %v918
    %v920 = vpop.f32.mrb[0].mxu0
    %921 = vmatprep.mubr.f32.mxu0 0.0
    %922 = vmatmul.mubr.f32.gmra.mrb[0].mxu0 %v334
    %v923 = vpop.f32.mrb[0].mxu0
    %v924 = vadd.f32 %v192, %v923
    %v925 = vpop.f32.mrb[0].mxu0
    %926 = vmatprep.mubr.f32.mxu0 0.0
    %927 = vmatmul.mubr.f32.gmra.mrb[0].mxu0 %v337
    %v928 = vpop.f32.mrb[0].mxu0
    %v929 = vadd.f32 %v192, %v928
    %v930 = vpop.f32.mrb[0].mxu0
    %931 = vmatprep.mubr.f32.mxu0 0.0
    %932 = vmatmul.mubr.f32.gmra.mrb[0].mxu0 %v340
    %v933 = vpop.f32.mrb[0].mxu0
    %v934 = vadd.f32 %v192, %v933
    %v935 = vpop.f32.mrb[0].mxu0
    %936 = vmatprep.mubr.f32.mxu0 0.0
    %937 = vmatmul.mubr.f32.gmra.mrb[0].mxu0 %v343
    %v938 = vpop.f32.mrb[0].mxu0
    %v939 = vadd.f32 %v192, %v938
    %v940 = vpop.f32.mrb[0].mxu0
    %941 = vmatprep.mubr.f32.mxu0 0.0
    %942 = vmatmul.mubr.f32.gmra.mrb[0].mxu0 %v346
    %v943 = vpop.f32.mrb[0].mxu0
    %v944 = vadd.f32 %v192, %v943
    %v945 = vpop.f32.mrb[0].mxu0
    %946 = vmatprep.mubr.f32.mxu0 0.0
    %947 = vmatmul.mubr.f32.gmra.mrb[0].mxu0 %v349
    %v948 = vpop.f32.mrb[0].mxu0
    %v949 = vadd.f32 %v192, %v948
    %v950 = vpop.f32.mrb[0].mxu0
    %951 = vmatprep.mubr.f32.mxu0 0.0
    %952 = vmatmul.mubr.f32.gmra.mrb[0].mxu0 %v352
    %v953 = vpop.f32.mrb[0].mxu0
    %v954 = vadd.f32 %v192, %v953
    %v955 = vpop.f32.mrb[0].mxu0
    %956 = vmatprep.mubr.f32.mxu0 0.0
    %957 = vmatmul.mubr.f32.gmra.mrb[0].mxu0 %v355
    %v958 = vpop.f32.mrb[0].mxu0
    %v959 = vadd.f32 %v192, %v958
    %v960 = vpop.f32.mrb[0].mxu0
    %961 = vmatprep.mubr.f32.mxu0 0.0
    %962 = vmatmul.mubr.f32.gmra.mrb[0].mxu0 %v358
    %v963 = vpop.f32.mrb[0].mxu0
    %v964 = vadd.f32 %v192, %v963
    %v965 = vpop.f32.mrb[0].mxu0
    %966 = vmatprep.mubr.f32.mxu0 0.0
    %967 = vmatmul.mubr.f32.gmra.mrb[0].mxu0 %v361
    %v968 = vpop.f32.mrb[0].mxu0
    %v969 = vadd.f32 %v192, %v968
    %v970 = vpop.f32.mrb[0].mxu0
    %971 = vmatprep.mubr.f32.mxu0 0.0
    %972 = vmatmul.mubr.f32.gmra.mrb[0].mxu0 %v364
    %v973 = vpop.f32.mrb[0].mxu0
    %v974 = vadd.f32 %v192, %v973
    %v975 = vpop.f32.mrb[0].mxu0
    %976 = vmatprep.mubr.f32.mxu0 0.0
    %977 = vmatmul.mubr.f32.gmra.mrb[0].mxu0 %v367
    %v978 = vpop.f32.mrb[0].mxu0
    %v979 = vadd.f32 %v192, %v978
    %v980 = vpop.f32.mrb[0].mxu0
    %981 = vmatprep.mubr.f32.mxu0 0.0
    %982 = vmatmul.mubr.f32.gmra.mrb[0].mxu0 %v370
    %v983 = vpop.f32.mrb[0].mxu0
    %v984 = vadd.f32 %v192, %v983
    %v985 = vpop.f32.mrb[0].mxu0
    %986 = vmatprep.mubr.f32.mxu0 0.0
    %987 = vmatmul.mubr.f32.gmra.mrb[0].mxu0 %v373
    %v988 = vpop.f32.mrb[0].mxu0
    %v989 = vadd.f32 %v192, %v988
    %v990 = vpop.f32.mrb[0].mxu0
    %991 = vmatprep.mubr.f32.mxu0 0.0
    %992 = vmatmul.mubr.f32.gmra.mrb[0].mxu0 %v376
    %v993 = vpop.f32.mrb[0].mxu0
    %v994 = vadd.f32 %v192, %v993
    %v995 = vpop.f32.mrb[0].mxu0
    %996 = vmatprep.mubr.f32.mxu0 0.0
    %997 = vmatmul.mubr.f32.gmra.mrb[0].mxu0 %v379
    %v998 = vpop.f32.mrb[0].mxu0
    %v999 = vadd.f32 %v192, %v998
    %v1000 = vpop.f32.mrb[0].mxu0
    %1001 = vmatprep.mubr.f32.mxu0 0.0
    %1002 = vmatmul.mubr.f32.gmra.mrb[0].mxu0 %v382
    %v1003 = vpop.f32.mrb[0].mxu0
    %v1004 = vadd.f32 %v192, %v1003
    %v1005 = vpop.f32.mrb[0].mxu0
    %1006 = vmatprep.mubr.f32.mxu0 0.0
    %1007 = vmatmul.mubr.f32.gmra.mrb[0].mxu0 %v385
    %v1008 = vpop.f32.mrb[0].mxu0
    %v1009 = vadd.f32 %v192, %v1008
    %v1010 = vpop.f32.mrb[0].mxu0
    %1011 = vmatprep.mubr.f32.mxu0 0.0
    %1012 = vmatmul.mubr.f32.gmra.mrb[0].mxu0 %v388
    %v1013 = vpop.f32.mrb[0].mxu0
    %v1014 = vadd.f32 %v192, %v1013
    %v1015 = vpop.f32.mrb[0].mxu0
    %1016 = vmatprep.mubr.f32.mxu0 0.0
    %1017 = vmatmul.mubr.f32.gmra.mrb[0].mxu0 %v391
    %v1018 = vpop.f32.mrb[0].mxu0
    %v1019 = vadd.f32 %v192, %v1018
    %v1020 = vpop.f32.mrb[0].mxu0
    %1021 = vmatprep.mubr.f32.mxu0 0.0
    %1022 = vmatmul.mubr.f32.gmra.mrb[0].mxu0 %v394
    %v1023 = vpop.f32.mrb[0].mxu0
    %v1024 = vadd.f32 %v192, %v1023
    %v1025 = vpop.f32.mrb[0].mxu0
    %1026 = vmatprep.mubr.f32.mxu0 0.0
    %1027 = vmatmul.mubr.f32.gmra.mrb[0].mxu0 %v397
    %v1028 = vpop.f32.mrb[0].mxu0
    %v1029 = vadd.f32 %v192, %v1028
    %v1030 = vpop.f32.mrb[0].mxu0
    %1031 = vmatprep.mubr.f32.mxu0 0.0
    %1032 = vmatmul.mubr.f32.gmra.mrb[0].mxu0 %v400
    %v1033 = vpop.f32.mrb[0].mxu0
    %v1034 = vadd.f32 %v192, %v1033
    %v1035 = vpop.f32.mrb[0].mxu0
    %1036 = vmatprep.mubr.f32.mxu0 0.0
    %1037 = vmatmul.mubr.f32.gmra.mrb[0].mxu0 %v403
    %v1038 = vpop.f32.mrb[0].mxu0
    %v1039 = vadd.f32 %v192, %v1038
    %v1040 = vpop.f32.mrb[0].mxu0
    %1041 = vmatprep.mubr.f32.mxu0 0.0
    %1042 = vmatmul.mubr.f32.gmra.mrb[0].mxu0 %v406
    %v1043 = vpop.f32.mrb[0].mxu0
    %v1044 = vadd.f32 %v192, %v1043
    %v1045 = vpop.f32.mrb[0].mxu0
    %1046 = vmatprep.mubr.f32.mxu0 0.0
    %1047 = vmatmul.mubr.f32.gmra.mrb[0].mxu0 %v409
    %v1048 = vpop.f32.mrb[0].mxu0
    %v1049 = vadd.f32 %v192, %v1048
    %v1050 = vpop.f32.mrb[0].mxu0
    %1051 = vmatprep.mubr.f32.mxu0 0.0
    %1052 = vmatmul.mubr.f32.gmra.mrb[0].mxu0 %v412
    %v1053 = vpop.f32.mrb[0].mxu0
    %v1054 = vadd.f32 %v192, %v1053
    %v1055 = vpop.f32.mrb[0].mxu0
    %1056 = vmatprep.mubr.f32.mxu0 0.0
    %1057 = vmatmul.mubr.f32.gmra.mrb[0].mxu0 %v415
    %v1058 = vpop.f32.mrb[0].mxu0
    %v1059 = vadd.f32 %v192, %v1058
    %v1060 = vpop.f32.mrb[0].mxu0
    %1061 = vmatprep.mubr.f32.mxu0 0.0
    %1062 = vmatmul.mubr.f32.gmra.mrb[0].mxu0 %v418
    %v1063 = vpop.f32.mrb[0].mxu0
    %v1064 = vadd.f32 %v192, %v1063
    %v1065 = vpop.f32.mrb[0].mxu0
    %1066 = vmatprep.mubr.f32.mxu0 0.0
    %1067 = vmatmul.mubr.f32.gmra.mrb[0].mxu0 %v421
    %v1068 = vpop.f32.mrb[0].mxu0
    %v1069 = vadd.f32 %v192, %v1068
    %v1070 = vpop.f32.mrb[0].mxu0
    %1071 = vmatprep.mubr.f32.mxu0 0.0
    %1072 = vmatmul.mubr.f32.gmra.mrb[0].mxu0 %v424
    %v1073 = vpop.f32.mrb[0].mxu0
    %v1074 = vadd.f32 %v192, %v1073
    %v1075 = vpop.f32.mrb[0].mxu0
    %1076 = vmatprep.mubr.f32.mxu0 0.0
    %1077 = vmatmul.mubr.f32.gmra.mrb[0].mxu0 %v427
    %v1078 = vpop.f32.mrb[0].mxu0
    %v1079 = vadd.f32 %v192, %v1078
    %v1080 = vpop.f32.mrb[0].mxu0
    %1081 = vmatprep.mubr.f32.mxu0 0.0
    %1082 = vmatmul.mubr.f32.gmra.mrb[0].mxu0 %v430
    %v1083 = vpop.f32.mrb[0].mxu0
    %v1084 = vadd.f32 %v192, %v1083
    %v1085 = vpop.f32.mrb[0].mxu0
    %1086 = vmatprep.mubr.f32.mxu0 0.0
    %1087 = vmatmul.mubr.f32.gmra.mrb[0].mxu0 %v433
    %v1088 = vpop.f32.mrb[0].mxu0
    %v1089 = vadd.f32 %v192, %v1088
    %v1090 = vpop.f32.mrb[0].mxu0
    %1091 = vmatprep.mubr.f32.mxu0 0.0
    %1092 = vmatmul.mubr.f32.gmra.mrb[0].mxu0 %v436
    %v1093 = vpop.f32.mrb[0].mxu0
    %v1094 = vadd.f32 %v192, %v1093
    %v1095 = vpop.f32.mrb[0].mxu0
    %1096 = vmatprep.mubr.f32.mxu0 0.0
    %1097 = vmatmul.mubr.f32.gmra.mrb[0].mxu0 %v439
    %v1098 = vpop.f32.mrb[0].mxu0
    %v1099 = vadd.f32 %v192, %v1098
    %v1100 = vpop.f32.mrb[0].mxu0
    %1101 = vmatprep.mubr.f32.mxu0 0.0
    %1102 = vmatmul.mubr.f32.gmra.mrb[0].mxu0 %v442
    %v1103 = vpop.f32.mrb[0].mxu0
    %v1104 = vadd.f32 %v192, %v1103
    %v1105 = vpop.f32.mrb[0].mxu0
    %1106 = vmatprep.mubr.f32.mxu0 0.0
    %1107 = vmatmul.mubr.f32.gmra.mrb[0].mxu0 %v445
    %v1108 = vpop.f32.mrb[0].mxu0
    %v1109 = vadd.f32 %v192, %v1108
    %v1110 = vpop.f32.mrb[0].mxu0
    %1111 = vmatprep.mubr.f32.mxu0 0.0
    %1112 = vmatmul.mubr.f32.gmra.mrb[0].mxu0 %v448
    %v1113 = vpop.f32.mrb[0].mxu0
    %v1114 = vadd.f32 %v192, %v1113
    %v1115 = vpop.f32.mrb[0].mxu0
    %1116 = vmatprep.mubr.f32.mxu0 0.0
    %1117 = vmatmul.mubr.f32.gmra.mrb[0].mxu0 %v451
    %v1118 = vpop.f32.mrb[0].mxu0
    %v1119 = vadd.f32 %v192, %v1118
    %v1120 = vpop.f32.mrb[0].mxu0
    %1121 = vmatprep.mubr.f32.mxu0 0.0
    %1122 = vmatmul.mubr.f32.gmra.mrb[0].mxu0 %v454
    %v1123 = vpop.f32.mrb[0].mxu0
    %v1124 = vadd.f32 %v192, %v1123
    %v1125 = vpop.f32.mrb[0].mxu0
    %1126 = vmatprep.mubr.f32.mxu0 0.0
    %1127 = vmatmul.mubr.f32.gmra.mrb[0].mxu0 %v457
    %v1128 = vpop.f32.mrb[0].mxu0
    %v1129 = vadd.f32 %v192, %v1128
    %v1130 = vpop.f32.mrb[0].mxu0
    %1131 = vmatprep.mubr.f32.mxu0 0.0
    %1132 = vmatmul.mubr.f32.gmra.mrb[0].mxu0 %v460
    %v1133 = vpop.f32.mrb[0].mxu0
    %v1134 = vadd.f32 %v192, %v1133
    %v1135 = vpop.f32.mrb[0].mxu0
    %1136 = vmatprep.mubr.f32.mxu0 0.0
    %1137 = vmatmul.mubr.f32.gmra.mrb[0].mxu0 %v463
    %v1138 = vpop.f32.mrb[0].mxu0
    %v1139 = vadd.f32 %v192, %v1138
    %v1140 = vpop.f32.mrb[0].mxu0
    %1141 = vmatprep.mubr.f32.mxu0 0.0
    %1142 = vmatmul.mubr.f32.gmra.mrb[0].mxu0 %v466
    %v1143 = vpop.f32.mrb[0].mxu0
    %v1144 = vadd.f32 %v192, %v1143
    %v1145 = vpop.f32.mrb[0].mxu0
    %1146 = vmatprep.mubr.f32.mxu0 0.0
    %1147 = vmatmul.mubr.f32.gmra.mrb[0].mxu0 %v469
    %v1148 = vpop.f32.mrb[0].mxu0
    %v1149 = vadd.f32 %v192, %v1148
    %v1150 = vpop.f32.mrb[0].mxu0
    %1151 = vmatprep.mubr.f32.mxu0 0.0
    %1152 = vmatmul.mubr.f32.gmra.mrb[0].mxu0 %v472
    %v1153 = vpop.f32.mrb[0].mxu0
    %v1154 = vadd.f32 %v192, %v1153
    %v1155 = vpop.f32.mrb[0].mxu0
    %1156 = vmatprep.mubr.f32.mxu0 0.0
    %1157 = vmatmul.mubr.f32.gmra.mrb[0].mxu0 %v475
    %v1158 = vpop.f32.mrb[0].mxu0
    %v1159 = vadd.f32 %v192, %v1158
    %v1160 = vpop.f32.mrb[0].mxu0
    %1161 = vmatprep.mubr.f32.mxu0 0.0
    %1162 = vmatmul.mubr.f32.gmra.mrb[0].mxu0 %v478
    %v1163 = vpop.f32.mrb[0].mxu0
    %v1164 = vadd.f32 %v192, %v1163
    %v1165 = vpop.f32.mrb[0].mxu0
    %1166 = vmatprep.mubr.f32.mxu0 0.0
    %1167 = vmatmul.mubr.f32.gmra.mrb[0].mxu0 %v481
    %v1168 = vpop.f32.mrb[0].mxu0
    %v1169 = vadd.f32 %v192, %v1168
    %v1170 = vpop.f32.mrb[0].mxu0
    %1171 = vmatprep.mubr.f32.mxu0 0.0
    %1172 = vmatmul.mubr.f32.gmra.mrb[0].mxu0 %v484
    %v1173 = vpop.f32.mrb[0].mxu0
    %v1174 = vadd.f32 %v192, %v1173
    %v1175 = vpop.f32.mrb[0].mxu0
    %1176 = vmatprep.mubr.f32.mxu0 0.0
    %1177 = vmatmul.mubr.f32.gmra.mrb[0].mxu0 %v487
    %v1178 = vpop.f32.mrb[0].mxu0
    %v1179 = vadd.f32 %v192, %v1178
    %v1180 = vpop.f32.mrb[0].mxu0
    %1181 = vmatprep.mubr.f32.mxu0 0.0
    %1182 = vmatmul.mubr.f32.gmra.mrb[0].mxu0 %v490
    %v1183 = vpop.f32.mrb[0].mxu0
    %v1184 = vadd.f32 %v192, %v1183
    %v1185 = vpop.f32.mrb[0].mxu0
    %1186 = vmatprep.mubr.f32.mxu0 0.0
    %1187 = vmatmul.mubr.f32.gmra.mrb[0].mxu0 %v493
    %v1188 = vpop.f32.mrb[0].mxu0
    %v1189 = vadd.f32 %v192, %v1188
    %v1190 = vpop.f32.mrb[0].mxu0
    %1191 = vmatprep.mubr.f32.mxu0 0.0
    %1192 = vmatmul.mubr.f32.gmra.mrb[0].mxu0 %v496
    %v1193 = vpop.f32.mrb[0].mxu0
    %v1194 = vadd.f32 %v192, %v1193
    %v1195 = vpop.f32.mrb[0].mxu0
    %1196 = vmatprep.mubr.f32.mxu0 0.0
    %1197 = vmatmul.mubr.f32.gmra.mrb[0].mxu0 %v499
    %v1198 = vpop.f32.mrb[0].mxu0
    %v1199 = vadd.f32 %v192, %v1198
    %v1200 = vpop.f32.mrb[0].mxu0
    %1201 = vmatprep.mubr.f32.mxu0 0.0
    %1202 = vmatmul.mubr.f32.gmra.mrb[0].mxu0 %v502
    %v1203 = vpop.f32.mrb[0].mxu0
    %v1204 = vadd.f32 %v192, %v1203
    %v1205 = vpop.f32.mrb[0].mxu0
    %1206 = vmatprep.mubr.f32.mxu0 0.0
    %1207 = vmatmul.mubr.f32.gmra.mrb[0].mxu0 %v505
    %v1208 = vpop.f32.mrb[0].mxu0
    %v1209 = vadd.f32 %v192, %v1208
    %v1210 = vpop.f32.mrb[0].mxu0
    %1211 = vmatprep.mubr.f32.mxu0 0.0
    %1212 = vmatmul.mubr.f32.gmra.mrb[0].mxu0 %v508
    %v1213 = vpop.f32.mrb[0].mxu0
    %v1214 = vadd.f32 %v192, %v1213
    %v1215 = vpop.f32.mrb[0].mxu0
    %1216 = vmatprep.mubr.f32.mxu0 0.0
    %1217 = vmatmul.mubr.f32.gmra.mrb[0].mxu0 %v511
    %v1218 = vpop.f32.mrb[0].mxu0
    %v1219 = vadd.f32 %v192, %v1218
    %v1220 = vpop.f32.mrb[0].mxu0
    %1221 = vmatprep.mubr.f32.mxu0 0.0
    %1222 = vmatmul.mubr.f32.gmra.mrb[0].mxu0 %v514
    %v1223 = vpop.f32.mrb[0].mxu0
    %v1224 = vadd.f32 %v192, %v1223
    %v1225 = vpop.f32.mrb[0].mxu0
    %1226 = vmatprep.mubr.f32.mxu0 0.0
    %1227 = vmatmul.mubr.f32.gmra.mrb[0].mxu0 %v517
    %v1228 = vpop.f32.mrb[0].mxu0
    %v1229 = vadd.f32 %v192, %v1228
    %v1230 = vpop.f32.mrb[0].mxu0
    %1231 = vmatprep.mubr.f32.mxu0 0.0
    %1232 = vmatmul.mubr.f32.gmra.mrb[0].mxu0 %v520
    %v1233 = vpop.f32.mrb[0].mxu0
    %v1234 = vadd.f32 %v192, %v1233
    %v1235 = vpop.f32.mrb[0].mxu0
    %1236 = vmatprep.mubr.f32.mxu0 0.0
    %1237 = vmatmul.mubr.f32.gmra.mrb[0].mxu0 %v523
    %v1238 = vpop.f32.mrb[0].mxu0
    %v1239 = vadd.f32 %v192, %v1238
    %v1240 = vpop.f32.mrb[0].mxu0
    %1241 = vmatprep.mubr.f32.mxu0 0.0
    %1242 = vmatmul.mubr.f32.gmra.mrb[0].mxu0 %v526
    %v1243 = vpop.f32.mrb[0].mxu0
    %v1244 = vadd.f32 %v192, %v1243
    %v1245 = vpop.f32.mrb[0].mxu0
    %1246 = vmatprep.mubr.f32.mxu0 0.0
    %1247 = vmatmul.mubr.f32.gmra.mrb[0].mxu0 %v529
    %v1248 = vpop.f32.mrb[0].mxu0
    %v1249 = vadd.f32 %v192, %v1248
    %v1250 = vpop.f32.mrb[0].mxu0
    %1251 = vmatprep.mubr.f32.mxu0 0.0
    %1252 = vmatmul.mubr.f32.gmra.mrb[0].mxu0 %v532
    %v1253 = vpop.f32.mrb[0].mxu0
    %v1254 = vadd.f32 %v192, %v1253
    %v1255 = vpop.f32.mrb[0].mxu0
    %1256 = vmatprep.mubr.f32.mxu0 0.0
    %1257 = vmatmul.mubr.f32.gmra.mrb[0].mxu0 %v535
    %v1258 = vpop.f32.mrb[0].mxu0
    %v1259 = vadd.f32 %v192, %v1258
    %v1260 = vpop.f32.mrb[0].mxu0
    %1261 = vmatprep.mubr.f32.mxu0 0.0
    %1262 = vmatmul.mubr.f32.gmra.mrb[0].mxu0 %v538
    %v1263 = vpop.f32.mrb[0].mxu0
    %v1264 = vadd.f32 %v192, %v1263
    %v1265 = vpop.f32.mrb[0].mxu0
    %1266 = vmatprep.mubr.f32.mxu0 0.0
    %1267 = vmatmul.mubr.f32.gmra.mrb[0].mxu0 %v541
    %v1268 = vpop.f32.mrb[0].mxu0
    %v1269 = vadd.f32 %v192, %v1268
    %v1270 = vpop.f32.mrb[0].mxu0
    %1271 = vmatprep.mubr.f32.mxu0 0.0
    %1272 = vmatmul.mubr.f32.gmra.mrb[0].mxu0 %v544
    %v1273 = vpop.f32.mrb[0].mxu0
    %v1274 = vadd.f32 %v192, %v1273
    %v1275 = vpop.f32.mrb[0].mxu0
    %1276 = vmatprep.mubr.f32.mxu0 0.0
    %1277 = vmatmul.mubr.f32.gmra.mrb[0].mxu0 %v547
    %v1278 = vpop.f32.mrb[0].mxu0
    %v1279 = vadd.f32 %v192, %v1278
    %v1280 = vpop.f32.mrb[0].mxu0
    %1281 = vmatprep.mubr.f32.mxu0 0.0
    %1282 = vmatmul.mubr.f32.gmra.mrb[0].mxu0 %v550
    %v1283 = vpop.f32.mrb[0].mxu0
    %v1284 = vadd.f32 %v192, %v1283
    %v1285 = vpop.f32.mrb[0].mxu0
    %1286 = vmatprep.mubr.f32.mxu0 0.0
    %1287 = vmatmul.mubr.f32.gmra.mrb[0].mxu0 %v553
    %v1288 = vpop.f32.mrb[0].mxu0
    %v1289 = vadd.f32 %v192, %v1288
    %v1290 = vpop.f32.mrb[0].mxu0
    %1291 = vmatprep.mubr.f32.mxu0 0.0
    %1292 = vmatmul.mubr.f32.gmra.mrb[0].mxu0 %v556
    %v1293 = vpop.f32.mrb[0].mxu0
    %v1294 = vadd.f32 %v192, %v1293
    %v1295 = vpop.f32.mrb[0].mxu0
    %1296 = vmatprep.mubr.f32.mxu0 0.0
    %1297 = vmatmul.mubr.f32.gmra.mrb[0].mxu0 %v559
    %v1298 = vpop.f32.mrb[0].mxu0
    %v1299 = vadd.f32 %v192, %v1298
    %v1300 = vpop.f32.mrb[0].mxu0
    %1301 = vmatprep.mubr.f32.mxu0 0.0
    %1302 = vmatmul.mubr.f32.gmra.mrb[0].mxu0 %v562
    %v1303 = vpop.f32.mrb[0].mxu0
    %v1304 = vadd.f32 %v192, %v1303
    %v1305 = vpop.f32.mrb[0].mxu0
    %1306 = vmatprep.mubr.f32.mxu0 0.0
    %1307 = vmatmul.mubr.f32.gmra.mrb[0].mxu0 %v565
    %v1308 = vpop.f32.mrb[0].mxu0
    %v1309 = vadd.f32 %v192, %v1308
    %v1310 = vpop.f32.mrb[0].mxu0
    %1311 = vmatprep.mubr.f32.mxu0 0.0
    %1312 = vmatmul.mubr.f32.gmra.mrb[0].mxu0 %v568
    %v1313 = vpop.f32.mrb[0].mxu0
    %v1314 = vadd.f32 %v192, %v1313
    %v1315 = vpop.f32.mrb[0].mxu0
    %1316 = vmatprep.mubr.f32.mxu0 0.0
    %1317 = vmatmul.mubr.f32.gmra.mrb[0].mxu0 %v571
    %v1318 = vpop.f32.mrb[0].mxu0
    %v1319 = vadd.f32 %v192, %v1318
    %v1320 = vpop.f32.mrb[0].mxu0
    %1321 = vmatprep.mubr.f32.mxu0 0.0
    %1322 = vmatmul.mubr.f32.gmra.mrb[0].mxu0 %v574
    %v1323 = vpop.f32.mrb[0].mxu0
    %v1324 = vadd.f32 %v192, %v1323
    %v1325 = vpop.f32.mrb[0].mxu0
    %1326 = vmatprep.mubr.f32.mxu0 0.0
    %1327 = vmatmul.mubr.f32.gmra.mrb[0].mxu0 %v577
    %v1328 = vpop.f32.mrb[0].mxu0
    %v1329 = vadd.f32 %v192, %v1328
    %v1330 = vpop.f32.mrb[0].mxu0
    %1331 = vmatprep.mubr.f32.mxu0 0.0
    %1332 = vmatmul.mubr.f32.gmra.mrb[0].mxu0 %v580
    %v1333 = vpop.f32.mrb[0].mxu0
    %v1334 = vadd.f32 %v192, %v1333
    %v1335 = vpop.f32.mrb[0].mxu0
    %1336 = vmatprep.mubr.f32.mxu0 0.0
    %1337 = vmatmul.mubr.f32.gmra.mrb[0].mxu0 %v583
    %v1338 = vpop.f32.mrb[0].mxu0
    %v1339 = vadd.f32 %v192, %v1338
    %v1340 = vpop.f32.mrb[0].mxu0
    %1341 = vmatprep.mubr.f32.mxu0 0.0
    %1342 = vmatmul.mubr.f32.gmra.mrb[0].mxu0 %v586
    %v1343 = vpop.f32.mrb[0].mxu0
    %v1344 = vadd.f32 %v192, %v1343
    %v1345 = vpop.f32.mrb[0].mxu0
    %1346 = vmatprep.mubr.f32.mxu0 0.0
    %1347 = vmatmul.mubr.f32.gmra.mrb[0].mxu0 %v589
    %v1348 = vpop.f32.mrb[0].mxu0
    %v1349 = vadd.f32 %v192, %v1348
    %v1350 = vpop.f32.mrb[0].mxu0
    %1351 = vmatprep.mubr.f32.mxu0 0.0
    %1352 = vmatmul.mubr.f32.gmra.mrb[0].mxu0 %v592
    %v1353 = vpop.f32.mrb[0].mxu0
    %v1354 = vadd.f32 %v192, %v1353
    %v1355 = vpop.f32.mrb[0].mxu0
    %1356 = vmatprep.mubr.f32.mxu0 0.0
    %1357 = vmatmul.mubr.f32.gmra.mrb[0].mxu0 %v595
    %v1358 = vpop.f32.mrb[0].mxu0
    %v1359 = vadd.f32 %v192, %v1358
    %v1360 = vpop.f32.mrb[0].mxu0
    %1361 = vmatprep.mubr.f32.mxu0 0.0
    %1362 = vmatmul.mubr.f32.gmra.mrb[0].mxu0 %v598
    %v1363 = vpop.f32.mrb[0].mxu0
    %v1364 = vadd.f32 %v192, %v1363
    %v1365 = vpop.f32.mrb[0].mxu0
    %1366 = vmatprep.mubr.f32.mxu0 0.0
    %1367 = vmatmul.mubr.f32.gmra.mrb[0].mxu0 %v601
    %v1368 = vpop.f32.mrb[0].mxu0
    %v1369 = vadd.f32 %v192, %v1368
    %v1370 = vpop.f32.mrb[0].mxu0
    %1371 = vmatprep.mubr.f32.mxu0 0.0
    %1372 = vmatmul.mubr.f32.gmra.mrb[0].mxu0 %v604
    %v1373 = vpop.f32.mrb[0].mxu0
    %v1374 = vadd.f32 %v192, %v1373
    %v1375 = vpop.f32.mrb[0].mxu0
    %1376 = vmatprep.mubr.f32.mxu0 0.0
    %1377 = vmatmul.mubr.f32.gmra.mrb[0].mxu0 %v607
    %v1378 = vpop.f32.mrb[0].mxu0
    %v1379 = vadd.f32 %v192, %v1378
    %v1380 = vpop.f32.mrb[0].mxu0
    %1381 = vmatprep.mubr.f32.mxu0 0.0
    %1382 = vmatmul.mubr.f32.gmra.mrb[0].mxu0 %v610
    %v1383 = vpop.f32.mrb[0].mxu0
    %v1384 = vadd.f32 %v192, %v1383
    %v1385 = vpop.f32.mrb[0].mxu0
    %1386 = vmatprep.mubr.f32.mxu0 0.0
    %1387 = vmatmul.mubr.f32.gmra.mrb[0].mxu0 %v613
    %v1388 = vpop.f32.mrb[0].mxu0
    %v1389 = vadd.f32 %v192, %v1388
    %v1390 = vpop.f32.mrb[0].mxu0
    %1391 = vmatprep.mubr.f32.mxu0 0.0
    %1392 = vmatmul.mubr.f32.gmra.mrb[0].mxu0 %v616
    %v1393 = vpop.f32.mrb[0].mxu0
    %v1394 = vadd.f32 %v192, %v1393
    %v1395 = vpop.f32.mrb[0].mxu0
    %1396 = vmatprep.mubr.f32.mxu0 0.0
    %1397 = vmatmul.mubr.f32.gmra.mrb[0].mxu0 %v619
    %v1398 = vpop.f32.mrb[0].mxu0
    %v1399 = vadd.f32 %v192, %v1398
    %v1400 = vpop.f32.mrb[0].mxu0
    %1401 = vmatprep.mubr.f32.mxu0 0.0
    %1402 = vmatmul.mubr.f32.gmra.mrb[0].mxu0 %v622
    %v1403 = vpop.f32.mrb[0].mxu0
    %v1404 = vadd.f32 %v192, %v1403
    %v1405 = vpop.f32.mrb[0].mxu0
    %1406 = vmatprep.mubr.f32.mxu0 0.0
    %1407 = vmatmul.mubr.f32.gmra.mrb[0].mxu0 %v625
    %v1408 = vpop.f32.mrb[0].mxu0
    %v1409 = vadd.f32 %v192, %v1408
    %v1410 = vpop.f32.mrb[0].mxu0
    %1411 = vdwg.mxu0
    %v1412 = vmax.f32 %v694, 0.0
    %v1413 = vmax.f32 %v699, 0.0
    %v1414 = vmax.f32 %v704, 0.0
    %v1415 = vmax.f32 %v709, 0.0
    %v1416 = vmax.f32 %v714, 0.0
    %v1417 = vmax.f32 %v719, 0.0
    %v1418 = vmax.f32 %v724, 0.0
    %v1419 = vmax.f32 %v729, 0.0
    %v1420 = vmax.f32 %v734, 0.0
    %v1421 = vmax.f32 %v739, 0.0
    %v1422 = vmax.f32 %v744, 0.0
    %v1423 = vmax.f32 %v749, 0.0
    %v1424 = vmax.f32 %v754, 0.0
    %v1425 = vmax.f32 %v759, 0.0
    %v1426 = vmax.f32 %v764, 0.0
    %v1427 = vmax.f32 %v769, 0.0
    %v1428 = vmax.f32 %v774, 0.0
    %v1429 = vmax.f32 %v779, 0.0
    %v1430 = vmax.f32 %v784, 0.0
    %v1431 = vmax.f32 %v789, 0.0
    %v1432 = vmax.f32 %v794, 0.0
    %v1433 = vmax.f32 %v799, 0.0
    %v1434 = vmax.f32 %v804, 0.0
    %v1435 = vmax.f32 %v809, 0.0
    %v1436 = vmax.f32 %v814, 0.0
    %v1437 = vmax.f32 %v819, 0.0
    %v1438 = vmax.f32 %v824, 0.0
    %v1439 = vmax.f32 %v829, 0.0
    %v1440 = vmax.f32 %v834, 0.0
    %v1441 = vmax.f32 %v839, 0.0
    %v1442 = vmax.f32 %v844, 0.0
    %v1443 = vmax.f32 %v849, 0.0
    %v1444 = vmax.f32 %v854, 0.0
    %v1445 = vmax.f32 %v859, 0.0
    %v1446 = vmax.f32 %v864, 0.0
    %v1447 = vmax.f32 %v869, 0.0
    %v1448 = vmax.f32 %v874, 0.0
    %v1449 = vmax.f32 %v879, 0.0
    %v1450 = vmax.f32 %v884, 0.0
    %v1451 = vmax.f32 %v889, 0.0
    %v1452 = vmax.f32 %v894, 0.0
    %v1453 = vmax.f32 %v899, 0.0
    %v1454 = vmax.f32 %v904, 0.0
    %v1455 = vmax.f32 %v909, 0.0
    %v1456 = vmax.f32 %v914, 0.0
    %v1457 = vmax.f32 %v919, 0.0
    %v1458 = vmax.f32 %v924, 0.0
    %v1459 = vmax.f32 %v929, 0.0
    %v1460 = vmax.f32 %v934, 0.0
    %v1461 = vmax.f32 %v939, 0.0
    %v1462 = vmax.f32 %v944, 0.0
    %v1463 = vmax.f32 %v949, 0.0
    %v1464 = vmax.f32 %v954, 0.0
    %v1465 = vmax.f32 %v959, 0.0
    %v1466 = vmax.f32 %v964, 0.0
    %v1467 = vmax.f32 %v969, 0.0
    %v1468 = vmax.f32 %v974, 0.0
    %v1469 = vmax.f32 %v979, 0.0
    %v1470 = vmax.f32 %v984, 0.0
    %v1471 = vmax.f32 %v989, 0.0
    %v1472 = vmax.f32 %v994, 0.0
    %v1473 = vmax.f32 %v999, 0.0
    %v1474 = vmax.f32 %v1004, 0.0
    %v1475 = vmax.f32 %v1009, 0.0
    %v1476 = vmax.f32 %v1014, 0.0
    %v1477 = vmax.f32 %v1019, 0.0
    %v1478 = vmax.f32 %v1024, 0.0
    %v1479 = vmax.f32 %v1029, 0.0
    %v1480 = vmax.f32 %v1034, 0.0
    %v1481 = vmax.f32 %v1039, 0.0
    %v1482 = vmax.f32 %v1044, 0.0
    %v1483 = vmax.f32 %v1049, 0.0
    %v1484 = vmax.f32 %v1054, 0.0
    %v1485 = vmax.f32 %v1059, 0.0
    %v1486 = vmax.f32 %v1064, 0.0
    %v1487 = vmax.f32 %v1069, 0.0
    %v1488 = vmax.f32 %v1074, 0.0
    %v1489 = vmax.f32 %v1079, 0.0
    %v1490 = vmax.f32 %v1084, 0.0
    %v1491 = vmax.f32 %v1089, 0.0
    %v1492 = vmax.f32 %v1094, 0.0
    %v1493 = vmax.f32 %v1099, 0.0
    %v1494 = vmax.f32 %v1104, 0.0
    %v1495 = vmax.f32 %v1109, 0.0
    %v1496 = vmax.f32 %v1114, 0.0
    %v1497 = vmax.f32 %v1119, 0.0
    %v1498 = vmax.f32 %v1124, 0.0
    %v1499 = vmax.f32 %v1129, 0.0
    %v1500 = vmax.f32 %v1134, 0.0
    %v1501 = vmax.f32 %v1139, 0.0
    %v1502 = vmax.f32 %v1144, 0.0
    %v1503 = vmax.f32 %v1149, 0.0
    %v1504 = vmax.f32 %v1154, 0.0
    %v1505 = vmax.f32 %v1159, 0.0
    %v1506 = vmax.f32 %v1164, 0.0
    %v1507 = vmax.f32 %v1169, 0.0
    %v1508 = vmax.f32 %v1174, 0.0
    %v1509 = vmax.f32 %v1179, 0.0
    %v1510 = vmax.f32 %v1184, 0.0
    %v1511 = vmax.f32 %v1189, 0.0
    %v1512 = vmax.f32 %v1194, 0.0
    %v1513 = vmax.f32 %v1199, 0.0
    %v1514 = vmax.f32 %v1204, 0.0
    %v1515 = vmax.f32 %v1209, 0.0
    %v1516 = vmax.f32 %v1214, 0.0
    %v1517 = vmax.f32 %v1219, 0.0
    %v1518 = vmax.f32 %v1224, 0.0
    %v1519 = vmax.f32 %v1229, 0.0
    %v1520 = vmax.f32 %v1234, 0.0
    %v1521 = vmax.f32 %v1239, 0.0
    %v1522 = vmax.f32 %v1244, 0.0
    %v1523 = vmax.f32 %v1249, 0.0
    %v1524 = vmax.f32 %v1254, 0.0
    %v1525 = vmax.f32 %v1259, 0.0
    %v1526 = vmax.f32 %v1264, 0.0
    %v1527 = vmax.f32 %v1269, 0.0
    %v1528 = vmax.f32 %v1274, 0.0
    %v1529 = vmax.f32 %v1279, 0.0
    %v1530 = vmax.f32 %v1284, 0.0
    %v1531 = vmax.f32 %v1289, 0.0
    %v1532 = vmax.f32 %v1294, 0.0
    %v1533 = vmax.f32 %v1299, 0.0
    %v1534 = vmax.f32 %v1304, 0.0
    %v1535 = vmax.f32 %v1309, 0.0
    %v1536 = vmax.f32 %v1314, 0.0
    %v1537 = vmax.f32 %v1319, 0.0
    %v1538 = vmax.f32 %v1324, 0.0
    %v1539 = vmax.f32 %v1329, 0.0
    %v1540 = vmax.f32 %v1334, 0.0
    %v1541 = vmax.f32 %v1339, 0.0
    %v1542 = vmax.f32 %v1344, 0.0
    %v1543 = vmax.f32 %v1349, 0.0
    %v1544 = vmax.f32 %v1354, 0.0
    %v1545 = vmax.f32 %v1359, 0.0
    %v1546 = vmax.f32 %v1364, 0.0
    %v1547 = vmax.f32 %v1369, 0.0
    %v1548 = vmax.f32 %v1374, 0.0
    %v1549 = vmax.f32 %v1379, 0.0
    %v1550 = vmax.f32 %v1384, 0.0
    %v1551 = vmax.f32 %v1389, 0.0
    %v1552 = vmax.f32 %v1394, 0.0
    %v1553 = vmax.f32 %v1399, 0.0
    %v1554 = vmax.f32 %v1404, 0.0
    %v1555 = vmax.f32 %v1409, 0.0
    %v1556 = vmax.f32 %v1412, %v1448
    %v1557 = vmax.f32 %v1413, %v1449
    %v1558 = vmax.f32 %v1414, %v1450
    %v1559 = vmax.f32 %v1415, %v1451
    %v1560 = vmax.f32 %v1416, %v1452
    %v1561 = vmax.f32 %v1417, %v1453
    %v1562 = vmax.f32 %v1418, %v1454
    %v1563 = vmax.f32 %v1419, %v1455
    %v1564 = vmax.f32 %v1420, %v1456
    %v1565 = vmax.f32 %v1421, %v1457
    %v1566 = vmax.f32 %v1422, %v1458
    %v1567 = vmax.f32 %v1423, %v1459
    %v1568 = vmax.f32 %v1424, %v1460
    %v1569 = vmax.f32 %v1425, %v1461
    %v1570 = vmax.f32 %v1426, %v1462
    %v1571 = vmax.f32 %v1427, %v1463
    %v1572 = vmax.f32 %v1428, %v1464
    %v1573 = vmax.f32 %v1429, %v1465
    %v1574 = vmax.f32 %v1430, %v1466
    %v1575 = vmax.f32 %v1431, %v1467
    %v1576 = vmax.f32 %v1432, %v1468
    %v1577 = vmax.f32 %v1433, %v1469
    %v1578 = vmax.f32 %v1434, %v1470
    %v1579 = vmax.f32 %v1435, %v1471
    %v1580 = vmax.f32 %v1436, %v1472
    %v1581 = vmax.f32 %v1437, %v1473
    %v1582 = vmax.f32 %v1438, %v1474
    %v1583 = vmax.f32 %v1439, %v1475
    %v1584 = vmax.f32 %v1440, %v1476
    %v1585 = vmax.f32 %v1441, %v1477
    %v1586 = vmax.f32 %v1442, %v1478
    %v1587 = vmax.f32 %v1443, %v1479
    %v1588 = vmax.f32 %v1444, %v1480
    %v1589 = vmax.f32 %v1445, %v1481
    %v1590 = vmax.f32 %v1446, %v1482
    %v1591 = vmax.f32 %v1447, %v1483
    %v1592 = vmax.f32 %v1484, %v1520
    %v1593 = vmax.f32 %v1485, %v1521
    %v1594 = vmax.f32 %v1486, %v1522
    %v1595 = vmax.f32 %v1487, %v1523
    %v1596 = vmax.f32 %v1488, %v1524
    %v1597 = vmax.f32 %v1489, %v1525
    %v1598 = vmax.f32 %v1490, %v1526
    %v1599 = vmax.f32 %v1491, %v1527
    %v1600 = vmax.f32 %v1492, %v1528
    %v1601 = vmax.f32 %v1493, %v1529
    %v1602 = vmax.f32 %v1494, %v1530
    %v1603 = vmax.f32 %v1495, %v1531
    %v1604 = vmax.f32 %v1496, %v1532
    %v1605 = vmax.f32 %v1497, %v1533
    %v1606 = vmax.f32 %v1498, %v1534
    %v1607 = vmax.f32 %v1499, %v1535
    %v1608 = vmax.f32 %v1500, %v1536
    %v1609 = vmax.f32 %v1501, %v1537
    %v1610 = vmax.f32 %v1502, %v1538
    %v1611 = vmax.f32 %v1503, %v1539
    %v1612 = vmax.f32 %v1504, %v1540
    %v1613 = vmax.f32 %v1505, %v1541
    %v1614 = vmax.f32 %v1506, %v1542
    %v1615 = vmax.f32 %v1507, %v1543
    %v1616 = vmax.f32 %v1508, %v1544
    %v1617 = vmax.f32 %v1509, %v1545
    %v1618 = vmax.f32 %v1510, %v1546
    %v1619 = vmax.f32 %v1511, %v1547
    %v1620 = vmax.f32 %v1512, %v1548
    %v1621 = vmax.f32 %v1513, %v1549
    %v1622 = vmax.f32 %v1514, %v1550
    %v1623 = vmax.f32 %v1515, %v1551
    %v1624 = vmax.f32 %v1516, %v1552
    %v1625 = vmax.f32 %v1517, %v1553
    %v1626 = vmax.f32 %v1518, %v1554
    %v1627 = vmax.f32 %v1519, %v1555
    %v1628 = vmax.f32 %v1556, %v1592
    %v1629 = vmax.f32 %v1557, %v1593
    %v1630 = vmax.f32 %v1558, %v1594
    %v1631 = vmax.f32 %v1559, %v1595
    %v1632 = vmax.f32 %v1560, %v1596
    %v1633 = vmax.f32 %v1561, %v1597
    %v1634 = vmax.f32 %v1562, %v1598
    %v1635 = vmax.f32 %v1563, %v1599
    %v1636 = vmax.f32 %v1564, %v1600
    %v1637 = vmax.f32 %v1565, %v1601
    %v1638 = vmax.f32 %v1566, %v1602
    %v1639 = vmax.f32 %v1567, %v1603
    %v1640 = vmax.f32 %v1568, %v1604
    %v1641 = vmax.f32 %v1569, %v1605
    %v1642 = vmax.f32 %v1570, %v1606
    %v1643 = vmax.f32 %v1571, %v1607
    %v1644 = vmax.f32 %v1572, %v1608
    %v1645 = vmax.f32 %v1573, %v1609
    %v1646 = vmax.f32 %v1574, %v1610
    %v1647 = vmax.f32 %v1575, %v1611
    %v1648 = vmax.f32 %v1576, %v1612
    %v1649 = vmax.f32 %v1577, %v1613
    %v1650 = vmax.f32 %v1578, %v1614
    %v1651 = vmax.f32 %v1579, %v1615
    %v1652 = vmax.f32 %v1580, %v1616
    %v1653 = vmax.f32 %v1581, %v1617
    %v1654 = vmax.f32 %v1582, %v1618
    %v1655 = vmax.f32 %v1583, %v1619
    %v1656 = vmax.f32 %v1584, %v1620
    %v1657 = vmax.f32 %v1585, %v1621
    %v1658 = vmax.f32 %v1586, %v1622
    %v1659 = vmax.f32 %v1587, %v1623
    %v1660 = vmax.f32 %v1588, %v1624
    %v1661 = vmax.f32 %v1589, %v1625
    %v1662 = vmax.f32 %v1590, %v1626
    %v1663 = vmax.f32 %v1591, %v1627
    %v1664 = vld [vmem:[%s3] sm:$0xff]
    %s1665 = scalar_lea.vmem %s3, 8
    %v1666 = vld [vmem:[%s1665] sm:$0xff]
    %vm1691 = vcmask 1045504
    %v1692 = vrot.slane %v1628, 2
    %v1693 = vrot.slane %v1629, 2
    %v1694 = vsel %vm1691, %v1692, %v1693
    %v1695 = vrot.slane %v1630, 2
    %v1696 = vsel %vm1691, %v1693, %v1695
    %v1697 = vrot.slane %v1631, 2
    %v1698 = vsel %vm1691, %v1695, %v1697
    %v1699 = vrot.slane %v1632, 2
    %v1700 = vsel %vm1691, %v1697, %v1699
    %v1701 = vrot.slane %v1633, 2
    %v1702 = vsel %vm1691, %v1699, %v1701
    %v1703 = vrot.slane %v1634, 2
    %v1704 = vsel %vm1691, %v1701, %v1703
    %v1705 = vrot.slane %v1635, 2
    %v1706 = vsel %vm1691, %v1703, %v1705
    %v1707 = vrot.slane %v1636, 2
    %v1708 = vsel %vm1691, %v1705, %v1707
    %v1709 = vrot.slane %v1637, 2
    %v1710 = vsel %vm1691, %v1707, %v1709
    %v1711 = vrot.slane %v1638, 2
    %v1712 = vsel %vm1691, %v1709, %v1711
    %v1713 = vrot.slane %v1639, 2
    %v1714 = vsel %vm1691, %v1711, %v1713
    %v1715 = vrot.slane %v1640, 2
    %v1716 = vsel %vm1691, %v1713, %v1715
    %v1717 = vrot.slane %v1641, 2
    %v1718 = vsel %vm1691, %v1715, %v1717
    %v1719 = vrot.slane %v1642, 2
    %v1720 = vsel %vm1691, %v1717, %v1719
    %v1721 = vrot.slane %v1643, 2
    %v1722 = vsel %vm1691, %v1719, %v1721
    %v1723 = vrot.slane %v1644, 2
    %v1724 = vsel %vm1691, %v1721, %v1723
    %v1725 = vrot.slane %v1645, 2
    %v1726 = vsel %vm1691, %v1723, %v1725
    %v1727 = vrot.slane %v1646, 2
    %v1728 = vsel %vm1691, %v1725, %v1727
    %v1729 = vrot.slane %v1647, 2
    %v1730 = vsel %vm1691, %v1727, %v1729
    %v1731 = vrot.slane %v1648, 2
    %v1732 = vsel %vm1691, %v1729, %v1731
    %v1733 = vrot.slane %v1649, 2
    %v1734 = vsel %vm1691, %v1731, %v1733
    %v1735 = vrot.slane %v1650, 2
    %v1736 = vsel %vm1691, %v1733, %v1735
    %v1737 = vrot.slane %v1651, 2
    %v1738 = vsel %vm1691, %v1735, %v1737
    %vm1739 = vcmask 64512
    %v1740 = vsel %vm1739, %v1694, 0
    %v1742 = vsel %vm1739, %v1696, 0
    %v1744 = vsel %vm1739, %v1698, 0
    %v1746 = vsel %vm1739, %v1700, 0
    %v1748 = vsel %vm1739, %v1702, 0
    %v1750 = vsel %vm1739, %v1704, 0
    %v1752 = vsel %vm1739, %v1706, 0
    %v1754 = vsel %vm1739, %v1708, 0
    %v1756 = vsel %vm1739, %v1710, 0
    %v1758 = vsel %vm1739, %v1712, 0
    %v1760 = vsel %vm1739, %v1714, 0
    %v1762 = vsel %vm1739, %v1716, 0
    %v1764 = vsel %vm1739, %v1718, 0
    %v1766 = vsel %vm1739, %v1720, 0
    %v1768 = vsel %vm1739, %v1722, 0
    %v1770 = vsel %vm1739, %v1724, 0
    %v1772 = vsel %vm1739, %v1726, 0
    %v1774 = vsel %vm1739, %v1728, 0
    %v1776 = vsel %vm1739, %v1730, 0
    %v1778 = vsel %vm1739, %v1732, 0
    %v1780 = vsel %vm1739, %v1734, 0
    %v1782 = vsel %vm1739, %v1736, 0
    %v1784 = vsel %vm1739, %v1738, 0
    %1786 = vmatprep.subr.mxu0 0.0
    %1787 = vmatpush1.msra.mxu0 %v1666
    %1788 = vmatprep.subr.mxu0 0.0
    %1789 = vmatpush1.msra.mxu0 0.0
    %1790 = vmatprep.subr.mxu0 0.0
    %1791 = vmatpush1.msra.mxu0 0.0
    %1792 = vmatprep.subr.mxu0 0.0
    %1793 = vmatpush1.msra.mxu0 0.0
    %1794 = vmatprep.subr.mxu0 0.0
    %1795 = vmatpush1.msra.mxu0 0.0
    %1796 = vmatprep.subr.mxu0 0.0
    %1797 = vmatpush1.msra.mxu0 0.0
    %1798 = vmatprep.subr.mxu0 0.0
    %1799 = vmatpush1.msra.mxu0 0.0
    %1800 = vmatprep.subr.mxu0 0.0
    %1801 = vmatpush1.msra.mxu0 0.0
    %1802 = vmatprep.subr.mxu0 0.0
    %1803 = vmatpush1.msra.mxu0 0.0
    %1804 = vmatprep.subr.mxu0 0.0
    %1805 = vmatpush1.msra.mxu0 0.0
    %1806 = vmatprep.subr.mxu0 0.0
    %1807 = vmatpush1.msra.mxu0 0.0
    %1808 = vmatprep.subr.mxu0 0.0
    %1809 = vmatpush1.msra.mxu0 0.0
    %1810 = vmatprep.subr.mxu0 0.0
    %1811 = vmatpush1.msra.mxu0 0.0
    %1812 = vmatprep.subr.mxu0 0.0
    %1813 = vmatpush1.msra.mxu0 0.0
    %1814 = vmatprep.subr.mxu0 0.0
    %1815 = vmatpush1.msra.mxu0 0.0
    %1816 = vmatprep.subr.mxu0 0.0
    %1817 = vmatpush1.msra.mxu0 0.0
    %1818 = vmatprep.subr.mxu0 0.0
    %1819 = vmatpush1.msra.mxu0 0.0
    %1820 = vmatprep.subr.mxu0 0.0
    %1821 = vmatpush1.msra.mxu0 0.0
    %1822 = vmatprep.subr.mxu0 0.0
    %1823 = vmatpush1.msra.mxu0 0.0
    %1824 = vmatprep.subr.mxu0 0.0
    %1825 = vmatpush1.msra.mxu0 0.0
    %1826 = vmatprep.subr.mxu0 0.0
    %1827 = vmatpush1.msra.mxu0 0.0
    %1828 = vmatprep.subr.mxu0 0.0
    %1829 = vmatpush1.msra.mxu0 0.0
    %1830 = vmatprep.subr.mxu0 0.0
    %1831 = vmatpush1.msra.mxu0 0.0
    %1832 = vmatprep.subr.mxu0 0.0
    %1833 = vmatpush1.msra.mxu0 0.0
    %1834 = vmatprep.subr.mxu0 0.0
    %1835 = vmatpush1.msra.mxu0 0.0
    %1836 = vmatprep.subr.mxu0 0.0
    %1837 = vmatpush1.msra.mxu0 0.0
    %1838 = vmatprep.subr.mxu0 0.0
    %1839 = vmatpush1.msra.mxu0 0.0
    %1840 = vmatprep.subr.mxu0 0.0
    %1841 = vmatpush1.msra.mxu0 0.0
    %1842 = vmatprep.subr.mxu0 0.0
    %1843 = vmatpush1.msra.mxu0 0.0
    %1844 = vmatprep.subr.mxu0 0.0
    %1845 = vmatpush1.msra.mxu0 0.0
    %1846 = vmatprep.subr.mxu0 0.0
    %1847 = vmatpush1.msra.mxu0 0.0
    %1848 = vmatprep.subr.mxu0 0.0
    %1849 = vmatpush1.msra.mxu0 0.0
    %1850 = vmatprep.mubr.f32.mxu0 0.0
    %1851 = vmatmul.mubr.f32.gmra.mrb[0].mxu0 %v1740
    %v1852 = vpop.f32.mrb[0].mxu0
    %v1853 = vadd.f32 0.0, %v1852
    %v1854 = vpop.f32.mrb[0].mxu0
    %1855 = vmatprep.mubr.f32.mxu0 0.0
    %1856 = vmatmul.mubr.f32.gmra.mrb[0].mxu0 %v1742
    %v1857 = vpop.f32.mrb[0].mxu0
    %v1858 = vadd.f32 0.0, %v1857
    %v1859 = vpop.f32.mrb[0].mxu0
    %1860 = vmatprep.mubr.f32.mxu0 0.0
    %1861 = vmatmul.mubr.f32.gmra.mrb[0].mxu0 %v1744
    %v1862 = vpop.f32.mrb[0].mxu0
    %v1863 = vadd.f32 0.0, %v1862
    %v1864 = vpop.f32.mrb[0].mxu0
    %1865 = vmatprep.mubr.f32.mxu0 0.0
    %1866 = vmatmul.mubr.f32.gmra.mrb[0].mxu0 %v1746
    %v1867 = vpop.f32.mrb[0].mxu0
    %v1868 = vadd.f32 0.0, %v1867
    %v1869 = vpop.f32.mrb[0].mxu0
    %1870 = vmatprep.mubr.f32.mxu0 0.0
    %1871 = vmatmul.mubr.f32.gmra.mrb[0].mxu0 %v1748
    %v1872 = vpop.f32.mrb[0].mxu0
    %v1873 = vadd.f32 0.0, %v1872
    %v1874 = vpop.f32.mrb[0].mxu0
    %1875 = vmatprep.mubr.f32.mxu0 0.0
    %1876 = vmatmul.mubr.f32.gmra.mrb[0].mxu0 %v1750
    %v1877 = vpop.f32.mrb[0].mxu0
    %v1878 = vadd.f32 0.0, %v1877
    %v1879 = vpop.f32.mrb[0].mxu0
    %1880 = vmatprep.mubr.f32.mxu0 0.0
    %1881 = vmatmul.mubr.f32.gmra.mrb[0].mxu0 %v1752
    %v1882 = vpop.f32.mrb[0].mxu0
    %v1883 = vadd.f32 0.0, %v1882
    %v1884 = vpop.f32.mrb[0].mxu0
    %1885 = vmatprep.mubr.f32.mxu0 0.0
    %1886 = vmatmul.mubr.f32.gmra.mrb[0].mxu0 %v1754
    %v1887 = vpop.f32.mrb[0].mxu0
    %v1888 = vadd.f32 0.0, %v1887
    %v1889 = vpop.f32.mrb[0].mxu0
    %1890 = vmatprep.mubr.f32.mxu0 0.0
    %1891 = vmatmul.mubr.f32.gmra.mrb[0].mxu0 %v1756
    %v1892 = vpop.f32.mrb[0].mxu0
    %v1893 = vadd.f32 0.0, %v1892
    %v1894 = vpop.f32.mrb[0].mxu0
    %1895 = vmatprep.mubr.f32.mxu0 0.0
    %1896 = vmatmul.mubr.f32.gmra.mrb[0].mxu0 %v1758
    %v1897 = vpop.f32.mrb[0].mxu0
    %v1898 = vadd.f32 0.0, %v1897
    %v1899 = vpop.f32.mrb[0].mxu0
    %1900 = vmatprep.mubr.f32.mxu0 0.0
    %1901 = vmatmul.mubr.f32.gmra.mrb[0].mxu0 %v1760
    %v1902 = vpop.f32.mrb[0].mxu0
    %v1903 = vadd.f32 0.0, %v1902
    %v1904 = vpop.f32.mrb[0].mxu0
    %1905 = vmatprep.mubr.f32.mxu0 0.0
    %1906 = vmatmul.mubr.f32.gmra.mrb[0].mxu0 %v1762
    %v1907 = vpop.f32.mrb[0].mxu0
    %v1908 = vadd.f32 0.0, %v1907
    %v1909 = vpop.f32.mrb[0].mxu0
    %1910 = vmatprep.mubr.f32.mxu0 0.0
    %1911 = vmatmul.mubr.f32.gmra.mrb[0].mxu0 %v1764
    %v1912 = vpop.f32.mrb[0].mxu0
    %v1913 = vadd.f32 0.0, %v1912
    %v1914 = vpop.f32.mrb[0].mxu0
    %1915 = vmatprep.mubr.f32.mxu0 0.0
    %1916 = vmatmul.mubr.f32.gmra.mrb[0].mxu0 %v1766
    %v1917 = vpop.f32.mrb[0].mxu0
    %v1918 = vadd.f32 0.0, %v1917
    %v1919 = vpop.f32.mrb[0].mxu0
    %1920 = vmatprep.mubr.f32.mxu0 0.0
    %1921 = vmatmul.mubr.f32.gmra.mrb[0].mxu0 %v1768
    %v1922 = vpop.f32.mrb[0].mxu0
    %v1923 = vadd.f32 0.0, %v1922
    %v1924 = vpop.f32.mrb[0].mxu0
    %1925 = vmatprep.mubr.f32.mxu0 0.0
    %1926 = vmatmul.mubr.f32.gmra.mrb[0].mxu0 %v1770
    %v1927 = vpop.f32.mrb[0].mxu0
    %v1928 = vadd.f32 0.0, %v1927
    %v1929 = vpop.f32.mrb[0].mxu0
    %1930 = vmatprep.mubr.f32.mxu0 0.0
    %1931 = vmatmul.mubr.f32.gmra.mrb[0].mxu0 %v1772
    %v1932 = vpop.f32.mrb[0].mxu0
    %v1933 = vadd.f32 0.0, %v1932
    %v1934 = vpop.f32.mrb[0].mxu0
    %1935 = vmatprep.mubr.f32.mxu0 0.0
    %1936 = vmatmul.mubr.f32.gmra.mrb[0].mxu0 %v1774
    %v1937 = vpop.f32.mrb[0].mxu0
    %v1938 = vadd.f32 0.0, %v1937
    %v1939 = vpop.f32.mrb[0].mxu0
    %1940 = vmatprep.mubr.f32.mxu0 0.0
    %1941 = vmatmul.mubr.f32.gmra.mrb[0].mxu0 %v1776
    %v1942 = vpop.f32.mrb[0].mxu0
    %v1943 = vadd.f32 0.0, %v1942
    %v1944 = vpop.f32.mrb[0].mxu0
    %1945 = vmatprep.mubr.f32.mxu0 0.0
    %1946 = vmatmul.mubr.f32.gmra.mrb[0].mxu0 %v1778
    %v1947 = vpop.f32.mrb[0].mxu0
    %v1948 = vadd.f32 0.0, %v1947
    %v1949 = vpop.f32.mrb[0].mxu0
    %1950 = vmatprep.mubr.f32.mxu0 0.0
    %1951 = vmatmul.mubr.f32.gmra.mrb[0].mxu0 %v1780
    %v1952 = vpop.f32.mrb[0].mxu0
    %v1953 = vpop.f32.mrb[0].mxu0
    %1954 = vmatprep.mubr.f32.mxu0 0.0
    %1955 = vmatmul.mubr.f32.gmra.mrb[0].mxu0 %v1782
    %v1956 = vpop.f32.mrb[0].mxu0
    %v1957 = vadd.f32 0.0, %v1956
    %v1958 = vpop.f32.mrb[0].mxu0
    %1959 = vmatprep.mubr.f32.mxu0 0.0
    %1960 = vmatmul.mubr.f32.gmra.mrb[0].mxu0 %v1784
    %v1961 = vpop.f32.mrb[0].mxu0
    %v1962 = vadd.f32 0.0, %v1961
    %v1963 = vpop.f32.mrb[0].mxu0
    %1964 = vdwg.mxu0
    %v1965 = vsel %vm1739, %v1628, 0
    %v1967 = vsel %vm1739, %v1629, 0
    %v1969 = vsel %vm1739, %v1630, 0
    %v1971 = vsel %vm1739, %v1631, 0
    %v1973 = vsel %vm1739, %v1632, 0
    %v1975 = vsel %vm1739, %v1633, 0
    %v1977 = vsel %vm1739, %v1634, 0
    %v1979 = vsel %vm1739, %v1635, 0
    %v1981 = vsel %vm1739, %v1636, 0
    %v1983 = vsel %vm1739, %v1637, 0
    %v1985 = vsel %vm1739, %v1638, 0
    %v1987 = vsel %vm1739, %v1639, 0
    %v1989 = vsel %vm1739, %v1640, 0
    %v1991 = vsel %vm1739, %v1641, 0
    %v1993 = vsel %vm1739, %v1642, 0
    %v1995 = vsel %vm1739, %v1643, 0
    %v1997 = vsel %vm1739, %v1644, 0
    %v1999 = vsel %vm1739, %v1645, 0
    %v2001 = vsel %vm1739, %v1646, 0
    %v2003 = vsel %vm1739, %v1647, 0
    %v2005 = vsel %vm1739, %v1648, 0
    %v2007 = vsel %vm1739, %v1649, 0
    %v2009 = vsel %vm1739, %v1650, 0
    %2011 = vmatprep.subr.mxu0 0.0
    %2012 = vmatpush1.msra.mxu0 %v1664
    %2013 = vmatprep.subr.mxu0 0.0
    %2014 = vmatpush1.msra.mxu0 0.0
    %2015 = vmatprep.subr.mxu0 0.0
    %2016 = vmatpush1.msra.mxu0 0.0
    %2017 = vmatprep.subr.mxu0 0.0
    %2018 = vmatpush1.msra.mxu0 0.0
    %2019 = vmatprep.subr.mxu0 0.0
    %2020 = vmatpush1.msra.mxu0 0.0
    %2021 = vmatprep.subr.mxu0 0.0
    %2022 = vmatpush1.msra.mxu0 0.0
    %2023 = vmatprep.subr.mxu0 0.0
    %2024 = vmatpush1.msra.mxu0 0.0
    %2025 = vmatprep.subr.mxu0 0.0
    %2026 = vmatpush1.msra.mxu0 0.0
    %2027 = vmatprep.subr.mxu0 0.0
    %2028 = vmatpush1.msra.mxu0 0.0
    %2029 = vmatprep.subr.mxu0 0.0
    %2030 = vmatpush1.msra.mxu0 0.0
    %2031 = vmatprep.subr.mxu0 0.0
    %2032 = vmatpush1.msra.mxu0 0.0
    %2033 = vmatprep.subr.mxu0 0.0
    %2034 = vmatpush1.msra.mxu0 0.0
    %2035 = vmatprep.subr.mxu0 0.0
    %2036 = vmatpush1.msra.mxu0 0.0
    %2037 = vmatprep.subr.mxu0 0.0
    %2038 = vmatpush1.msra.mxu0 0.0
    %2039 = vmatprep.subr.mxu0 0.0
    %2040 = vmatpush1.msra.mxu0 0.0
    %2041 = vmatprep.subr.mxu0 0.0
    %2042 = vmatpush1.msra.mxu0 0.0
    %2043 = vmatprep.subr.mxu0 0.0
    %2044 = vmatpush1.msra.mxu0 0.0
    %2045 = vmatprep.subr.mxu0 0.0
    %2046 = vmatpush1.msra.mxu0 0.0
    %2047 = vmatprep.subr.mxu0 0.0
    %2048 = vmatpush1.msra.mxu0 0.0
    %2049 = vmatprep.subr.mxu0 0.0
    %2050 = vmatpush1.msra.mxu0 0.0
    %2051 = vmatprep.subr.mxu0 0.0
    %2052 = vmatpush1.msra.mxu0 0.0
    %2053 = vmatprep.subr.mxu0 0.0
    %2054 = vmatpush1.msra.mxu0 0.0
    %2055 = vmatprep.subr.mxu0 0.0
    %2056 = vmatpush1.msra.mxu0 0.0
    %2057 = vmatprep.subr.mxu0 0.0
    %2058 = vmatpush1.msra.mxu0 0.0
    %2059 = vmatprep.subr.mxu0 0.0
    %2060 = vmatpush1.msra.mxu0 0.0
    %2061 = vmatprep.subr.mxu0 0.0
    %2062 = vmatpush1.msra.mxu0 0.0
    %2063 = vmatprep.subr.mxu0 0.0
    %2064 = vmatpush1.msra.mxu0 0.0
    %2065 = vmatprep.subr.mxu0 0.0
    %2066 = vmatpush1.msra.mxu0 0.0
    %2067 = vmatprep.subr.mxu0 0.0
    %2068 = vmatpush1.msra.mxu0 0.0
    %2069 = vmatprep.subr.mxu0 0.0
    %2070 = vmatpush1.msra.mxu0 0.0
    %2071 = vmatprep.subr.mxu0 0.0
    %2072 = vmatpush1.msra.mxu0 0.0
    %2073 = vmatprep.subr.mxu0 0.0
    %2074 = vmatpush1.msra.mxu0 0.0
    %2075 = vmatprep.mubr.f32.mxu0 0.0
    %2076 = vmatmul.mubr.f32.gmra.mrb[0].mxu0 %v1965
    %v2077 = vpop.f32.mrb[0].mxu0
    %v2078 = vadd.f32 %v1853, %v2077
    %v2079 = vpop.f32.mrb[0].mxu0
    %2080 = vmatprep.mubr.f32.mxu0 0.0
    %2081 = vmatmul.mubr.f32.gmra.mrb[0].mxu0 %v1967
    %v2082 = vpop.f32.mrb[0].mxu0
    %v2083 = vadd.f32 %v1858, %v2082
    %v2084 = vpop.f32.mrb[0].mxu0
    %2085 = vmatprep.mubr.f32.mxu0 0.0
    %2086 = vmatmul.mubr.f32.gmra.mrb[0].mxu0 %v1969
    %v2087 = vpop.f32.mrb[0].mxu0
    %v2088 = vadd.f32 %v1863, %v2087
    %v2089 = vpop.f32.mrb[0].mxu0
    %2090 = vmatprep.mubr.f32.mxu0 0.0
    %2091 = vmatmul.mubr.f32.gmra.mrb[0].mxu0 %v1971
    %v2092 = vpop.f32.mrb[0].mxu0
    %v2093 = vadd.f32 %v1868, %v2092
    %v2094 = vpop.f32.mrb[0].mxu0
    %2095 = vmatprep.mubr.f32.mxu0 0.0
    %2096 = vmatmul.mubr.f32.gmra.mrb[0].mxu0 %v1973
    %v2097 = vpop.f32.mrb[0].mxu0
    %v2098 = vadd.f32 %v1873, %v2097
    %v2099 = vpop.f32.mrb[0].mxu0
    %2100 = vmatprep.mubr.f32.mxu0 0.0
    %2101 = vmatmul.mubr.f32.gmra.mrb[0].mxu0 %v1975
    %v2102 = vpop.f32.mrb[0].mxu0
    %v2103 = vadd.f32 %v1878, %v2102
    %v2104 = vpop.f32.mrb[0].mxu0
    %2105 = vmatprep.mubr.f32.mxu0 0.0
    %2106 = vmatmul.mubr.f32.gmra.mrb[0].mxu0 %v1977
    %v2107 = vpop.f32.mrb[0].mxu0
    %v2108 = vadd.f32 %v1883, %v2107
    %v2109 = vpop.f32.mrb[0].mxu0
    %2110 = vmatprep.mubr.f32.mxu0 0.0
    %2111 = vmatmul.mubr.f32.gmra.mrb[0].mxu0 %v1979
    %v2112 = vpop.f32.mrb[0].mxu0
    %v2113 = vadd.f32 %v1888, %v2112
    %v2114 = vpop.f32.mrb[0].mxu0
    %2115 = vmatprep.mubr.f32.mxu0 0.0
    %2116 = vmatmul.mubr.f32.gmra.mrb[0].mxu0 %v1981
    %v2117 = vpop.f32.mrb[0].mxu0
    %v2118 = vadd.f32 %v1893, %v2117
    %v2119 = vpop.f32.mrb[0].mxu0
    %2120 = vmatprep.mubr.f32.mxu0 0.0
    %2121 = vmatmul.mubr.f32.gmra.mrb[0].mxu0 %v1983
    %v2122 = vpop.f32.mrb[0].mxu0
    %v2123 = vadd.f32 %v1898, %v2122
    %v2124 = vpop.f32.mrb[0].mxu0
    %2125 = vmatprep.mubr.f32.mxu0 0.0
    %2126 = vmatmul.mubr.f32.gmra.mrb[0].mxu0 %v1985
    %v2127 = vpop.f32.mrb[0].mxu0
    %v2128 = vadd.f32 %v1903, %v2127
    %v2129 = vpop.f32.mrb[0].mxu0
    %2130 = vmatprep.mubr.f32.mxu0 0.0
    %2131 = vmatmul.mubr.f32.gmra.mrb[0].mxu0 %v1987
    %v2132 = vpop.f32.mrb[0].mxu0
    %v2133 = vadd.f32 %v1908, %v2132
    %v2134 = vpop.f32.mrb[0].mxu0
    %2135 = vmatprep.mubr.f32.mxu0 0.0
    %2136 = vmatmul.mubr.f32.gmra.mrb[0].mxu0 %v1989
    %v2137 = vpop.f32.mrb[0].mxu0
    %v2138 = vadd.f32 %v1913, %v2137
    %v2139 = vpop.f32.mrb[0].mxu0
    %2140 = vmatprep.mubr.f32.mxu0 0.0
    %2141 = vmatmul.mubr.f32.gmra.mrb[0].mxu0 %v1991
    %v2142 = vpop.f32.mrb[0].mxu0
    %v2143 = vadd.f32 %v1918, %v2142
    %v2144 = vpop.f32.mrb[0].mxu0
    %2145 = vmatprep.mubr.f32.mxu0 0.0
    %2146 = vmatmul.mubr.f32.gmra.mrb[0].mxu0 %v1993
    %v2147 = vpop.f32.mrb[0].mxu0
    %v2148 = vadd.f32 %v1923, %v2147
    %v2149 = vpop.f32.mrb[0].mxu0
    %2150 = vmatprep.mubr.f32.mxu0 0.0
    %2151 = vmatmul.mubr.f32.gmra.mrb[0].mxu0 %v1995
    %v2152 = vpop.f32.mrb[0].mxu0
    %v2153 = vadd.f32 %v1928, %v2152
    %v2154 = vpop.f32.mrb[0].mxu0
    %2155 = vmatprep.mubr.f32.mxu0 0.0
    %2156 = vmatmul.mubr.f32.gmra.mrb[0].mxu0 %v1997
    %v2157 = vpop.f32.mrb[0].mxu0
    %v2158 = vadd.f32 %v1933, %v2157
    %v2159 = vpop.f32.mrb[0].mxu0
    %2160 = vmatprep.mubr.f32.mxu0 0.0
    %2161 = vmatmul.mubr.f32.gmra.mrb[0].mxu0 %v1999
    %v2162 = vpop.f32.mrb[0].mxu0
    %v2163 = vadd.f32 %v1938, %v2162
    %v2164 = vpop.f32.mrb[0].mxu0
    %2165 = vmatprep.mubr.f32.mxu0 0.0
    %2166 = vmatmul.mubr.f32.gmra.mrb[0].mxu0 %v2001
    %v2167 = vpop.f32.mrb[0].mxu0
    %v2168 = vadd.f32 %v1943, %v2167
    %v2169 = vpop.f32.mrb[0].mxu0
    %2170 = vmatprep.mubr.f32.mxu0 0.0
    %2171 = vmatmul.mubr.f32.gmra.mrb[0].mxu0 %v2003
    %v2172 = vpop.f32.mrb[0].mxu0
    %v2173 = vadd.f32 %v1948, %v2172
    %v2174 = vpop.f32.mrb[0].mxu0
    %2175 = vmatprep.mubr.f32.mxu0 0.0
    %2176 = vmatmul.mubr.f32.gmra.mrb[0].mxu0 %v2005
    %v2177 = vpop.f32.mrb[0].mxu0
    %v2178 = vpop.f32.mrb[0].mxu0
    %2179 = vmatprep.mubr.f32.mxu0 0.0
    %2180 = vmatmul.mubr.f32.gmra.mrb[0].mxu0 %v2007
    %v2181 = vpop.f32.mrb[0].mxu0
    %v2182 = vadd.f32 %v1957, %v2181
    %v2183 = vpop.f32.mrb[0].mxu0
    %2184 = vmatprep.mubr.f32.mxu0 0.0
    %2185 = vmatmul.mubr.f32.gmra.mrb[0].mxu0 %v2009
    %v2186 = vpop.f32.mrb[0].mxu0
    %v2187 = vadd.f32 %v1962, %v2186
    %v2188 = vpop.f32.mrb[0].mxu0
    %2189 = vdwg.mxu0
    %s2190 = scalar_lea.vmem %s3, 16
    %v2191 = vld [vmem:[%s2190] sm:$0xff]
    %vm2192 = vcmask 1043456
    %v2193 = vrot.slane %v1628, 4
    %v2194 = vrot.slane %v1629, 4
    %v2195 = vsel %vm2192, %v2193, %v2194
    %v2196 = vrot.slane %v1630, 4
    %v2197 = vsel %vm2192, %v2194, %v2196
    %v2198 = vrot.slane %v1631, 4
    %v2199 = vsel %vm2192, %v2196, %v2198
    %v2200 = vrot.slane %v1632, 4
    %v2201 = vsel %vm2192, %v2198, %v2200
    %v2202 = vrot.slane %v1633, 4
    %v2203 = vsel %vm2192, %v2200, %v2202
    %v2204 = vrot.slane %v1634, 4
    %v2205 = vsel %vm2192, %v2202, %v2204
    %v2206 = vrot.slane %v1635, 4
    %v2207 = vsel %vm2192, %v2204, %v2206
    %v2208 = vrot.slane %v1636, 4
    %v2209 = vsel %vm2192, %v2206, %v2208
    %v2210 = vrot.slane %v1637, 4
    %v2211 = vsel %vm2192, %v2208, %v2210
    %v2212 = vrot.slane %v1638, 4
    %v2213 = vsel %vm2192, %v2210, %v2212
    %v2214 = vrot.slane %v1639, 4
    %v2215 = vsel %vm2192, %v2212, %v2214
    %v2216 = vrot.slane %v1640, 4
    %v2217 = vsel %vm2192, %v2214, %v2216
    %v2218 = vrot.slane %v1641, 4
    %v2219 = vsel %vm2192, %v2216, %v2218
    %v2220 = vrot.slane %v1642, 4
    %v2221 = vsel %vm2192, %v2218, %v2220
    %v2222 = vrot.slane %v1643, 4
    %v2223 = vsel %vm2192, %v2220, %v2222
    %v2224 = vrot.slane %v1644, 4
    %v2225 = vsel %vm2192, %v2222, %v2224
    %v2226 = vrot.slane %v1645, 4
    %v2227 = vsel %vm2192, %v2224, %v2226
    %v2228 = vrot.slane %v1646, 4
    %v2229 = vsel %vm2192, %v2226, %v2228
    %v2230 = vrot.slane %v1647, 4
    %v2231 = vsel %vm2192, %v2228, %v2230
    %v2232 = vrot.slane %v1648, 4
    %v2233 = vsel %vm2192, %v2230, %v2232
    %v2234 = vrot.slane %v1649, 4
    %v2235 = vsel %vm2192, %v2232, %v2234
    %v2236 = vrot.slane %v1650, 4
    %v2237 = vsel %vm2192, %v2234, %v2236
    %v2238 = vrot.slane %v1651, 4
    %v2239 = vsel %vm2192, %v2236, %v2238
    %v2240 = vsel %vm1739, %v2195, 0
    %v2242 = vsel %vm1739, %v2197, 0
    %v2244 = vsel %vm1739, %v2199, 0
    %v2246 = vsel %vm1739, %v2201, 0
    %v2248 = vsel %vm1739, %v2203, 0
    %v2250 = vsel %vm1739, %v2205, 0
    %v2252 = vsel %vm1739, %v2207, 0
    %v2254 = vsel %vm1739, %v2209, 0
    %v2256 = vsel %vm1739, %v2211, 0
    %v2258 = vsel %vm1739, %v2213, 0
    %v2260 = vsel %vm1739, %v2215, 0
    %v2262 = vsel %vm1739, %v2217, 0
    %v2264 = vsel %vm1739, %v2219, 0
    %v2266 = vsel %vm1739, %v2221, 0
    %v2268 = vsel %vm1739, %v2223, 0
    %v2270 = vsel %vm1739, %v2225, 0
    %v2272 = vsel %vm1739, %v2227, 0
    %v2274 = vsel %vm1739, %v2229, 0
    %v2276 = vsel %vm1739, %v2231, 0
    %v2278 = vsel %vm1739, %v2233, 0
    %v2280 = vsel %vm1739, %v2235, 0
    %v2282 = vsel %vm1739, %v2237, 0
    %v2284 = vsel %vm1739, %v2239, 0
    %2286 = vmatprep.subr.mxu0 0.0
    %2287 = vmatpush1.msra.mxu0 %v2191
    %2288 = vmatprep.subr.mxu0 0.0
    %2289 = vmatpush1.msra.mxu0 0.0
    %2290 = vmatprep.subr.mxu0 0.0
    %2291 = vmatpush1.msra.mxu0 0.0
    %2292 = vmatprep.subr.mxu0 0.0
    %2293 = vmatpush1.msra.mxu0 0.0
    %2294 = vmatprep.subr.mxu0 0.0
    %2295 = vmatpush1.msra.mxu0 0.0
    %2296 = vmatprep.subr.mxu0 0.0
    %2297 = vmatpush1.msra.mxu0 0.0
    %2298 = vmatprep.subr.mxu0 0.0
    %2299 = vmatpush1.msra.mxu0 0.0
    %2300 = vmatprep.subr.mxu0 0.0
    %2301 = vmatpush1.msra.mxu0 0.0
    %2302 = vmatprep.subr.mxu0 0.0
    %2303 = vmatpush1.msra.mxu0 0.0
    %2304 = vmatprep.subr.mxu0 0.0
    %2305 = vmatpush1.msra.mxu0 0.0
    %2306 = vmatprep.subr.mxu0 0.0
    %2307 = vmatpush1.msra.mxu0 0.0
    %2308 = vmatprep.subr.mxu0 0.0
    %2309 = vmatpush1.msra.mxu0 0.0
    %2310 = vmatprep.subr.mxu0 0.0
    %2311 = vmatpush1.msra.mxu0 0.0
    %2312 = vmatprep.subr.mxu0 0.0
    %2313 = vmatpush1.msra.mxu0 0.0
    %2314 = vmatprep.subr.mxu0 0.0
    %2315 = vmatpush1.msra.mxu0 0.0
    %2316 = vmatprep.subr.mxu0 0.0
    %2317 = vmatpush1.msra.mxu0 0.0
    %2318 = vmatprep.subr.mxu0 0.0
    %2319 = vmatpush1.msra.mxu0 0.0
    %2320 = vmatprep.subr.mxu0 0.0
    %2321 = vmatpush1.msra.mxu0 0.0
    %2322 = vmatprep.subr.mxu0 0.0
    %2323 = vmatpush1.msra.mxu0 0.0
    %2324 = vmatprep.subr.mxu0 0.0
    %2325 = vmatpush1.msra.mxu0 0.0
    %2326 = vmatprep.subr.mxu0 0.0
    %2327 = vmatpush1.msra.mxu0 0.0
    %2328 = vmatprep.subr.mxu0 0.0
    %2329 = vmatpush1.msra.mxu0 0.0
    %2330 = vmatprep.subr.mxu0 0.0
    %2331 = vmatpush1.msra.mxu0 0.0
    %2332 = vmatprep.subr.mxu0 0.0
    %2333 = vmatpush1.msra.mxu0 0.0
    %2334 = vmatprep.subr.mxu0 0.0
    %2335 = vmatpush1.msra.mxu0 0.0
    %2336 = vmatprep.subr.mxu0 0.0
    %2337 = vmatpush1.msra.mxu0 0.0
    %2338 = vmatprep.subr.mxu0 0.0
    %2339 = vmatpush1.msra.mxu0 0.0
    %2340 = vmatprep.subr.mxu0 0.0
    %2341 = vmatpush1.msra.mxu0 0.0
    %2342 = vmatprep.subr.mxu0 0.0
    %2343 = vmatpush1.msra.mxu0 0.0
    %2344 = vmatprep.subr.mxu0 0.0
    %2345 = vmatpush1.msra.mxu0 0.0
    %2346 = vmatprep.subr.mxu0 0.0
    %2347 = vmatpush1.msra.mxu0 0.0
    %2348 = vmatprep.subr.mxu0 0.0
    %2349 = vmatpush1.msra.mxu0 0.0
    %2350 = vmatprep.mubr.f32.mxu0 0.0
    %2351 = vmatmul.mubr.f32.gmra.mrb[0].mxu0 %v2240
    %v2352 = vpop.f32.mrb[0].mxu0
    %v2353 = vadd.f32 0.0, %v2352
    %v2354 = vpop.f32.mrb[0].mxu0
    %2355 = vmatprep.mubr.f32.mxu0 0.0
    %2356 = vmatmul.mubr.f32.gmra.mrb[0].mxu0 %v2242
    %v2357 = vpop.f32.mrb[0].mxu0
    %v2358 = vadd.f32 0.0, %v2357
    %v2359 = vpop.f32.mrb[0].mxu0
    %2360 = vmatprep.mubr.f32.mxu0 0.0
    %2361 = vmatmul.mubr.f32.gmra.mrb[0].mxu0 %v2244
    %v2362 = vpop.f32.mrb[0].mxu0
    %v2363 = vadd.f32 0.0, %v2362
    %v2364 = vpop.f32.mrb[0].mxu0
    %2365 = vmatprep.mubr.f32.mxu0 0.0
    %2366 = vmatmul.mubr.f32.gmra.mrb[0].mxu0 %v2246
    %v2367 = vpop.f32.mrb[0].mxu0
    %v2368 = vadd.f32 0.0, %v2367
    %v2369 = vpop.f32.mrb[0].mxu0
    %2370 = vmatprep.mubr.f32.mxu0 0.0
    %2371 = vmatmul.mubr.f32.gmra.mrb[0].mxu0 %v2248
    %v2372 = vpop.f32.mrb[0].mxu0
    %v2373 = vadd.f32 0.0, %v2372
    %v2374 = vpop.f32.mrb[0].mxu0
    %2375 = vmatprep.mubr.f32.mxu0 0.0
    %2376 = vmatmul.mubr.f32.gmra.mrb[0].mxu0 %v2250
    %v2377 = vpop.f32.mrb[0].mxu0
    %v2378 = vadd.f32 0.0, %v2377
    %v2379 = vpop.f32.mrb[0].mxu0
    %2380 = vmatprep.mubr.f32.mxu0 0.0
    %2381 = vmatmul.mubr.f32.gmra.mrb[0].mxu0 %v2252
    %v2382 = vpop.f32.mrb[0].mxu0
    %v2383 = vadd.f32 0.0, %v2382
    %v2384 = vpop.f32.mrb[0].mxu0
    %2385 = vmatprep.mubr.f32.mxu0 0.0
    %2386 = vmatmul.mubr.f32.gmra.mrb[0].mxu0 %v2254
    %v2387 = vpop.f32.mrb[0].mxu0
    %v2388 = vadd.f32 0.0, %v2387
    %v2389 = vpop.f32.mrb[0].mxu0
    %2390 = vmatprep.mubr.f32.mxu0 0.0
    %2391 = vmatmul.mubr.f32.gmra.mrb[0].mxu0 %v2256
    %v2392 = vpop.f32.mrb[0].mxu0
    %v2393 = vadd.f32 0.0, %v2392
    %v2394 = vpop.f32.mrb[0].mxu0
    %2395 = vmatprep.mubr.f32.mxu0 0.0
    %2396 = vmatmul.mubr.f32.gmra.mrb[0].mxu0 %v2258
    %v2397 = vpop.f32.mrb[0].mxu0
    %v2398 = vadd.f32 0.0, %v2397
    %v2399 = vpop.f32.mrb[0].mxu0
    %2400 = vmatprep.mubr.f32.mxu0 0.0
    %2401 = vmatmul.mubr.f32.gmra.mrb[0].mxu0 %v2260
    %v2402 = vpop.f32.mrb[0].mxu0
    %v2403 = vadd.f32 0.0, %v2402
    %v2404 = vpop.f32.mrb[0].mxu0
    %2405 = vmatprep.mubr.f32.mxu0 0.0
    %2406 = vmatmul.mubr.f32.gmra.mrb[0].mxu0 %v2262
    %v2407 = vpop.f32.mrb[0].mxu0
    %v2408 = vadd.f32 0.0, %v2407
    %v2409 = vpop.f32.mrb[0].mxu0
    %2410 = vmatprep.mubr.f32.mxu0 0.0
    %2411 = vmatmul.mubr.f32.gmra.mrb[0].mxu0 %v2264
    %v2412 = vpop.f32.mrb[0].mxu0
    %v2413 = vadd.f32 0.0, %v2412
    %v2414 = vpop.f32.mrb[0].mxu0
    %2415 = vmatprep.mubr.f32.mxu0 0.0
    %2416 = vmatmul.mubr.f32.gmra.mrb[0].mxu0 %v2266
    %v2417 = vpop.f32.mrb[0].mxu0
    %v2418 = vadd.f32 0.0, %v2417
    %v2419 = vpop.f32.mrb[0].mxu0
    %2420 = vmatprep.mubr.f32.mxu0 0.0
    %2421 = vmatmul.mubr.f32.gmra.mrb[0].mxu0 %v2268
    %v2422 = vpop.f32.mrb[0].mxu0
    %v2423 = vadd.f32 0.0, %v2422
    %v2424 = vpop.f32.mrb[0].mxu0
    %2425 = vmatprep.mubr.f32.mxu0 0.0
    %2426 = vmatmul.mubr.f32.gmra.mrb[0].mxu0 %v2270
    %v2427 = vpop.f32.mrb[0].mxu0
    %v2428 = vadd.f32 0.0, %v2427
    %v2429 = vpop.f32.mrb[0].mxu0
    %2430 = vmatprep.mubr.f32.mxu0 0.0
    %2431 = vmatmul.mubr.f32.gmra.mrb[0].mxu0 %v2272
    %v2432 = vpop.f32.mrb[0].mxu0
    %v2433 = vadd.f32 0.0, %v2432
    %v2434 = vpop.f32.mrb[0].mxu0
    %2435 = vmatprep.mubr.f32.mxu0 0.0
    %2436 = vmatmul.mubr.f32.gmra.mrb[0].mxu0 %v2274
    %v2437 = vpop.f32.mrb[0].mxu0
    %v2438 = vadd.f32 0.0, %v2437
    %v2439 = vpop.f32.mrb[0].mxu0
    %2440 = vmatprep.mubr.f32.mxu0 0.0
    %2441 = vmatmul.mubr.f32.gmra.mrb[0].mxu0 %v2276
    %v2442 = vpop.f32.mrb[0].mxu0
    %v2443 = vadd.f32 0.0, %v2442
    %v2444 = vpop.f32.mrb[0].mxu0
    %2445 = vmatprep.mubr.f32.mxu0 0.0
    %2446 = vmatmul.mubr.f32.gmra.mrb[0].mxu0 %v2278
    %v2447 = vpop.f32.mrb[0].mxu0
    %v2448 = vadd.f32 0.0, %v2447
    %v2449 = vpop.f32.mrb[0].mxu0
    %2450 = vmatprep.mubr.f32.mxu0 0.0
    %2451 = vmatmul.mubr.f32.gmra.mrb[0].mxu0 %v2280
    %v2452 = vpop.f32.mrb[0].mxu0
    %v2453 = vpop.f32.mrb[0].mxu0
    %2454 = vmatprep.mubr.f32.mxu0 0.0
    %2455 = vmatmul.mubr.f32.gmra.mrb[0].mxu0 %v2282
    %v2456 = vpop.f32.mrb[0].mxu0
    %v2457 = vadd.f32 0.0, %v2456
    %v2458 = vpop.f32.mrb[0].mxu0
    %2459 = vmatprep.mubr.f32.mxu0 0.0
    %2460 = vmatmul.mubr.f32.gmra.mrb[0].mxu0 %v2284
    %v2461 = vpop.f32.mrb[0].mxu0
    %v2462 = vadd.f32 0.0, %v2461
    %v2463 = vpop.f32.mrb[0].mxu0
    %2464 = vdwg.mxu0
    %v2465 = vadd.f32 %v2078, %v2353
    %v2466 = vadd.f32 %v2083, %v2358
    %v2467 = vadd.f32 %v2088, %v2363
    %v2468 = vadd.f32 %v2093, %v2368
    %v2469 = vadd.f32 %v2098, %v2373
    %v2470 = vadd.f32 %v2103, %v2378
    %v2471 = vadd.f32 %v2108, %v2383
    %v2472 = vadd.f32 %v2113, %v2388
    %v2473 = vadd.f32 %v2118, %v2393
    %v2474 = vadd.f32 %v2123, %v2398
    %v2475 = vadd.f32 %v2128, %v2403
    %v2476 = vadd.f32 %v2133, %v2408
    %v2477 = vadd.f32 %v2138, %v2413
    %v2478 = vadd.f32 %v2143, %v2418
    %v2479 = vadd.f32 %v2148, %v2423
    %v2480 = vadd.f32 %v2153, %v2428
    %v2481 = vadd.f32 %v2158, %v2433
    %v2482 = vadd.f32 %v2163, %v2438
    %v2483 = vadd.f32 %v2168, %v2443
    %v2484 = vadd.f32 %v2173, %v2448
    %v2485 = vadd.f32 %v2182, %v2457
    %v2486 = vadd.f32 %v2187, %v2462
    %s2487 = scalar_lea.vmem %s3, 24
    %v2488 = vld [vmem:[%s2487] sm:$0xff]
    %vm2489 = vcmask 1041408
    %v2490 = vrot.slane %v1628, 6
    %v2491 = vrot.slane %v1629, 6
    %v2492 = vsel %vm2489, %v2490, %v2491
    %v2493 = vrot.slane %v1630, 6
    %v2494 = vsel %vm2489, %v2491, %v2493
    %v2495 = vrot.slane %v1631, 6
    %v2496 = vsel %vm2489, %v2493, %v2495
    %v2497 = vrot.slane %v1632, 6
    %v2498 = vsel %vm2489, %v2495, %v2497
    %v2499 = vrot.slane %v1633, 6
    %v2500 = vsel %vm2489, %v2497, %v2499
    %v2501 = vrot.slane %v1634, 6
    %v2502 = vsel %vm2489, %v2499, %v2501
    %v2503 = vrot.slane %v1635, 6
    %v2504 = vsel %vm2489, %v2501, %v2503
    %v2505 = vrot.slane %v1636, 6
    %v2506 = vsel %vm2489, %v2503, %v2505
    %v2507 = vrot.slane %v1637, 6
    %v2508 = vsel %vm2489, %v2505, %v2507
    %v2509 = vrot.slane %v1638, 6
    %v2510 = vsel %vm2489, %v2507, %v2509
    %v2511 = vrot.slane %v1639, 6
    %v2512 = vsel %vm2489, %v2509, %v2511
    %v2513 = vrot.slane %v1640, 6
    %v2514 = vsel %vm2489, %v2511, %v2513
    %v2515 = vrot.slane %v1641, 6
    %v2516 = vsel %vm2489, %v2513, %v2515
    %v2517 = vrot.slane %v1642, 6
    %v2518 = vsel %vm2489, %v2515, %v2517
    %v2519 = vrot.slane %v1643, 6
    %v2520 = vsel %vm2489, %v2517, %v2519
    %v2521 = vrot.slane %v1644, 6
    %v2522 = vsel %vm2489, %v2519, %v2521
    %v2523 = vrot.slane %v1645, 6
    %v2524 = vsel %vm2489, %v2521, %v2523
    %v2525 = vrot.slane %v1646, 6
    %v2526 = vsel %vm2489, %v2523, %v2525
    %v2527 = vrot.slane %v1647, 6
    %v2528 = vsel %vm2489, %v2525, %v2527
    %v2529 = vrot.slane %v1648, 6
    %v2530 = vsel %vm2489, %v2527, %v2529
    %v2531 = vrot.slane %v1649, 6
    %v2532 = vsel %vm2489, %v2529, %v2531
    %v2533 = vrot.slane %v1650, 6
    %v2534 = vsel %vm2489, %v2531, %v2533
    %v2535 = vrot.slane %v1651, 6
    %v2536 = vsel %vm2489, %v2533, %v2535
    %v2537 = vsel %vm1739, %v2492, 0
    %v2539 = vsel %vm1739, %v2494, 0
    %v2541 = vsel %vm1739, %v2496, 0
    %v2543 = vsel %vm1739, %v2498, 0
    %v2545 = vsel %vm1739, %v2500, 0
    %v2547 = vsel %vm1739, %v2502, 0
    %v2549 = vsel %vm1739, %v2504, 0
    %v2551 = vsel %vm1739, %v2506, 0
    %v2553 = vsel %vm1739, %v2508, 0
    %v2555 = vsel %vm1739, %v2510, 0
    %v2557 = vsel %vm1739, %v2512, 0
    %v2559 = vsel %vm1739, %v2514, 0
    %v2561 = vsel %vm1739, %v2516, 0
    %v2563 = vsel %vm1739, %v2518, 0
    %v2565 = vsel %vm1739, %v2520, 0
    %v2567 = vsel %vm1739, %v2522, 0
    %v2569 = vsel %vm1739, %v2524, 0
    %v2571 = vsel %vm1739, %v2526, 0
    %v2573 = vsel %vm1739, %v2528, 0
    %v2575 = vsel %vm1739, %v2530, 0
    %v2577 = vsel %vm1739, %v2532, 0
    %v2579 = vsel %vm1739, %v2534, 0
    %v2581 = vsel %vm1739, %v2536, 0
    %2583 = vmatprep.subr.mxu0 0.0
    %2584 = vmatpush1.msra.mxu0 %v2488
    %2585 = vmatprep.subr.mxu0 0.0
    %2586 = vmatpush1.msra.mxu0 0.0
    %2587 = vmatprep.subr.mxu0 0.0
    %2588 = vmatpush1.msra.mxu0 0.0
    %2589 = vmatprep.subr.mxu0 0.0
    %2590 = vmatpush1.msra.mxu0 0.0
    %2591 = vmatprep.subr.mxu0 0.0
    %2592 = vmatpush1.msra.mxu0 0.0
    %2593 = vmatprep.subr.mxu0 0.0
    %2594 = vmatpush1.msra.mxu0 0.0
    %2595 = vmatprep.subr.mxu0 0.0
    %2596 = vmatpush1.msra.mxu0 0.0
    %2597 = vmatprep.subr.mxu0 0.0
    %2598 = vmatpush1.msra.mxu0 0.0
    %2599 = vmatprep.subr.mxu0 0.0
    %2600 = vmatpush1.msra.mxu0 0.0
    %2601 = vmatprep.subr.mxu0 0.0
    %2602 = vmatpush1.msra.mxu0 0.0
    %2603 = vmatprep.subr.mxu0 0.0
    %2604 = vmatpush1.msra.mxu0 0.0
    %2605 = vmatprep.subr.mxu0 0.0
    %2606 = vmatpush1.msra.mxu0 0.0
    %2607 = vmatprep.subr.mxu0 0.0
    %2608 = vmatpush1.msra.mxu0 0.0
    %2609 = vmatprep.subr.mxu0 0.0
    %2610 = vmatpush1.msra.mxu0 0.0
    %2611 = vmatprep.subr.mxu0 0.0
    %2612 = vmatpush1.msra.mxu0 0.0
    %2613 = vmatprep.subr.mxu0 0.0
    %2614 = vmatpush1.msra.mxu0 0.0
    %2615 = vmatprep.subr.mxu0 0.0
    %2616 = vmatpush1.msra.mxu0 0.0
    %2617 = vmatprep.subr.mxu0 0.0
    %2618 = vmatpush1.msra.mxu0 0.0
    %2619 = vmatprep.subr.mxu0 0.0
    %2620 = vmatpush1.msra.mxu0 0.0
    %2621 = vmatprep.subr.mxu0 0.0
    %2622 = vmatpush1.msra.mxu0 0.0
    %2623 = vmatprep.subr.mxu0 0.0
    %2624 = vmatpush1.msra.mxu0 0.0
    %2625 = vmatprep.subr.mxu0 0.0
    %2626 = vmatpush1.msra.mxu0 0.0
    %2627 = vmatprep.subr.mxu0 0.0
    %2628 = vmatpush1.msra.mxu0 0.0
    %2629 = vmatprep.subr.mxu0 0.0
    %2630 = vmatpush1.msra.mxu0 0.0
    %2631 = vmatprep.subr.mxu0 0.0
    %2632 = vmatpush1.msra.mxu0 0.0
    %2633 = vmatprep.subr.mxu0 0.0
    %2634 = vmatpush1.msra.mxu0 0.0
    %2635 = vmatprep.subr.mxu0 0.0
    %2636 = vmatpush1.msra.mxu0 0.0
    %2637 = vmatprep.subr.mxu0 0.0
    %2638 = vmatpush1.msra.mxu0 0.0
    %2639 = vmatprep.subr.mxu0 0.0
    %2640 = vmatpush1.msra.mxu0 0.0
    %2641 = vmatprep.subr.mxu0 0.0
    %2642 = vmatpush1.msra.mxu0 0.0
    %2643 = vmatprep.subr.mxu0 0.0
    %2644 = vmatpush1.msra.mxu0 0.0
    %2645 = vmatprep.subr.mxu0 0.0
    %2646 = vmatpush1.msra.mxu0 0.0
    %2647 = vmatprep.mubr.f32.mxu0 0.0
    %2648 = vmatmul.mubr.f32.gmra.mrb[0].mxu0 %v2537
    %v2649 = vpop.f32.mrb[0].mxu0
    %v2650 = vadd.f32 0.0, %v2649
    %v2651 = vpop.f32.mrb[0].mxu0
    %2652 = vmatprep.mubr.f32.mxu0 0.0
    %2653 = vmatmul.mubr.f32.gmra.mrb[0].mxu0 %v2539
    %v2654 = vpop.f32.mrb[0].mxu0
    %v2655 = vadd.f32 0.0, %v2654
    %v2656 = vpop.f32.mrb[0].mxu0
    %2657 = vmatprep.mubr.f32.mxu0 0.0
    %2658 = vmatmul.mubr.f32.gmra.mrb[0].mxu0 %v2541
    %v2659 = vpop.f32.mrb[0].mxu0
    %v2660 = vadd.f32 0.0, %v2659
    %v2661 = vpop.f32.mrb[0].mxu0
    %2662 = vmatprep.mubr.f32.mxu0 0.0
    %2663 = vmatmul.mubr.f32.gmra.mrb[0].mxu0 %v2543
    %v2664 = vpop.f32.mrb[0].mxu0
    %v2665 = vadd.f32 0.0, %v2664
    %v2666 = vpop.f32.mrb[0].mxu0
    %2667 = vmatprep.mubr.f32.mxu0 0.0
    %2668 = vmatmul.mubr.f32.gmra.mrb[0].mxu0 %v2545
    %v2669 = vpop.f32.mrb[0].mxu0
    %v2670 = vadd.f32 0.0, %v2669
    %v2671 = vpop.f32.mrb[0].mxu0
    %2672 = vmatprep.mubr.f32.mxu0 0.0
    %2673 = vmatmul.mubr.f32.gmra.mrb[0].mxu0 %v2547
    %v2674 = vpop.f32.mrb[0].mxu0
    %v2675 = vadd.f32 0.0, %v2674
    %v2676 = vpop.f32.mrb[0].mxu0
    %2677 = vmatprep.mubr.f32.mxu0 0.0
    %2678 = vmatmul.mubr.f32.gmra.mrb[0].mxu0 %v2549
    %v2679 = vpop.f32.mrb[0].mxu0
    %v2680 = vadd.f32 0.0, %v2679
    %v2681 = vpop.f32.mrb[0].mxu0
    %2682 = vmatprep.mubr.f32.mxu0 0.0
    %2683 = vmatmul.mubr.f32.gmra.mrb[0].mxu0 %v2551
    %v2684 = vpop.f32.mrb[0].mxu0
    %v2685 = vadd.f32 0.0, %v2684
    %v2686 = vpop.f32.mrb[0].mxu0
    %2687 = vmatprep.mubr.f32.mxu0 0.0
    %2688 = vmatmul.mubr.f32.gmra.mrb[0].mxu0 %v2553
    %v2689 = vpop.f32.mrb[0].mxu0
    %v2690 = vadd.f32 0.0, %v2689
    %v2691 = vpop.f32.mrb[0].mxu0
    %2692 = vmatprep.mubr.f32.mxu0 0.0
    %2693 = vmatmul.mubr.f32.gmra.mrb[0].mxu0 %v2555
    %v2694 = vpop.f32.mrb[0].mxu0
    %v2695 = vadd.f32 0.0, %v2694
    %v2696 = vpop.f32.mrb[0].mxu0
    %2697 = vmatprep.mubr.f32.mxu0 0.0
    %2698 = vmatmul.mubr.f32.gmra.mrb[0].mxu0 %v2557
    %v2699 = vpop.f32.mrb[0].mxu0
    %v2700 = vadd.f32 0.0, %v2699
    %v2701 = vpop.f32.mrb[0].mxu0
    %2702 = vmatprep.mubr.f32.mxu0 0.0
    %2703 = vmatmul.mubr.f32.gmra.mrb[0].mxu0 %v2559
    %v2704 = vpop.f32.mrb[0].mxu0
    %v2705 = vadd.f32 0.0, %v2704
    %v2706 = vpop.f32.mrb[0].mxu0
    %2707 = vmatprep.mubr.f32.mxu0 0.0
    %2708 = vmatmul.mubr.f32.gmra.mrb[0].mxu0 %v2561
    %v2709 = vpop.f32.mrb[0].mxu0
    %v2710 = vadd.f32 0.0, %v2709
    %v2711 = vpop.f32.mrb[0].mxu0
    %2712 = vmatprep.mubr.f32.mxu0 0.0
    %2713 = vmatmul.mubr.f32.gmra.mrb[0].mxu0 %v2563
    %v2714 = vpop.f32.mrb[0].mxu0
    %v2715 = vadd.f32 0.0, %v2714
    %v2716 = vpop.f32.mrb[0].mxu0
    %2717 = vmatprep.mubr.f32.mxu0 0.0
    %2718 = vmatmul.mubr.f32.gmra.mrb[0].mxu0 %v2565
    %v2719 = vpop.f32.mrb[0].mxu0
    %v2720 = vadd.f32 0.0, %v2719
    %v2721 = vpop.f32.mrb[0].mxu0
    %2722 = vmatprep.mubr.f32.mxu0 0.0
    %2723 = vmatmul.mubr.f32.gmra.mrb[0].mxu0 %v2567
    %v2724 = vpop.f32.mrb[0].mxu0
    %v2725 = vadd.f32 0.0, %v2724
    %v2726 = vpop.f32.mrb[0].mxu0
    %2727 = vmatprep.mubr.f32.mxu0 0.0
    %2728 = vmatmul.mubr.f32.gmra.mrb[0].mxu0 %v2569
    %v2729 = vpop.f32.mrb[0].mxu0
    %v2730 = vadd.f32 0.0, %v2729
    %v2731 = vpop.f32.mrb[0].mxu0
    %2732 = vmatprep.mubr.f32.mxu0 0.0
    %2733 = vmatmul.mubr.f32.gmra.mrb[0].mxu0 %v2571
    %v2734 = vpop.f32.mrb[0].mxu0
    %v2735 = vadd.f32 0.0, %v2734
    %v2736 = vpop.f32.mrb[0].mxu0
    %2737 = vmatprep.mubr.f32.mxu0 0.0
    %2738 = vmatmul.mubr.f32.gmra.mrb[0].mxu0 %v2573
    %v2739 = vpop.f32.mrb[0].mxu0
    %v2740 = vadd.f32 0.0, %v2739
    %v2741 = vpop.f32.mrb[0].mxu0
    %2742 = vmatprep.mubr.f32.mxu0 0.0
    %2743 = vmatmul.mubr.f32.gmra.mrb[0].mxu0 %v2575
    %v2744 = vpop.f32.mrb[0].mxu0
    %v2745 = vadd.f32 0.0, %v2744
    %v2746 = vpop.f32.mrb[0].mxu0
    %2747 = vmatprep.mubr.f32.mxu0 0.0
    %2748 = vmatmul.mubr.f32.gmra.mrb[0].mxu0 %v2577
    %v2749 = vpop.f32.mrb[0].mxu0
    %v2750 = vpop.f32.mrb[0].mxu0
    %2751 = vmatprep.mubr.f32.mxu0 0.0
    %2752 = vmatmul.mubr.f32.gmra.mrb[0].mxu0 %v2579
    %v2753 = vpop.f32.mrb[0].mxu0
    %v2754 = vadd.f32 0.0, %v2753
    %v2755 = vpop.f32.mrb[0].mxu0
    %2756 = vmatprep.mubr.f32.mxu0 0.0
    %2757 = vmatmul.mubr.f32.gmra.mrb[0].mxu0 %v2581
    %v2758 = vpop.f32.mrb[0].mxu0
    %v2759 = vadd.f32 0.0, %v2758
    %v2760 = vpop.f32.mrb[0].mxu0
    %2761 = vdwg.mxu0
    %v2762 = vadd.f32 %v2465, %v2650
    %v2763 = vadd.f32 %v2466, %v2655
    %v2764 = vadd.f32 %v2467, %v2660
    %v2765 = vadd.f32 %v2468, %v2665
    %v2766 = vadd.f32 %v2469, %v2670
    %v2767 = vadd.f32 %v2470, %v2675
    %v2768 = vadd.f32 %v2471, %v2680
    %v2769 = vadd.f32 %v2472, %v2685
    %v2770 = vadd.f32 %v2473, %v2690
    %v2771 = vadd.f32 %v2474, %v2695
    %v2772 = vadd.f32 %v2475, %v2700
    %v2773 = vadd.f32 %v2476, %v2705
    %v2774 = vadd.f32 %v2477, %v2710
    %v2775 = vadd.f32 %v2478, %v2715
    %v2776 = vadd.f32 %v2479, %v2720
    %v2777 = vadd.f32 %v2480, %v2725
    %v2778 = vadd.f32 %v2481, %v2730
    %v2779 = vadd.f32 %v2482, %v2735
    %v2780 = vadd.f32 %v2483, %v2740
    %v2781 = vadd.f32 %v2484, %v2745
    %v2782 = vadd.f32 %v2485, %v2754
    %v2783 = vadd.f32 %v2486, %v2759
    %s2784 = scalar_lea.vmem %s3, 32
    %v2785 = vld [vmem:[%s2784] sm:$0xff]
    %v2786 = vsel %vm1739, %v1651, 0
    %2788 = vmatprep.subr.mxu0 0.0
    %2789 = vmatpush1.msra.mxu0 %v2785
    %2790 = vmatprep.subr.mxu0 0.0
    %2791 = vmatpush1.msra.mxu0 0.0
    %2792 = vmatprep.subr.mxu0 0.0
    %2793 = vmatpush1.msra.mxu0 0.0
    %2794 = vmatprep.subr.mxu0 0.0
    %2795 = vmatpush1.msra.mxu0 0.0
    %2796 = vmatprep.subr.mxu0 0.0
    %2797 = vmatpush1.msra.mxu0 0.0
    %2798 = vmatprep.subr.mxu0 0.0
    %2799 = vmatpush1.msra.mxu0 0.0
    %2800 = vmatprep.subr.mxu0 0.0
    %2801 = vmatpush1.msra.mxu0 0.0
    %2802 = vmatprep.subr.mxu0 0.0
    %2803 = vmatpush1.msra.mxu0 0.0
    %2804 = vmatprep.subr.mxu0 0.0
    %2805 = vmatpush1.msra.mxu0 0.0
    %2806 = vmatprep.subr.mxu0 0.0
    %2807 = vmatpush1.msra.mxu0 0.0
    %2808 = vmatprep.subr.mxu0 0.0
    %2809 = vmatpush1.msra.mxu0 0.0
    %2810 = vmatprep.subr.mxu0 0.0
    %2811 = vmatpush1.msra.mxu0 0.0
    %2812 = vmatprep.subr.mxu0 0.0
    %2813 = vmatpush1.msra.mxu0 0.0
    %2814 = vmatprep.subr.mxu0 0.0
    %2815 = vmatpush1.msra.mxu0 0.0
    %2816 = vmatprep.subr.mxu0 0.0
    %2817 = vmatpush1.msra.mxu0 0.0
    %2818 = vmatprep.subr.mxu0 0.0
    %2819 = vmatpush1.msra.mxu0 0.0
    %2820 = vmatprep.subr.mxu0 0.0
    %2821 = vmatpush1.msra.mxu0 0.0
    %2822 = vmatprep.subr.mxu0 0.0
    %2823 = vmatpush1.msra.mxu0 0.0
    %2824 = vmatprep.subr.mxu0 0.0
    %2825 = vmatpush1.msra.mxu0 0.0
    %2826 = vmatprep.subr.mxu0 0.0
    %2827 = vmatpush1.msra.mxu0 0.0
    %2828 = vmatprep.subr.mxu0 0.0
    %2829 = vmatpush1.msra.mxu0 0.0
    %2830 = vmatprep.subr.mxu0 0.0
    %2831 = vmatpush1.msra.mxu0 0.0
    %2832 = vmatprep.subr.mxu0 0.0
    %2833 = vmatpush1.msra.mxu0 0.0
    %2834 = vmatprep.subr.mxu0 0.0
    %2835 = vmatpush1.msra.mxu0 0.0
    %2836 = vmatprep.subr.mxu0 0.0
    %2837 = vmatpush1.msra.mxu0 0.0
    %2838 = vmatprep.subr.mxu0 0.0
    %2839 = vmatpush1.msra.mxu0 0.0
    %2840 = vmatprep.subr.mxu0 0.0
    %2841 = vmatpush1.msra.mxu0 0.0
    %2842 = vmatprep.subr.mxu0 0.0
    %2843 = vmatpush1.msra.mxu0 0.0
    %2844 = vmatprep.subr.mxu0 0.0
    %2845 = vmatpush1.msra.mxu0 0.0
    %2846 = vmatprep.subr.mxu0 0.0
    %2847 = vmatpush1.msra.mxu0 0.0
    %2848 = vmatprep.subr.mxu0 0.0
    %2849 = vmatpush1.msra.mxu0 0.0
    %2850 = vmatprep.subr.mxu0 0.0
    %2851 = vmatpush1.msra.mxu0 0.0
    %2852 = vmatprep.mubr.f32.mxu0 0.0
    %2853 = vmatmul.mubr.f32.gmra.mrb[0].mxu0 %v1967
    %v2854 = vpop.f32.mrb[0].mxu0
    %v2855 = vadd.f32 0.0, %v2854
    %v2856 = vpop.f32.mrb[0].mxu0
    %2857 = vmatprep.mubr.f32.mxu0 0.0
    %2858 = vmatmul.mubr.f32.gmra.mrb[0].mxu0 %v1969
    %v2859 = vpop.f32.mrb[0].mxu0
    %v2860 = vadd.f32 0.0, %v2859
    %v2861 = vpop.f32.mrb[0].mxu0
    %2862 = vmatprep.mubr.f32.mxu0 0.0
    %2863 = vmatmul.mubr.f32.gmra.mrb[0].mxu0 %v1971
    %v2864 = vpop.f32.mrb[0].mxu0
    %v2865 = vadd.f32 0.0, %v2864
    %v2866 = vpop.f32.mrb[0].mxu0
    %2867 = vmatprep.mubr.f32.mxu0 0.0
    %2868 = vmatmul.mubr.f32.gmra.mrb[0].mxu0 %v1973
    %v2869 = vpop.f32.mrb[0].mxu0
    %v2870 = vadd.f32 0.0, %v2869
    %v2871 = vpop.f32.mrb[0].mxu0
    %2872 = vmatprep.mubr.f32.mxu0 0.0
    %2873 = vmatmul.mubr.f32.gmra.mrb[0].mxu0 %v1975
    %v2874 = vpop.f32.mrb[0].mxu0
    %v2875 = vadd.f32 0.0, %v2874
    %v2876 = vpop.f32.mrb[0].mxu0
    %2877 = vmatprep.mubr.f32.mxu0 0.0
    %2878 = vmatmul.mubr.f32.gmra.mrb[0].mxu0 %v1977
    %v2879 = vpop.f32.mrb[0].mxu0
    %v2880 = vadd.f32 0.0, %v2879
    %v2881 = vpop.f32.mrb[0].mxu0
    %2882 = vmatprep.mubr.f32.mxu0 0.0
    %2883 = vmatmul.mubr.f32.gmra.mrb[0].mxu0 %v1979
    %v2884 = vpop.f32.mrb[0].mxu0
    %v2885 = vadd.f32 0.0, %v2884
    %v2886 = vpop.f32.mrb[0].mxu0
    %2887 = vmatprep.mubr.f32.mxu0 0.0
    %2888 = vmatmul.mubr.f32.gmra.mrb[0].mxu0 %v1981
    %v2889 = vpop.f32.mrb[0].mxu0
    %v2890 = vadd.f32 0.0, %v2889
    %v2891 = vpop.f32.mrb[0].mxu0
    %2892 = vmatprep.mubr.f32.mxu0 0.0
    %2893 = vmatmul.mubr.f32.gmra.mrb[0].mxu0 %v1983
    %v2894 = vpop.f32.mrb[0].mxu0
    %v2895 = vadd.f32 0.0, %v2894
    %v2896 = vpop.f32.mrb[0].mxu0
    %2897 = vmatprep.mubr.f32.mxu0 0.0
    %2898 = vmatmul.mubr.f32.gmra.mrb[0].mxu0 %v1985
    %v2899 = vpop.f32.mrb[0].mxu0
    %v2900 = vadd.f32 0.0, %v2899
    %v2901 = vpop.f32.mrb[0].mxu0
    %2902 = vmatprep.mubr.f32.mxu0 0.0
    %2903 = vmatmul.mubr.f32.gmra.mrb[0].mxu0 %v1987
    %v2904 = vpop.f32.mrb[0].mxu0
    %v2905 = vadd.f32 0.0, %v2904
    %v2906 = vpop.f32.mrb[0].mxu0
    %2907 = vmatprep.mubr.f32.mxu0 0.0
    %2908 = vmatmul.mubr.f32.gmra.mrb[0].mxu0 %v1989
    %v2909 = vpop.f32.mrb[0].mxu0
    %v2910 = vadd.f32 0.0, %v2909
    %v2911 = vpop.f32.mrb[0].mxu0
    %2912 = vmatprep.mubr.f32.mxu0 0.0
    %2913 = vmatmul.mubr.f32.gmra.mrb[0].mxu0 %v1991
    %v2914 = vpop.f32.mrb[0].mxu0
    %v2915 = vadd.f32 0.0, %v2914
    %v2916 = vpop.f32.mrb[0].mxu0
    %2917 = vmatprep.mubr.f32.mxu0 0.0
    %2918 = vmatmul.mubr.f32.gmra.mrb[0].mxu0 %v1993
    %v2919 = vpop.f32.mrb[0].mxu0
    %v2920 = vadd.f32 0.0, %v2919
    %v2921 = vpop.f32.mrb[0].mxu0
    %2922 = vmatprep.mubr.f32.mxu0 0.0
    %2923 = vmatmul.mubr.f32.gmra.mrb[0].mxu0 %v1995
    %v2924 = vpop.f32.mrb[0].mxu0
    %v2925 = vadd.f32 0.0, %v2924
    %v2926 = vpop.f32.mrb[0].mxu0
    %2927 = vmatprep.mubr.f32.mxu0 0.0
    %2928 = vmatmul.mubr.f32.gmra.mrb[0].mxu0 %v1997
    %v2929 = vpop.f32.mrb[0].mxu0
    %v2930 = vadd.f32 0.0, %v2929
    %v2931 = vpop.f32.mrb[0].mxu0
    %2932 = vmatprep.mubr.f32.mxu0 0.0
    %2933 = vmatmul.mubr.f32.gmra.mrb[0].mxu0 %v1999
    %v2934 = vpop.f32.mrb[0].mxu0
    %v2935 = vadd.f32 0.0, %v2934
    %v2936 = vpop.f32.mrb[0].mxu0
    %2937 = vmatprep.mubr.f32.mxu0 0.0
    %2938 = vmatmul.mubr.f32.gmra.mrb[0].mxu0 %v2001
    %v2939 = vpop.f32.mrb[0].mxu0
    %v2940 = vadd.f32 0.0, %v2939
    %v2941 = vpop.f32.mrb[0].mxu0
    %2942 = vmatprep.mubr.f32.mxu0 0.0
    %2943 = vmatmul.mubr.f32.gmra.mrb[0].mxu0 %v2003
    %v2944 = vpop.f32.mrb[0].mxu0
    %v2945 = vadd.f32 0.0, %v2944
    %v2946 = vpop.f32.mrb[0].mxu0
    %2947 = vmatprep.mubr.f32.mxu0 0.0
    %2948 = vmatmul.mubr.f32.gmra.mrb[0].mxu0 %v2005
    %v2949 = vpop.f32.mrb[0].mxu0
    %v2950 = vadd.f32 0.0, %v2949
    %v2951 = vpop.f32.mrb[0].mxu0
    %2952 = vmatprep.mubr.f32.mxu0 0.0
    %2953 = vmatmul.mubr.f32.gmra.mrb[0].mxu0 %v2007
    %v2954 = vpop.f32.mrb[0].mxu0
    %v2955 = vpop.f32.mrb[0].mxu0
    %2956 = vmatprep.mubr.f32.mxu0 0.0
    %2957 = vmatmul.mubr.f32.gmra.mrb[0].mxu0 %v2009
    %v2958 = vpop.f32.mrb[0].mxu0
    %v2959 = vadd.f32 0.0, %v2958
    %v2960 = vpop.f32.mrb[0].mxu0
    %2961 = vmatprep.mubr.f32.mxu0 0.0
    %2962 = vmatmul.mubr.f32.gmra.mrb[0].mxu0 %v2786
    %v2963 = vpop.f32.mrb[0].mxu0
    %v2964 = vadd.f32 0.0, %v2963
    %v2965 = vpop.f32.mrb[0].mxu0
    %2966 = vdwg.mxu0
    %v2967 = vadd.f32 %v2762, %v2855
    %v2968 = vadd.f32 %v2763, %v2860
    %v2969 = vadd.f32 %v2764, %v2865
    %v2970 = vadd.f32 %v2765, %v2870
    %v2971 = vadd.f32 %v2766, %v2875
    %v2972 = vadd.f32 %v2767, %v2880
    %v2973 = vadd.f32 %v2768, %v2885
    %v2974 = vadd.f32 %v2769, %v2890
    %v2975 = vadd.f32 %v2770, %v2895
    %v2976 = vadd.f32 %v2771, %v2900
    %v2977 = vadd.f32 %v2772, %v2905
    %v2978 = vadd.f32 %v2773, %v2910
    %v2979 = vadd.f32 %v2774, %v2915
    %v2980 = vadd.f32 %v2775, %v2920
    %v2981 = vadd.f32 %v2776, %v2925
    %v2982 = vadd.f32 %v2777, %v2930
    %v2983 = vadd.f32 %v2778, %v2935
    %v2984 = vadd.f32 %v2779, %v2940
    %v2985 = vadd.f32 %v2780, %v2945
    %v2986 = vadd.f32 %v2781, %v2950
    %v2987 = vadd.f32 %v2782, %v2959
    %v2988 = vadd.f32 %v2783, %v2964
    %s2989 = scalar_lea.vmem %s3, 40
    %v2990 = vld [vmem:[%s2989] sm:$0xff]
    %v2992 = vsel %vm1739, %v1652, 0
    %v2995 = vsel %vm1739, %v1653, 0
    %2997 = vmatprep.subr.mxu0 0.0
    %2998 = vmatpush1.msra.mxu0 %v2990
    %2999 = vmatprep.subr.mxu0 0.0
    %3000 = vmatpush1.msra.mxu0 0.0
    %3001 = vmatprep.subr.mxu0 0.0
    %3002 = vmatpush1.msra.mxu0 0.0
    %3003 = vmatprep.subr.mxu0 0.0
    %3004 = vmatpush1.msra.mxu0 0.0
    %3005 = vmatprep.subr.mxu0 0.0
    %3006 = vmatpush1.msra.mxu0 0.0
    %3007 = vmatprep.subr.mxu0 0.0
    %3008 = vmatpush1.msra.mxu0 0.0
    %3009 = vmatprep.subr.mxu0 0.0
    %3010 = vmatpush1.msra.mxu0 0.0
    %3011 = vmatprep.subr.mxu0 0.0
    %3012 = vmatpush1.msra.mxu0 0.0
    %3013 = vmatprep.subr.mxu0 0.0
    %3014 = vmatpush1.msra.mxu0 0.0
    %3015 = vmatprep.subr.mxu0 0.0
    %3016 = vmatpush1.msra.mxu0 0.0
    %3017 = vmatprep.subr.mxu0 0.0
    %3018 = vmatpush1.msra.mxu0 0.0
    %3019 = vmatprep.subr.mxu0 0.0
    %3020 = vmatpush1.msra.mxu0 0.0
    %3021 = vmatprep.subr.mxu0 0.0
    %3022 = vmatpush1.msra.mxu0 0.0
    %3023 = vmatprep.subr.mxu0 0.0
    %3024 = vmatpush1.msra.mxu0 0.0
    %3025 = vmatprep.subr.mxu0 0.0
    %3026 = vmatpush1.msra.mxu0 0.0
    %3027 = vmatprep.subr.mxu0 0.0
    %3028 = vmatpush1.msra.mxu0 0.0
    %3029 = vmatprep.subr.mxu0 0.0
    %3030 = vmatpush1.msra.mxu0 0.0
    %3031 = vmatprep.subr.mxu0 0.0
    %3032 = vmatpush1.msra.mxu0 0.0
    %3033 = vmatprep.subr.mxu0 0.0
    %3034 = vmatpush1.msra.mxu0 0.0
    %3035 = vmatprep.subr.mxu0 0.0
    %3036 = vmatpush1.msra.mxu0 0.0
    %3037 = vmatprep.subr.mxu0 0.0
    %3038 = vmatpush1.msra.mxu0 0.0
    %3039 = vmatprep.subr.mxu0 0.0
    %3040 = vmatpush1.msra.mxu0 0.0
    %3041 = vmatprep.subr.mxu0 0.0
    %3042 = vmatpush1.msra.mxu0 0.0
    %3043 = vmatprep.subr.mxu0 0.0
    %3044 = vmatpush1.msra.mxu0 0.0
    %3045 = vmatprep.subr.mxu0 0.0
    %3046 = vmatpush1.msra.mxu0 0.0
    %3047 = vmatprep.subr.mxu0 0.0
    %3048 = vmatpush1.msra.mxu0 0.0
    %3049 = vmatprep.subr.mxu0 0.0
    %3050 = vmatpush1.msra.mxu0 0.0
    %3051 = vmatprep.subr.mxu0 0.0
    %3052 = vmatpush1.msra.mxu0 0.0
    %3053 = vmatprep.subr.mxu0 0.0
    %3054 = vmatpush1.msra.mxu0 0.0
    %3055 = vmatprep.subr.mxu0 0.0
    %3056 = vmatpush1.msra.mxu0 0.0
    %3057 = vmatprep.subr.mxu0 0.0
    %3058 = vmatpush1.msra.mxu0 0.0
    %3059 = vmatprep.subr.mxu0 0.0
    %3060 = vmatpush1.msra.mxu0 0.0
    %3061 = vmatprep.mubr.f32.mxu0 0.0
    %3062 = vmatmul.mubr.f32.gmra.mrb[0].mxu0 %v1971
    %v3063 = vpop.f32.mrb[0].mxu0
    %v3064 = vadd.f32 0.0, %v3063
    %v3065 = vpop.f32.mrb[0].mxu0
    %3066 = vmatprep.mubr.f32.mxu0 0.0
    %3067 = vmatmul.mubr.f32.gmra.mrb[0].mxu0 %v1973
    %v3068 = vpop.f32.mrb[0].mxu0
    %v3069 = vadd.f32 0.0, %v3068
    %v3070 = vpop.f32.mrb[0].mxu0
    %3071 = vmatprep.mubr.f32.mxu0 0.0
    %3072 = vmatmul.mubr.f32.gmra.mrb[0].mxu0 %v1975
    %v3073 = vpop.f32.mrb[0].mxu0
    %v3074 = vadd.f32 0.0, %v3073
    %v3075 = vpop.f32.mrb[0].mxu0
    %3076 = vmatprep.mubr.f32.mxu0 0.0
    %3077 = vmatmul.mubr.f32.gmra.mrb[0].mxu0 %v1977
    %v3078 = vpop.f32.mrb[0].mxu0
    %v3079 = vadd.f32 0.0, %v3078
    %v3080 = vpop.f32.mrb[0].mxu0
    %3081 = vmatprep.mubr.f32.mxu0 0.0
    %3082 = vmatmul.mubr.f32.gmra.mrb[0].mxu0 %v1979
    %v3083 = vpop.f32.mrb[0].mxu0
    %v3084 = vadd.f32 0.0, %v3083
    %v3085 = vpop.f32.mrb[0].mxu0
    %3086 = vmatprep.mubr.f32.mxu0 0.0
    %3087 = vmatmul.mubr.f32.gmra.mrb[0].mxu0 %v1981
    %v3088 = vpop.f32.mrb[0].mxu0
    %v3089 = vadd.f32 0.0, %v3088
    %v3090 = vpop.f32.mrb[0].mxu0
    %3091 = vmatprep.mubr.f32.mxu0 0.0
    %3092 = vmatmul.mubr.f32.gmra.mrb[0].mxu0 %v1983
    %v3093 = vpop.f32.mrb[0].mxu0
    %v3094 = vadd.f32 0.0, %v3093
    %v3095 = vpop.f32.mrb[0].mxu0
    %3096 = vmatprep.mubr.f32.mxu0 0.0
    %3097 = vmatmul.mubr.f32.gmra.mrb[0].mxu0 %v1985
    %v3098 = vpop.f32.mrb[0].mxu0
    %v3099 = vadd.f32 0.0, %v3098
    %v3100 = vpop.f32.mrb[0].mxu0
    %3101 = vmatprep.mubr.f32.mxu0 0.0
    %3102 = vmatmul.mubr.f32.gmra.mrb[0].mxu0 %v1987
    %v3103 = vpop.f32.mrb[0].mxu0
    %v3104 = vadd.f32 0.0, %v3103
    %v3105 = vpop.f32.mrb[0].mxu0
    %3106 = vmatprep.mubr.f32.mxu0 0.0
    %3107 = vmatmul.mubr.f32.gmra.mrb[0].mxu0 %v1989
    %v3108 = vpop.f32.mrb[0].mxu0
    %v3109 = vadd.f32 0.0, %v3108
    %v3110 = vpop.f32.mrb[0].mxu0
    %3111 = vmatprep.mubr.f32.mxu0 0.0
    %3112 = vmatmul.mubr.f32.gmra.mrb[0].mxu0 %v1991
    %v3113 = vpop.f32.mrb[0].mxu0
    %v3114 = vadd.f32 0.0, %v3113
    %v3115 = vpop.f32.mrb[0].mxu0
    %3116 = vmatprep.mubr.f32.mxu0 0.0
    %3117 = vmatmul.mubr.f32.gmra.mrb[0].mxu0 %v1993
    %v3118 = vpop.f32.mrb[0].mxu0
    %v3119 = vadd.f32 0.0, %v3118
    %v3120 = vpop.f32.mrb[0].mxu0
    %3121 = vmatprep.mubr.f32.mxu0 0.0
    %3122 = vmatmul.mubr.f32.gmra.mrb[0].mxu0 %v1995
    %v3123 = vpop.f32.mrb[0].mxu0
    %v3124 = vadd.f32 0.0, %v3123
    %v3125 = vpop.f32.mrb[0].mxu0
    %3126 = vmatprep.mubr.f32.mxu0 0.0
    %3127 = vmatmul.mubr.f32.gmra.mrb[0].mxu0 %v1997
    %v3128 = vpop.f32.mrb[0].mxu0
    %v3129 = vadd.f32 0.0, %v3128
    %v3130 = vpop.f32.mrb[0].mxu0
    %3131 = vmatprep.mubr.f32.mxu0 0.0
    %3132 = vmatmul.mubr.f32.gmra.mrb[0].mxu0 %v1999
    %v3133 = vpop.f32.mrb[0].mxu0
    %v3134 = vadd.f32 0.0, %v3133
    %v3135 = vpop.f32.mrb[0].mxu0
    %3136 = vmatprep.mubr.f32.mxu0 0.0
    %3137 = vmatmul.mubr.f32.gmra.mrb[0].mxu0 %v2001
    %v3138 = vpop.f32.mrb[0].mxu0
    %v3139 = vadd.f32 0.0, %v3138
    %v3140 = vpop.f32.mrb[0].mxu0
    %3141 = vmatprep.mubr.f32.mxu0 0.0
    %3142 = vmatmul.mubr.f32.gmra.mrb[0].mxu0 %v2003
    %v3143 = vpop.f32.mrb[0].mxu0
    %v3144 = vadd.f32 0.0, %v3143
    %v3145 = vpop.f32.mrb[0].mxu0
    %3146 = vmatprep.mubr.f32.mxu0 0.0
    %3147 = vmatmul.mubr.f32.gmra.mrb[0].mxu0 %v2005
    %v3148 = vpop.f32.mrb[0].mxu0
    %v3149 = vadd.f32 0.0, %v3148
    %v3150 = vpop.f32.mrb[0].mxu0
    %3151 = vmatprep.mubr.f32.mxu0 0.0
    %3152 = vmatmul.mubr.f32.gmra.mrb[0].mxu0 %v2007
    %v3153 = vpop.f32.mrb[0].mxu0
    %v3154 = vadd.f32 0.0, %v3153
    %v3155 = vpop.f32.mrb[0].mxu0
    %3156 = vmatprep.mubr.f32.mxu0 0.0
    %3157 = vmatmul.mubr.f32.gmra.mrb[0].mxu0 %v2009
    %v3158 = vpop.f32.mrb[0].mxu0
    %v3159 = vadd.f32 0.0, %v3158
    %v3160 = vpop.f32.mrb[0].mxu0
    %3161 = vmatprep.mubr.f32.mxu0 0.0
    %3162 = vmatmul.mubr.f32.gmra.mrb[0].mxu0 %v2786
    %v3163 = vpop.f32.mrb[0].mxu0
    %v3164 = vpop.f32.mrb[0].mxu0
    %3165 = vmatprep.mubr.f32.mxu0 0.0
    %3166 = vmatmul.mubr.f32.gmra.mrb[0].mxu0 %v2992
    %v3167 = vpop.f32.mrb[0].mxu0
    %v3168 = vadd.f32 0.0, %v3167
    %v3169 = vpop.f32.mrb[0].mxu0
    %3170 = vmatprep.mubr.f32.mxu0 0.0
    %3171 = vmatmul.mubr.f32.gmra.mrb[0].mxu0 %v2995
    %v3172 = vpop.f32.mrb[0].mxu0
    %v3173 = vadd.f32 0.0, %v3172
    %v3174 = vpop.f32.mrb[0].mxu0
    %3175 = vdwg.mxu0
    %v3176 = vadd.f32 %v2967, %v3064
    %v3177 = vadd.f32 %v2968, %v3069
    %v3178 = vadd.f32 %v2969, %v3074
    %v3179 = vadd.f32 %v2970, %v3079
    %v3180 = vadd.f32 %v2971, %v3084
    %v3181 = vadd.f32 %v2972, %v3089
    %v3182 = vadd.f32 %v2973, %v3094
    %v3183 = vadd.f32 %v2974, %v3099
    %v3184 = vadd.f32 %v2975, %v3104
    %v3185 = vadd.f32 %v2976, %v3109
    %v3186 = vadd.f32 %v2977, %v3114
    %v3187 = vadd.f32 %v2978, %v3119
    %v3188 = vadd.f32 %v2979, %v3124
    %v3189 = vadd.f32 %v2980, %v3129
    %v3190 = vadd.f32 %v2981, %v3134
    %v3191 = vadd.f32 %v2982, %v3139
    %v3192 = vadd.f32 %v2983, %v3144
    %v3193 = vadd.f32 %v2984, %v3149
    %v3194 = vadd.f32 %v2985, %v3154
    %v3195 = vadd.f32 %v2986, %v3159
    %v3196 = vadd.f32 %v2987, %v3168
    %v3197 = vadd.f32 %v2988, %v3173
    %s3198 = scalar_lea.vmem %s3, 48
    %v3199 = vld [vmem:[%s3198] sm:$0xff]
    %v3201 = vrot.slane %v1652, 2
    %v3202 = vsel %vm1691, %v1737, %v3201
    %v3203 = vrot.slane %v1653, 2
    %v3204 = vsel %vm1691, %v3201, %v3203
    %v3205 = vrot.slane %v1654, 2
    %v3206 = vsel %vm1691, %v3203, %v3205
    %v3207 = vsel %vm1739, %v3202, 0
    %v3209 = vsel %vm1739, %v3204, 0
    %v3211 = vsel %vm1739, %v3206, 0
    %3213 = vmatprep.subr.mxu0 0.0
    %3214 = vmatpush1.msra.mxu0 %v3199
    %3215 = vmatprep.subr.mxu0 0.0
    %3216 = vmatpush1.msra.mxu0 0.0
    %3217 = vmatprep.subr.mxu0 0.0
    %3218 = vmatpush1.msra.mxu0 0.0
    %3219 = vmatprep.subr.mxu0 0.0
    %3220 = vmatpush1.msra.mxu0 0.0
    %3221 = vmatprep.subr.mxu0 0.0
    %3222 = vmatpush1.msra.mxu0 0.0
    %3223 = vmatprep.subr.mxu0 0.0
    %3224 = vmatpush1.msra.mxu0 0.0
    %3225 = vmatprep.subr.mxu0 0.0
    %3226 = vmatpush1.msra.mxu0 0.0
    %3227 = vmatprep.subr.mxu0 0.0
    %3228 = vmatpush1.msra.mxu0 0.0
    %3229 = vmatprep.subr.mxu0 0.0
    %3230 = vmatpush1.msra.mxu0 0.0
    %3231 = vmatprep.subr.mxu0 0.0
    %3232 = vmatpush1.msra.mxu0 0.0
    %3233 = vmatprep.subr.mxu0 0.0
    %3234 = vmatpush1.msra.mxu0 0.0
    %3235 = vmatprep.subr.mxu0 0.0
    %3236 = vmatpush1.msra.mxu0 0.0
    %3237 = vmatprep.subr.mxu0 0.0
    %3238 = vmatpush1.msra.mxu0 0.0
    %3239 = vmatprep.subr.mxu0 0.0
    %3240 = vmatpush1.msra.mxu0 0.0
    %3241 = vmatprep.subr.mxu0 0.0
    %3242 = vmatpush1.msra.mxu0 0.0
    %3243 = vmatprep.subr.mxu0 0.0
    %3244 = vmatpush1.msra.mxu0 0.0
    %3245 = vmatprep.subr.mxu0 0.0
    %3246 = vmatpush1.msra.mxu0 0.0
    %3247 = vmatprep.subr.mxu0 0.0
    %3248 = vmatpush1.msra.mxu0 0.0
    %3249 = vmatprep.subr.mxu0 0.0
    %3250 = vmatpush1.msra.mxu0 0.0
    %3251 = vmatprep.subr.mxu0 0.0
    %3252 = vmatpush1.msra.mxu0 0.0
    %3253 = vmatprep.subr.mxu0 0.0
    %3254 = vmatpush1.msra.mxu0 0.0
    %3255 = vmatprep.subr.mxu0 0.0
    %3256 = vmatpush1.msra.mxu0 0.0
    %3257 = vmatprep.subr.mxu0 0.0
    %3258 = vmatpush1.msra.mxu0 0.0
    %3259 = vmatprep.subr.mxu0 0.0
    %3260 = vmatpush1.msra.mxu0 0.0
    %3261 = vmatprep.subr.mxu0 0.0
    %3262 = vmatpush1.msra.mxu0 0.0
    %3263 = vmatprep.subr.mxu0 0.0
    %3264 = vmatpush1.msra.mxu0 0.0
    %3265 = vmatprep.subr.mxu0 0.0
    %3266 = vmatpush1.msra.mxu0 0.0
    %3267 = vmatprep.subr.mxu0 0.0
    %3268 = vmatpush1.msra.mxu0 0.0
    %3269 = vmatprep.subr.mxu0 0.0
    %3270 = vmatpush1.msra.mxu0 0.0
    %3271 = vmatprep.subr.mxu0 0.0
    %3272 = vmatpush1.msra.mxu0 0.0
    %3273 = vmatprep.subr.mxu0 0.0
    %3274 = vmatpush1.msra.mxu0 0.0
    %3275 = vmatprep.subr.mxu0 0.0
    %3276 = vmatpush1.msra.mxu0 0.0
    %3277 = vmatprep.mubr.f32.mxu0 0.0
    %3278 = vmatmul.mubr.f32.gmra.mrb[0].mxu0 %v1746
    %v3279 = vpop.f32.mrb[0].mxu0
    %v3280 = vadd.f32 0.0, %v3279
    %v3281 = vpop.f32.mrb[0].mxu0
    %3282 = vmatprep.mubr.f32.mxu0 0.0
    %3283 = vmatmul.mubr.f32.gmra.mrb[0].mxu0 %v1748
    %v3284 = vpop.f32.mrb[0].mxu0
    %v3285 = vadd.f32 0.0, %v3284
    %v3286 = vpop.f32.mrb[0].mxu0
    %3287 = vmatprep.mubr.f32.mxu0 0.0
    %3288 = vmatmul.mubr.f32.gmra.mrb[0].mxu0 %v1750
    %v3289 = vpop.f32.mrb[0].mxu0
    %v3290 = vadd.f32 0.0, %v3289
    %v3291 = vpop.f32.mrb[0].mxu0
    %3292 = vmatprep.mubr.f32.mxu0 0.0
    %3293 = vmatmul.mubr.f32.gmra.mrb[0].mxu0 %v1752
    %v3294 = vpop.f32.mrb[0].mxu0
    %v3295 = vadd.f32 0.0, %v3294
    %v3296 = vpop.f32.mrb[0].mxu0
    %3297 = vmatprep.mubr.f32.mxu0 0.0
    %3298 = vmatmul.mubr.f32.gmra.mrb[0].mxu0 %v1754
    %v3299 = vpop.f32.mrb[0].mxu0
    %v3300 = vadd.f32 0.0, %v3299
    %v3301 = vpop.f32.mrb[0].mxu0
    %3302 = vmatprep.mubr.f32.mxu0 0.0
    %3303 = vmatmul.mubr.f32.gmra.mrb[0].mxu0 %v1756
    %v3304 = vpop.f32.mrb[0].mxu0
    %v3305 = vadd.f32 0.0, %v3304
    %v3306 = vpop.f32.mrb[0].mxu0
    %3307 = vmatprep.mubr.f32.mxu0 0.0
    %3308 = vmatmul.mubr.f32.gmra.mrb[0].mxu0 %v1758
    %v3309 = vpop.f32.mrb[0].mxu0
    %v3310 = vadd.f32 0.0, %v3309
    %v3311 = vpop.f32.mrb[0].mxu0
    %3312 = vmatprep.mubr.f32.mxu0 0.0
    %3313 = vmatmul.mubr.f32.gmra.mrb[0].mxu0 %v1760
    %v3314 = vpop.f32.mrb[0].mxu0
    %v3315 = vadd.f32 0.0, %v3314
    %v3316 = vpop.f32.mrb[0].mxu0
    %3317 = vmatprep.mubr.f32.mxu0 0.0
    %3318 = vmatmul.mubr.f32.gmra.mrb[0].mxu0 %v1762
    %v3319 = vpop.f32.mrb[0].mxu0
    %v3320 = vadd.f32 0.0, %v3319
    %v3321 = vpop.f32.mrb[0].mxu0
    %3322 = vmatprep.mubr.f32.mxu0 0.0
    %3323 = vmatmul.mubr.f32.gmra.mrb[0].mxu0 %v1764
    %v3324 = vpop.f32.mrb[0].mxu0
    %v3325 = vadd.f32 0.0, %v3324
    %v3326 = vpop.f32.mrb[0].mxu0
    %3327 = vmatprep.mubr.f32.mxu0 0.0
    %3328 = vmatmul.mubr.f32.gmra.mrb[0].mxu0 %v1766
    %v3329 = vpop.f32.mrb[0].mxu0
    %v3330 = vadd.f32 0.0, %v3329
    %v3331 = vpop.f32.mrb[0].mxu0
    %3332 = vmatprep.mubr.f32.mxu0 0.0
    %3333 = vmatmul.mubr.f32.gmra.mrb[0].mxu0 %v1768
    %v3334 = vpop.f32.mrb[0].mxu0
    %v3335 = vadd.f32 0.0, %v3334
    %v3336 = vpop.f32.mrb[0].mxu0
    %3337 = vmatprep.mubr.f32.mxu0 0.0
    %3338 = vmatmul.mubr.f32.gmra.mrb[0].mxu0 %v1770
    %v3339 = vpop.f32.mrb[0].mxu0
    %v3340 = vadd.f32 0.0, %v3339
    %v3341 = vpop.f32.mrb[0].mxu0
    %3342 = vmatprep.mubr.f32.mxu0 0.0
    %3343 = vmatmul.mubr.f32.gmra.mrb[0].mxu0 %v1772
    %v3344 = vpop.f32.mrb[0].mxu0
    %v3345 = vadd.f32 0.0, %v3344
    %v3346 = vpop.f32.mrb[0].mxu0
    %3347 = vmatprep.mubr.f32.mxu0 0.0
    %3348 = vmatmul.mubr.f32.gmra.mrb[0].mxu0 %v1774
    %v3349 = vpop.f32.mrb[0].mxu0
    %v3350 = vadd.f32 0.0, %v3349
    %v3351 = vpop.f32.mrb[0].mxu0
    %3352 = vmatprep.mubr.f32.mxu0 0.0
    %3353 = vmatmul.mubr.f32.gmra.mrb[0].mxu0 %v1776
    %v3354 = vpop.f32.mrb[0].mxu0
    %v3355 = vadd.f32 0.0, %v3354
    %v3356 = vpop.f32.mrb[0].mxu0
    %3357 = vmatprep.mubr.f32.mxu0 0.0
    %3358 = vmatmul.mubr.f32.gmra.mrb[0].mxu0 %v1778
    %v3359 = vpop.f32.mrb[0].mxu0
    %v3360 = vadd.f32 0.0, %v3359
    %v3361 = vpop.f32.mrb[0].mxu0
    %3362 = vmatprep.mubr.f32.mxu0 0.0
    %3363 = vmatmul.mubr.f32.gmra.mrb[0].mxu0 %v1780
    %v3364 = vpop.f32.mrb[0].mxu0
    %v3365 = vadd.f32 0.0, %v3364
    %v3366 = vpop.f32.mrb[0].mxu0
    %3367 = vmatprep.mubr.f32.mxu0 0.0
    %3368 = vmatmul.mubr.f32.gmra.mrb[0].mxu0 %v1782
    %v3369 = vpop.f32.mrb[0].mxu0
    %v3370 = vadd.f32 0.0, %v3369
    %v3371 = vpop.f32.mrb[0].mxu0
    %3372 = vmatprep.mubr.f32.mxu0 0.0
    %3373 = vmatmul.mubr.f32.gmra.mrb[0].mxu0 %v1784
    %v3374 = vpop.f32.mrb[0].mxu0
    %v3375 = vadd.f32 0.0, %v3374
    %v3376 = vpop.f32.mrb[0].mxu0
    %3377 = vmatprep.mubr.f32.mxu0 0.0
    %3378 = vmatmul.mubr.f32.gmra.mrb[0].mxu0 %v3207
    %v3379 = vpop.f32.mrb[0].mxu0
    %v3380 = vpop.f32.mrb[0].mxu0
    %3381 = vmatprep.mubr.f32.mxu0 0.0
    %3382 = vmatmul.mubr.f32.gmra.mrb[0].mxu0 %v3209
    %v3383 = vpop.f32.mrb[0].mxu0
    %v3384 = vadd.f32 0.0, %v3383
    %v3385 = vpop.f32.mrb[0].mxu0
    %3386 = vmatprep.mubr.f32.mxu0 0.0
    %3387 = vmatmul.mubr.f32.gmra.mrb[0].mxu0 %v3211
    %v3388 = vpop.f32.mrb[0].mxu0
    %v3389 = vadd.f32 0.0, %v3388
    %v3390 = vpop.f32.mrb[0].mxu0
    %3391 = vdwg.mxu0
    %v3392 = vadd.f32 %v3176, %v3280
    %v3393 = vadd.f32 %v3177, %v3285
    %v3394 = vadd.f32 %v3178, %v3290
    %v3395 = vadd.f32 %v3179, %v3295
    %v3396 = vadd.f32 %v3180, %v3300
    %v3397 = vadd.f32 %v3181, %v3305
    %v3398 = vadd.f32 %v3182, %v3310
    %v3399 = vadd.f32 %v3183, %v3315
    %v3400 = vadd.f32 %v3184, %v3320
    %v3401 = vadd.f32 %v3185, %v3325
    %v3402 = vadd.f32 %v3186, %v3330
    %v3403 = vadd.f32 %v3187, %v3335
    %v3404 = vadd.f32 %v3188, %v3340
    %v3405 = vadd.f32 %v3189, %v3345
    %v3406 = vadd.f32 %v3190, %v3350
    %v3407 = vadd.f32 %v3191, %v3355
    %v3408 = vadd.f32 %v3192, %v3360
    %v3409 = vadd.f32 %v3193, %v3365
    %v3410 = vadd.f32 %v3194, %v3370
    %v3411 = vadd.f32 %v3195, %v3375
    %v3412 = vadd.f32 %v3196, %v3384
    %v3413 = vadd.f32 %v3197, %v3389
    %s3414 = scalar_lea.vmem %s3, 56
    %v3415 = vld [vmem:[%s3414] sm:$0xff]
    %v3416 = vrot.slane %v1652, 4
    %v3417 = vsel %vm2192, %v2238, %v3416
    %v3418 = vrot.slane %v1653, 4
    %v3419 = vsel %vm2192, %v3416, %v3418
    %v3420 = vrot.slane %v1654, 4
    %v3421 = vsel %vm2192, %v3418, %v3420
    %v3422 = vsel %vm1739, %v3417, 0
    %v3424 = vsel %vm1739, %v3419, 0
    %v3426 = vsel %vm1739, %v3421, 0
    %3428 = vmatprep.subr.mxu0 0.0
    %3429 = vmatpush1.msra.mxu0 %v3415
    %3430 = vmatprep.subr.mxu0 0.0
    %3431 = vmatpush1.msra.mxu0 0.0
    %3432 = vmatprep.subr.mxu0 0.0
    %3433 = vmatpush1.msra.mxu0 0.0
    %3434 = vmatprep.subr.mxu0 0.0
    %3435 = vmatpush1.msra.mxu0 0.0
    %3436 = vmatprep.subr.mxu0 0.0
    %3437 = vmatpush1.msra.mxu0 0.0
    %3438 = vmatprep.subr.mxu0 0.0
    %3439 = vmatpush1.msra.mxu0 0.0
    %3440 = vmatprep.subr.mxu0 0.0
    %3441 = vmatpush1.msra.mxu0 0.0
    %3442 = vmatprep.subr.mxu0 0.0
    %3443 = vmatpush1.msra.mxu0 0.0
    %3444 = vmatprep.subr.mxu0 0.0
    %3445 = vmatpush1.msra.mxu0 0.0
    %3446 = vmatprep.subr.mxu0 0.0
    %3447 = vmatpush1.msra.mxu0 0.0
    %3448 = vmatprep.subr.mxu0 0.0
    %3449 = vmatpush1.msra.mxu0 0.0
    %3450 = vmatprep.subr.mxu0 0.0
    %3451 = vmatpush1.msra.mxu0 0.0
    %3452 = vmatprep.subr.mxu0 0.0
    %3453 = vmatpush1.msra.mxu0 0.0
    %3454 = vmatprep.subr.mxu0 0.0
    %3455 = vmatpush1.msra.mxu0 0.0
    %3456 = vmatprep.subr.mxu0 0.0
    %3457 = vmatpush1.msra.mxu0 0.0
    %3458 = vmatprep.subr.mxu0 0.0
    %3459 = vmatpush1.msra.mxu0 0.0
    %3460 = vmatprep.subr.mxu0 0.0
    %3461 = vmatpush1.msra.mxu0 0.0
    %3462 = vmatprep.subr.mxu0 0.0
    %3463 = vmatpush1.msra.mxu0 0.0
    %3464 = vmatprep.subr.mxu0 0.0
    %3465 = vmatpush1.msra.mxu0 0.0
    %3466 = vmatprep.subr.mxu0 0.0
    %3467 = vmatpush1.msra.mxu0 0.0
    %3468 = vmatprep.subr.mxu0 0.0
    %3469 = vmatpush1.msra.mxu0 0.0
    %3470 = vmatprep.subr.mxu0 0.0
    %3471 = vmatpush1.msra.mxu0 0.0
    %3472 = vmatprep.subr.mxu0 0.0
    %3473 = vmatpush1.msra.mxu0 0.0
    %3474 = vmatprep.subr.mxu0 0.0
    %3475 = vmatpush1.msra.mxu0 0.0
    %3476 = vmatprep.subr.mxu0 0.0
    %3477 = vmatpush1.msra.mxu0 0.0
    %3478 = vmatprep.subr.mxu0 0.0
    %3479 = vmatpush1.msra.mxu0 0.0
    %3480 = vmatprep.subr.mxu0 0.0
    %3481 = vmatpush1.msra.mxu0 0.0
    %3482 = vmatprep.subr.mxu0 0.0
    %3483 = vmatpush1.msra.mxu0 0.0
    %3484 = vmatprep.subr.mxu0 0.0
    %3485 = vmatpush1.msra.mxu0 0.0
    %3486 = vmatprep.subr.mxu0 0.0
    %3487 = vmatpush1.msra.mxu0 0.0
    %3488 = vmatprep.subr.mxu0 0.0
    %3489 = vmatpush1.msra.mxu0 0.0
    %3490 = vmatprep.subr.mxu0 0.0
    %3491 = vmatpush1.msra.mxu0 0.0
    %3492 = vmatprep.mubr.f32.mxu0 0.0
    %3493 = vmatmul.mubr.f32.gmra.mrb[0].mxu0 %v2246
    %v3494 = vpop.f32.mrb[0].mxu0
    %v3495 = vadd.f32 0.0, %v3494
    %v3496 = vpop.f32.mrb[0].mxu0
    %3497 = vmatprep.mubr.f32.mxu0 0.0
    %3498 = vmatmul.mubr.f32.gmra.mrb[0].mxu0 %v2248
    %v3499 = vpop.f32.mrb[0].mxu0
    %v3500 = vadd.f32 0.0, %v3499
    %v3501 = vpop.f32.mrb[0].mxu0
    %3502 = vmatprep.mubr.f32.mxu0 0.0
    %3503 = vmatmul.mubr.f32.gmra.mrb[0].mxu0 %v2250
    %v3504 = vpop.f32.mrb[0].mxu0
    %v3505 = vadd.f32 0.0, %v3504
    %v3506 = vpop.f32.mrb[0].mxu0
    %3507 = vmatprep.mubr.f32.mxu0 0.0
    %3508 = vmatmul.mubr.f32.gmra.mrb[0].mxu0 %v2252
    %v3509 = vpop.f32.mrb[0].mxu0
    %v3510 = vadd.f32 0.0, %v3509
    %v3511 = vpop.f32.mrb[0].mxu0
    %3512 = vmatprep.mubr.f32.mxu0 0.0
    %3513 = vmatmul.mubr.f32.gmra.mrb[0].mxu0 %v2254
    %v3514 = vpop.f32.mrb[0].mxu0
    %v3515 = vadd.f32 0.0, %v3514
    %v3516 = vpop.f32.mrb[0].mxu0
    %3517 = vmatprep.mubr.f32.mxu0 0.0
    %3518 = vmatmul.mubr.f32.gmra.mrb[0].mxu0 %v2256
    %v3519 = vpop.f32.mrb[0].mxu0
    %v3520 = vadd.f32 0.0, %v3519
    %v3521 = vpop.f32.mrb[0].mxu0
    %3522 = vmatprep.mubr.f32.mxu0 0.0
    %3523 = vmatmul.mubr.f32.gmra.mrb[0].mxu0 %v2258
    %v3524 = vpop.f32.mrb[0].mxu0
    %v3525 = vadd.f32 0.0, %v3524
    %v3526 = vpop.f32.mrb[0].mxu0
    %3527 = vmatprep.mubr.f32.mxu0 0.0
    %3528 = vmatmul.mubr.f32.gmra.mrb[0].mxu0 %v2260
    %v3529 = vpop.f32.mrb[0].mxu0
    %v3530 = vadd.f32 0.0, %v3529
    %v3531 = vpop.f32.mrb[0].mxu0
    %3532 = vmatprep.mubr.f32.mxu0 0.0
    %3533 = vmatmul.mubr.f32.gmra.mrb[0].mxu0 %v2262
    %v3534 = vpop.f32.mrb[0].mxu0
    %v3535 = vadd.f32 0.0, %v3534
    %v3536 = vpop.f32.mrb[0].mxu0
    %3537 = vmatprep.mubr.f32.mxu0 0.0
    %3538 = vmatmul.mubr.f32.gmra.mrb[0].mxu0 %v2264
    %v3539 = vpop.f32.mrb[0].mxu0
    %v3540 = vadd.f32 0.0, %v3539
    %v3541 = vpop.f32.mrb[0].mxu0
    %3542 = vmatprep.mubr.f32.mxu0 0.0
    %3543 = vmatmul.mubr.f32.gmra.mrb[0].mxu0 %v2266
    %v3544 = vpop.f32.mrb[0].mxu0
    %v3545 = vadd.f32 0.0, %v3544
    %v3546 = vpop.f32.mrb[0].mxu0
    %3547 = vmatprep.mubr.f32.mxu0 0.0
    %3548 = vmatmul.mubr.f32.gmra.mrb[0].mxu0 %v2268
    %v3549 = vpop.f32.mrb[0].mxu0
    %v3550 = vadd.f32 0.0, %v3549
    %v3551 = vpop.f32.mrb[0].mxu0
    %3552 = vmatprep.mubr.f32.mxu0 0.0
    %3553 = vmatmul.mubr.f32.gmra.mrb[0].mxu0 %v2270
    %v3554 = vpop.f32.mrb[0].mxu0
    %v3555 = vadd.f32 0.0, %v3554
    %v3556 = vpop.f32.mrb[0].mxu0
    %3557 = vmatprep.mubr.f32.mxu0 0.0
    %3558 = vmatmul.mubr.f32.gmra.mrb[0].mxu0 %v2272
    %v3559 = vpop.f32.mrb[0].mxu0
    %v3560 = vadd.f32 0.0, %v3559
    %v3561 = vpop.f32.mrb[0].mxu0
    %3562 = vmatprep.mubr.f32.mxu0 0.0
    %3563 = vmatmul.mubr.f32.gmra.mrb[0].mxu0 %v2274
    %v3564 = vpop.f32.mrb[0].mxu0
    %v3565 = vadd.f32 0.0, %v3564
    %v3566 = vpop.f32.mrb[0].mxu0
    %3567 = vmatprep.mubr.f32.mxu0 0.0
    %3568 = vmatmul.mubr.f32.gmra.mrb[0].mxu0 %v2276
    %v3569 = vpop.f32.mrb[0].mxu0
    %v3570 = vadd.f32 0.0, %v3569
    %v3571 = vpop.f32.mrb[0].mxu0
    %3572 = vmatprep.mubr.f32.mxu0 0.0
    %3573 = vmatmul.mubr.f32.gmra.mrb[0].mxu0 %v2278
    %v3574 = vpop.f32.mrb[0].mxu0
    %v3575 = vadd.f32 0.0, %v3574
    %v3576 = vpop.f32.mrb[0].mxu0
    %3577 = vmatprep.mubr.f32.mxu0 0.0
    %3578 = vmatmul.mubr.f32.gmra.mrb[0].mxu0 %v2280
    %v3579 = vpop.f32.mrb[0].mxu0
    %v3580 = vadd.f32 0.0, %v3579
    %v3581 = vpop.f32.mrb[0].mxu0
    %3582 = vmatprep.mubr.f32.mxu0 0.0
    %3583 = vmatmul.mubr.f32.gmra.mrb[0].mxu0 %v2282
    %v3584 = vpop.f32.mrb[0].mxu0
    %v3585 = vadd.f32 0.0, %v3584
    %v3586 = vpop.f32.mrb[0].mxu0
    %3587 = vmatprep.mubr.f32.mxu0 0.0
    %3588 = vmatmul.mubr.f32.gmra.mrb[0].mxu0 %v2284
    %v3589 = vpop.f32.mrb[0].mxu0
    %v3590 = vadd.f32 0.0, %v3589
    %v3591 = vpop.f32.mrb[0].mxu0
    %3592 = vmatprep.mubr.f32.mxu0 0.0
    %3593 = vmatmul.mubr.f32.gmra.mrb[0].mxu0 %v3422
    %v3594 = vpop.f32.mrb[0].mxu0
    %v3595 = vpop.f32.mrb[0].mxu0
    %3596 = vmatprep.mubr.f32.mxu0 0.0
    %3597 = vmatmul.mubr.f32.gmra.mrb[0].mxu0 %v3424
    %v3598 = vpop.f32.mrb[0].mxu0
    %v3599 = vadd.f32 0.0, %v3598
    %v3600 = vpop.f32.mrb[0].mxu0
    %3601 = vmatprep.mubr.f32.mxu0 0.0
    %3602 = vmatmul.mubr.f32.gmra.mrb[0].mxu0 %v3426
    %v3603 = vpop.f32.mrb[0].mxu0
    %v3604 = vadd.f32 0.0, %v3603
    %v3605 = vpop.f32.mrb[0].mxu0
    %3606 = vdwg.mxu0
    %v3607 = vadd.f32 %v3392, %v3495
    %v3608 = vadd.f32 %v3393, %v3500
    %v3609 = vadd.f32 %v3394, %v3505
    %v3610 = vadd.f32 %v3395, %v3510
    %v3611 = vadd.f32 %v3396, %v3515
    %v3612 = vadd.f32 %v3397, %v3520
    %v3613 = vadd.f32 %v3398, %v3525
    %v3614 = vadd.f32 %v3399, %v3530
    %v3615 = vadd.f32 %v3400, %v3535
    %v3616 = vadd.f32 %v3401, %v3540
    %v3617 = vadd.f32 %v3402, %v3545
    %v3618 = vadd.f32 %v3403, %v3550
    %v3619 = vadd.f32 %v3404, %v3555
    %v3620 = vadd.f32 %v3405, %v3560
    %v3621 = vadd.f32 %v3406, %v3565
    %v3622 = vadd.f32 %v3407, %v3570
    %v3623 = vadd.f32 %v3408, %v3575
    %v3624 = vadd.f32 %v3409, %v3580
    %v3625 = vadd.f32 %v3410, %v3585
    %v3626 = vadd.f32 %v3411, %v3590
    %v3627 = vadd.f32 %v3412, %v3599
    %v3628 = vadd.f32 %v3413, %v3604
    %s3629 = scalar_lea.vmem %s3, 64
    %v3630 = vld [vmem:[%s3629] sm:$0xff]
    %v3631 = vrot.slane %v1652, 6
    %v3632 = vsel %vm2489, %v2535, %v3631
    %v3633 = vrot.slane %v1653, 6
    %v3634 = vsel %vm2489, %v3631, %v3633
    %v3635 = vrot.slane %v1654, 6
    %v3636 = vsel %vm2489, %v3633, %v3635
    %v3637 = vsel %vm1739, %v3632, 0
    %v3639 = vsel %vm1739, %v3634, 0
    %v3641 = vsel %vm1739, %v3636, 0
    %3643 = vmatprep.subr.mxu0 0.0
    %3644 = vmatpush1.msra.mxu0 %v3630
    %3645 = vmatprep.subr.mxu0 0.0
    %3646 = vmatpush1.msra.mxu0 0.0
    %3647 = vmatprep.subr.mxu0 0.0
    %3648 = vmatpush1.msra.mxu0 0.0
    %3649 = vmatprep.subr.mxu0 0.0
    %3650 = vmatpush1.msra.mxu0 0.0
    %3651 = vmatprep.subr.mxu0 0.0
    %3652 = vmatpush1.msra.mxu0 0.0
    %3653 = vmatprep.subr.mxu0 0.0
    %3654 = vmatpush1.msra.mxu0 0.0
    %3655 = vmatprep.subr.mxu0 0.0
    %3656 = vmatpush1.msra.mxu0 0.0
    %3657 = vmatprep.subr.mxu0 0.0
    %3658 = vmatpush1.msra.mxu0 0.0
    %3659 = vmatprep.subr.mxu0 0.0
    %3660 = vmatpush1.msra.mxu0 0.0
    %3661 = vmatprep.subr.mxu0 0.0
    %3662 = vmatpush1.msra.mxu0 0.0
    %3663 = vmatprep.subr.mxu0 0.0
    %3664 = vmatpush1.msra.mxu0 0.0
    %3665 = vmatprep.subr.mxu0 0.0
    %3666 = vmatpush1.msra.mxu0 0.0
    %3667 = vmatprep.subr.mxu0 0.0
    %3668 = vmatpush1.msra.mxu0 0.0
    %3669 = vmatprep.subr.mxu0 0.0
    %3670 = vmatpush1.msra.mxu0 0.0
    %3671 = vmatprep.subr.mxu0 0.0
    %3672 = vmatpush1.msra.mxu0 0.0
    %3673 = vmatprep.subr.mxu0 0.0
    %3674 = vmatpush1.msra.mxu0 0.0
    %3675 = vmatprep.subr.mxu0 0.0
    %3676 = vmatpush1.msra.mxu0 0.0
    %3677 = vmatprep.subr.mxu0 0.0
    %3678 = vmatpush1.msra.mxu0 0.0
    %3679 = vmatprep.subr.mxu0 0.0
    %3680 = vmatpush1.msra.mxu0 0.0
    %3681 = vmatprep.subr.mxu0 0.0
    %3682 = vmatpush1.msra.mxu0 0.0
    %3683 = vmatprep.subr.mxu0 0.0
    %3684 = vmatpush1.msra.mxu0 0.0
    %3685 = vmatprep.subr.mxu0 0.0
    %3686 = vmatpush1.msra.mxu0 0.0
    %3687 = vmatprep.subr.mxu0 0.0
    %3688 = vmatpush1.msra.mxu0 0.0
    %3689 = vmatprep.subr.mxu0 0.0
    %3690 = vmatpush1.msra.mxu0 0.0
    %3691 = vmatprep.subr.mxu0 0.0
    %3692 = vmatpush1.msra.mxu0 0.0
    %3693 = vmatprep.subr.mxu0 0.0
    %3694 = vmatpush1.msra.mxu0 0.0
    %3695 = vmatprep.subr.mxu0 0.0
    %3696 = vmatpush1.msra.mxu0 0.0
    %3697 = vmatprep.subr.mxu0 0.0
    %3698 = vmatpush1.msra.mxu0 0.0
    %3699 = vmatprep.subr.mxu0 0.0
    %3700 = vmatpush1.msra.mxu0 0.0
    %3701 = vmatprep.subr.mxu0 0.0
    %3702 = vmatpush1.msra.mxu0 0.0
    %3703 = vmatprep.subr.mxu0 0.0
    %3704 = vmatpush1.msra.mxu0 0.0
    %3705 = vmatprep.subr.mxu0 0.0
    %3706 = vmatpush1.msra.mxu0 0.0
    %3707 = vmatprep.mubr.f32.mxu0 0.0
    %3708 = vmatmul.mubr.f32.gmra.mrb[0].mxu0 %v2543
    %v3709 = vpop.f32.mrb[0].mxu0
    %v3710 = vadd.f32 0.0, %v3709
    %v3711 = vpop.f32.mrb[0].mxu0
    %3712 = vmatprep.mubr.f32.mxu0 0.0
    %3713 = vmatmul.mubr.f32.gmra.mrb[0].mxu0 %v2545
    %v3714 = vpop.f32.mrb[0].mxu0
    %v3715 = vadd.f32 0.0, %v3714
    %v3716 = vpop.f32.mrb[0].mxu0
    %3717 = vmatprep.mubr.f32.mxu0 0.0
    %3718 = vmatmul.mubr.f32.gmra.mrb[0].mxu0 %v2547
    %v3719 = vpop.f32.mrb[0].mxu0
    %v3720 = vadd.f32 0.0, %v3719
    %v3721 = vpop.f32.mrb[0].mxu0
    %3722 = vmatprep.mubr.f32.mxu0 0.0
    %3723 = vmatmul.mubr.f32.gmra.mrb[0].mxu0 %v2549
    %v3724 = vpop.f32.mrb[0].mxu0
    %v3725 = vadd.f32 0.0, %v3724
    %v3726 = vpop.f32.mrb[0].mxu0
    %3727 = vmatprep.mubr.f32.mxu0 0.0
    %3728 = vmatmul.mubr.f32.gmra.mrb[0].mxu0 %v2551
    %v3729 = vpop.f32.mrb[0].mxu0
    %v3730 = vadd.f32 0.0, %v3729
    %v3731 = vpop.f32.mrb[0].mxu0
    %3732 = vmatprep.mubr.f32.mxu0 0.0
    %3733 = vmatmul.mubr.f32.gmra.mrb[0].mxu0 %v2553
    %v3734 = vpop.f32.mrb[0].mxu0
    %v3735 = vadd.f32 0.0, %v3734
    %v3736 = vpop.f32.mrb[0].mxu0
    %3737 = vmatprep.mubr.f32.mxu0 0.0
    %3738 = vmatmul.mubr.f32.gmra.mrb[0].mxu0 %v2555
    %v3739 = vpop.f32.mrb[0].mxu0
    %v3740 = vadd.f32 0.0, %v3739
    %v3741 = vpop.f32.mrb[0].mxu0
    %3742 = vmatprep.mubr.f32.mxu0 0.0
    %3743 = vmatmul.mubr.f32.gmra.mrb[0].mxu0 %v2557
    %v3744 = vpop.f32.mrb[0].mxu0
    %v3745 = vadd.f32 0.0, %v3744
    %v3746 = vpop.f32.mrb[0].mxu0
    %3747 = vmatprep.mubr.f32.mxu0 0.0
    %3748 = vmatmul.mubr.f32.gmra.mrb[0].mxu0 %v2559
    %v3749 = vpop.f32.mrb[0].mxu0
    %v3750 = vadd.f32 0.0, %v3749
    %v3751 = vpop.f32.mrb[0].mxu0
    %3752 = vmatprep.mubr.f32.mxu0 0.0
    %3753 = vmatmul.mubr.f32.gmra.mrb[0].mxu0 %v2561
    %v3754 = vpop.f32.mrb[0].mxu0
    %v3755 = vadd.f32 0.0, %v3754
    %v3756 = vpop.f32.mrb[0].mxu0
    %3757 = vmatprep.mubr.f32.mxu0 0.0
    %3758 = vmatmul.mubr.f32.gmra.mrb[0].mxu0 %v2563
    %v3759 = vpop.f32.mrb[0].mxu0
    %v3760 = vadd.f32 0.0, %v3759
    %v3761 = vpop.f32.mrb[0].mxu0
    %3762 = vmatprep.mubr.f32.mxu0 0.0
    %3763 = vmatmul.mubr.f32.gmra.mrb[0].mxu0 %v2565
    %v3764 = vpop.f32.mrb[0].mxu0
    %v3765 = vadd.f32 0.0, %v3764
    %v3766 = vpop.f32.mrb[0].mxu0
    %3767 = vmatprep.mubr.f32.mxu0 0.0
    %3768 = vmatmul.mubr.f32.gmra.mrb[0].mxu0 %v2567
    %v3769 = vpop.f32.mrb[0].mxu0
    %v3770 = vadd.f32 0.0, %v3769
    %v3771 = vpop.f32.mrb[0].mxu0
    %3772 = vmatprep.mubr.f32.mxu0 0.0
    %3773 = vmatmul.mubr.f32.gmra.mrb[0].mxu0 %v2569
    %v3774 = vpop.f32.mrb[0].mxu0
    %v3775 = vadd.f32 0.0, %v3774
    %v3776 = vpop.f32.mrb[0].mxu0
    %3777 = vmatprep.mubr.f32.mxu0 0.0
    %3778 = vmatmul.mubr.f32.gmra.mrb[0].mxu0 %v2571
    %v3779 = vpop.f32.mrb[0].mxu0
    %v3780 = vadd.f32 0.0, %v3779
    %v3781 = vpop.f32.mrb[0].mxu0
    %3782 = vmatprep.mubr.f32.mxu0 0.0
    %3783 = vmatmul.mubr.f32.gmra.mrb[0].mxu0 %v2573
    %v3784 = vpop.f32.mrb[0].mxu0
    %v3785 = vadd.f32 0.0, %v3784
    %v3786 = vpop.f32.mrb[0].mxu0
    %3787 = vmatprep.mubr.f32.mxu0 0.0
    %3788 = vmatmul.mubr.f32.gmra.mrb[0].mxu0 %v2575
    %v3789 = vpop.f32.mrb[0].mxu0
    %v3790 = vadd.f32 0.0, %v3789
    %v3791 = vpop.f32.mrb[0].mxu0
    %3792 = vmatprep.mubr.f32.mxu0 0.0
    %3793 = vmatmul.mubr.f32.gmra.mrb[0].mxu0 %v2577
    %v3794 = vpop.f32.mrb[0].mxu0
    %v3795 = vadd.f32 0.0, %v3794
    %v3796 = vpop.f32.mrb[0].mxu0
    %3797 = vmatprep.mubr.f32.mxu0 0.0
    %3798 = vmatmul.mubr.f32.gmra.mrb[0].mxu0 %v2579
    %v3799 = vpop.f32.mrb[0].mxu0
    %v3800 = vadd.f32 0.0, %v3799
    %v3801 = vpop.f32.mrb[0].mxu0
    %3802 = vmatprep.mubr.f32.mxu0 0.0
    %3803 = vmatmul.mubr.f32.gmra.mrb[0].mxu0 %v2581
    %v3804 = vpop.f32.mrb[0].mxu0
    %v3805 = vadd.f32 0.0, %v3804
    %v3806 = vpop.f32.mrb[0].mxu0
    %3807 = vmatprep.mubr.f32.mxu0 0.0
    %3808 = vmatmul.mubr.f32.gmra.mrb[0].mxu0 %v3637
    %v3809 = vpop.f32.mrb[0].mxu0
    %v3810 = vpop.f32.mrb[0].mxu0
    %3811 = vmatprep.mubr.f32.mxu0 0.0
    %3812 = vmatmul.mubr.f32.gmra.mrb[0].mxu0 %v3639
    %v3813 = vpop.f32.mrb[0].mxu0
    %v3814 = vadd.f32 0.0, %v3813
    %v3815 = vpop.f32.mrb[0].mxu0
    %3816 = vmatprep.mubr.f32.mxu0 0.0
    %3817 = vmatmul.mubr.f32.gmra.mrb[0].mxu0 %v3641
    %v3818 = vpop.f32.mrb[0].mxu0
    %v3819 = vadd.f32 0.0, %v3818
    %v3820 = vpop.f32.mrb[0].mxu0
    %3821 = vdwg.mxu0
    %v3822 = vadd.f32 %v3607, %v3710
    %v3823 = vadd.f32 %v3608, %v3715
    %v3824 = vadd.f32 %v3609, %v3720
    %v3825 = vadd.f32 %v3610, %v3725
    %v3826 = vadd.f32 %v3611, %v3730
    %v3827 = vadd.f32 %v3612, %v3735
    %v3828 = vadd.f32 %v3613, %v3740
    %v3829 = vadd.f32 %v3614, %v3745
    %v3830 = vadd.f32 %v3615, %v3750
    %v3831 = vadd.f32 %v3616, %v3755
    %v3832 = vadd.f32 %v3617, %v3760
    %v3833 = vadd.f32 %v3618, %v3765
    %v3834 = vadd.f32 %v3619, %v3770
    %v3835 = vadd.f32 %v3620, %v3775
    %v3836 = vadd.f32 %v3621, %v3780
    %v3837 = vadd.f32 %v3622, %v3785
    %v3838 = vadd.f32 %v3623, %v3790
    %v3839 = vadd.f32 %v3624, %v3795
    %v3840 = vadd.f32 %v3625, %v3800
    %v3841 = vadd.f32 %v3626, %v3805
    %v3842 = vadd.f32 %v3627, %v3814
    %v3843 = vadd.f32 %v3628, %v3819
    %s3844 = scalar_lea.vmem %s3, 72
    %v3845 = vld [vmem:[%s3844] sm:$0xff]
    %v3846 = vsel %vm1739, %v1654, 0
    %3848 = vmatprep.subr.mxu0 0.0
    %3849 = vmatpush1.msra.mxu0 %v3845
    %3850 = vmatprep.subr.mxu0 0.0
    %3851 = vmatpush1.msra.mxu0 0.0
    %3852 = vmatprep.subr.mxu0 0.0
    %3853 = vmatpush1.msra.mxu0 0.0
    %3854 = vmatprep.subr.mxu0 0.0
    %3855 = vmatpush1.msra.mxu0 0.0
    %3856 = vmatprep.subr.mxu0 0.0
    %3857 = vmatpush1.msra.mxu0 0.0
    %3858 = vmatprep.subr.mxu0 0.0
    %3859 = vmatpush1.msra.mxu0 0.0
    %3860 = vmatprep.subr.mxu0 0.0
    %3861 = vmatpush1.msra.mxu0 0.0
    %3862 = vmatprep.subr.mxu0 0.0
    %3863 = vmatpush1.msra.mxu0 0.0
    %3864 = vmatprep.subr.mxu0 0.0
    %3865 = vmatpush1.msra.mxu0 0.0
    %3866 = vmatprep.subr.mxu0 0.0
    %3867 = vmatpush1.msra.mxu0 0.0
    %3868 = vmatprep.subr.mxu0 0.0
    %3869 = vmatpush1.msra.mxu0 0.0
    %3870 = vmatprep.subr.mxu0 0.0
    %3871 = vmatpush1.msra.mxu0 0.0
    %3872 = vmatprep.subr.mxu0 0.0
    %3873 = vmatpush1.msra.mxu0 0.0
    %3874 = vmatprep.subr.mxu0 0.0
    %3875 = vmatpush1.msra.mxu0 0.0
    %3876 = vmatprep.subr.mxu0 0.0
    %3877 = vmatpush1.msra.mxu0 0.0
    %3878 = vmatprep.subr.mxu0 0.0
    %3879 = vmatpush1.msra.mxu0 0.0
    %3880 = vmatprep.subr.mxu0 0.0
    %3881 = vmatpush1.msra.mxu0 0.0
    %3882 = vmatprep.subr.mxu0 0.0
    %3883 = vmatpush1.msra.mxu0 0.0
    %3884 = vmatprep.subr.mxu0 0.0
    %3885 = vmatpush1.msra.mxu0 0.0
    %3886 = vmatprep.subr.mxu0 0.0
    %3887 = vmatpush1.msra.mxu0 0.0
    %3888 = vmatprep.subr.mxu0 0.0
    %3889 = vmatpush1.msra.mxu0 0.0
    %3890 = vmatprep.subr.mxu0 0.0
    %3891 = vmatpush1.msra.mxu0 0.0
    %3892 = vmatprep.subr.mxu0 0.0
    %3893 = vmatpush1.msra.mxu0 0.0
    %3894 = vmatprep.subr.mxu0 0.0
    %3895 = vmatpush1.msra.mxu0 0.0
    %3896 = vmatprep.subr.mxu0 0.0
    %3897 = vmatpush1.msra.mxu0 0.0
    %3898 = vmatprep.subr.mxu0 0.0
    %3899 = vmatpush1.msra.mxu0 0.0
    %3900 = vmatprep.subr.mxu0 0.0
    %3901 = vmatpush1.msra.mxu0 0.0
    %3902 = vmatprep.subr.mxu0 0.0
    %3903 = vmatpush1.msra.mxu0 0.0
    %3904 = vmatprep.subr.mxu0 0.0
    %3905 = vmatpush1.msra.mxu0 0.0
    %3906 = vmatprep.subr.mxu0 0.0
    %3907 = vmatpush1.msra.mxu0 0.0
    %3908 = vmatprep.subr.mxu0 0.0
    %3909 = vmatpush1.msra.mxu0 0.0
    %3910 = vmatprep.subr.mxu0 0.0
    %3911 = vmatpush1.msra.mxu0 0.0
    %3912 = vmatprep.mubr.f32.mxu0 0.0
    %3913 = vmatmul.mubr.f32.gmra.mrb[0].mxu0 %v1973
    %v3914 = vpop.f32.mrb[0].mxu0
    %v3915 = vadd.f32 0.0, %v3914
    %v3916 = vpop.f32.mrb[0].mxu0
    %3917 = vmatprep.mubr.f32.mxu0 0.0
    %3918 = vmatmul.mubr.f32.gmra.mrb[0].mxu0 %v1975
    %v3919 = vpop.f32.mrb[0].mxu0
    %v3920 = vadd.f32 0.0, %v3919
    %v3921 = vpop.f32.mrb[0].mxu0
    %3922 = vmatprep.mubr.f32.mxu0 0.0
    %3923 = vmatmul.mubr.f32.gmra.mrb[0].mxu0 %v1977
    %v3924 = vpop.f32.mrb[0].mxu0
    %v3925 = vadd.f32 0.0, %v3924
    %v3926 = vpop.f32.mrb[0].mxu0
    %3927 = vmatprep.mubr.f32.mxu0 0.0
    %3928 = vmatmul.mubr.f32.gmra.mrb[0].mxu0 %v1979
    %v3929 = vpop.f32.mrb[0].mxu0
    %v3930 = vadd.f32 0.0, %v3929
    %v3931 = vpop.f32.mrb[0].mxu0
    %3932 = vmatprep.mubr.f32.mxu0 0.0
    %3933 = vmatmul.mubr.f32.gmra.mrb[0].mxu0 %v1981
    %v3934 = vpop.f32.mrb[0].mxu0
    %v3935 = vadd.f32 0.0, %v3934
    %v3936 = vpop.f32.mrb[0].mxu0
    %3937 = vmatprep.mubr.f32.mxu0 0.0
    %3938 = vmatmul.mubr.f32.gmra.mrb[0].mxu0 %v1983
    %v3939 = vpop.f32.mrb[0].mxu0
    %v3940 = vadd.f32 0.0, %v3939
    %v3941 = vpop.f32.mrb[0].mxu0
    %3942 = vmatprep.mubr.f32.mxu0 0.0
    %3943 = vmatmul.mubr.f32.gmra.mrb[0].mxu0 %v1985
    %v3944 = vpop.f32.mrb[0].mxu0
    %v3945 = vadd.f32 0.0, %v3944
    %v3946 = vpop.f32.mrb[0].mxu0
    %3947 = vmatprep.mubr.f32.mxu0 0.0
    %3948 = vmatmul.mubr.f32.gmra.mrb[0].mxu0 %v1987
    %v3949 = vpop.f32.mrb[0].mxu0
    %v3950 = vadd.f32 0.0, %v3949
    %v3951 = vpop.f32.mrb[0].mxu0
    %3952 = vmatprep.mubr.f32.mxu0 0.0
    %3953 = vmatmul.mubr.f32.gmra.mrb[0].mxu0 %v1989
    %v3954 = vpop.f32.mrb[0].mxu0
    %v3955 = vadd.f32 0.0, %v3954
    %v3956 = vpop.f32.mrb[0].mxu0
    %3957 = vmatprep.mubr.f32.mxu0 0.0
    %3958 = vmatmul.mubr.f32.gmra.mrb[0].mxu0 %v1991
    %v3959 = vpop.f32.mrb[0].mxu0
    %v3960 = vadd.f32 0.0, %v3959
    %v3961 = vpop.f32.mrb[0].mxu0
    %3962 = vmatprep.mubr.f32.mxu0 0.0
    %3963 = vmatmul.mubr.f32.gmra.mrb[0].mxu0 %v1993
    %v3964 = vpop.f32.mrb[0].mxu0
    %v3965 = vadd.f32 0.0, %v3964
    %v3966 = vpop.f32.mrb[0].mxu0
    %3967 = vmatprep.mubr.f32.mxu0 0.0
    %3968 = vmatmul.mubr.f32.gmra.mrb[0].mxu0 %v1995
    %v3969 = vpop.f32.mrb[0].mxu0
    %v3970 = vadd.f32 0.0, %v3969
    %v3971 = vpop.f32.mrb[0].mxu0
    %3972 = vmatprep.mubr.f32.mxu0 0.0
    %3973 = vmatmul.mubr.f32.gmra.mrb[0].mxu0 %v1997
    %v3974 = vpop.f32.mrb[0].mxu0
    %v3975 = vadd.f32 0.0, %v3974
    %v3976 = vpop.f32.mrb[0].mxu0
    %3977 = vmatprep.mubr.f32.mxu0 0.0
    %3978 = vmatmul.mubr.f32.gmra.mrb[0].mxu0 %v1999
    %v3979 = vpop.f32.mrb[0].mxu0
    %v3980 = vadd.f32 0.0, %v3979
    %v3981 = vpop.f32.mrb[0].mxu0
    %3982 = vmatprep.mubr.f32.mxu0 0.0
    %3983 = vmatmul.mubr.f32.gmra.mrb[0].mxu0 %v2001
    %v3984 = vpop.f32.mrb[0].mxu0
    %v3985 = vadd.f32 0.0, %v3984
    %v3986 = vpop.f32.mrb[0].mxu0
    %3987 = vmatprep.mubr.f32.mxu0 0.0
    %3988 = vmatmul.mubr.f32.gmra.mrb[0].mxu0 %v2003
    %v3989 = vpop.f32.mrb[0].mxu0
    %v3990 = vadd.f32 0.0, %v3989
    %v3991 = vpop.f32.mrb[0].mxu0
    %3992 = vmatprep.mubr.f32.mxu0 0.0
    %3993 = vmatmul.mubr.f32.gmra.mrb[0].mxu0 %v2005
    %v3994 = vpop.f32.mrb[0].mxu0
    %v3995 = vadd.f32 0.0, %v3994
    %v3996 = vpop.f32.mrb[0].mxu0
    %3997 = vmatprep.mubr.f32.mxu0 0.0
    %3998 = vmatmul.mubr.f32.gmra.mrb[0].mxu0 %v2007
    %v3999 = vpop.f32.mrb[0].mxu0
    %v4000 = vadd.f32 0.0, %v3999
    %v4001 = vpop.f32.mrb[0].mxu0
    %4002 = vmatprep.mubr.f32.mxu0 0.0
    %4003 = vmatmul.mubr.f32.gmra.mrb[0].mxu0 %v2009
    %v4004 = vpop.f32.mrb[0].mxu0
    %v4005 = vadd.f32 0.0, %v4004
    %v4006 = vpop.f32.mrb[0].mxu0
    %4007 = vmatprep.mubr.f32.mxu0 0.0
    %4008 = vmatmul.mubr.f32.gmra.mrb[0].mxu0 %v2786
    %v4009 = vpop.f32.mrb[0].mxu0
    %v4010 = vadd.f32 0.0, %v4009
    %v4011 = vpop.f32.mrb[0].mxu0
    %4012 = vmatprep.mubr.f32.mxu0 0.0
    %4013 = vmatmul.mubr.f32.gmra.mrb[0].mxu0 %v2992
    %v4014 = vpop.f32.mrb[0].mxu0
    %v4015 = vpop.f32.mrb[0].mxu0
    %4016 = vmatprep.mubr.f32.mxu0 0.0
    %4017 = vmatmul.mubr.f32.gmra.mrb[0].mxu0 %v2995
    %v4018 = vpop.f32.mrb[0].mxu0
    %v4019 = vadd.f32 0.0, %v4018
    %v4020 = vpop.f32.mrb[0].mxu0
    %4021 = vmatprep.mubr.f32.mxu0 0.0
    %4022 = vmatmul.mubr.f32.gmra.mrb[0].mxu0 %v3846
    %v4023 = vpop.f32.mrb[0].mxu0
    %v4024 = vadd.f32 0.0, %v4023
    %v4025 = vpop.f32.mrb[0].mxu0
    %4026 = vdwg.mxu0
    %v4027 = vadd.f32 %v3822, %v3915
    %v4028 = vadd.f32 %v3823, %v3920
    %v4029 = vadd.f32 %v3824, %v3925
    %v4030 = vadd.f32 %v3825, %v3930
    %v4031 = vadd.f32 %v3826, %v3935
    %v4032 = vadd.f32 %v3827, %v3940
    %v4033 = vadd.f32 %v3828, %v3945
    %v4034 = vadd.f32 %v3829, %v3950
    %v4035 = vadd.f32 %v3830, %v3955
    %v4036 = vadd.f32 %v3831, %v3960
    %v4037 = vadd.f32 %v3832, %v3965
    %v4038 = vadd.f32 %v3833, %v3970
    %v4039 = vadd.f32 %v3834, %v3975
    %v4040 = vadd.f32 %v3835, %v3980
    %v4041 = vadd.f32 %v3836, %v3985
    %v4042 = vadd.f32 %v3837, %v3990
    %v4043 = vadd.f32 %v3838, %v3995
    %v4044 = vadd.f32 %v3839, %v4000
    %v4045 = vadd.f32 %v3840, %v4005
    %v4046 = vadd.f32 %v3841, %v4010
    %v4047 = vadd.f32 %v3842, %v4019
    %v4048 = vadd.f32 %v3843, %v4024
    %s4049 = scalar_lea.vmem %s3, 80
    %v4050 = vld [vmem:[%s4049] sm:$0xff]
    %v4052 = vsel %vm1739, %v1655, 0
    %v4055 = vsel %vm1739, %v1656, 0
    %4057 = vmatprep.subr.mxu0 0.0
    %4058 = vmatpush1.msra.mxu0 %v4050
    %4059 = vmatprep.subr.mxu0 0.0
    %4060 = vmatpush1.msra.mxu0 0.0
    %4061 = vmatprep.subr.mxu0 0.0
    %4062 = vmatpush1.msra.mxu0 0.0
    %4063 = vmatprep.subr.mxu0 0.0
    %4064 = vmatpush1.msra.mxu0 0.0
    %4065 = vmatprep.subr.mxu0 0.0
    %4066 = vmatpush1.msra.mxu0 0.0
    %4067 = vmatprep.subr.mxu0 0.0
    %4068 = vmatpush1.msra.mxu0 0.0
    %4069 = vmatprep.subr.mxu0 0.0
    %4070 = vmatpush1.msra.mxu0 0.0
    %4071 = vmatprep.subr.mxu0 0.0
    %4072 = vmatpush1.msra.mxu0 0.0
    %4073 = vmatprep.subr.mxu0 0.0
    %4074 = vmatpush1.msra.mxu0 0.0
    %4075 = vmatprep.subr.mxu0 0.0
    %4076 = vmatpush1.msra.mxu0 0.0
    %4077 = vmatprep.subr.mxu0 0.0
    %4078 = vmatpush1.msra.mxu0 0.0
    %4079 = vmatprep.subr.mxu0 0.0
    %4080 = vmatpush1.msra.mxu0 0.0
    %4081 = vmatprep.subr.mxu0 0.0
    %4082 = vmatpush1.msra.mxu0 0.0
    %4083 = vmatprep.subr.mxu0 0.0
    %4084 = vmatpush1.msra.mxu0 0.0
    %4085 = vmatprep.subr.mxu0 0.0
    %4086 = vmatpush1.msra.mxu0 0.0
    %4087 = vmatprep.subr.mxu0 0.0
    %4088 = vmatpush1.msra.mxu0 0.0
    %4089 = vmatprep.subr.mxu0 0.0
    %4090 = vmatpush1.msra.mxu0 0.0
    %4091 = vmatprep.subr.mxu0 0.0
    %4092 = vmatpush1.msra.mxu0 0.0
    %4093 = vmatprep.subr.mxu0 0.0
    %4094 = vmatpush1.msra.mxu0 0.0
    %4095 = vmatprep.subr.mxu0 0.0
    %4096 = vmatpush1.msra.mxu0 0.0
    %4097 = vmatprep.subr.mxu0 0.0
    %4098 = vmatpush1.msra.mxu0 0.0
    %4099 = vmatprep.subr.mxu0 0.0
    %4100 = vmatpush1.msra.mxu0 0.0
    %4101 = vmatprep.subr.mxu0 0.0
    %4102 = vmatpush1.msra.mxu0 0.0
    %4103 = vmatprep.subr.mxu0 0.0
    %4104 = vmatpush1.msra.mxu0 0.0
    %4105 = vmatprep.subr.mxu0 0.0
    %4106 = vmatpush1.msra.mxu0 0.0
    %4107 = vmatprep.subr.mxu0 0.0
    %4108 = vmatpush1.msra.mxu0 0.0
    %4109 = vmatprep.subr.mxu0 0.0
    %4110 = vmatpush1.msra.mxu0 0.0
    %4111 = vmatprep.subr.mxu0 0.0
    %4112 = vmatpush1.msra.mxu0 0.0
    %4113 = vmatprep.subr.mxu0 0.0
    %4114 = vmatpush1.msra.mxu0 0.0
    %4115 = vmatprep.subr.mxu0 0.0
    %4116 = vmatpush1.msra.mxu0 0.0
    %4117 = vmatprep.subr.mxu0 0.0
    %4118 = vmatpush1.msra.mxu0 0.0
    %4119 = vmatprep.subr.mxu0 0.0
    %4120 = vmatpush1.msra.mxu0 0.0
    %4121 = vmatprep.mubr.f32.mxu0 0.0
    %4122 = vmatmul.mubr.f32.gmra.mrb[0].mxu0 %v1977
    %v4123 = vpop.f32.mrb[0].mxu0
    %v4124 = vadd.f32 0.0, %v4123
    %v4125 = vpop.f32.mrb[0].mxu0
    %4126 = vmatprep.mubr.f32.mxu0 0.0
    %4127 = vmatmul.mubr.f32.gmra.mrb[0].mxu0 %v1979
    %v4128 = vpop.f32.mrb[0].mxu0
    %v4129 = vadd.f32 0.0, %v4128
    %v4130 = vpop.f32.mrb[0].mxu0
    %4131 = vmatprep.mubr.f32.mxu0 0.0
    %4132 = vmatmul.mubr.f32.gmra.mrb[0].mxu0 %v1981
    %v4133 = vpop.f32.mrb[0].mxu0
    %v4134 = vadd.f32 0.0, %v4133
    %v4135 = vpop.f32.mrb[0].mxu0
    %4136 = vmatprep.mubr.f32.mxu0 0.0
    %4137 = vmatmul.mubr.f32.gmra.mrb[0].mxu0 %v1983
    %v4138 = vpop.f32.mrb[0].mxu0
    %v4139 = vadd.f32 0.0, %v4138
    %v4140 = vpop.f32.mrb[0].mxu0
    %4141 = vmatprep.mubr.f32.mxu0 0.0
    %4142 = vmatmul.mubr.f32.gmra.mrb[0].mxu0 %v1985
    %v4143 = vpop.f32.mrb[0].mxu0
    %v4144 = vadd.f32 0.0, %v4143
    %v4145 = vpop.f32.mrb[0].mxu0
    %4146 = vmatprep.mubr.f32.mxu0 0.0
    %4147 = vmatmul.mubr.f32.gmra.mrb[0].mxu0 %v1987
    %v4148 = vpop.f32.mrb[0].mxu0
    %v4149 = vadd.f32 0.0, %v4148
    %v4150 = vpop.f32.mrb[0].mxu0
    %4151 = vmatprep.mubr.f32.mxu0 0.0
    %4152 = vmatmul.mubr.f32.gmra.mrb[0].mxu0 %v1989
    %v4153 = vpop.f32.mrb[0].mxu0
    %v4154 = vadd.f32 0.0, %v4153
    %v4155 = vpop.f32.mrb[0].mxu0
    %4156 = vmatprep.mubr.f32.mxu0 0.0
    %4157 = vmatmul.mubr.f32.gmra.mrb[0].mxu0 %v1991
    %v4158 = vpop.f32.mrb[0].mxu0
    %v4159 = vadd.f32 0.0, %v4158
    %v4160 = vpop.f32.mrb[0].mxu0
    %4161 = vmatprep.mubr.f32.mxu0 0.0
    %4162 = vmatmul.mubr.f32.gmra.mrb[0].mxu0 %v1993
    %v4163 = vpop.f32.mrb[0].mxu0
    %v4164 = vadd.f32 0.0, %v4163
    %v4165 = vpop.f32.mrb[0].mxu0
    %4166 = vmatprep.mubr.f32.mxu0 0.0
    %4167 = vmatmul.mubr.f32.gmra.mrb[0].mxu0 %v1995
    %v4168 = vpop.f32.mrb[0].mxu0
    %v4169 = vadd.f32 0.0, %v4168
    %v4170 = vpop.f32.mrb[0].mxu0
    %4171 = vmatprep.mubr.f32.mxu0 0.0
    %4172 = vmatmul.mubr.f32.gmra.mrb[0].mxu0 %v1997
    %v4173 = vpop.f32.mrb[0].mxu0
    %v4174 = vadd.f32 0.0, %v4173
    %v4175 = vpop.f32.mrb[0].mxu0
    %4176 = vmatprep.mubr.f32.mxu0 0.0
    %4177 = vmatmul.mubr.f32.gmra.mrb[0].mxu0 %v1999
    %v4178 = vpop.f32.mrb[0].mxu0
    %v4179 = vadd.f32 0.0, %v4178
    %v4180 = vpop.f32.mrb[0].mxu0
    %4181 = vmatprep.mubr.f32.mxu0 0.0
    %4182 = vmatmul.mubr.f32.gmra.mrb[0].mxu0 %v2001
    %v4183 = vpop.f32.mrb[0].mxu0
    %v4184 = vadd.f32 0.0, %v4183
    %v4185 = vpop.f32.mrb[0].mxu0
    %4186 = vmatprep.mubr.f32.mxu0 0.0
    %4187 = vmatmul.mubr.f32.gmra.mrb[0].mxu0 %v2003
    %v4188 = vpop.f32.mrb[0].mxu0
    %v4189 = vadd.f32 0.0, %v4188
    %v4190 = vpop.f32.mrb[0].mxu0
    %4191 = vmatprep.mubr.f32.mxu0 0.0
    %4192 = vmatmul.mubr.f32.gmra.mrb[0].mxu0 %v2005
    %v4193 = vpop.f32.mrb[0].mxu0
    %v4194 = vadd.f32 0.0, %v4193
    %v4195 = vpop.f32.mrb[0].mxu0
    %4196 = vmatprep.mubr.f32.mxu0 0.0
    %4197 = vmatmul.mubr.f32.gmra.mrb[0].mxu0 %v2007
    %v4198 = vpop.f32.mrb[0].mxu0
    %v4199 = vadd.f32 0.0, %v4198
    %v4200 = vpop.f32.mrb[0].mxu0
    %4201 = vmatprep.mubr.f32.mxu0 0.0
    %4202 = vmatmul.mubr.f32.gmra.mrb[0].mxu0 %v2009
    %v4203 = vpop.f32.mrb[0].mxu0
    %v4204 = vadd.f32 0.0, %v4203
    %v4205 = vpop.f32.mrb[0].mxu0
    %4206 = vmatprep.mubr.f32.mxu0 0.0
    %4207 = vmatmul.mubr.f32.gmra.mrb[0].mxu0 %v2786
    %v4208 = vpop.f32.mrb[0].mxu0
    %v4209 = vadd.f32 0.0, %v4208
    %v4210 = vpop.f32.mrb[0].mxu0
    %4211 = vmatprep.mubr.f32.mxu0 0.0
    %4212 = vmatmul.mubr.f32.gmra.mrb[0].mxu0 %v2992
    %v4213 = vpop.f32.mrb[0].mxu0
    %v4214 = vadd.f32 0.0, %v4213
    %v4215 = vpop.f32.mrb[0].mxu0
    %4216 = vmatprep.mubr.f32.mxu0 0.0
    %4217 = vmatmul.mubr.f32.gmra.mrb[0].mxu0 %v2995
    %v4218 = vpop.f32.mrb[0].mxu0
    %v4219 = vadd.f32 0.0, %v4218
    %v4220 = vpop.f32.mrb[0].mxu0
    %4221 = vmatprep.mubr.f32.mxu0 0.0
    %4222 = vmatmul.mubr.f32.gmra.mrb[0].mxu0 %v3846
    %v4223 = vpop.f32.mrb[0].mxu0
    %v4224 = vpop.f32.mrb[0].mxu0
    %4225 = vmatprep.mubr.f32.mxu0 0.0
    %4226 = vmatmul.mubr.f32.gmra.mrb[0].mxu0 %v4052
    %v4227 = vpop.f32.mrb[0].mxu0
    %v4228 = vadd.f32 0.0, %v4227
    %v4229 = vpop.f32.mrb[0].mxu0
    %4230 = vmatprep.mubr.f32.mxu0 0.0
    %4231 = vmatmul.mubr.f32.gmra.mrb[0].mxu0 %v4055
    %v4232 = vpop.f32.mrb[0].mxu0
    %v4233 = vadd.f32 0.0, %v4232
    %v4234 = vpop.f32.mrb[0].mxu0
    %4235 = vdwg.mxu0
    %v4236 = vadd.f32 %v4027, %v4124
    %v4237 = vadd.f32 %v4028, %v4129
    %v4238 = vadd.f32 %v4029, %v4134
    %v4239 = vadd.f32 %v4030, %v4139
    %v4240 = vadd.f32 %v4031, %v4144
    %v4241 = vadd.f32 %v4032, %v4149
    %v4242 = vadd.f32 %v4033, %v4154
    %v4243 = vadd.f32 %v4034, %v4159
    %v4244 = vadd.f32 %v4035, %v4164
    %v4245 = vadd.f32 %v4036, %v4169
    %v4246 = vadd.f32 %v4037, %v4174
    %v4247 = vadd.f32 %v4038, %v4179
    %v4248 = vadd.f32 %v4039, %v4184
    %v4249 = vadd.f32 %v4040, %v4189
    %v4250 = vadd.f32 %v4041, %v4194
    %v4251 = vadd.f32 %v4042, %v4199
    %v4252 = vadd.f32 %v4043, %v4204
    %v4253 = vadd.f32 %v4044, %v4209
    %v4254 = vadd.f32 %v4045, %v4214
    %v4255 = vadd.f32 %v4046, %v4219
    %v4256 = vadd.f32 %v4047, %v4228
    %v4257 = vadd.f32 %v4048, %v4233
    %s4258 = scalar_lea.vmem %s3, 88
    %v4259 = vld [vmem:[%s4258] sm:$0xff]
    %v4261 = vrot.slane %v1655, 2
    %v4262 = vsel %vm1691, %v3205, %v4261
    %v4263 = vrot.slane %v1656, 2
    %v4264 = vsel %vm1691, %v4261, %v4263
    %v4265 = vrot.slane %v1657, 2
    %v4266 = vsel %vm1691, %v4263, %v4265
    %v4267 = vsel %vm1739, %v4262, 0
    %v4269 = vsel %vm1739, %v4264, 0
    %v4271 = vsel %vm1739, %v4266, 0
    %4273 = vmatprep.subr.mxu0 0.0
    %4274 = vmatpush1.msra.mxu0 %v4259
    %4275 = vmatprep.subr.mxu0 0.0
    %4276 = vmatpush1.msra.mxu0 0.0
    %4277 = vmatprep.subr.mxu0 0.0
    %4278 = vmatpush1.msra.mxu0 0.0
    %4279 = vmatprep.subr.mxu0 0.0
    %4280 = vmatpush1.msra.mxu0 0.0
    %4281 = vmatprep.subr.mxu0 0.0
    %4282 = vmatpush1.msra.mxu0 0.0
    %4283 = vmatprep.subr.mxu0 0.0
    %4284 = vmatpush1.msra.mxu0 0.0
    %4285 = vmatprep.subr.mxu0 0.0
    %4286 = vmatpush1.msra.mxu0 0.0
    %4287 = vmatprep.subr.mxu0 0.0
    %4288 = vmatpush1.msra.mxu0 0.0
    %4289 = vmatprep.subr.mxu0 0.0
    %4290 = vmatpush1.msra.mxu0 0.0
    %4291 = vmatprep.subr.mxu0 0.0
    %4292 = vmatpush1.msra.mxu0 0.0
    %4293 = vmatprep.subr.mxu0 0.0
    %4294 = vmatpush1.msra.mxu0 0.0
    %4295 = vmatprep.subr.mxu0 0.0
    %4296 = vmatpush1.msra.mxu0 0.0
    %4297 = vmatprep.subr.mxu0 0.0
    %4298 = vmatpush1.msra.mxu0 0.0
    %4299 = vmatprep.subr.mxu0 0.0
    %4300 = vmatpush1.msra.mxu0 0.0
    %4301 = vmatprep.subr.mxu0 0.0
    %4302 = vmatpush1.msra.mxu0 0.0
    %4303 = vmatprep.subr.mxu0 0.0
    %4304 = vmatpush1.msra.mxu0 0.0
    %4305 = vmatprep.subr.mxu0 0.0
    %4306 = vmatpush1.msra.mxu0 0.0
    %4307 = vmatprep.subr.mxu0 0.0
    %4308 = vmatpush1.msra.mxu0 0.0
    %4309 = vmatprep.subr.mxu0 0.0
    %4310 = vmatpush1.msra.mxu0 0.0
    %4311 = vmatprep.subr.mxu0 0.0
    %4312 = vmatpush1.msra.mxu0 0.0
    %4313 = vmatprep.subr.mxu0 0.0
    %4314 = vmatpush1.msra.mxu0 0.0
    %4315 = vmatprep.subr.mxu0 0.0
    %4316 = vmatpush1.msra.mxu0 0.0
    %4317 = vmatprep.subr.mxu0 0.0
    %4318 = vmatpush1.msra.mxu0 0.0
    %4319 = vmatprep.subr.mxu0 0.0
    %4320 = vmatpush1.msra.mxu0 0.0
    %4321 = vmatprep.subr.mxu0 0.0
    %4322 = vmatpush1.msra.mxu0 0.0
    %4323 = vmatprep.subr.mxu0 0.0
    %4324 = vmatpush1.msra.mxu0 0.0
    %4325 = vmatprep.subr.mxu0 0.0
    %4326 = vmatpush1.msra.mxu0 0.0
    %4327 = vmatprep.subr.mxu0 0.0
    %4328 = vmatpush1.msra.mxu0 0.0
    %4329 = vmatprep.subr.mxu0 0.0
    %4330 = vmatpush1.msra.mxu0 0.0
    %4331 = vmatprep.subr.mxu0 0.0
    %4332 = vmatpush1.msra.mxu0 0.0
    %4333 = vmatprep.subr.mxu0 0.0
    %4334 = vmatpush1.msra.mxu0 0.0
    %4335 = vmatprep.subr.mxu0 0.0
    %4336 = vmatpush1.msra.mxu0 0.0
    %4337 = vmatprep.mubr.f32.mxu0 0.0
    %4338 = vmatmul.mubr.f32.gmra.mrb[0].mxu0 %v1752
    %v4339 = vpop.f32.mrb[0].mxu0
    %v4340 = vadd.f32 0.0, %v4339
    %v4341 = vpop.f32.mrb[0].mxu0
    %4342 = vmatprep.mubr.f32.mxu0 0.0
    %4343 = vmatmul.mubr.f32.gmra.mrb[0].mxu0 %v1754
    %v4344 = vpop.f32.mrb[0].mxu0
    %v4345 = vadd.f32 0.0, %v4344
    %v4346 = vpop.f32.mrb[0].mxu0
    %4347 = vmatprep.mubr.f32.mxu0 0.0
    %4348 = vmatmul.mubr.f32.gmra.mrb[0].mxu0 %v1756
    %v4349 = vpop.f32.mrb[0].mxu0
    %v4350 = vadd.f32 0.0, %v4349
    %v4351 = vpop.f32.mrb[0].mxu0
    %4352 = vmatprep.mubr.f32.mxu0 0.0
    %4353 = vmatmul.mubr.f32.gmra.mrb[0].mxu0 %v1758
    %v4354 = vpop.f32.mrb[0].mxu0
    %v4355 = vadd.f32 0.0, %v4354
    %v4356 = vpop.f32.mrb[0].mxu0
    %4357 = vmatprep.mubr.f32.mxu0 0.0
    %4358 = vmatmul.mubr.f32.gmra.mrb[0].mxu0 %v1760
    %v4359 = vpop.f32.mrb[0].mxu0
    %v4360 = vadd.f32 0.0, %v4359
    %v4361 = vpop.f32.mrb[0].mxu0
    %4362 = vmatprep.mubr.f32.mxu0 0.0
    %4363 = vmatmul.mubr.f32.gmra.mrb[0].mxu0 %v1762
    %v4364 = vpop.f32.mrb[0].mxu0
    %v4365 = vadd.f32 0.0, %v4364
    %v4366 = vpop.f32.mrb[0].mxu0
    %4367 = vmatprep.mubr.f32.mxu0 0.0
    %4368 = vmatmul.mubr.f32.gmra.mrb[0].mxu0 %v1764
    %v4369 = vpop.f32.mrb[0].mxu0
    %v4370 = vadd.f32 0.0, %v4369
    %v4371 = vpop.f32.mrb[0].mxu0
    %4372 = vmatprep.mubr.f32.mxu0 0.0
    %4373 = vmatmul.mubr.f32.gmra.mrb[0].mxu0 %v1766
    %v4374 = vpop.f32.mrb[0].mxu0
    %v4375 = vadd.f32 0.0, %v4374
    %v4376 = vpop.f32.mrb[0].mxu0
    %4377 = vmatprep.mubr.f32.mxu0 0.0
    %4378 = vmatmul.mubr.f32.gmra.mrb[0].mxu0 %v1768
    %v4379 = vpop.f32.mrb[0].mxu0
    %v4380 = vadd.f32 0.0, %v4379
    %v4381 = vpop.f32.mrb[0].mxu0
    %4382 = vmatprep.mubr.f32.mxu0 0.0
    %4383 = vmatmul.mubr.f32.gmra.mrb[0].mxu0 %v1770
    %v4384 = vpop.f32.mrb[0].mxu0
    %v4385 = vadd.f32 0.0, %v4384
    %v4386 = vpop.f32.mrb[0].mxu0
    %4387 = vmatprep.mubr.f32.mxu0 0.0
    %4388 = vmatmul.mubr.f32.gmra.mrb[0].mxu0 %v1772
    %v4389 = vpop.f32.mrb[0].mxu0
    %v4390 = vadd.f32 0.0, %v4389
    %v4391 = vpop.f32.mrb[0].mxu0
    %4392 = vmatprep.mubr.f32.mxu0 0.0
    %4393 = vmatmul.mubr.f32.gmra.mrb[0].mxu0 %v1774
    %v4394 = vpop.f32.mrb[0].mxu0
    %v4395 = vadd.f32 0.0, %v4394
    %v4396 = vpop.f32.mrb[0].mxu0
    %4397 = vmatprep.mubr.f32.mxu0 0.0
    %4398 = vmatmul.mubr.f32.gmra.mrb[0].mxu0 %v1776
    %v4399 = vpop.f32.mrb[0].mxu0
    %v4400 = vadd.f32 0.0, %v4399
    %v4401 = vpop.f32.mrb[0].mxu0
    %4402 = vmatprep.mubr.f32.mxu0 0.0
    %4403 = vmatmul.mubr.f32.gmra.mrb[0].mxu0 %v1778
    %v4404 = vpop.f32.mrb[0].mxu0
    %v4405 = vadd.f32 0.0, %v4404
    %v4406 = vpop.f32.mrb[0].mxu0
    %4407 = vmatprep.mubr.f32.mxu0 0.0
    %4408 = vmatmul.mubr.f32.gmra.mrb[0].mxu0 %v1780
    %v4409 = vpop.f32.mrb[0].mxu0
    %v4410 = vadd.f32 0.0, %v4409
    %v4411 = vpop.f32.mrb[0].mxu0
    %4412 = vmatprep.mubr.f32.mxu0 0.0
    %4413 = vmatmul.mubr.f32.gmra.mrb[0].mxu0 %v1782
    %v4414 = vpop.f32.mrb[0].mxu0
    %v4415 = vadd.f32 0.0, %v4414
    %v4416 = vpop.f32.mrb[0].mxu0
    %4417 = vmatprep.mubr.f32.mxu0 0.0
    %4418 = vmatmul.mubr.f32.gmra.mrb[0].mxu0 %v1784
    %v4419 = vpop.f32.mrb[0].mxu0
    %v4420 = vadd.f32 0.0, %v4419
    %v4421 = vpop.f32.mrb[0].mxu0
    %4422 = vmatprep.mubr.f32.mxu0 0.0
    %4423 = vmatmul.mubr.f32.gmra.mrb[0].mxu0 %v3207
    %v4424 = vpop.f32.mrb[0].mxu0
    %v4425 = vadd.f32 0.0, %v4424
    %v4426 = vpop.f32.mrb[0].mxu0
    %4427 = vmatprep.mubr.f32.mxu0 0.0
    %4428 = vmatmul.mubr.f32.gmra.mrb[0].mxu0 %v3209
    %v4429 = vpop.f32.mrb[0].mxu0
    %v4430 = vadd.f32 0.0, %v4429
    %v4431 = vpop.f32.mrb[0].mxu0
    %4432 = vmatprep.mubr.f32.mxu0 0.0
    %4433 = vmatmul.mubr.f32.gmra.mrb[0].mxu0 %v3211
    %v4434 = vpop.f32.mrb[0].mxu0
    %v4435 = vadd.f32 0.0, %v4434
    %v4436 = vpop.f32.mrb[0].mxu0
    %4437 = vmatprep.mubr.f32.mxu0 0.0
    %4438 = vmatmul.mubr.f32.gmra.mrb[0].mxu0 %v4267
    %v4439 = vpop.f32.mrb[0].mxu0
    %v4440 = vpop.f32.mrb[0].mxu0
    %4441 = vmatprep.mubr.f32.mxu0 0.0
    %4442 = vmatmul.mubr.f32.gmra.mrb[0].mxu0 %v4269
    %v4443 = vpop.f32.mrb[0].mxu0
    %v4444 = vadd.f32 0.0, %v4443
    %v4445 = vpop.f32.mrb[0].mxu0
    %4446 = vmatprep.mubr.f32.mxu0 0.0
    %4447 = vmatmul.mubr.f32.gmra.mrb[0].mxu0 %v4271
    %v4448 = vpop.f32.mrb[0].mxu0
    %v4449 = vadd.f32 0.0, %v4448
    %v4450 = vpop.f32.mrb[0].mxu0
    %4451 = vdwg.mxu0
    %v4452 = vadd.f32 %v4236, %v4340
    %v4453 = vadd.f32 %v4237, %v4345
    %v4454 = vadd.f32 %v4238, %v4350
    %v4455 = vadd.f32 %v4239, %v4355
    %v4456 = vadd.f32 %v4240, %v4360
    %v4457 = vadd.f32 %v4241, %v4365
    %v4458 = vadd.f32 %v4242, %v4370
    %v4459 = vadd.f32 %v4243, %v4375
    %v4460 = vadd.f32 %v4244, %v4380
    %v4461 = vadd.f32 %v4245, %v4385
    %v4462 = vadd.f32 %v4246, %v4390
    %v4463 = vadd.f32 %v4247, %v4395
    %v4464 = vadd.f32 %v4248, %v4400
    %v4465 = vadd.f32 %v4249, %v4405
    %v4466 = vadd.f32 %v4250, %v4410
    %v4467 = vadd.f32 %v4251, %v4415
    %v4468 = vadd.f32 %v4252, %v4420
    %v4469 = vadd.f32 %v4253, %v4425
    %v4470 = vadd.f32 %v4254, %v4430
    %v4471 = vadd.f32 %v4255, %v4435
    %v4472 = vadd.f32 %v4256, %v4444
    %v4473 = vadd.f32 %v4257, %v4449
    %s4474 = scalar_lea.vmem %s3, 96
    %v4475 = vld [vmem:[%s4474] sm:$0xff]
    %v4476 = vrot.slane %v1655, 4
    %v4477 = vsel %vm2192, %v3420, %v4476
    %v4478 = vrot.slane %v1656, 4
    %v4479 = vsel %vm2192, %v4476, %v4478
    %v4480 = vrot.slane %v1657, 4
    %v4481 = vsel %vm2192, %v4478, %v4480
    %v4482 = vsel %vm1739, %v4477, 0
    %v4484 = vsel %vm1739, %v4479, 0
    %v4486 = vsel %vm1739, %v4481, 0
    %4488 = vmatprep.subr.mxu0 0.0
    %4489 = vmatpush1.msra.mxu0 %v4475
    %4490 = vmatprep.subr.mxu0 0.0
    %4491 = vmatpush1.msra.mxu0 0.0
    %4492 = vmatprep.subr.mxu0 0.0
    %4493 = vmatpush1.msra.mxu0 0.0
    %4494 = vmatprep.subr.mxu0 0.0
    %4495 = vmatpush1.msra.mxu0 0.0
    %4496 = vmatprep.subr.mxu0 0.0
    %4497 = vmatpush1.msra.mxu0 0.0
    %4498 = vmatprep.subr.mxu0 0.0
    %4499 = vmatpush1.msra.mxu0 0.0
    %4500 = vmatprep.subr.mxu0 0.0
    %4501 = vmatpush1.msra.mxu0 0.0
    %4502 = vmatprep.subr.mxu0 0.0
    %4503 = vmatpush1.msra.mxu0 0.0
    %4504 = vmatprep.subr.mxu0 0.0
    %4505 = vmatpush1.msra.mxu0 0.0
    %4506 = vmatprep.subr.mxu0 0.0
    %4507 = vmatpush1.msra.mxu0 0.0
    %4508 = vmatprep.subr.mxu0 0.0
    %4509 = vmatpush1.msra.mxu0 0.0
    %4510 = vmatprep.subr.mxu0 0.0
    %4511 = vmatpush1.msra.mxu0 0.0
    %4512 = vmatprep.subr.mxu0 0.0
    %4513 = vmatpush1.msra.mxu0 0.0
    %4514 = vmatprep.subr.mxu0 0.0
    %4515 = vmatpush1.msra.mxu0 0.0
    %4516 = vmatprep.subr.mxu0 0.0
    %4517 = vmatpush1.msra.mxu0 0.0
    %4518 = vmatprep.subr.mxu0 0.0
    %4519 = vmatpush1.msra.mxu0 0.0
    %4520 = vmatprep.subr.mxu0 0.0
    %4521 = vmatpush1.msra.mxu0 0.0
    %4522 = vmatprep.subr.mxu0 0.0
    %4523 = vmatpush1.msra.mxu0 0.0
    %4524 = vmatprep.subr.mxu0 0.0
    %4525 = vmatpush1.msra.mxu0 0.0
    %4526 = vmatprep.subr.mxu0 0.0
    %4527 = vmatpush1.msra.mxu0 0.0
    %4528 = vmatprep.subr.mxu0 0.0
    %4529 = vmatpush1.msra.mxu0 0.0
    %4530 = vmatprep.subr.mxu0 0.0
    %4531 = vmatpush1.msra.mxu0 0.0
    %4532 = vmatprep.subr.mxu0 0.0
    %4533 = vmatpush1.msra.mxu0 0.0
    %4534 = vmatprep.subr.mxu0 0.0
    %4535 = vmatpush1.msra.mxu0 0.0
    %4536 = vmatprep.subr.mxu0 0.0
    %4537 = vmatpush1.msra.mxu0 0.0
    %4538 = vmatprep.subr.mxu0 0.0
    %4539 = vmatpush1.msra.mxu0 0.0
    %4540 = vmatprep.subr.mxu0 0.0
    %4541 = vmatpush1.msra.mxu0 0.0
    %4542 = vmatprep.subr.mxu0 0.0
    %4543 = vmatpush1.msra.mxu0 0.0
    %4544 = vmatprep.subr.mxu0 0.0
    %4545 = vmatpush1.msra.mxu0 0.0
    %4546 = vmatprep.subr.mxu0 0.0
    %4547 = vmatpush1.msra.mxu0 0.0
    %4548 = vmatprep.subr.mxu0 0.0
    %4549 = vmatpush1.msra.mxu0 0.0
    %4550 = vmatprep.subr.mxu0 0.0
    %4551 = vmatpush1.msra.mxu0 0.0
    %4552 = vmatprep.mubr.f32.mxu0 0.0
    %4553 = vmatmul.mubr.f32.gmra.mrb[0].mxu0 %v2252
    %v4554 = vpop.f32.mrb[0].mxu0
    %v4555 = vadd.f32 0.0, %v4554
    %v4556 = vpop.f32.mrb[0].mxu0
    %4557 = vmatprep.mubr.f32.mxu0 0.0
    %4558 = vmatmul.mubr.f32.gmra.mrb[0].mxu0 %v2254
    %v4559 = vpop.f32.mrb[0].mxu0
    %v4560 = vadd.f32 0.0, %v4559
    %v4561 = vpop.f32.mrb[0].mxu0
    %4562 = vmatprep.mubr.f32.mxu0 0.0
    %4563 = vmatmul.mubr.f32.gmra.mrb[0].mxu0 %v2256
    %v4564 = vpop.f32.mrb[0].mxu0
    %v4565 = vadd.f32 0.0, %v4564
    %v4566 = vpop.f32.mrb[0].mxu0
    %4567 = vmatprep.mubr.f32.mxu0 0.0
    %4568 = vmatmul.mubr.f32.gmra.mrb[0].mxu0 %v2258
    %v4569 = vpop.f32.mrb[0].mxu0
    %v4570 = vadd.f32 0.0, %v4569
    %v4571 = vpop.f32.mrb[0].mxu0
    %4572 = vmatprep.mubr.f32.mxu0 0.0
    %4573 = vmatmul.mubr.f32.gmra.mrb[0].mxu0 %v2260
    %v4574 = vpop.f32.mrb[0].mxu0
    %v4575 = vadd.f32 0.0, %v4574
    %v4576 = vpop.f32.mrb[0].mxu0
    %4577 = vmatprep.mubr.f32.mxu0 0.0
    %4578 = vmatmul.mubr.f32.gmra.mrb[0].mxu0 %v2262
    %v4579 = vpop.f32.mrb[0].mxu0
    %v4580 = vadd.f32 0.0, %v4579
    %v4581 = vpop.f32.mrb[0].mxu0
    %4582 = vmatprep.mubr.f32.mxu0 0.0
    %4583 = vmatmul.mubr.f32.gmra.mrb[0].mxu0 %v2264
    %v4584 = vpop.f32.mrb[0].mxu0
    %v4585 = vadd.f32 0.0, %v4584
    %v4586 = vpop.f32.mrb[0].mxu0
    %4587 = vmatprep.mubr.f32.mxu0 0.0
    %4588 = vmatmul.mubr.f32.gmra.mrb[0].mxu0 %v2266
    %v4589 = vpop.f32.mrb[0].mxu0
    %v4590 = vadd.f32 0.0, %v4589
    %v4591 = vpop.f32.mrb[0].mxu0
    %4592 = vmatprep.mubr.f32.mxu0 0.0
    %4593 = vmatmul.mubr.f32.gmra.mrb[0].mxu0 %v2268
    %v4594 = vpop.f32.mrb[0].mxu0
    %v4595 = vadd.f32 0.0, %v4594
    %v4596 = vpop.f32.mrb[0].mxu0
    %4597 = vmatprep.mubr.f32.mxu0 0.0
    %4598 = vmatmul.mubr.f32.gmra.mrb[0].mxu0 %v2270
    %v4599 = vpop.f32.mrb[0].mxu0
    %v4600 = vadd.f32 0.0, %v4599
    %v4601 = vpop.f32.mrb[0].mxu0
    %4602 = vmatprep.mubr.f32.mxu0 0.0
    %4603 = vmatmul.mubr.f32.gmra.mrb[0].mxu0 %v2272
    %v4604 = vpop.f32.mrb[0].mxu0
    %v4605 = vadd.f32 0.0, %v4604
    %v4606 = vpop.f32.mrb[0].mxu0
    %4607 = vmatprep.mubr.f32.mxu0 0.0
    %4608 = vmatmul.mubr.f32.gmra.mrb[0].mxu0 %v2274
    %v4609 = vpop.f32.mrb[0].mxu0
    %v4610 = vadd.f32 0.0, %v4609
    %v4611 = vpop.f32.mrb[0].mxu0
    %4612 = vmatprep.mubr.f32.mxu0 0.0
    %4613 = vmatmul.mubr.f32.gmra.mrb[0].mxu0 %v2276
    %v4614 = vpop.f32.mrb[0].mxu0
    %v4615 = vadd.f32 0.0, %v4614
    %v4616 = vpop.f32.mrb[0].mxu0
    %4617 = vmatprep.mubr.f32.mxu0 0.0
    %4618 = vmatmul.mubr.f32.gmra.mrb[0].mxu0 %v2278
    %v4619 = vpop.f32.mrb[0].mxu0
    %v4620 = vadd.f32 0.0, %v4619
    %v4621 = vpop.f32.mrb[0].mxu0
    %4622 = vmatprep.mubr.f32.mxu0 0.0
    %4623 = vmatmul.mubr.f32.gmra.mrb[0].mxu0 %v2280
    %v4624 = vpop.f32.mrb[0].mxu0
    %v4625 = vadd.f32 0.0, %v4624
    %v4626 = vpop.f32.mrb[0].mxu0
    %4627 = vmatprep.mubr.f32.mxu0 0.0
    %4628 = vmatmul.mubr.f32.gmra.mrb[0].mxu0 %v2282
    %v4629 = vpop.f32.mrb[0].mxu0
    %v4630 = vadd.f32 0.0, %v4629
    %v4631 = vpop.f32.mrb[0].mxu0
    %4632 = vmatprep.mubr.f32.mxu0 0.0
    %4633 = vmatmul.mubr.f32.gmra.mrb[0].mxu0 %v2284
    %v4634 = vpop.f32.mrb[0].mxu0
    %v4635 = vadd.f32 0.0, %v4634
    %v4636 = vpop.f32.mrb[0].mxu0
    %4637 = vmatprep.mubr.f32.mxu0 0.0
    %4638 = vmatmul.mubr.f32.gmra.mrb[0].mxu0 %v3422
    %v4639 = vpop.f32.mrb[0].mxu0
    %v4640 = vadd.f32 0.0, %v4639
    %v4641 = vpop.f32.mrb[0].mxu0
    %4642 = vmatprep.mubr.f32.mxu0 0.0
    %4643 = vmatmul.mubr.f32.gmra.mrb[0].mxu0 %v3424
    %v4644 = vpop.f32.mrb[0].mxu0
    %v4645 = vadd.f32 0.0, %v4644
    %v4646 = vpop.f32.mrb[0].mxu0
    %4647 = vmatprep.mubr.f32.mxu0 0.0
    %4648 = vmatmul.mubr.f32.gmra.mrb[0].mxu0 %v3426
    %v4649 = vpop.f32.mrb[0].mxu0
    %v4650 = vadd.f32 0.0, %v4649
    %v4651 = vpop.f32.mrb[0].mxu0
    %4652 = vmatprep.mubr.f32.mxu0 0.0
    %4653 = vmatmul.mubr.f32.gmra.mrb[0].mxu0 %v4482
    %v4654 = vpop.f32.mrb[0].mxu0
    %v4655 = vpop.f32.mrb[0].mxu0
    %4656 = vmatprep.mubr.f32.mxu0 0.0
    %4657 = vmatmul.mubr.f32.gmra.mrb[0].mxu0 %v4484
    %v4658 = vpop.f32.mrb[0].mxu0
    %v4659 = vadd.f32 0.0, %v4658
    %v4660 = vpop.f32.mrb[0].mxu0
    %4661 = vmatprep.mubr.f32.mxu0 0.0
    %4662 = vmatmul.mubr.f32.gmra.mrb[0].mxu0 %v4486
    %v4663 = vpop.f32.mrb[0].mxu0
    %v4664 = vadd.f32 0.0, %v4663
    %v4665 = vpop.f32.mrb[0].mxu0
    %4666 = vdwg.mxu0
    %v4667 = vadd.f32 %v4452, %v4555
    %v4668 = vadd.f32 %v4453, %v4560
    %v4669 = vadd.f32 %v4454, %v4565
    %v4670 = vadd.f32 %v4455, %v4570
    %v4671 = vadd.f32 %v4456, %v4575
    %v4672 = vadd.f32 %v4457, %v4580
    %v4673 = vadd.f32 %v4458, %v4585
    %v4674 = vadd.f32 %v4459, %v4590
    %v4675 = vadd.f32 %v4460, %v4595
    %v4676 = vadd.f32 %v4461, %v4600
    %v4677 = vadd.f32 %v4462, %v4605
    %v4678 = vadd.f32 %v4463, %v4610
    %v4679 = vadd.f32 %v4464, %v4615
    %v4680 = vadd.f32 %v4465, %v4620
    %v4681 = vadd.f32 %v4466, %v4625
    %v4682 = vadd.f32 %v4467, %v4630
    %v4683 = vadd.f32 %v4468, %v4635
    %v4684 = vadd.f32 %v4469, %v4640
    %v4685 = vadd.f32 %v4470, %v4645
    %v4686 = vadd.f32 %v4471, %v4650
    %v4687 = vadd.f32 %v4472, %v4659
    %v4688 = vadd.f32 %v4473, %v4664
    %s4689 = scalar_lea.vmem %s3, 104
    %v4690 = vld [vmem:[%s4689] sm:$0xff]
    %v4691 = vrot.slane %v1655, 6
    %v4692 = vsel %vm2489, %v3635, %v4691
    %v4693 = vrot.slane %v1656, 6
    %v4694 = vsel %vm2489, %v4691, %v4693
    %v4695 = vrot.slane %v1657, 6
    %v4696 = vsel %vm2489, %v4693, %v4695
    %v4697 = vsel %vm1739, %v4692, 0
    %v4699 = vsel %vm1739, %v4694, 0
    %v4701 = vsel %vm1739, %v4696, 0
    %4703 = vmatprep.subr.mxu0 0.0
    %4704 = vmatpush1.msra.mxu0 %v4690
    %4705 = vmatprep.subr.mxu0 0.0
    %4706 = vmatpush1.msra.mxu0 0.0
    %4707 = vmatprep.subr.mxu0 0.0
    %4708 = vmatpush1.msra.mxu0 0.0
    %4709 = vmatprep.subr.mxu0 0.0
    %4710 = vmatpush1.msra.mxu0 0.0
    %4711 = vmatprep.subr.mxu0 0.0
    %4712 = vmatpush1.msra.mxu0 0.0
    %4713 = vmatprep.subr.mxu0 0.0
    %4714 = vmatpush1.msra.mxu0 0.0
    %4715 = vmatprep.subr.mxu0 0.0
    %4716 = vmatpush1.msra.mxu0 0.0
    %4717 = vmatprep.subr.mxu0 0.0
    %4718 = vmatpush1.msra.mxu0 0.0
    %4719 = vmatprep.subr.mxu0 0.0
    %4720 = vmatpush1.msra.mxu0 0.0
    %4721 = vmatprep.subr.mxu0 0.0
    %4722 = vmatpush1.msra.mxu0 0.0
    %4723 = vmatprep.subr.mxu0 0.0
    %4724 = vmatpush1.msra.mxu0 0.0
    %4725 = vmatprep.subr.mxu0 0.0
    %4726 = vmatpush1.msra.mxu0 0.0
    %4727 = vmatprep.subr.mxu0 0.0
    %4728 = vmatpush1.msra.mxu0 0.0
    %4729 = vmatprep.subr.mxu0 0.0
    %4730 = vmatpush1.msra.mxu0 0.0
    %4731 = vmatprep.subr.mxu0 0.0
    %4732 = vmatpush1.msra.mxu0 0.0
    %4733 = vmatprep.subr.mxu0 0.0
    %4734 = vmatpush1.msra.mxu0 0.0
    %4735 = vmatprep.subr.mxu0 0.0
    %4736 = vmatpush1.msra.mxu0 0.0
    %4737 = vmatprep.subr.mxu0 0.0
    %4738 = vmatpush1.msra.mxu0 0.0
    %4739 = vmatprep.subr.mxu0 0.0
    %4740 = vmatpush1.msra.mxu0 0.0
    %4741 = vmatprep.subr.mxu0 0.0
    %4742 = vmatpush1.msra.mxu0 0.0
    %4743 = vmatprep.subr.mxu0 0.0
    %4744 = vmatpush1.msra.mxu0 0.0
    %4745 = vmatprep.subr.mxu0 0.0
    %4746 = vmatpush1.msra.mxu0 0.0
    %4747 = vmatprep.subr.mxu0 0.0
    %4748 = vmatpush1.msra.mxu0 0.0
    %4749 = vmatprep.subr.mxu0 0.0
    %4750 = vmatpush1.msra.mxu0 0.0
    %4751 = vmatprep.subr.mxu0 0.0
    %4752 = vmatpush1.msra.mxu0 0.0
    %4753 = vmatprep.subr.mxu0 0.0
    %4754 = vmatpush1.msra.mxu0 0.0
    %4755 = vmatprep.subr.mxu0 0.0
    %4756 = vmatpush1.msra.mxu0 0.0
    %4757 = vmatprep.subr.mxu0 0.0
    %4758 = vmatpush1.msra.mxu0 0.0
    %4759 = vmatprep.subr.mxu0 0.0
    %4760 = vmatpush1.msra.mxu0 0.0
    %4761 = vmatprep.subr.mxu0 0.0
    %4762 = vmatpush1.msra.mxu0 0.0
    %4763 = vmatprep.subr.mxu0 0.0
    %4764 = vmatpush1.msra.mxu0 0.0
    %4765 = vmatprep.subr.mxu0 0.0
    %4766 = vmatpush1.msra.mxu0 0.0
    %4767 = vmatprep.mubr.f32.mxu0 0.0
    %4768 = vmatmul.mubr.f32.gmra.mrb[0].mxu0 %v2549
    %v4769 = vpop.f32.mrb[0].mxu0
    %v4770 = vadd.f32 0.0, %v4769
    %v4771 = vpop.f32.mrb[0].mxu0
    %4772 = vmatprep.mubr.f32.mxu0 0.0
    %4773 = vmatmul.mubr.f32.gmra.mrb[0].mxu0 %v2551
    %v4774 = vpop.f32.mrb[0].mxu0
    %v4775 = vadd.f32 0.0, %v4774
    %v4776 = vpop.f32.mrb[0].mxu0
    %4777 = vmatprep.mubr.f32.mxu0 0.0
    %4778 = vmatmul.mubr.f32.gmra.mrb[0].mxu0 %v2553
    %v4779 = vpop.f32.mrb[0].mxu0
    %v4780 = vadd.f32 0.0, %v4779
    %v4781 = vpop.f32.mrb[0].mxu0
    %4782 = vmatprep.mubr.f32.mxu0 0.0
    %4783 = vmatmul.mubr.f32.gmra.mrb[0].mxu0 %v2555
    %v4784 = vpop.f32.mrb[0].mxu0
    %v4785 = vadd.f32 0.0, %v4784
    %v4786 = vpop.f32.mrb[0].mxu0
    %4787 = vmatprep.mubr.f32.mxu0 0.0
    %4788 = vmatmul.mubr.f32.gmra.mrb[0].mxu0 %v2557
    %v4789 = vpop.f32.mrb[0].mxu0
    %v4790 = vadd.f32 0.0, %v4789
    %v4791 = vpop.f32.mrb[0].mxu0
    %4792 = vmatprep.mubr.f32.mxu0 0.0
    %4793 = vmatmul.mubr.f32.gmra.mrb[0].mxu0 %v2559
    %v4794 = vpop.f32.mrb[0].mxu0
    %v4795 = vadd.f32 0.0, %v4794
    %v4796 = vpop.f32.mrb[0].mxu0
    %4797 = vmatprep.mubr.f32.mxu0 0.0
    %4798 = vmatmul.mubr.f32.gmra.mrb[0].mxu0 %v2561
    %v4799 = vpop.f32.mrb[0].mxu0
    %v4800 = vadd.f32 0.0, %v4799
    %v4801 = vpop.f32.mrb[0].mxu0
    %4802 = vmatprep.mubr.f32.mxu0 0.0
    %4803 = vmatmul.mubr.f32.gmra.mrb[0].mxu0 %v2563
    %v4804 = vpop.f32.mrb[0].mxu0
    %v4805 = vadd.f32 0.0, %v4804
    %v4806 = vpop.f32.mrb[0].mxu0
    %4807 = vmatprep.mubr.f32.mxu0 0.0
    %4808 = vmatmul.mubr.f32.gmra.mrb[0].mxu0 %v2565
    %v4809 = vpop.f32.mrb[0].mxu0
    %v4810 = vadd.f32 0.0, %v4809
    %v4811 = vpop.f32.mrb[0].mxu0
    %4812 = vmatprep.mubr.f32.mxu0 0.0
    %4813 = vmatmul.mubr.f32.gmra.mrb[0].mxu0 %v2567
    %v4814 = vpop.f32.mrb[0].mxu0
    %v4815 = vadd.f32 0.0, %v4814
    %v4816 = vpop.f32.mrb[0].mxu0
    %4817 = vmatprep.mubr.f32.mxu0 0.0
    %4818 = vmatmul.mubr.f32.gmra.mrb[0].mxu0 %v2569
    %v4819 = vpop.f32.mrb[0].mxu0
    %v4820 = vadd.f32 0.0, %v4819
    %v4821 = vpop.f32.mrb[0].mxu0
    %4822 = vmatprep.mubr.f32.mxu0 0.0
    %4823 = vmatmul.mubr.f32.gmra.mrb[0].mxu0 %v2571
    %v4824 = vpop.f32.mrb[0].mxu0
    %v4825 = vadd.f32 0.0, %v4824
    %v4826 = vpop.f32.mrb[0].mxu0
    %4827 = vmatprep.mubr.f32.mxu0 0.0
    %4828 = vmatmul.mubr.f32.gmra.mrb[0].mxu0 %v2573
    %v4829 = vpop.f32.mrb[0].mxu0
    %v4830 = vadd.f32 0.0, %v4829
    %v4831 = vpop.f32.mrb[0].mxu0
    %4832 = vmatprep.mubr.f32.mxu0 0.0
    %4833 = vmatmul.mubr.f32.gmra.mrb[0].mxu0 %v2575
    %v4834 = vpop.f32.mrb[0].mxu0
    %v4835 = vadd.f32 0.0, %v4834
    %v4836 = vpop.f32.mrb[0].mxu0
    %4837 = vmatprep.mubr.f32.mxu0 0.0
    %4838 = vmatmul.mubr.f32.gmra.mrb[0].mxu0 %v2577
    %v4839 = vpop.f32.mrb[0].mxu0
    %v4840 = vadd.f32 0.0, %v4839
    %v4841 = vpop.f32.mrb[0].mxu0
    %4842 = vmatprep.mubr.f32.mxu0 0.0
    %4843 = vmatmul.mubr.f32.gmra.mrb[0].mxu0 %v2579
    %v4844 = vpop.f32.mrb[0].mxu0
    %v4845 = vadd.f32 0.0, %v4844
    %v4846 = vpop.f32.mrb[0].mxu0
    %4847 = vmatprep.mubr.f32.mxu0 0.0
    %4848 = vmatmul.mubr.f32.gmra.mrb[0].mxu0 %v2581
    %v4849 = vpop.f32.mrb[0].mxu0
    %v4850 = vadd.f32 0.0, %v4849
    %v4851 = vpop.f32.mrb[0].mxu0
    %4852 = vmatprep.mubr.f32.mxu0 0.0
    %4853 = vmatmul.mubr.f32.gmra.mrb[0].mxu0 %v3637
    %v4854 = vpop.f32.mrb[0].mxu0
    %v4855 = vadd.f32 0.0, %v4854
    %v4856 = vpop.f32.mrb[0].mxu0
    %4857 = vmatprep.mubr.f32.mxu0 0.0
    %4858 = vmatmul.mubr.f32.gmra.mrb[0].mxu0 %v3639
    %v4859 = vpop.f32.mrb[0].mxu0
    %v4860 = vadd.f32 0.0, %v4859
    %v4861 = vpop.f32.mrb[0].mxu0
    %4862 = vmatprep.mubr.f32.mxu0 0.0
    %4863 = vmatmul.mubr.f32.gmra.mrb[0].mxu0 %v3641
    %v4864 = vpop.f32.mrb[0].mxu0
    %v4865 = vadd.f32 0.0, %v4864
    %v4866 = vpop.f32.mrb[0].mxu0
    %4867 = vmatprep.mubr.f32.mxu0 0.0
    %4868 = vmatmul.mubr.f32.gmra.mrb[0].mxu0 %v4697
    %v4869 = vpop.f32.mrb[0].mxu0
    %v4870 = vpop.f32.mrb[0].mxu0
    %4871 = vmatprep.mubr.f32.mxu0 0.0
    %4872 = vmatmul.mubr.f32.gmra.mrb[0].mxu0 %v4699
    %v4873 = vpop.f32.mrb[0].mxu0
    %v4874 = vadd.f32 0.0, %v4873
    %v4875 = vpop.f32.mrb[0].mxu0
    %4876 = vmatprep.mubr.f32.mxu0 0.0
    %4877 = vmatmul.mubr.f32.gmra.mrb[0].mxu0 %v4701
    %v4878 = vpop.f32.mrb[0].mxu0
    %v4879 = vadd.f32 0.0, %v4878
    %v4880 = vpop.f32.mrb[0].mxu0
    %4881 = vdwg.mxu0
    %v4882 = vadd.f32 %v4667, %v4770
    %v4883 = vadd.f32 %v4668, %v4775
    %v4884 = vadd.f32 %v4669, %v4780
    %v4885 = vadd.f32 %v4670, %v4785
    %v4886 = vadd.f32 %v4671, %v4790
    %v4887 = vadd.f32 %v4672, %v4795
    %v4888 = vadd.f32 %v4673, %v4800
    %v4889 = vadd.f32 %v4674, %v4805
    %v4890 = vadd.f32 %v4675, %v4810
    %v4891 = vadd.f32 %v4676, %v4815
    %v4892 = vadd.f32 %v4677, %v4820
    %v4893 = vadd.f32 %v4678, %v4825
    %v4894 = vadd.f32 %v4679, %v4830
    %v4895 = vadd.f32 %v4680, %v4835
    %v4896 = vadd.f32 %v4681, %v4840
    %v4897 = vadd.f32 %v4682, %v4845
    %v4898 = vadd.f32 %v4683, %v4850
    %v4899 = vadd.f32 %v4684, %v4855
    %v4900 = vadd.f32 %v4685, %v4860
    %v4901 = vadd.f32 %v4686, %v4865
    %v4902 = vadd.f32 %v4687, %v4874
    %v4903 = vadd.f32 %v4688, %v4879
    %s4904 = scalar_lea.vmem %s3, 112
    %v4905 = vld [vmem:[%s4904] sm:$0xff]
    %v4906 = vsel %vm1739, %v1657, 0
    %4908 = vmatprep.subr.mxu0 0.0
    %4909 = vmatpush1.msra.mxu0 %v4905
    %4910 = vmatprep.subr.mxu0 0.0
    %4911 = vmatpush1.msra.mxu0 0.0
    %4912 = vmatprep.subr.mxu0 0.0
    %4913 = vmatpush1.msra.mxu0 0.0
    %4914 = vmatprep.subr.mxu0 0.0
    %4915 = vmatpush1.msra.mxu0 0.0
    %4916 = vmatprep.subr.mxu0 0.0
    %4917 = vmatpush1.msra.mxu0 0.0
    %4918 = vmatprep.subr.mxu0 0.0
    %4919 = vmatpush1.msra.mxu0 0.0
    %4920 = vmatprep.subr.mxu0 0.0
    %4921 = vmatpush1.msra.mxu0 0.0
    %4922 = vmatprep.subr.mxu0 0.0
    %4923 = vmatpush1.msra.mxu0 0.0
    %4924 = vmatprep.subr.mxu0 0.0
    %4925 = vmatpush1.msra.mxu0 0.0
    %4926 = vmatprep.subr.mxu0 0.0
    %4927 = vmatpush1.msra.mxu0 0.0
    %4928 = vmatprep.subr.mxu0 0.0
    %4929 = vmatpush1.msra.mxu0 0.0
    %4930 = vmatprep.subr.mxu0 0.0
    %4931 = vmatpush1.msra.mxu0 0.0
    %4932 = vmatprep.subr.mxu0 0.0
    %4933 = vmatpush1.msra.mxu0 0.0
    %4934 = vmatprep.subr.mxu0 0.0
    %4935 = vmatpush1.msra.mxu0 0.0
    %4936 = vmatprep.subr.mxu0 0.0
    %4937 = vmatpush1.msra.mxu0 0.0
    %4938 = vmatprep.subr.mxu0 0.0
    %4939 = vmatpush1.msra.mxu0 0.0
    %4940 = vmatprep.subr.mxu0 0.0
    %4941 = vmatpush1.msra.mxu0 0.0
    %4942 = vmatprep.subr.mxu0 0.0
    %4943 = vmatpush1.msra.mxu0 0.0
    %4944 = vmatprep.subr.mxu0 0.0
    %4945 = vmatpush1.msra.mxu0 0.0
    %4946 = vmatprep.subr.mxu0 0.0
    %4947 = vmatpush1.msra.mxu0 0.0
    %4948 = vmatprep.subr.mxu0 0.0
    %4949 = vmatpush1.msra.mxu0 0.0
    %4950 = vmatprep.subr.mxu0 0.0
    %4951 = vmatpush1.msra.mxu0 0.0
    %4952 = vmatprep.subr.mxu0 0.0
    %4953 = vmatpush1.msra.mxu0 0.0
    %4954 = vmatprep.subr.mxu0 0.0
    %4955 = vmatpush1.msra.mxu0 0.0
    %4956 = vmatprep.subr.mxu0 0.0
    %4957 = vmatpush1.msra.mxu0 0.0
    %4958 = vmatprep.subr.mxu0 0.0
    %4959 = vmatpush1.msra.mxu0 0.0
    %4960 = vmatprep.subr.mxu0 0.0
    %4961 = vmatpush1.msra.mxu0 0.0
    %4962 = vmatprep.subr.mxu0 0.0
    %4963 = vmatpush1.msra.mxu0 0.0
    %4964 = vmatprep.subr.mxu0 0.0
    %4965 = vmatpush1.msra.mxu0 0.0
    %4966 = vmatprep.subr.mxu0 0.0
    %4967 = vmatpush1.msra.mxu0 0.0
    %4968 = vmatprep.subr.mxu0 0.0
    %4969 = vmatpush1.msra.mxu0 0.0
    %4970 = vmatprep.subr.mxu0 0.0
    %4971 = vmatpush1.msra.mxu0 0.0
    %4972 = vmatprep.mubr.f32.mxu0 0.0
    %4973 = vmatmul.mubr.f32.gmra.mrb[0].mxu0 %v1979
    %v4974 = vpop.f32.mrb[0].mxu0
    %v4975 = vadd.f32 0.0, %v4974
    %v4976 = vpop.f32.mrb[0].mxu0
    %4977 = vmatprep.mubr.f32.mxu0 0.0
    %4978 = vmatmul.mubr.f32.gmra.mrb[0].mxu0 %v1981
    %v4979 = vpop.f32.mrb[0].mxu0
    %v4980 = vadd.f32 0.0, %v4979
    %v4981 = vpop.f32.mrb[0].mxu0
    %4982 = vmatprep.mubr.f32.mxu0 0.0
    %4983 = vmatmul.mubr.f32.gmra.mrb[0].mxu0 %v1983
    %v4984 = vpop.f32.mrb[0].mxu0
    %v4985 = vadd.f32 0.0, %v4984
    %v4986 = vpop.f32.mrb[0].mxu0
    %4987 = vmatprep.mubr.f32.mxu0 0.0
    %4988 = vmatmul.mubr.f32.gmra.mrb[0].mxu0 %v1985
    %v4989 = vpop.f32.mrb[0].mxu0
    %v4990 = vadd.f32 0.0, %v4989
    %v4991 = vpop.f32.mrb[0].mxu0
    %4992 = vmatprep.mubr.f32.mxu0 0.0
    %4993 = vmatmul.mubr.f32.gmra.mrb[0].mxu0 %v1987
    %v4994 = vpop.f32.mrb[0].mxu0
    %v4995 = vadd.f32 0.0, %v4994
    %v4996 = vpop.f32.mrb[0].mxu0
    %4997 = vmatprep.mubr.f32.mxu0 0.0
    %4998 = vmatmul.mubr.f32.gmra.mrb[0].mxu0 %v1989
    %v4999 = vpop.f32.mrb[0].mxu0
    %v5000 = vadd.f32 0.0, %v4999
    %v5001 = vpop.f32.mrb[0].mxu0
    %5002 = vmatprep.mubr.f32.mxu0 0.0
    %5003 = vmatmul.mubr.f32.gmra.mrb[0].mxu0 %v1991
    %v5004 = vpop.f32.mrb[0].mxu0
    %v5005 = vadd.f32 0.0, %v5004
    %v5006 = vpop.f32.mrb[0].mxu0
    %5007 = vmatprep.mubr.f32.mxu0 0.0
    %5008 = vmatmul.mubr.f32.gmra.mrb[0].mxu0 %v1993
    %v5009 = vpop.f32.mrb[0].mxu0
    %v5010 = vadd.f32 0.0, %v5009
    %v5011 = vpop.f32.mrb[0].mxu0
    %5012 = vmatprep.mubr.f32.mxu0 0.0
    %5013 = vmatmul.mubr.f32.gmra.mrb[0].mxu0 %v1995
    %v5014 = vpop.f32.mrb[0].mxu0
    %v5015 = vadd.f32 0.0, %v5014
    %v5016 = vpop.f32.mrb[0].mxu0
    %5017 = vmatprep.mubr.f32.mxu0 0.0
    %5018 = vmatmul.mubr.f32.gmra.mrb[0].mxu0 %v1997
    %v5019 = vpop.f32.mrb[0].mxu0
    %v5020 = vadd.f32 0.0, %v5019
    %v5021 = vpop.f32.mrb[0].mxu0
    %5022 = vmatprep.mubr.f32.mxu0 0.0
    %5023 = vmatmul.mubr.f32.gmra.mrb[0].mxu0 %v1999
    %v5024 = vpop.f32.mrb[0].mxu0
    %v5025 = vadd.f32 0.0, %v5024
    %v5026 = vpop.f32.mrb[0].mxu0
    %5027 = vmatprep.mubr.f32.mxu0 0.0
    %5028 = vmatmul.mubr.f32.gmra.mrb[0].mxu0 %v2001
    %v5029 = vpop.f32.mrb[0].mxu0
    %v5030 = vadd.f32 0.0, %v5029
    %v5031 = vpop.f32.mrb[0].mxu0
    %5032 = vmatprep.mubr.f32.mxu0 0.0
    %5033 = vmatmul.mubr.f32.gmra.mrb[0].mxu0 %v2003
    %v5034 = vpop.f32.mrb[0].mxu0
    %v5035 = vadd.f32 0.0, %v5034
    %v5036 = vpop.f32.mrb[0].mxu0
    %5037 = vmatprep.mubr.f32.mxu0 0.0
    %5038 = vmatmul.mubr.f32.gmra.mrb[0].mxu0 %v2005
    %v5039 = vpop.f32.mrb[0].mxu0
    %v5040 = vadd.f32 0.0, %v5039
    %v5041 = vpop.f32.mrb[0].mxu0
    %5042 = vmatprep.mubr.f32.mxu0 0.0
    %5043 = vmatmul.mubr.f32.gmra.mrb[0].mxu0 %v2007
    %v5044 = vpop.f32.mrb[0].mxu0
    %v5045 = vadd.f32 0.0, %v5044
    %v5046 = vpop.f32.mrb[0].mxu0
    %5047 = vmatprep.mubr.f32.mxu0 0.0
    %5048 = vmatmul.mubr.f32.gmra.mrb[0].mxu0 %v2009
    %v5049 = vpop.f32.mrb[0].mxu0
    %v5050 = vadd.f32 0.0, %v5049
    %v5051 = vpop.f32.mrb[0].mxu0
    %5052 = vmatprep.mubr.f32.mxu0 0.0
    %5053 = vmatmul.mubr.f32.gmra.mrb[0].mxu0 %v2786
    %v5054 = vpop.f32.mrb[0].mxu0
    %v5055 = vadd.f32 0.0, %v5054
    %v5056 = vpop.f32.mrb[0].mxu0
    %5057 = vmatprep.mubr.f32.mxu0 0.0
    %5058 = vmatmul.mubr.f32.gmra.mrb[0].mxu0 %v2992
    %v5059 = vpop.f32.mrb[0].mxu0
    %v5060 = vadd.f32 0.0, %v5059
    %v5061 = vpop.f32.mrb[0].mxu0
    %5062 = vmatprep.mubr.f32.mxu0 0.0
    %5063 = vmatmul.mubr.f32.gmra.mrb[0].mxu0 %v2995
    %v5064 = vpop.f32.mrb[0].mxu0
    %v5065 = vadd.f32 0.0, %v5064
    %v5066 = vpop.f32.mrb[0].mxu0
    %5067 = vmatprep.mubr.f32.mxu0 0.0
    %5068 = vmatmul.mubr.f32.gmra.mrb[0].mxu0 %v3846
    %v5069 = vpop.f32.mrb[0].mxu0
    %v5070 = vadd.f32 0.0, %v5069
    %v5071 = vpop.f32.mrb[0].mxu0
    %5072 = vmatprep.mubr.f32.mxu0 0.0
    %5073 = vmatmul.mubr.f32.gmra.mrb[0].mxu0 %v4052
    %v5074 = vpop.f32.mrb[0].mxu0
    %v5075 = vpop.f32.mrb[0].mxu0
    %5076 = vmatprep.mubr.f32.mxu0 0.0
    %5077 = vmatmul.mubr.f32.gmra.mrb[0].mxu0 %v4055
    %v5078 = vpop.f32.mrb[0].mxu0
    %v5079 = vadd.f32 0.0, %v5078
    %v5080 = vpop.f32.mrb[0].mxu0
    %5081 = vmatprep.mubr.f32.mxu0 0.0
    %5082 = vmatmul.mubr.f32.gmra.mrb[0].mxu0 %v4906
    %v5083 = vpop.f32.mrb[0].mxu0
    %v5084 = vadd.f32 0.0, %v5083
    %v5085 = vpop.f32.mrb[0].mxu0
    %5086 = vdwg.mxu0
    %v5087 = vadd.f32 %v4882, %v4975
    %v5088 = vadd.f32 %v4883, %v4980
    %v5089 = vadd.f32 %v4884, %v4985
    %v5090 = vadd.f32 %v4885, %v4990
    %v5091 = vadd.f32 %v4886, %v4995
    %v5092 = vadd.f32 %v4887, %v5000
    %v5093 = vadd.f32 %v4888, %v5005
    %v5094 = vadd.f32 %v4889, %v5010
    %v5095 = vadd.f32 %v4890, %v5015
    %v5096 = vadd.f32 %v4891, %v5020
    %v5097 = vadd.f32 %v4892, %v5025
    %v5098 = vadd.f32 %v4893, %v5030
    %v5099 = vadd.f32 %v4894, %v5035
    %v5100 = vadd.f32 %v4895, %v5040
    %v5101 = vadd.f32 %v4896, %v5045
    %v5102 = vadd.f32 %v4897, %v5050
    %v5103 = vadd.f32 %v4898, %v5055
    %v5104 = vadd.f32 %v4899, %v5060
    %v5105 = vadd.f32 %v4900, %v5065
    %v5106 = vadd.f32 %v4901, %v5070
    %v5107 = vadd.f32 %v4902, %v5079
    %v5108 = vadd.f32 %v4903, %v5084
    %s5109 = scalar_lea.vmem %s3, 120
    %v5110 = vld [vmem:[%s5109] sm:$0xff]
    %v5112 = vsel %vm1739, %v1658, 0
    %v5115 = vsel %vm1739, %v1659, 0
    %5117 = vmatprep.subr.mxu0 0.0
    %5118 = vmatpush1.msra.mxu0 %v5110
    %5119 = vmatprep.subr.mxu0 0.0
    %5120 = vmatpush1.msra.mxu0 0.0
    %5121 = vmatprep.subr.mxu0 0.0
    %5122 = vmatpush1.msra.mxu0 0.0
    %5123 = vmatprep.subr.mxu0 0.0
    %5124 = vmatpush1.msra.mxu0 0.0
    %5125 = vmatprep.subr.mxu0 0.0
    %5126 = vmatpush1.msra.mxu0 0.0
    %5127 = vmatprep.subr.mxu0 0.0
    %5128 = vmatpush1.msra.mxu0 0.0
    %5129 = vmatprep.subr.mxu0 0.0
    %5130 = vmatpush1.msra.mxu0 0.0
    %5131 = vmatprep.subr.mxu0 0.0
    %5132 = vmatpush1.msra.mxu0 0.0
    %5133 = vmatprep.subr.mxu0 0.0
    %5134 = vmatpush1.msra.mxu0 0.0
    %5135 = vmatprep.subr.mxu0 0.0
    %5136 = vmatpush1.msra.mxu0 0.0
    %5137 = vmatprep.subr.mxu0 0.0
    %5138 = vmatpush1.msra.mxu0 0.0
    %5139 = vmatprep.subr.mxu0 0.0
    %5140 = vmatpush1.msra.mxu0 0.0
    %5141 = vmatprep.subr.mxu0 0.0
    %5142 = vmatpush1.msra.mxu0 0.0
    %5143 = vmatprep.subr.mxu0 0.0
    %5144 = vmatpush1.msra.mxu0 0.0
    %5145 = vmatprep.subr.mxu0 0.0
    %5146 = vmatpush1.msra.mxu0 0.0
    %5147 = vmatprep.subr.mxu0 0.0
    %5148 = vmatpush1.msra.mxu0 0.0
    %5149 = vmatprep.subr.mxu0 0.0
    %5150 = vmatpush1.msra.mxu0 0.0
    %5151 = vmatprep.subr.mxu0 0.0
    %5152 = vmatpush1.msra.mxu0 0.0
    %5153 = vmatprep.subr.mxu0 0.0
    %5154 = vmatpush1.msra.mxu0 0.0
    %5155 = vmatprep.subr.mxu0 0.0
    %5156 = vmatpush1.msra.mxu0 0.0
    %5157 = vmatprep.subr.mxu0 0.0
    %5158 = vmatpush1.msra.mxu0 0.0
    %5159 = vmatprep.subr.mxu0 0.0
    %5160 = vmatpush1.msra.mxu0 0.0
    %5161 = vmatprep.subr.mxu0 0.0
    %5162 = vmatpush1.msra.mxu0 0.0
    %5163 = vmatprep.subr.mxu0 0.0
    %5164 = vmatpush1.msra.mxu0 0.0
    %5165 = vmatprep.subr.mxu0 0.0
    %5166 = vmatpush1.msra.mxu0 0.0
    %5167 = vmatprep.subr.mxu0 0.0
    %5168 = vmatpush1.msra.mxu0 0.0
    %5169 = vmatprep.subr.mxu0 0.0
    %5170 = vmatpush1.msra.mxu0 0.0
    %5171 = vmatprep.subr.mxu0 0.0
    %5172 = vmatpush1.msra.mxu0 0.0
    %5173 = vmatprep.subr.mxu0 0.0
    %5174 = vmatpush1.msra.mxu0 0.0
    %5175 = vmatprep.subr.mxu0 0.0
    %5176 = vmatpush1.msra.mxu0 0.0
    %5177 = vmatprep.subr.mxu0 0.0
    %5178 = vmatpush1.msra.mxu0 0.0
    %5179 = vmatprep.subr.mxu0 0.0
    %5180 = vmatpush1.msra.mxu0 0.0
    %5181 = vmatprep.mubr.f32.mxu0 0.0
    %5182 = vmatmul.mubr.f32.gmra.mrb[0].mxu0 %v1983
    %v5183 = vpop.f32.mrb[0].mxu0
    %v5184 = vadd.f32 0.0, %v5183
    %v5185 = vpop.f32.mrb[0].mxu0
    %5186 = vmatprep.mubr.f32.mxu0 0.0
    %5187 = vmatmul.mubr.f32.gmra.mrb[0].mxu0 %v1985
    %v5188 = vpop.f32.mrb[0].mxu0
    %v5189 = vadd.f32 0.0, %v5188
    %v5190 = vpop.f32.mrb[0].mxu0
    %5191 = vmatprep.mubr.f32.mxu0 0.0
    %5192 = vmatmul.mubr.f32.gmra.mrb[0].mxu0 %v1987
    %v5193 = vpop.f32.mrb[0].mxu0
    %v5194 = vadd.f32 0.0, %v5193
    %v5195 = vpop.f32.mrb[0].mxu0
    %5196 = vmatprep.mubr.f32.mxu0 0.0
    %5197 = vmatmul.mubr.f32.gmra.mrb[0].mxu0 %v1989
    %v5198 = vpop.f32.mrb[0].mxu0
    %v5199 = vadd.f32 0.0, %v5198
    %v5200 = vpop.f32.mrb[0].mxu0
    %5201 = vmatprep.mubr.f32.mxu0 0.0
    %5202 = vmatmul.mubr.f32.gmra.mrb[0].mxu0 %v1991
    %v5203 = vpop.f32.mrb[0].mxu0
    %v5204 = vadd.f32 0.0, %v5203
    %v5205 = vpop.f32.mrb[0].mxu0
    %5206 = vmatprep.mubr.f32.mxu0 0.0
    %5207 = vmatmul.mubr.f32.gmra.mrb[0].mxu0 %v1993
    %v5208 = vpop.f32.mrb[0].mxu0
    %v5209 = vadd.f32 0.0, %v5208
    %v5210 = vpop.f32.mrb[0].mxu0
    %5211 = vmatprep.mubr.f32.mxu0 0.0
    %5212 = vmatmul.mubr.f32.gmra.mrb[0].mxu0 %v1995
    %v5213 = vpop.f32.mrb[0].mxu0
    %v5214 = vadd.f32 0.0, %v5213
    %v5215 = vpop.f32.mrb[0].mxu0
    %5216 = vmatprep.mubr.f32.mxu0 0.0
    %5217 = vmatmul.mubr.f32.gmra.mrb[0].mxu0 %v1997
    %v5218 = vpop.f32.mrb[0].mxu0
    %v5219 = vadd.f32 0.0, %v5218
    %v5220 = vpop.f32.mrb[0].mxu0
    %5221 = vmatprep.mubr.f32.mxu0 0.0
    %5222 = vmatmul.mubr.f32.gmra.mrb[0].mxu0 %v1999
    %v5223 = vpop.f32.mrb[0].mxu0
    %v5224 = vadd.f32 0.0, %v5223
    %v5225 = vpop.f32.mrb[0].mxu0
    %5226 = vmatprep.mubr.f32.mxu0 0.0
    %5227 = vmatmul.mubr.f32.gmra.mrb[0].mxu0 %v2001
    %v5228 = vpop.f32.mrb[0].mxu0
    %v5229 = vadd.f32 0.0, %v5228
    %v5230 = vpop.f32.mrb[0].mxu0
    %5231 = vmatprep.mubr.f32.mxu0 0.0
    %5232 = vmatmul.mubr.f32.gmra.mrb[0].mxu0 %v2003
    %v5233 = vpop.f32.mrb[0].mxu0
    %v5234 = vadd.f32 0.0, %v5233
    %v5235 = vpop.f32.mrb[0].mxu0
    %5236 = vmatprep.mubr.f32.mxu0 0.0
    %5237 = vmatmul.mubr.f32.gmra.mrb[0].mxu0 %v2005
    %v5238 = vpop.f32.mrb[0].mxu0
    %v5239 = vadd.f32 0.0, %v5238
    %v5240 = vpop.f32.mrb[0].mxu0
    %5241 = vmatprep.mubr.f32.mxu0 0.0
    %5242 = vmatmul.mubr.f32.gmra.mrb[0].mxu0 %v2007
    %v5243 = vpop.f32.mrb[0].mxu0
    %v5244 = vadd.f32 0.0, %v5243
    %v5245 = vpop.f32.mrb[0].mxu0
    %5246 = vmatprep.mubr.f32.mxu0 0.0
    %5247 = vmatmul.mubr.f32.gmra.mrb[0].mxu0 %v2009
    %v5248 = vpop.f32.mrb[0].mxu0
    %v5249 = vadd.f32 0.0, %v5248
    %v5250 = vpop.f32.mrb[0].mxu0
    %5251 = vmatprep.mubr.f32.mxu0 0.0
    %5252 = vmatmul.mubr.f32.gmra.mrb[0].mxu0 %v2786
    %v5253 = vpop.f32.mrb[0].mxu0
    %v5254 = vadd.f32 0.0, %v5253
    %v5255 = vpop.f32.mrb[0].mxu0
    %5256 = vmatprep.mubr.f32.mxu0 0.0
    %5257 = vmatmul.mubr.f32.gmra.mrb[0].mxu0 %v2992
    %v5258 = vpop.f32.mrb[0].mxu0
    %v5259 = vadd.f32 0.0, %v5258
    %v5260 = vpop.f32.mrb[0].mxu0
    %5261 = vmatprep.mubr.f32.mxu0 0.0
    %5262 = vmatmul.mubr.f32.gmra.mrb[0].mxu0 %v2995
    %v5263 = vpop.f32.mrb[0].mxu0
    %v5264 = vadd.f32 0.0, %v5263
    %v5265 = vpop.f32.mrb[0].mxu0
    %5266 = vmatprep.mubr.f32.mxu0 0.0
    %5267 = vmatmul.mubr.f32.gmra.mrb[0].mxu0 %v3846
    %v5268 = vpop.f32.mrb[0].mxu0
    %v5269 = vadd.f32 0.0, %v5268
    %v5270 = vpop.f32.mrb[0].mxu0
    %5271 = vmatprep.mubr.f32.mxu0 0.0
    %5272 = vmatmul.mubr.f32.gmra.mrb[0].mxu0 %v4052
    %v5273 = vpop.f32.mrb[0].mxu0
    %v5274 = vadd.f32 0.0, %v5273
    %v5275 = vpop.f32.mrb[0].mxu0
    %5276 = vmatprep.mubr.f32.mxu0 0.0
    %5277 = vmatmul.mubr.f32.gmra.mrb[0].mxu0 %v4055
    %v5278 = vpop.f32.mrb[0].mxu0
    %v5279 = vadd.f32 0.0, %v5278
    %v5280 = vpop.f32.mrb[0].mxu0
    %5281 = vmatprep.mubr.f32.mxu0 0.0
    %5282 = vmatmul.mubr.f32.gmra.mrb[0].mxu0 %v4906
    %v5283 = vpop.f32.mrb[0].mxu0
    %v5284 = vpop.f32.mrb[0].mxu0
    %5285 = vmatprep.mubr.f32.mxu0 0.0
    %5286 = vmatmul.mubr.f32.gmra.mrb[0].mxu0 %v5112
    %v5287 = vpop.f32.mrb[0].mxu0
    %v5288 = vadd.f32 0.0, %v5287
    %v5289 = vpop.f32.mrb[0].mxu0
    %5290 = vmatprep.mubr.f32.mxu0 0.0
    %5291 = vmatmul.mubr.f32.gmra.mrb[0].mxu0 %v5115
    %v5292 = vpop.f32.mrb[0].mxu0
    %v5293 = vadd.f32 0.0, %v5292
    %v5294 = vpop.f32.mrb[0].mxu0
    %5295 = vdwg.mxu0
    %v5296 = vadd.f32 %v5087, %v5184
    %v5297 = vadd.f32 %v5088, %v5189
    %v5298 = vadd.f32 %v5089, %v5194
    %v5299 = vadd.f32 %v5090, %v5199
    %v5300 = vadd.f32 %v5091, %v5204
    %v5301 = vadd.f32 %v5092, %v5209
    %v5302 = vadd.f32 %v5093, %v5214
    %v5303 = vadd.f32 %v5094, %v5219
    %v5304 = vadd.f32 %v5095, %v5224
    %v5305 = vadd.f32 %v5096, %v5229
    %v5306 = vadd.f32 %v5097, %v5234
    %v5307 = vadd.f32 %v5098, %v5239
    %v5308 = vadd.f32 %v5099, %v5244
    %v5309 = vadd.f32 %v5100, %v5249
    %v5310 = vadd.f32 %v5101, %v5254
    %v5311 = vadd.f32 %v5102, %v5259
    %v5312 = vadd.f32 %v5103, %v5264
    %v5313 = vadd.f32 %v5104, %v5269
    %v5314 = vadd.f32 %v5105, %v5274
    %v5315 = vadd.f32 %v5106, %v5279
    %v5316 = vadd.f32 %v5107, %v5288
    %v5317 = vadd.f32 %v5108, %v5293
    %s5318 = scalar_lea.vmem %s3, 128
    %v5319 = vld [vmem:[%s5318] sm:$0xff]
    %v5321 = vrot.slane %v1658, 2
    %v5322 = vsel %vm1691, %v4265, %v5321
    %v5323 = vrot.slane %v1659, 2
    %v5324 = vsel %vm1691, %v5321, %v5323
    %v5325 = vrot.slane %v1660, 2
    %v5326 = vsel %vm1691, %v5323, %v5325
    %v5327 = vsel %vm1739, %v5322, 0
    %v5329 = vsel %vm1739, %v5324, 0
    %v5331 = vsel %vm1739, %v5326, 0
    %5333 = vmatprep.subr.mxu0 0.0
    %5334 = vmatpush1.msra.mxu0 %v5319
    %5335 = vmatprep.subr.mxu0 0.0
    %5336 = vmatpush1.msra.mxu0 0.0
    %5337 = vmatprep.subr.mxu0 0.0
    %5338 = vmatpush1.msra.mxu0 0.0
    %5339 = vmatprep.subr.mxu0 0.0
    %5340 = vmatpush1.msra.mxu0 0.0
    %5341 = vmatprep.subr.mxu0 0.0
    %5342 = vmatpush1.msra.mxu0 0.0
    %5343 = vmatprep.subr.mxu0 0.0
    %5344 = vmatpush1.msra.mxu0 0.0
    %5345 = vmatprep.subr.mxu0 0.0
    %5346 = vmatpush1.msra.mxu0 0.0
    %5347 = vmatprep.subr.mxu0 0.0
    %5348 = vmatpush1.msra.mxu0 0.0
    %5349 = vmatprep.subr.mxu0 0.0
    %5350 = vmatpush1.msra.mxu0 0.0
    %5351 = vmatprep.subr.mxu0 0.0
    %5352 = vmatpush1.msra.mxu0 0.0
    %5353 = vmatprep.subr.mxu0 0.0
    %5354 = vmatpush1.msra.mxu0 0.0
    %5355 = vmatprep.subr.mxu0 0.0
    %5356 = vmatpush1.msra.mxu0 0.0
    %5357 = vmatprep.subr.mxu0 0.0
    %5358 = vmatpush1.msra.mxu0 0.0
    %5359 = vmatprep.subr.mxu0 0.0
    %5360 = vmatpush1.msra.mxu0 0.0
    %5361 = vmatprep.subr.mxu0 0.0
    %5362 = vmatpush1.msra.mxu0 0.0
    %5363 = vmatprep.subr.mxu0 0.0
    %5364 = vmatpush1.msra.mxu0 0.0
    %5365 = vmatprep.subr.mxu0 0.0
    %5366 = vmatpush1.msra.mxu0 0.0
    %5367 = vmatprep.subr.mxu0 0.0
    %5368 = vmatpush1.msra.mxu0 0.0
    %5369 = vmatprep.subr.mxu0 0.0
    %5370 = vmatpush1.msra.mxu0 0.0
    %5371 = vmatprep.subr.mxu0 0.0
    %5372 = vmatpush1.msra.mxu0 0.0
    %5373 = vmatprep.subr.mxu0 0.0
    %5374 = vmatpush1.msra.mxu0 0.0
    %5375 = vmatprep.subr.mxu0 0.0
    %5376 = vmatpush1.msra.mxu0 0.0
    %5377 = vmatprep.subr.mxu0 0.0
    %5378 = vmatpush1.msra.mxu0 0.0
    %5379 = vmatprep.subr.mxu0 0.0
    %5380 = vmatpush1.msra.mxu0 0.0
    %5381 = vmatprep.subr.mxu0 0.0
    %5382 = vmatpush1.msra.mxu0 0.0
    %5383 = vmatprep.subr.mxu0 0.0
    %5384 = vmatpush1.msra.mxu0 0.0
    %5385 = vmatprep.subr.mxu0 0.0
    %5386 = vmatpush1.msra.mxu0 0.0
    %5387 = vmatprep.subr.mxu0 0.0
    %5388 = vmatpush1.msra.mxu0 0.0
    %5389 = vmatprep.subr.mxu0 0.0
    %5390 = vmatpush1.msra.mxu0 0.0
    %5391 = vmatprep.subr.mxu0 0.0
    %5392 = vmatpush1.msra.mxu0 0.0
    %5393 = vmatprep.subr.mxu0 0.0
    %5394 = vmatpush1.msra.mxu0 0.0
    %5395 = vmatprep.subr.mxu0 0.0
    %5396 = vmatpush1.msra.mxu0 0.0
    %5397 = vmatprep.mubr.f32.mxu0 0.0
    %5398 = vmatmul.mubr.f32.gmra.mrb[0].mxu0 %v1758
    %v5399 = vpop.f32.mrb[0].mxu0
    %v5400 = vadd.f32 0.0, %v5399
    %v5401 = vpop.f32.mrb[0].mxu0
    %5402 = vmatprep.mubr.f32.mxu0 0.0
    %5403 = vmatmul.mubr.f32.gmra.mrb[0].mxu0 %v1760
    %v5404 = vpop.f32.mrb[0].mxu0
    %v5405 = vadd.f32 0.0, %v5404
    %v5406 = vpop.f32.mrb[0].mxu0
    %5407 = vmatprep.mubr.f32.mxu0 0.0
    %5408 = vmatmul.mubr.f32.gmra.mrb[0].mxu0 %v1762
    %v5409 = vpop.f32.mrb[0].mxu0
    %v5410 = vadd.f32 0.0, %v5409
    %v5411 = vpop.f32.mrb[0].mxu0
    %5412 = vmatprep.mubr.f32.mxu0 0.0
    %5413 = vmatmul.mubr.f32.gmra.mrb[0].mxu0 %v1764
    %v5414 = vpop.f32.mrb[0].mxu0
    %v5415 = vadd.f32 0.0, %v5414
    %v5416 = vpop.f32.mrb[0].mxu0
    %5417 = vmatprep.mubr.f32.mxu0 0.0
    %5418 = vmatmul.mubr.f32.gmra.mrb[0].mxu0 %v1766
    %v5419 = vpop.f32.mrb[0].mxu0
    %v5420 = vadd.f32 0.0, %v5419
    %v5421 = vpop.f32.mrb[0].mxu0
    %5422 = vmatprep.mubr.f32.mxu0 0.0
    %5423 = vmatmul.mubr.f32.gmra.mrb[0].mxu0 %v1768
    %v5424 = vpop.f32.mrb[0].mxu0
    %v5425 = vadd.f32 0.0, %v5424
    %v5426 = vpop.f32.mrb[0].mxu0
    %5427 = vmatprep.mubr.f32.mxu0 0.0
    %5428 = vmatmul.mubr.f32.gmra.mrb[0].mxu0 %v1770
    %v5429 = vpop.f32.mrb[0].mxu0
    %v5430 = vadd.f32 0.0, %v5429
    %v5431 = vpop.f32.mrb[0].mxu0
    %5432 = vmatprep.mubr.f32.mxu0 0.0
    %5433 = vmatmul.mubr.f32.gmra.mrb[0].mxu0 %v1772
    %v5434 = vpop.f32.mrb[0].mxu0
    %v5435 = vadd.f32 0.0, %v5434
    %v5436 = vpop.f32.mrb[0].mxu0
    %5437 = vmatprep.mubr.f32.mxu0 0.0
    %5438 = vmatmul.mubr.f32.gmra.mrb[0].mxu0 %v1774
    %v5439 = vpop.f32.mrb[0].mxu0
    %v5440 = vadd.f32 0.0, %v5439
    %v5441 = vpop.f32.mrb[0].mxu0
    %5442 = vmatprep.mubr.f32.mxu0 0.0
    %5443 = vmatmul.mubr.f32.gmra.mrb[0].mxu0 %v1776
    %v5444 = vpop.f32.mrb[0].mxu0
    %v5445 = vadd.f32 0.0, %v5444
    %v5446 = vpop.f32.mrb[0].mxu0
    %5447 = vmatprep.mubr.f32.mxu0 0.0
    %5448 = vmatmul.mubr.f32.gmra.mrb[0].mxu0 %v1778
    %v5449 = vpop.f32.mrb[0].mxu0
    %v5450 = vadd.f32 0.0, %v5449
    %v5451 = vpop.f32.mrb[0].mxu0
    %5452 = vmatprep.mubr.f32.mxu0 0.0
    %5453 = vmatmul.mubr.f32.gmra.mrb[0].mxu0 %v1780
    %v5454 = vpop.f32.mrb[0].mxu0
    %v5455 = vadd.f32 0.0, %v5454
    %v5456 = vpop.f32.mrb[0].mxu0
    %5457 = vmatprep.mubr.f32.mxu0 0.0
    %5458 = vmatmul.mubr.f32.gmra.mrb[0].mxu0 %v1782
    %v5459 = vpop.f32.mrb[0].mxu0
    %v5460 = vadd.f32 0.0, %v5459
    %v5461 = vpop.f32.mrb[0].mxu0
    %5462 = vmatprep.mubr.f32.mxu0 0.0
    %5463 = vmatmul.mubr.f32.gmra.mrb[0].mxu0 %v1784
    %v5464 = vpop.f32.mrb[0].mxu0
    %v5465 = vadd.f32 0.0, %v5464
    %v5466 = vpop.f32.mrb[0].mxu0
    %5467 = vmatprep.mubr.f32.mxu0 0.0
    %5468 = vmatmul.mubr.f32.gmra.mrb[0].mxu0 %v3207
    %v5469 = vpop.f32.mrb[0].mxu0
    %v5470 = vadd.f32 0.0, %v5469
    %v5471 = vpop.f32.mrb[0].mxu0
    %5472 = vmatprep.mubr.f32.mxu0 0.0
    %5473 = vmatmul.mubr.f32.gmra.mrb[0].mxu0 %v3209
    %v5474 = vpop.f32.mrb[0].mxu0
    %v5475 = vadd.f32 0.0, %v5474
    %v5476 = vpop.f32.mrb[0].mxu0
    %5477 = vmatprep.mubr.f32.mxu0 0.0
    %5478 = vmatmul.mubr.f32.gmra.mrb[0].mxu0 %v3211
    %v5479 = vpop.f32.mrb[0].mxu0
    %v5480 = vadd.f32 0.0, %v5479
    %v5481 = vpop.f32.mrb[0].mxu0
    %5482 = vmatprep.mubr.f32.mxu0 0.0
    %5483 = vmatmul.mubr.f32.gmra.mrb[0].mxu0 %v4267
    %v5484 = vpop.f32.mrb[0].mxu0
    %v5485 = vadd.f32 0.0, %v5484
    %v5486 = vpop.f32.mrb[0].mxu0
    %5487 = vmatprep.mubr.f32.mxu0 0.0
    %5488 = vmatmul.mubr.f32.gmra.mrb[0].mxu0 %v4269
    %v5489 = vpop.f32.mrb[0].mxu0
    %v5490 = vadd.f32 0.0, %v5489
    %v5491 = vpop.f32.mrb[0].mxu0
    %5492 = vmatprep.mubr.f32.mxu0 0.0
    %5493 = vmatmul.mubr.f32.gmra.mrb[0].mxu0 %v4271
    %v5494 = vpop.f32.mrb[0].mxu0
    %v5495 = vadd.f32 0.0, %v5494
    %v5496 = vpop.f32.mrb[0].mxu0
    %5497 = vmatprep.mubr.f32.mxu0 0.0
    %5498 = vmatmul.mubr.f32.gmra.mrb[0].mxu0 %v5327
    %v5499 = vpop.f32.mrb[0].mxu0
    %v5500 = vpop.f32.mrb[0].mxu0
    %5501 = vmatprep.mubr.f32.mxu0 0.0
    %5502 = vmatmul.mubr.f32.gmra.mrb[0].mxu0 %v5329
    %v5503 = vpop.f32.mrb[0].mxu0
    %v5504 = vadd.f32 0.0, %v5503
    %v5505 = vpop.f32.mrb[0].mxu0
    %5506 = vmatprep.mubr.f32.mxu0 0.0
    %5507 = vmatmul.mubr.f32.gmra.mrb[0].mxu0 %v5331
    %v5508 = vpop.f32.mrb[0].mxu0
    %v5509 = vadd.f32 0.0, %v5508
    %v5510 = vpop.f32.mrb[0].mxu0
    %5511 = vdwg.mxu0
    %v5512 = vadd.f32 %v5296, %v5400
    %v5513 = vadd.f32 %v5297, %v5405
    %v5514 = vadd.f32 %v5298, %v5410
    %v5515 = vadd.f32 %v5299, %v5415
    %v5516 = vadd.f32 %v5300, %v5420
    %v5517 = vadd.f32 %v5301, %v5425
    %v5518 = vadd.f32 %v5302, %v5430
    %v5519 = vadd.f32 %v5303, %v5435
    %v5520 = vadd.f32 %v5304, %v5440
    %v5521 = vadd.f32 %v5305, %v5445
    %v5522 = vadd.f32 %v5306, %v5450
    %v5523 = vadd.f32 %v5307, %v5455
    %v5524 = vadd.f32 %v5308, %v5460
    %v5525 = vadd.f32 %v5309, %v5465
    %v5526 = vadd.f32 %v5310, %v5470
    %v5527 = vadd.f32 %v5311, %v5475
    %v5528 = vadd.f32 %v5312, %v5480
    %v5529 = vadd.f32 %v5313, %v5485
    %v5530 = vadd.f32 %v5314, %v5490
    %v5531 = vadd.f32 %v5315, %v5495
    %v5532 = vadd.f32 %v5316, %v5504
    %v5533 = vadd.f32 %v5317, %v5509
    %s5534 = scalar_lea.vmem %s3, 136
    %v5535 = vld [vmem:[%s5534] sm:$0xff]
    %v5536 = vrot.slane %v1658, 4
    %v5537 = vsel %vm2192, %v4480, %v5536
    %v5538 = vrot.slane %v1659, 4
    %v5539 = vsel %vm2192, %v5536, %v5538
    %v5540 = vrot.slane %v1660, 4
    %v5541 = vsel %vm2192, %v5538, %v5540
    %v5542 = vsel %vm1739, %v5537, 0
    %v5544 = vsel %vm1739, %v5539, 0
    %v5546 = vsel %vm1739, %v5541, 0
    %5548 = vmatprep.subr.mxu0 0.0
    %5549 = vmatpush1.msra.mxu0 %v5535
    %5550 = vmatprep.subr.mxu0 0.0
    %5551 = vmatpush1.msra.mxu0 0.0
    %5552 = vmatprep.subr.mxu0 0.0
    %5553 = vmatpush1.msra.mxu0 0.0
    %5554 = vmatprep.subr.mxu0 0.0
    %5555 = vmatpush1.msra.mxu0 0.0
    %5556 = vmatprep.subr.mxu0 0.0
    %5557 = vmatpush1.msra.mxu0 0.0
    %5558 = vmatprep.subr.mxu0 0.0
    %5559 = vmatpush1.msra.mxu0 0.0
    %5560 = vmatprep.subr.mxu0 0.0
    %5561 = vmatpush1.msra.mxu0 0.0
    %5562 = vmatprep.subr.mxu0 0.0
    %5563 = vmatpush1.msra.mxu0 0.0
    %5564 = vmatprep.subr.mxu0 0.0
    %5565 = vmatpush1.msra.mxu0 0.0
    %5566 = vmatprep.subr.mxu0 0.0
    %5567 = vmatpush1.msra.mxu0 0.0
    %5568 = vmatprep.subr.mxu0 0.0
    %5569 = vmatpush1.msra.mxu0 0.0
    %5570 = vmatprep.subr.mxu0 0.0
    %5571 = vmatpush1.msra.mxu0 0.0
    %5572 = vmatprep.subr.mxu0 0.0
    %5573 = vmatpush1.msra.mxu0 0.0
    %5574 = vmatprep.subr.mxu0 0.0
    %5575 = vmatpush1.msra.mxu0 0.0
    %5576 = vmatprep.subr.mxu0 0.0
    %5577 = vmatpush1.msra.mxu0 0.0
    %5578 = vmatprep.subr.mxu0 0.0
    %5579 = vmatpush1.msra.mxu0 0.0
    %5580 = vmatprep.subr.mxu0 0.0
    %5581 = vmatpush1.msra.mxu0 0.0
    %5582 = vmatprep.subr.mxu0 0.0
    %5583 = vmatpush1.msra.mxu0 0.0
    %5584 = vmatprep.subr.mxu0 0.0
    %5585 = vmatpush1.msra.mxu0 0.0
    %5586 = vmatprep.subr.mxu0 0.0
    %5587 = vmatpush1.msra.mxu0 0.0
    %5588 = vmatprep.subr.mxu0 0.0
    %5589 = vmatpush1.msra.mxu0 0.0
    %5590 = vmatprep.subr.mxu0 0.0
    %5591 = vmatpush1.msra.mxu0 0.0
    %5592 = vmatprep.subr.mxu0 0.0
    %5593 = vmatpush1.msra.mxu0 0.0
    %5594 = vmatprep.subr.mxu0 0.0
    %5595 = vmatpush1.msra.mxu0 0.0
    %5596 = vmatprep.subr.mxu0 0.0
    %5597 = vmatpush1.msra.mxu0 0.0
    %5598 = vmatprep.subr.mxu0 0.0
    %5599 = vmatpush1.msra.mxu0 0.0
    %5600 = vmatprep.subr.mxu0 0.0
    %5601 = vmatpush1.msra.mxu0 0.0
    %5602 = vmatprep.subr.mxu0 0.0
    %5603 = vmatpush1.msra.mxu0 0.0
    %5604 = vmatprep.subr.mxu0 0.0
    %5605 = vmatpush1.msra.mxu0 0.0
    %5606 = vmatprep.subr.mxu0 0.0
    %5607 = vmatpush1.msra.mxu0 0.0
    %5608 = vmatprep.subr.mxu0 0.0
    %5609 = vmatpush1.msra.mxu0 0.0
    %5610 = vmatprep.subr.mxu0 0.0
    %5611 = vmatpush1.msra.mxu0 0.0
    %5612 = vmatprep.mubr.f32.mxu0 0.0
    %5613 = vmatmul.mubr.f32.gmra.mrb[0].mxu0 %v2258
    %v5614 = vpop.f32.mrb[0].mxu0
    %v5615 = vadd.f32 0.0, %v5614
    %v5616 = vpop.f32.mrb[0].mxu0
    %5617 = vmatprep.mubr.f32.mxu0 0.0
    %5618 = vmatmul.mubr.f32.gmra.mrb[0].mxu0 %v2260
    %v5619 = vpop.f32.mrb[0].mxu0
    %v5620 = vadd.f32 0.0, %v5619
    %v5621 = vpop.f32.mrb[0].mxu0
    %5622 = vmatprep.mubr.f32.mxu0 0.0
    %5623 = vmatmul.mubr.f32.gmra.mrb[0].mxu0 %v2262
    %v5624 = vpop.f32.mrb[0].mxu0
    %v5625 = vadd.f32 0.0, %v5624
    %v5626 = vpop.f32.mrb[0].mxu0
    %5627 = vmatprep.mubr.f32.mxu0 0.0
    %5628 = vmatmul.mubr.f32.gmra.mrb[0].mxu0 %v2264
    %v5629 = vpop.f32.mrb[0].mxu0
    %v5630 = vadd.f32 0.0, %v5629
    %v5631 = vpop.f32.mrb[0].mxu0
    %5632 = vmatprep.mubr.f32.mxu0 0.0
    %5633 = vmatmul.mubr.f32.gmra.mrb[0].mxu0 %v2266
    %v5634 = vpop.f32.mrb[0].mxu0
    %v5635 = vadd.f32 0.0, %v5634
    %v5636 = vpop.f32.mrb[0].mxu0
    %5637 = vmatprep.mubr.f32.mxu0 0.0
    %5638 = vmatmul.mubr.f32.gmra.mrb[0].mxu0 %v2268
    %v5639 = vpop.f32.mrb[0].mxu0
    %v5640 = vadd.f32 0.0, %v5639
    %v5641 = vpop.f32.mrb[0].mxu0
    %5642 = vmatprep.mubr.f32.mxu0 0.0
    %5643 = vmatmul.mubr.f32.gmra.mrb[0].mxu0 %v2270
    %v5644 = vpop.f32.mrb[0].mxu0
    %v5645 = vadd.f32 0.0, %v5644
    %v5646 = vpop.f32.mrb[0].mxu0
    %5647 = vmatprep.mubr.f32.mxu0 0.0
    %5648 = vmatmul.mubr.f32.gmra.mrb[0].mxu0 %v2272
    %v5649 = vpop.f32.mrb[0].mxu0
    %v5650 = vadd.f32 0.0, %v5649
    %v5651 = vpop.f32.mrb[0].mxu0
    %5652 = vmatprep.mubr.f32.mxu0 0.0
    %5653 = vmatmul.mubr.f32.gmra.mrb[0].mxu0 %v2274
    %v5654 = vpop.f32.mrb[0].mxu0
    %v5655 = vadd.f32 0.0, %v5654
    %v5656 = vpop.f32.mrb[0].mxu0
    %5657 = vmatprep.mubr.f32.mxu0 0.0
    %5658 = vmatmul.mubr.f32.gmra.mrb[0].mxu0 %v2276
    %v5659 = vpop.f32.mrb[0].mxu0
    %v5660 = vadd.f32 0.0, %v5659
    %v5661 = vpop.f32.mrb[0].mxu0
    %5662 = vmatprep.mubr.f32.mxu0 0.0
    %5663 = vmatmul.mubr.f32.gmra.mrb[0].mxu0 %v2278
    %v5664 = vpop.f32.mrb[0].mxu0
    %v5665 = vadd.f32 0.0, %v5664
    %v5666 = vpop.f32.mrb[0].mxu0
    %5667 = vmatprep.mubr.f32.mxu0 0.0
    %5668 = vmatmul.mubr.f32.gmra.mrb[0].mxu0 %v2280
    %v5669 = vpop.f32.mrb[0].mxu0
    %v5670 = vadd.f32 0.0, %v5669
    %v5671 = vpop.f32.mrb[0].mxu0
    %5672 = vmatprep.mubr.f32.mxu0 0.0
    %5673 = vmatmul.mubr.f32.gmra.mrb[0].mxu0 %v2282
    %v5674 = vpop.f32.mrb[0].mxu0
    %v5675 = vadd.f32 0.0, %v5674
    %v5676 = vpop.f32.mrb[0].mxu0
    %5677 = vmatprep.mubr.f32.mxu0 0.0
    %5678 = vmatmul.mubr.f32.gmra.mrb[0].mxu0 %v2284
    %v5679 = vpop.f32.mrb[0].mxu0
    %v5680 = vadd.f32 0.0, %v5679
    %v5681 = vpop.f32.mrb[0].mxu0
    %5682 = vmatprep.mubr.f32.mxu0 0.0
    %5683 = vmatmul.mubr.f32.gmra.mrb[0].mxu0 %v3422
    %v5684 = vpop.f32.mrb[0].mxu0
    %v5685 = vadd.f32 0.0, %v5684
    %v5686 = vpop.f32.mrb[0].mxu0
    %5687 = vmatprep.mubr.f32.mxu0 0.0
    %5688 = vmatmul.mubr.f32.gmra.mrb[0].mxu0 %v3424
    %v5689 = vpop.f32.mrb[0].mxu0
    %v5690 = vadd.f32 0.0, %v5689
    %v5691 = vpop.f32.mrb[0].mxu0
    %5692 = vmatprep.mubr.f32.mxu0 0.0
    %5693 = vmatmul.mubr.f32.gmra.mrb[0].mxu0 %v3426
    %v5694 = vpop.f32.mrb[0].mxu0
    %v5695 = vadd.f32 0.0, %v5694
    %v5696 = vpop.f32.mrb[0].mxu0
    %5697 = vmatprep.mubr.f32.mxu0 0.0
    %5698 = vmatmul.mubr.f32.gmra.mrb[0].mxu0 %v4482
    %v5699 = vpop.f32.mrb[0].mxu0
    %v5700 = vadd.f32 0.0, %v5699
    %v5701 = vpop.f32.mrb[0].mxu0
    %5702 = vmatprep.mubr.f32.mxu0 0.0
    %5703 = vmatmul.mubr.f32.gmra.mrb[0].mxu0 %v4484
    %v5704 = vpop.f32.mrb[0].mxu0
    %v5705 = vadd.f32 0.0, %v5704
    %v5706 = vpop.f32.mrb[0].mxu0
    %5707 = vmatprep.mubr.f32.mxu0 0.0
    %5708 = vmatmul.mubr.f32.gmra.mrb[0].mxu0 %v4486
    %v5709 = vpop.f32.mrb[0].mxu0
    %v5710 = vadd.f32 0.0, %v5709
    %v5711 = vpop.f32.mrb[0].mxu0
    %5712 = vmatprep.mubr.f32.mxu0 0.0
    %5713 = vmatmul.mubr.f32.gmra.mrb[0].mxu0 %v5542
    %v5714 = vpop.f32.mrb[0].mxu0
    %v5715 = vpop.f32.mrb[0].mxu0
    %5716 = vmatprep.mubr.f32.mxu0 0.0
    %5717 = vmatmul.mubr.f32.gmra.mrb[0].mxu0 %v5544
    %v5718 = vpop.f32.mrb[0].mxu0
    %v5719 = vadd.f32 0.0, %v5718
    %v5720 = vpop.f32.mrb[0].mxu0
    %5721 = vmatprep.mubr.f32.mxu0 0.0
    %5722 = vmatmul.mubr.f32.gmra.mrb[0].mxu0 %v5546
    %v5723 = vpop.f32.mrb[0].mxu0
    %v5724 = vadd.f32 0.0, %v5723
    %v5725 = vpop.f32.mrb[0].mxu0
    %5726 = vdwg.mxu0
    %v5727 = vadd.f32 %v5512, %v5615
    %v5728 = vadd.f32 %v5513, %v5620
    %v5729 = vadd.f32 %v5514, %v5625
    %v5730 = vadd.f32 %v5515, %v5630
    %v5731 = vadd.f32 %v5516, %v5635
    %v5732 = vadd.f32 %v5517, %v5640
    %v5733 = vadd.f32 %v5518, %v5645
    %v5734 = vadd.f32 %v5519, %v5650
    %v5735 = vadd.f32 %v5520, %v5655
    %v5736 = vadd.f32 %v5521, %v5660
    %v5737 = vadd.f32 %v5522, %v5665
    %v5738 = vadd.f32 %v5523, %v5670
    %v5739 = vadd.f32 %v5524, %v5675
    %v5740 = vadd.f32 %v5525, %v5680
    %v5741 = vadd.f32 %v5526, %v5685
    %v5742 = vadd.f32 %v5527, %v5690
    %v5743 = vadd.f32 %v5528, %v5695
    %v5744 = vadd.f32 %v5529, %v5700
    %v5745 = vadd.f32 %v5530, %v5705
    %v5746 = vadd.f32 %v5531, %v5710
    %v5747 = vadd.f32 %v5532, %v5719
    %v5748 = vadd.f32 %v5533, %v5724
    %s5749 = scalar_lea.vmem %s3, 144
    %v5750 = vld [vmem:[%s5749] sm:$0xff]
    %v5751 = vrot.slane %v1658, 6
    %v5752 = vsel %vm2489, %v4695, %v5751
    %v5753 = vrot.slane %v1659, 6
    %v5754 = vsel %vm2489, %v5751, %v5753
    %v5755 = vrot.slane %v1660, 6
    %v5756 = vsel %vm2489, %v5753, %v5755
    %v5757 = vsel %vm1739, %v5752, 0
    %v5759 = vsel %vm1739, %v5754, 0
    %v5761 = vsel %vm1739, %v5756, 0
    %5763 = vmatprep.subr.mxu0 0.0
    %5764 = vmatpush1.msra.mxu0 %v5750
    %5765 = vmatprep.subr.mxu0 0.0
    %5766 = vmatpush1.msra.mxu0 0.0
    %5767 = vmatprep.subr.mxu0 0.0
    %5768 = vmatpush1.msra.mxu0 0.0
    %5769 = vmatprep.subr.mxu0 0.0
    %5770 = vmatpush1.msra.mxu0 0.0
    %5771 = vmatprep.subr.mxu0 0.0
    %5772 = vmatpush1.msra.mxu0 0.0
    %5773 = vmatprep.subr.mxu0 0.0
    %5774 = vmatpush1.msra.mxu0 0.0
    %5775 = vmatprep.subr.mxu0 0.0
    %5776 = vmatpush1.msra.mxu0 0.0
    %5777 = vmatprep.subr.mxu0 0.0
    %5778 = vmatpush1.msra.mxu0 0.0
    %5779 = vmatprep.subr.mxu0 0.0
    %5780 = vmatpush1.msra.mxu0 0.0
    %5781 = vmatprep.subr.mxu0 0.0
    %5782 = vmatpush1.msra.mxu0 0.0
    %5783 = vmatprep.subr.mxu0 0.0
    %5784 = vmatpush1.msra.mxu0 0.0
    %5785 = vmatprep.subr.mxu0 0.0
    %5786 = vmatpush1.msra.mxu0 0.0
    %5787 = vmatprep.subr.mxu0 0.0
    %5788 = vmatpush1.msra.mxu0 0.0
    %5789 = vmatprep.subr.mxu0 0.0
    %5790 = vmatpush1.msra.mxu0 0.0
    %5791 = vmatprep.subr.mxu0 0.0
    %5792 = vmatpush1.msra.mxu0 0.0
    %5793 = vmatprep.subr.mxu0 0.0
    %5794 = vmatpush1.msra.mxu0 0.0
    %5795 = vmatprep.subr.mxu0 0.0
    %5796 = vmatpush1.msra.mxu0 0.0
    %5797 = vmatprep.subr.mxu0 0.0
    %5798 = vmatpush1.msra.mxu0 0.0
    %5799 = vmatprep.subr.mxu0 0.0
    %5800 = vmatpush1.msra.mxu0 0.0
    %5801 = vmatprep.subr.mxu0 0.0
    %5802 = vmatpush1.msra.mxu0 0.0
    %5803 = vmatprep.subr.mxu0 0.0
    %5804 = vmatpush1.msra.mxu0 0.0
    %5805 = vmatprep.subr.mxu0 0.0
    %5806 = vmatpush1.msra.mxu0 0.0
    %5807 = vmatprep.subr.mxu0 0.0
    %5808 = vmatpush1.msra.mxu0 0.0
    %5809 = vmatprep.subr.mxu0 0.0
    %5810 = vmatpush1.msra.mxu0 0.0
    %5811 = vmatprep.subr.mxu0 0.0
    %5812 = vmatpush1.msra.mxu0 0.0
    %5813 = vmatprep.subr.mxu0 0.0
    %5814 = vmatpush1.msra.mxu0 0.0
    %5815 = vmatprep.subr.mxu0 0.0
    %5816 = vmatpush1.msra.mxu0 0.0
    %5817 = vmatprep.subr.mxu0 0.0
    %5818 = vmatpush1.msra.mxu0 0.0
    %5819 = vmatprep.subr.mxu0 0.0
    %5820 = vmatpush1.msra.mxu0 0.0
    %5821 = vmatprep.subr.mxu0 0.0
    %5822 = vmatpush1.msra.mxu0 0.0
    %5823 = vmatprep.subr.mxu0 0.0
    %5824 = vmatpush1.msra.mxu0 0.0
    %5825 = vmatprep.subr.mxu0 0.0
    %5826 = vmatpush1.msra.mxu0 0.0
    %5827 = vmatprep.mubr.f32.mxu0 0.0
    %5828 = vmatmul.mubr.f32.gmra.mrb[0].mxu0 %v2555
    %v5829 = vpop.f32.mrb[0].mxu0
    %v5830 = vadd.f32 0.0, %v5829
    %v5831 = vpop.f32.mrb[0].mxu0
    %5832 = vmatprep.mubr.f32.mxu0 0.0
    %5833 = vmatmul.mubr.f32.gmra.mrb[0].mxu0 %v2557
    %v5834 = vpop.f32.mrb[0].mxu0
    %v5835 = vadd.f32 0.0, %v5834
    %v5836 = vpop.f32.mrb[0].mxu0
    %5837 = vmatprep.mubr.f32.mxu0 0.0
    %5838 = vmatmul.mubr.f32.gmra.mrb[0].mxu0 %v2559
    %v5839 = vpop.f32.mrb[0].mxu0
    %v5840 = vadd.f32 0.0, %v5839
    %v5841 = vpop.f32.mrb[0].mxu0
    %5842 = vmatprep.mubr.f32.mxu0 0.0
    %5843 = vmatmul.mubr.f32.gmra.mrb[0].mxu0 %v2561
    %v5844 = vpop.f32.mrb[0].mxu0
    %v5845 = vadd.f32 0.0, %v5844
    %v5846 = vpop.f32.mrb[0].mxu0
    %5847 = vmatprep.mubr.f32.mxu0 0.0
    %5848 = vmatmul.mubr.f32.gmra.mrb[0].mxu0 %v2563
    %v5849 = vpop.f32.mrb[0].mxu0
    %v5850 = vadd.f32 0.0, %v5849
    %v5851 = vpop.f32.mrb[0].mxu0
    %5852 = vmatprep.mubr.f32.mxu0 0.0
    %5853 = vmatmul.mubr.f32.gmra.mrb[0].mxu0 %v2565
    %v5854 = vpop.f32.mrb[0].mxu0
    %v5855 = vadd.f32 0.0, %v5854
    %v5856 = vpop.f32.mrb[0].mxu0
    %5857 = vmatprep.mubr.f32.mxu0 0.0
    %5858 = vmatmul.mubr.f32.gmra.mrb[0].mxu0 %v2567
    %v5859 = vpop.f32.mrb[0].mxu0
    %v5860 = vadd.f32 0.0, %v5859
    %v5861 = vpop.f32.mrb[0].mxu0
    %5862 = vmatprep.mubr.f32.mxu0 0.0
    %5863 = vmatmul.mubr.f32.gmra.mrb[0].mxu0 %v2569
    %v5864 = vpop.f32.mrb[0].mxu0
    %v5865 = vadd.f32 0.0, %v5864
    %v5866 = vpop.f32.mrb[0].mxu0
    %5867 = vmatprep.mubr.f32.mxu0 0.0
    %5868 = vmatmul.mubr.f32.gmra.mrb[0].mxu0 %v2571
    %v5869 = vpop.f32.mrb[0].mxu0
    %v5870 = vadd.f32 0.0, %v5869
    %v5871 = vpop.f32.mrb[0].mxu0
    %5872 = vmatprep.mubr.f32.mxu0 0.0
    %5873 = vmatmul.mubr.f32.gmra.mrb[0].mxu0 %v2573
    %v5874 = vpop.f32.mrb[0].mxu0
    %v5875 = vadd.f32 0.0, %v5874
    %v5876 = vpop.f32.mrb[0].mxu0
    %5877 = vmatprep.mubr.f32.mxu0 0.0
    %5878 = vmatmul.mubr.f32.gmra.mrb[0].mxu0 %v2575
    %v5879 = vpop.f32.mrb[0].mxu0
    %v5880 = vadd.f32 0.0, %v5879
    %v5881 = vpop.f32.mrb[0].mxu0
    %5882 = vmatprep.mubr.f32.mxu0 0.0
    %5883 = vmatmul.mubr.f32.gmra.mrb[0].mxu0 %v2577
    %v5884 = vpop.f32.mrb[0].mxu0
    %v5885 = vadd.f32 0.0, %v5884
    %v5886 = vpop.f32.mrb[0].mxu0
    %5887 = vmatprep.mubr.f32.mxu0 0.0
    %5888 = vmatmul.mubr.f32.gmra.mrb[0].mxu0 %v2579
    %v5889 = vpop.f32.mrb[0].mxu0
    %v5890 = vadd.f32 0.0, %v5889
    %v5891 = vpop.f32.mrb[0].mxu0
    %5892 = vmatprep.mubr.f32.mxu0 0.0
    %5893 = vmatmul.mubr.f32.gmra.mrb[0].mxu0 %v2581
    %v5894 = vpop.f32.mrb[0].mxu0
    %v5895 = vadd.f32 0.0, %v5894
    %v5896 = vpop.f32.mrb[0].mxu0
    %5897 = vmatprep.mubr.f32.mxu0 0.0
    %5898 = vmatmul.mubr.f32.gmra.mrb[0].mxu0 %v3637
    %v5899 = vpop.f32.mrb[0].mxu0
    %v5900 = vadd.f32 0.0, %v5899
    %v5901 = vpop.f32.mrb[0].mxu0
    %5902 = vmatprep.mubr.f32.mxu0 0.0
    %5903 = vmatmul.mubr.f32.gmra.mrb[0].mxu0 %v3639
    %v5904 = vpop.f32.mrb[0].mxu0
    %v5905 = vadd.f32 0.0, %v5904
    %v5906 = vpop.f32.mrb[0].mxu0
    %5907 = vmatprep.mubr.f32.mxu0 0.0
    %5908 = vmatmul.mubr.f32.gmra.mrb[0].mxu0 %v3641
    %v5909 = vpop.f32.mrb[0].mxu0
    %v5910 = vadd.f32 0.0, %v5909
    %v5911 = vpop.f32.mrb[0].mxu0
    %5912 = vmatprep.mubr.f32.mxu0 0.0
    %5913 = vmatmul.mubr.f32.gmra.mrb[0].mxu0 %v4697
    %v5914 = vpop.f32.mrb[0].mxu0
    %v5915 = vadd.f32 0.0, %v5914
    %v5916 = vpop.f32.mrb[0].mxu0
    %5917 = vmatprep.mubr.f32.mxu0 0.0
    %5918 = vmatmul.mubr.f32.gmra.mrb[0].mxu0 %v4699
    %v5919 = vpop.f32.mrb[0].mxu0
    %v5920 = vadd.f32 0.0, %v5919
    %v5921 = vpop.f32.mrb[0].mxu0
    %5922 = vmatprep.mubr.f32.mxu0 0.0
    %5923 = vmatmul.mubr.f32.gmra.mrb[0].mxu0 %v4701
    %v5924 = vpop.f32.mrb[0].mxu0
    %v5925 = vadd.f32 0.0, %v5924
    %v5926 = vpop.f32.mrb[0].mxu0
    %5927 = vmatprep.mubr.f32.mxu0 0.0
    %5928 = vmatmul.mubr.f32.gmra.mrb[0].mxu0 %v5757
    %v5929 = vpop.f32.mrb[0].mxu0
    %v5930 = vpop.f32.mrb[0].mxu0
    %5931 = vmatprep.mubr.f32.mxu0 0.0
    %5932 = vmatmul.mubr.f32.gmra.mrb[0].mxu0 %v5759
    %v5933 = vpop.f32.mrb[0].mxu0
    %v5934 = vadd.f32 0.0, %v5933
    %v5935 = vpop.f32.mrb[0].mxu0
    %5936 = vmatprep.mubr.f32.mxu0 0.0
    %5937 = vmatmul.mubr.f32.gmra.mrb[0].mxu0 %v5761
    %v5938 = vpop.f32.mrb[0].mxu0
    %v5939 = vadd.f32 0.0, %v5938
    %v5940 = vpop.f32.mrb[0].mxu0
    %5941 = vdwg.mxu0
    %v5942 = vadd.f32 %v5727, %v5830
    %v5943 = vadd.f32 %v5728, %v5835
    %v5944 = vadd.f32 %v5729, %v5840
    %v5945 = vadd.f32 %v5730, %v5845
    %v5946 = vadd.f32 %v5731, %v5850
    %v5947 = vadd.f32 %v5732, %v5855
    %v5948 = vadd.f32 %v5733, %v5860
    %v5949 = vadd.f32 %v5734, %v5865
    %v5950 = vadd.f32 %v5735, %v5870
    %v5951 = vadd.f32 %v5736, %v5875
    %v5952 = vadd.f32 %v5737, %v5880
    %v5953 = vadd.f32 %v5738, %v5885
    %v5954 = vadd.f32 %v5739, %v5890
    %v5955 = vadd.f32 %v5740, %v5895
    %v5956 = vadd.f32 %v5741, %v5900
    %v5957 = vadd.f32 %v5742, %v5905
    %v5958 = vadd.f32 %v5743, %v5910
    %v5959 = vadd.f32 %v5744, %v5915
    %v5960 = vadd.f32 %v5745, %v5920
    %v5961 = vadd.f32 %v5746, %v5925
    %v5962 = vadd.f32 %v5747, %v5934
    %v5963 = vadd.f32 %v5748, %v5939
    %s5964 = scalar_lea.vmem %s3, 152
    %v5965 = vld [vmem:[%s5964] sm:$0xff]
    %v5966 = vsel %vm1739, %v1660, 0
    %5968 = vmatprep.subr.mxu0 0.0
    %5969 = vmatpush1.msra.mxu0 %v5965
    %5970 = vmatprep.subr.mxu0 0.0
    %5971 = vmatpush1.msra.mxu0 0.0
    %5972 = vmatprep.subr.mxu0 0.0
    %5973 = vmatpush1.msra.mxu0 0.0
    %5974 = vmatprep.subr.mxu0 0.0
    %5975 = vmatpush1.msra.mxu0 0.0
    %5976 = vmatprep.subr.mxu0 0.0
    %5977 = vmatpush1.msra.mxu0 0.0
    %5978 = vmatprep.subr.mxu0 0.0
    %5979 = vmatpush1.msra.mxu0 0.0
    %5980 = vmatprep.subr.mxu0 0.0
    %5981 = vmatpush1.msra.mxu0 0.0
    %5982 = vmatprep.subr.mxu0 0.0
    %5983 = vmatpush1.msra.mxu0 0.0
    %5984 = vmatprep.subr.mxu0 0.0
    %5985 = vmatpush1.msra.mxu0 0.0
    %5986 = vmatprep.subr.mxu0 0.0
    %5987 = vmatpush1.msra.mxu0 0.0
    %5988 = vmatprep.subr.mxu0 0.0
    %5989 = vmatpush1.msra.mxu0 0.0
    %5990 = vmatprep.subr.mxu0 0.0
    %5991 = vmatpush1.msra.mxu0 0.0
    %5992 = vmatprep.subr.mxu0 0.0
    %5993 = vmatpush1.msra.mxu0 0.0
    %5994 = vmatprep.subr.mxu0 0.0
    %5995 = vmatpush1.msra.mxu0 0.0
    %5996 = vmatprep.subr.mxu0 0.0
    %5997 = vmatpush1.msra.mxu0 0.0
    %5998 = vmatprep.subr.mxu0 0.0
    %5999 = vmatpush1.msra.mxu0 0.0
    %6000 = vmatprep.subr.mxu0 0.0
    %6001 = vmatpush1.msra.mxu0 0.0
    %6002 = vmatprep.subr.mxu0 0.0
    %6003 = vmatpush1.msra.mxu0 0.0
    %6004 = vmatprep.subr.mxu0 0.0
    %6005 = vmatpush1.msra.mxu0 0.0
    %6006 = vmatprep.subr.mxu0 0.0
    %6007 = vmatpush1.msra.mxu0 0.0
    %6008 = vmatprep.subr.mxu0 0.0
    %6009 = vmatpush1.msra.mxu0 0.0
    %6010 = vmatprep.subr.mxu0 0.0
    %6011 = vmatpush1.msra.mxu0 0.0
    %6012 = vmatprep.subr.mxu0 0.0
    %6013 = vmatpush1.msra.mxu0 0.0
    %6014 = vmatprep.subr.mxu0 0.0
    %6015 = vmatpush1.msra.mxu0 0.0
    %6016 = vmatprep.subr.mxu0 0.0
    %6017 = vmatpush1.msra.mxu0 0.0
    %6018 = vmatprep.subr.mxu0 0.0
    %6019 = vmatpush1.msra.mxu0 0.0
    %6020 = vmatprep.subr.mxu0 0.0
    %6021 = vmatpush1.msra.mxu0 0.0
    %6022 = vmatprep.subr.mxu0 0.0
    %6023 = vmatpush1.msra.mxu0 0.0
    %6024 = vmatprep.subr.mxu0 0.0
    %6025 = vmatpush1.msra.mxu0 0.0
    %6026 = vmatprep.subr.mxu0 0.0
    %6027 = vmatpush1.msra.mxu0 0.0
    %6028 = vmatprep.subr.mxu0 0.0
    %6029 = vmatpush1.msra.mxu0 0.0
    %6030 = vmatprep.subr.mxu0 0.0
    %6031 = vmatpush1.msra.mxu0 0.0
    %6032 = vmatprep.mubr.f32.mxu0 0.0
    %6033 = vmatmul.mubr.f32.gmra.mrb[0].mxu0 %v1985
    %v6034 = vpop.f32.mrb[0].mxu0
    %v6035 = vadd.f32 0.0, %v6034
    %v6036 = vpop.f32.mrb[0].mxu0
    %6037 = vmatprep.mubr.f32.mxu0 0.0
    %6038 = vmatmul.mubr.f32.gmra.mrb[0].mxu0 %v1987
    %v6039 = vpop.f32.mrb[0].mxu0
    %v6040 = vadd.f32 0.0, %v6039
    %v6041 = vpop.f32.mrb[0].mxu0
    %6042 = vmatprep.mubr.f32.mxu0 0.0
    %6043 = vmatmul.mubr.f32.gmra.mrb[0].mxu0 %v1989
    %v6044 = vpop.f32.mrb[0].mxu0
    %v6045 = vadd.f32 0.0, %v6044
    %v6046 = vpop.f32.mrb[0].mxu0
    %6047 = vmatprep.mubr.f32.mxu0 0.0
    %6048 = vmatmul.mubr.f32.gmra.mrb[0].mxu0 %v1991
    %v6049 = vpop.f32.mrb[0].mxu0
    %v6050 = vadd.f32 0.0, %v6049
    %v6051 = vpop.f32.mrb[0].mxu0
    %6052 = vmatprep.mubr.f32.mxu0 0.0
    %6053 = vmatmul.mubr.f32.gmra.mrb[0].mxu0 %v1993
    %v6054 = vpop.f32.mrb[0].mxu0
    %v6055 = vadd.f32 0.0, %v6054
    %v6056 = vpop.f32.mrb[0].mxu0
    %6057 = vmatprep.mubr.f32.mxu0 0.0
    %6058 = vmatmul.mubr.f32.gmra.mrb[0].mxu0 %v1995
    %v6059 = vpop.f32.mrb[0].mxu0
    %v6060 = vadd.f32 0.0, %v6059
    %v6061 = vpop.f32.mrb[0].mxu0
    %6062 = vmatprep.mubr.f32.mxu0 0.0
    %6063 = vmatmul.mubr.f32.gmra.mrb[0].mxu0 %v1997
    %v6064 = vpop.f32.mrb[0].mxu0
    %v6065 = vadd.f32 0.0, %v6064
    %v6066 = vpop.f32.mrb[0].mxu0
    %6067 = vmatprep.mubr.f32.mxu0 0.0
    %6068 = vmatmul.mubr.f32.gmra.mrb[0].mxu0 %v1999
    %v6069 = vpop.f32.mrb[0].mxu0
    %v6070 = vadd.f32 0.0, %v6069
    %v6071 = vpop.f32.mrb[0].mxu0
    %6072 = vmatprep.mubr.f32.mxu0 0.0
    %6073 = vmatmul.mubr.f32.gmra.mrb[0].mxu0 %v2001
    %v6074 = vpop.f32.mrb[0].mxu0
    %v6075 = vadd.f32 0.0, %v6074
    %v6076 = vpop.f32.mrb[0].mxu0
    %6077 = vmatprep.mubr.f32.mxu0 0.0
    %6078 = vmatmul.mubr.f32.gmra.mrb[0].mxu0 %v2003
    %v6079 = vpop.f32.mrb[0].mxu0
    %v6080 = vadd.f32 0.0, %v6079
    %v6081 = vpop.f32.mrb[0].mxu0
    %6082 = vmatprep.mubr.f32.mxu0 0.0
    %6083 = vmatmul.mubr.f32.gmra.mrb[0].mxu0 %v2005
    %v6084 = vpop.f32.mrb[0].mxu0
    %v6085 = vadd.f32 0.0, %v6084
    %v6086 = vpop.f32.mrb[0].mxu0
    %6087 = vmatprep.mubr.f32.mxu0 0.0
    %6088 = vmatmul.mubr.f32.gmra.mrb[0].mxu0 %v2007
    %v6089 = vpop.f32.mrb[0].mxu0
    %v6090 = vadd.f32 0.0, %v6089
    %v6091 = vpop.f32.mrb[0].mxu0
    %6092 = vmatprep.mubr.f32.mxu0 0.0
    %6093 = vmatmul.mubr.f32.gmra.mrb[0].mxu0 %v2009
    %v6094 = vpop.f32.mrb[0].mxu0
    %v6095 = vadd.f32 0.0, %v6094
    %v6096 = vpop.f32.mrb[0].mxu0
    %6097 = vmatprep.mubr.f32.mxu0 0.0
    %6098 = vmatmul.mubr.f32.gmra.mrb[0].mxu0 %v2786
    %v6099 = vpop.f32.mrb[0].mxu0
    %v6100 = vadd.f32 0.0, %v6099
    %v6101 = vpop.f32.mrb[0].mxu0
    %6102 = vmatprep.mubr.f32.mxu0 0.0
    %6103 = vmatmul.mubr.f32.gmra.mrb[0].mxu0 %v2992
    %v6104 = vpop.f32.mrb[0].mxu0
    %v6105 = vadd.f32 0.0, %v6104
    %v6106 = vpop.f32.mrb[0].mxu0
    %6107 = vmatprep.mubr.f32.mxu0 0.0
    %6108 = vmatmul.mubr.f32.gmra.mrb[0].mxu0 %v2995
    %v6109 = vpop.f32.mrb[0].mxu0
    %v6110 = vadd.f32 0.0, %v6109
    %v6111 = vpop.f32.mrb[0].mxu0
    %6112 = vmatprep.mubr.f32.mxu0 0.0
    %6113 = vmatmul.mubr.f32.gmra.mrb[0].mxu0 %v3846
    %v6114 = vpop.f32.mrb[0].mxu0
    %v6115 = vadd.f32 0.0, %v6114
    %v6116 = vpop.f32.mrb[0].mxu0
    %6117 = vmatprep.mubr.f32.mxu0 0.0
    %6118 = vmatmul.mubr.f32.gmra.mrb[0].mxu0 %v4052
    %v6119 = vpop.f32.mrb[0].mxu0
    %v6120 = vadd.f32 0.0, %v6119
    %v6121 = vpop.f32.mrb[0].mxu0
    %6122 = vmatprep.mubr.f32.mxu0 0.0
    %6123 = vmatmul.mubr.f32.gmra.mrb[0].mxu0 %v4055
    %v6124 = vpop.f32.mrb[0].mxu0
    %v6125 = vadd.f32 0.0, %v6124
    %v6126 = vpop.f32.mrb[0].mxu0
    %6127 = vmatprep.mubr.f32.mxu0 0.0
    %6128 = vmatmul.mubr.f32.gmra.mrb[0].mxu0 %v4906
    %v6129 = vpop.f32.mrb[0].mxu0
    %v6130 = vadd.f32 0.0, %v6129
    %v6131 = vpop.f32.mrb[0].mxu0
    %6132 = vmatprep.mubr.f32.mxu0 0.0
    %6133 = vmatmul.mubr.f32.gmra.mrb[0].mxu0 %v5112
    %v6134 = vpop.f32.mrb[0].mxu0
    %v6135 = vpop.f32.mrb[0].mxu0
    %6136 = vmatprep.mubr.f32.mxu0 0.0
    %6137 = vmatmul.mubr.f32.gmra.mrb[0].mxu0 %v5115
    %v6138 = vpop.f32.mrb[0].mxu0
    %v6139 = vadd.f32 0.0, %v6138
    %v6140 = vpop.f32.mrb[0].mxu0
    %6141 = vmatprep.mubr.f32.mxu0 0.0
    %6142 = vmatmul.mubr.f32.gmra.mrb[0].mxu0 %v5966
    %v6143 = vpop.f32.mrb[0].mxu0
    %v6144 = vadd.f32 0.0, %v6143
    %v6145 = vpop.f32.mrb[0].mxu0
    %6146 = vdwg.mxu0
    %v6147 = vadd.f32 %v5942, %v6035
    %v6148 = vadd.f32 %v5943, %v6040
    %v6149 = vadd.f32 %v5944, %v6045
    %v6150 = vadd.f32 %v5945, %v6050
    %v6151 = vadd.f32 %v5946, %v6055
    %v6152 = vadd.f32 %v5947, %v6060
    %v6153 = vadd.f32 %v5948, %v6065
    %v6154 = vadd.f32 %v5949, %v6070
    %v6155 = vadd.f32 %v5950, %v6075
    %v6156 = vadd.f32 %v5951, %v6080
    %v6157 = vadd.f32 %v5952, %v6085
    %v6158 = vadd.f32 %v5953, %v6090
    %v6159 = vadd.f32 %v5954, %v6095
    %v6160 = vadd.f32 %v5955, %v6100
    %v6161 = vadd.f32 %v5956, %v6105
    %v6162 = vadd.f32 %v5957, %v6110
    %v6163 = vadd.f32 %v5958, %v6115
    %v6164 = vadd.f32 %v5959, %v6120
    %v6165 = vadd.f32 %v5960, %v6125
    %v6166 = vadd.f32 %v5961, %v6130
    %v6167 = vadd.f32 %v5962, %v6139
    %v6168 = vadd.f32 %v5963, %v6144
    %s6169 = scalar_lea.vmem %s3, 160
    %v6170 = vld [vmem:[%s6169] sm:$0xff]
    %v6172 = vsel %vm1739, %v1661, 0
    %v6175 = vsel %vm1739, %v1662, 0
    %6177 = vmatprep.subr.mxu0 0.0
    %6178 = vmatpush1.msra.mxu0 %v6170
    %6179 = vmatprep.subr.mxu0 0.0
    %6180 = vmatpush1.msra.mxu0 0.0
    %6181 = vmatprep.subr.mxu0 0.0
    %6182 = vmatpush1.msra.mxu0 0.0
    %6183 = vmatprep.subr.mxu0 0.0
    %6184 = vmatpush1.msra.mxu0 0.0
    %6185 = vmatprep.subr.mxu0 0.0
    %6186 = vmatpush1.msra.mxu0 0.0
    %6187 = vmatprep.subr.mxu0 0.0
    %6188 = vmatpush1.msra.mxu0 0.0
    %6189 = vmatprep.subr.mxu0 0.0
    %6190 = vmatpush1.msra.mxu0 0.0
    %6191 = vmatprep.subr.mxu0 0.0
    %6192 = vmatpush1.msra.mxu0 0.0
    %6193 = vmatprep.subr.mxu0 0.0
    %6194 = vmatpush1.msra.mxu0 0.0
    %6195 = vmatprep.subr.mxu0 0.0
    %6196 = vmatpush1.msra.mxu0 0.0
    %6197 = vmatprep.subr.mxu0 0.0
    %6198 = vmatpush1.msra.mxu0 0.0
    %6199 = vmatprep.subr.mxu0 0.0
    %6200 = vmatpush1.msra.mxu0 0.0
    %6201 = vmatprep.subr.mxu0 0.0
    %6202 = vmatpush1.msra.mxu0 0.0
    %6203 = vmatprep.subr.mxu0 0.0
    %6204 = vmatpush1.msra.mxu0 0.0
    %6205 = vmatprep.subr.mxu0 0.0
    %6206 = vmatpush1.msra.mxu0 0.0
    %6207 = vmatprep.subr.mxu0 0.0
    %6208 = vmatpush1.msra.mxu0 0.0
    %6209 = vmatprep.subr.mxu0 0.0
    %6210 = vmatpush1.msra.mxu0 0.0
    %6211 = vmatprep.subr.mxu0 0.0
    %6212 = vmatpush1.msra.mxu0 0.0
    %6213 = vmatprep.subr.mxu0 0.0
    %6214 = vmatpush1.msra.mxu0 0.0
    %6215 = vmatprep.subr.mxu0 0.0
    %6216 = vmatpush1.msra.mxu0 0.0
    %6217 = vmatprep.subr.mxu0 0.0
    %6218 = vmatpush1.msra.mxu0 0.0
    %6219 = vmatprep.subr.mxu0 0.0
    %6220 = vmatpush1.msra.mxu0 0.0
    %6221 = vmatprep.subr.mxu0 0.0
    %6222 = vmatpush1.msra.mxu0 0.0
    %6223 = vmatprep.subr.mxu0 0.0
    %6224 = vmatpush1.msra.mxu0 0.0
    %6225 = vmatprep.subr.mxu0 0.0
    %6226 = vmatpush1.msra.mxu0 0.0
    %6227 = vmatprep.subr.mxu0 0.0
    %6228 = vmatpush1.msra.mxu0 0.0
    %6229 = vmatprep.subr.mxu0 0.0
    %6230 = vmatpush1.msra.mxu0 0.0
    %6231 = vmatprep.subr.mxu0 0.0
    %6232 = vmatpush1.msra.mxu0 0.0
    %6233 = vmatprep.subr.mxu0 0.0
    %6234 = vmatpush1.msra.mxu0 0.0
    %6235 = vmatprep.subr.mxu0 0.0
    %6236 = vmatpush1.msra.mxu0 0.0
    %6237 = vmatprep.subr.mxu0 0.0
    %6238 = vmatpush1.msra.mxu0 0.0
    %6239 = vmatprep.subr.mxu0 0.0
    %6240 = vmatpush1.msra.mxu0 0.0
    %6241 = vmatprep.mubr.f32.mxu0 0.0
    %6242 = vmatmul.mubr.f32.gmra.mrb[0].mxu0 %v1989
    %v6243 = vpop.f32.mrb[0].mxu0
    %v6244 = vadd.f32 0.0, %v6243
    %v6245 = vpop.f32.mrb[0].mxu0
    %6246 = vmatprep.mubr.f32.mxu0 0.0
    %6247 = vmatmul.mubr.f32.gmra.mrb[0].mxu0 %v1991
    %v6248 = vpop.f32.mrb[0].mxu0
    %v6249 = vadd.f32 0.0, %v6248
    %v6250 = vpop.f32.mrb[0].mxu0
    %6251 = vmatprep.mubr.f32.mxu0 0.0
    %6252 = vmatmul.mubr.f32.gmra.mrb[0].mxu0 %v1993
    %v6253 = vpop.f32.mrb[0].mxu0
    %v6254 = vadd.f32 0.0, %v6253
    %v6255 = vpop.f32.mrb[0].mxu0
    %6256 = vmatprep.mubr.f32.mxu0 0.0
    %6257 = vmatmul.mubr.f32.gmra.mrb[0].mxu0 %v1995
    %v6258 = vpop.f32.mrb[0].mxu0
    %v6259 = vadd.f32 0.0, %v6258
    %v6260 = vpop.f32.mrb[0].mxu0
    %6261 = vmatprep.mubr.f32.mxu0 0.0
    %6262 = vmatmul.mubr.f32.gmra.mrb[0].mxu0 %v1997
    %v6263 = vpop.f32.mrb[0].mxu0
    %v6264 = vadd.f32 0.0, %v6263
    %v6265 = vpop.f32.mrb[0].mxu0
    %6266 = vmatprep.mubr.f32.mxu0 0.0
    %6267 = vmatmul.mubr.f32.gmra.mrb[0].mxu0 %v1999
    %v6268 = vpop.f32.mrb[0].mxu0
    %v6269 = vadd.f32 0.0, %v6268
    %v6270 = vpop.f32.mrb[0].mxu0
    %6271 = vmatprep.mubr.f32.mxu0 0.0
    %6272 = vmatmul.mubr.f32.gmra.mrb[0].mxu0 %v2001
    %v6273 = vpop.f32.mrb[0].mxu0
    %v6274 = vadd.f32 0.0, %v6273
    %v6275 = vpop.f32.mrb[0].mxu0
    %6276 = vmatprep.mubr.f32.mxu0 0.0
    %6277 = vmatmul.mubr.f32.gmra.mrb[0].mxu0 %v2003
    %v6278 = vpop.f32.mrb[0].mxu0
    %v6279 = vadd.f32 0.0, %v6278
    %v6280 = vpop.f32.mrb[0].mxu0
    %6281 = vmatprep.mubr.f32.mxu0 0.0
    %6282 = vmatmul.mubr.f32.gmra.mrb[0].mxu0 %v2005
    %v6283 = vpop.f32.mrb[0].mxu0
    %v6284 = vadd.f32 0.0, %v6283
    %v6285 = vpop.f32.mrb[0].mxu0
    %6286 = vmatprep.mubr.f32.mxu0 0.0
    %6287 = vmatmul.mubr.f32.gmra.mrb[0].mxu0 %v2007
    %v6288 = vpop.f32.mrb[0].mxu0
    %v6289 = vadd.f32 0.0, %v6288
    %v6290 = vpop.f32.mrb[0].mxu0
    %6291 = vmatprep.mubr.f32.mxu0 0.0
    %6292 = vmatmul.mubr.f32.gmra.mrb[0].mxu0 %v2009
    %v6293 = vpop.f32.mrb[0].mxu0
    %v6294 = vadd.f32 0.0, %v6293
    %v6295 = vpop.f32.mrb[0].mxu0
    %6296 = vmatprep.mubr.f32.mxu0 0.0
    %6297 = vmatmul.mubr.f32.gmra.mrb[0].mxu0 %v2786
    %v6298 = vpop.f32.mrb[0].mxu0
    %v6299 = vadd.f32 0.0, %v6298
    %v6300 = vpop.f32.mrb[0].mxu0
    %6301 = vmatprep.mubr.f32.mxu0 0.0
    %6302 = vmatmul.mubr.f32.gmra.mrb[0].mxu0 %v2992
    %v6303 = vpop.f32.mrb[0].mxu0
    %v6304 = vadd.f32 0.0, %v6303
    %v6305 = vpop.f32.mrb[0].mxu0
    %6306 = vmatprep.mubr.f32.mxu0 0.0
    %6307 = vmatmul.mubr.f32.gmra.mrb[0].mxu0 %v2995
    %v6308 = vpop.f32.mrb[0].mxu0
    %v6309 = vadd.f32 0.0, %v6308
    %v6310 = vpop.f32.mrb[0].mxu0
    %6311 = vmatprep.mubr.f32.mxu0 0.0
    %6312 = vmatmul.mubr.f32.gmra.mrb[0].mxu0 %v3846
    %v6313 = vpop.f32.mrb[0].mxu0
    %v6314 = vadd.f32 0.0, %v6313
    %v6315 = vpop.f32.mrb[0].mxu0
    %6316 = vmatprep.mubr.f32.mxu0 0.0
    %6317 = vmatmul.mubr.f32.gmra.mrb[0].mxu0 %v4052
    %v6318 = vpop.f32.mrb[0].mxu0
    %v6319 = vadd.f32 0.0, %v6318
    %v6320 = vpop.f32.mrb[0].mxu0
    %6321 = vmatprep.mubr.f32.mxu0 0.0
    %6322 = vmatmul.mubr.f32.gmra.mrb[0].mxu0 %v4055
    %v6323 = vpop.f32.mrb[0].mxu0
    %v6324 = vadd.f32 0.0, %v6323
    %v6325 = vpop.f32.mrb[0].mxu0
    %6326 = vmatprep.mubr.f32.mxu0 0.0
    %6327 = vmatmul.mubr.f32.gmra.mrb[0].mxu0 %v4906
    %v6328 = vpop.f32.mrb[0].mxu0
    %v6329 = vadd.f32 0.0, %v6328
    %v6330 = vpop.f32.mrb[0].mxu0
    %6331 = vmatprep.mubr.f32.mxu0 0.0
    %6332 = vmatmul.mubr.f32.gmra.mrb[0].mxu0 %v5112
    %v6333 = vpop.f32.mrb[0].mxu0
    %v6334 = vadd.f32 0.0, %v6333
    %v6335 = vpop.f32.mrb[0].mxu0
    %6336 = vmatprep.mubr.f32.mxu0 0.0
    %6337 = vmatmul.mubr.f32.gmra.mrb[0].mxu0 %v5115
    %v6338 = vpop.f32.mrb[0].mxu0
    %v6339 = vadd.f32 0.0, %v6338
    %v6340 = vpop.f32.mrb[0].mxu0
    %6341 = vmatprep.mubr.f32.mxu0 0.0
    %6342 = vmatmul.mubr.f32.gmra.mrb[0].mxu0 %v5966
    %v6343 = vpop.f32.mrb[0].mxu0
    %v6344 = vpop.f32.mrb[0].mxu0
    %6345 = vmatprep.mubr.f32.mxu0 0.0
    %6346 = vmatmul.mubr.f32.gmra.mrb[0].mxu0 %v6172
    %v6347 = vpop.f32.mrb[0].mxu0
    %v6348 = vadd.f32 0.0, %v6347
    %v6349 = vpop.f32.mrb[0].mxu0
    %6350 = vmatprep.mubr.f32.mxu0 0.0
    %6351 = vmatmul.mubr.f32.gmra.mrb[0].mxu0 %v6175
    %v6352 = vpop.f32.mrb[0].mxu0
    %v6353 = vadd.f32 0.0, %v6352
    %v6354 = vpop.f32.mrb[0].mxu0
    %6355 = vdwg.mxu0
    %v6356 = vadd.f32 %v6147, %v6244
    %v6357 = vadd.f32 %v6148, %v6249
    %v6358 = vadd.f32 %v6149, %v6254
    %v6359 = vadd.f32 %v6150, %v6259
    %v6360 = vadd.f32 %v6151, %v6264
    %v6361 = vadd.f32 %v6152, %v6269
    %v6362 = vadd.f32 %v6153, %v6274
    %v6363 = vadd.f32 %v6154, %v6279
    %v6364 = vadd.f32 %v6155, %v6284
    %v6365 = vadd.f32 %v6156, %v6289
    %v6366 = vadd.f32 %v6157, %v6294
    %v6367 = vadd.f32 %v6158, %v6299
    %v6368 = vadd.f32 %v6159, %v6304
    %v6369 = vadd.f32 %v6160, %v6309
    %v6370 = vadd.f32 %v6161, %v6314
    %v6371 = vadd.f32 %v6162, %v6319
    %v6372 = vadd.f32 %v6163, %v6324
    %v6373 = vadd.f32 %v6164, %v6329
    %v6374 = vadd.f32 %v6165, %v6334
    %v6375 = vadd.f32 %v6166, %v6339
    %v6376 = vadd.f32 %v6167, %v6348
    %v6377 = vadd.f32 %v6168, %v6353
    %s6378 = scalar_lea.vmem %s3, 168
    %v6379 = vld [vmem:[%s6378] sm:$0xff]
    %v6381 = vrot.slane %v1661, 2
    %v6382 = vsel %vm1691, %v5325, %v6381
    %v6383 = vrot.slane %v1662, 2
    %v6384 = vsel %vm1691, %v6381, %v6383
    %v6385 = vrot.slane %v1663, 2
    %v6386 = vsel %vm1691, %v6383, %v6385
    %v6387 = vsel %vm1739, %v6382, 0
    %v6389 = vsel %vm1739, %v6384, 0
    %v6391 = vsel %vm1739, %v6386, 0
    %6393 = vmatprep.subr.mxu0 0.0
    %6394 = vmatpush1.msra.mxu0 %v6379
    %6395 = vmatprep.subr.mxu0 0.0
    %6396 = vmatpush1.msra.mxu0 0.0
    %6397 = vmatprep.subr.mxu0 0.0
    %6398 = vmatpush1.msra.mxu0 0.0
    %6399 = vmatprep.subr.mxu0 0.0
    %6400 = vmatpush1.msra.mxu0 0.0
    %6401 = vmatprep.subr.mxu0 0.0
    %6402 = vmatpush1.msra.mxu0 0.0
    %6403 = vmatprep.subr.mxu0 0.0
    %6404 = vmatpush1.msra.mxu0 0.0
    %6405 = vmatprep.subr.mxu0 0.0
    %6406 = vmatpush1.msra.mxu0 0.0
    %6407 = vmatprep.subr.mxu0 0.0
    %6408 = vmatpush1.msra.mxu0 0.0
    %6409 = vmatprep.subr.mxu0 0.0
    %6410 = vmatpush1.msra.mxu0 0.0
    %6411 = vmatprep.subr.mxu0 0.0
    %6412 = vmatpush1.msra.mxu0 0.0
    %6413 = vmatprep.subr.mxu0 0.0
    %6414 = vmatpush1.msra.mxu0 0.0
    %6415 = vmatprep.subr.mxu0 0.0
    %6416 = vmatpush1.msra.mxu0 0.0
    %6417 = vmatprep.subr.mxu0 0.0
    %6418 = vmatpush1.msra.mxu0 0.0
    %6419 = vmatprep.subr.mxu0 0.0
    %6420 = vmatpush1.msra.mxu0 0.0
    %6421 = vmatprep.subr.mxu0 0.0
    %6422 = vmatpush1.msra.mxu0 0.0
    %6423 = vmatprep.subr.mxu0 0.0
    %6424 = vmatpush1.msra.mxu0 0.0
    %6425 = vmatprep.subr.mxu0 0.0
    %6426 = vmatpush1.msra.mxu0 0.0
    %6427 = vmatprep.subr.mxu0 0.0
    %6428 = vmatpush1.msra.mxu0 0.0
    %6429 = vmatprep.subr.mxu0 0.0
    %6430 = vmatpush1.msra.mxu0 0.0
    %6431 = vmatprep.subr.mxu0 0.0
    %6432 = vmatpush1.msra.mxu0 0.0
    %6433 = vmatprep.subr.mxu0 0.0
    %6434 = vmatpush1.msra.mxu0 0.0
    %6435 = vmatprep.subr.mxu0 0.0
    %6436 = vmatpush1.msra.mxu0 0.0
    %6437 = vmatprep.subr.mxu0 0.0
    %6438 = vmatpush1.msra.mxu0 0.0
    %6439 = vmatprep.subr.mxu0 0.0
    %6440 = vmatpush1.msra.mxu0 0.0
    %6441 = vmatprep.subr.mxu0 0.0
    %6442 = vmatpush1.msra.mxu0 0.0
    %6443 = vmatprep.subr.mxu0 0.0
    %6444 = vmatpush1.msra.mxu0 0.0
    %6445 = vmatprep.subr.mxu0 0.0
    %6446 = vmatpush1.msra.mxu0 0.0
    %6447 = vmatprep.subr.mxu0 0.0
    %6448 = vmatpush1.msra.mxu0 0.0
    %6449 = vmatprep.subr.mxu0 0.0
    %6450 = vmatpush1.msra.mxu0 0.0
    %6451 = vmatprep.subr.mxu0 0.0
    %6452 = vmatpush1.msra.mxu0 0.0
    %6453 = vmatprep.subr.mxu0 0.0
    %6454 = vmatpush1.msra.mxu0 0.0
    %6455 = vmatprep.subr.mxu0 0.0
    %6456 = vmatpush1.msra.mxu0 0.0
    %6457 = vmatprep.mubr.f32.mxu0 0.0
    %6458 = vmatmul.mubr.f32.gmra.mrb[0].mxu0 %v1764
    %v6459 = vpop.f32.mrb[0].mxu0
    %v6460 = vadd.f32 0.0, %v6459
    %v6461 = vpop.f32.mrb[0].mxu0
    %6462 = vmatprep.mubr.f32.mxu0 0.0
    %6463 = vmatmul.mubr.f32.gmra.mrb[0].mxu0 %v1766
    %v6464 = vpop.f32.mrb[0].mxu0
    %v6465 = vadd.f32 0.0, %v6464
    %v6466 = vpop.f32.mrb[0].mxu0
    %6467 = vmatprep.mubr.f32.mxu0 0.0
    %6468 = vmatmul.mubr.f32.gmra.mrb[0].mxu0 %v1768
    %v6469 = vpop.f32.mrb[0].mxu0
    %v6470 = vadd.f32 0.0, %v6469
    %v6471 = vpop.f32.mrb[0].mxu0
    %6472 = vmatprep.mubr.f32.mxu0 0.0
    %6473 = vmatmul.mubr.f32.gmra.mrb[0].mxu0 %v1770
    %v6474 = vpop.f32.mrb[0].mxu0
    %v6475 = vadd.f32 0.0, %v6474
    %v6476 = vpop.f32.mrb[0].mxu0
    %6477 = vmatprep.mubr.f32.mxu0 0.0
    %6478 = vmatmul.mubr.f32.gmra.mrb[0].mxu0 %v1772
    %v6479 = vpop.f32.mrb[0].mxu0
    %v6480 = vadd.f32 0.0, %v6479
    %v6481 = vpop.f32.mrb[0].mxu0
    %6482 = vmatprep.mubr.f32.mxu0 0.0
    %6483 = vmatmul.mubr.f32.gmra.mrb[0].mxu0 %v1774
    %v6484 = vpop.f32.mrb[0].mxu0
    %v6485 = vadd.f32 0.0, %v6484
    %v6486 = vpop.f32.mrb[0].mxu0
    %6487 = vmatprep.mubr.f32.mxu0 0.0
    %6488 = vmatmul.mubr.f32.gmra.mrb[0].mxu0 %v1776
    %v6489 = vpop.f32.mrb[0].mxu0
    %v6490 = vadd.f32 0.0, %v6489
    %v6491 = vpop.f32.mrb[0].mxu0
    %6492 = vmatprep.mubr.f32.mxu0 0.0
    %6493 = vmatmul.mubr.f32.gmra.mrb[0].mxu0 %v1778
    %v6494 = vpop.f32.mrb[0].mxu0
    %v6495 = vadd.f32 0.0, %v6494
    %v6496 = vpop.f32.mrb[0].mxu0
    %6497 = vmatprep.mubr.f32.mxu0 0.0
    %6498 = vmatmul.mubr.f32.gmra.mrb[0].mxu0 %v1780
    %v6499 = vpop.f32.mrb[0].mxu0
    %v6500 = vadd.f32 0.0, %v6499
    %v6501 = vpop.f32.mrb[0].mxu0
    %6502 = vmatprep.mubr.f32.mxu0 0.0
    %6503 = vmatmul.mubr.f32.gmra.mrb[0].mxu0 %v1782
    %v6504 = vpop.f32.mrb[0].mxu0
    %v6505 = vadd.f32 0.0, %v6504
    %v6506 = vpop.f32.mrb[0].mxu0
    %6507 = vmatprep.mubr.f32.mxu0 0.0
    %6508 = vmatmul.mubr.f32.gmra.mrb[0].mxu0 %v1784
    %v6509 = vpop.f32.mrb[0].mxu0
    %v6510 = vadd.f32 0.0, %v6509
    %v6511 = vpop.f32.mrb[0].mxu0
    %6512 = vmatprep.mubr.f32.mxu0 0.0
    %6513 = vmatmul.mubr.f32.gmra.mrb[0].mxu0 %v3207
    %v6514 = vpop.f32.mrb[0].mxu0
    %v6515 = vadd.f32 0.0, %v6514
    %v6516 = vpop.f32.mrb[0].mxu0
    %6517 = vmatprep.mubr.f32.mxu0 0.0
    %6518 = vmatmul.mubr.f32.gmra.mrb[0].mxu0 %v3209
    %v6519 = vpop.f32.mrb[0].mxu0
    %v6520 = vadd.f32 0.0, %v6519
    %v6521 = vpop.f32.mrb[0].mxu0
    %6522 = vmatprep.mubr.f32.mxu0 0.0
    %6523 = vmatmul.mubr.f32.gmra.mrb[0].mxu0 %v3211
    %v6524 = vpop.f32.mrb[0].mxu0
    %v6525 = vadd.f32 0.0, %v6524
    %v6526 = vpop.f32.mrb[0].mxu0
    %6527 = vmatprep.mubr.f32.mxu0 0.0
    %6528 = vmatmul.mubr.f32.gmra.mrb[0].mxu0 %v4267
    %v6529 = vpop.f32.mrb[0].mxu0
    %v6530 = vadd.f32 0.0, %v6529
    %v6531 = vpop.f32.mrb[0].mxu0
    %6532 = vmatprep.mubr.f32.mxu0 0.0
    %6533 = vmatmul.mubr.f32.gmra.mrb[0].mxu0 %v4269
    %v6534 = vpop.f32.mrb[0].mxu0
    %v6535 = vadd.f32 0.0, %v6534
    %v6536 = vpop.f32.mrb[0].mxu0
    %6537 = vmatprep.mubr.f32.mxu0 0.0
    %6538 = vmatmul.mubr.f32.gmra.mrb[0].mxu0 %v4271
    %v6539 = vpop.f32.mrb[0].mxu0
    %v6540 = vadd.f32 0.0, %v6539
    %v6541 = vpop.f32.mrb[0].mxu0
    %6542 = vmatprep.mubr.f32.mxu0 0.0
    %6543 = vmatmul.mubr.f32.gmra.mrb[0].mxu0 %v5327
    %v6544 = vpop.f32.mrb[0].mxu0
    %v6545 = vadd.f32 0.0, %v6544
    %v6546 = vpop.f32.mrb[0].mxu0
    %6547 = vmatprep.mubr.f32.mxu0 0.0
    %6548 = vmatmul.mubr.f32.gmra.mrb[0].mxu0 %v5329
    %v6549 = vpop.f32.mrb[0].mxu0
    %v6550 = vadd.f32 0.0, %v6549
    %v6551 = vpop.f32.mrb[0].mxu0
    %6552 = vmatprep.mubr.f32.mxu0 0.0
    %6553 = vmatmul.mubr.f32.gmra.mrb[0].mxu0 %v5331
    %v6554 = vpop.f32.mrb[0].mxu0
    %v6555 = vadd.f32 0.0, %v6554
    %v6556 = vpop.f32.mrb[0].mxu0
    %6557 = vmatprep.mubr.f32.mxu0 0.0
    %6558 = vmatmul.mubr.f32.gmra.mrb[0].mxu0 %v6387
    %v6559 = vpop.f32.mrb[0].mxu0
    %v6560 = vpop.f32.mrb[0].mxu0
    %6561 = vmatprep.mubr.f32.mxu0 0.0
    %6562 = vmatmul.mubr.f32.gmra.mrb[0].mxu0 %v6389
    %v6563 = vpop.f32.mrb[0].mxu0
    %v6564 = vadd.f32 0.0, %v6563
    %v6565 = vpop.f32.mrb[0].mxu0
    %6566 = vmatprep.mubr.f32.mxu0 0.0
    %6567 = vmatmul.mubr.f32.gmra.mrb[0].mxu0 %v6391
    %v6568 = vpop.f32.mrb[0].mxu0
    %v6569 = vadd.f32 0.0, %v6568
    %v6570 = vpop.f32.mrb[0].mxu0
    %6571 = vdwg.mxu0
    %v6572 = vadd.f32 %v6356, %v6460
    %v6573 = vadd.f32 %v6357, %v6465
    %v6574 = vadd.f32 %v6358, %v6470
    %v6575 = vadd.f32 %v6359, %v6475
    %v6576 = vadd.f32 %v6360, %v6480
    %v6577 = vadd.f32 %v6361, %v6485
    %v6578 = vadd.f32 %v6362, %v6490
    %v6579 = vadd.f32 %v6363, %v6495
    %v6580 = vadd.f32 %v6364, %v6500
    %v6581 = vadd.f32 %v6365, %v6505
    %v6582 = vadd.f32 %v6366, %v6510
    %v6583 = vadd.f32 %v6367, %v6515
    %v6584 = vadd.f32 %v6368, %v6520
    %v6585 = vadd.f32 %v6369, %v6525
    %v6586 = vadd.f32 %v6370, %v6530
    %v6587 = vadd.f32 %v6371, %v6535
    %v6588 = vadd.f32 %v6372, %v6540
    %v6589 = vadd.f32 %v6373, %v6545
    %v6590 = vadd.f32 %v6374, %v6550
    %v6591 = vadd.f32 %v6375, %v6555
    %v6592 = vadd.f32 %v6376, %v6564
    %v6593 = vadd.f32 %v6377, %v6569
    %s6594 = scalar_lea.vmem %s3, 176
    %v6595 = vld [vmem:[%s6594] sm:$0xff]
    %v6596 = vrot.slane %v1661, 4
    %v6597 = vsel %vm2192, %v5540, %v6596
    %v6598 = vrot.slane %v1662, 4
    %v6599 = vsel %vm2192, %v6596, %v6598
    %v6600 = vrot.slane %v1663, 4
    %v6601 = vsel %vm2192, %v6598, %v6600
    %v6602 = vsel %vm1739, %v6597, 0
    %v6604 = vsel %vm1739, %v6599, 0
    %v6606 = vsel %vm1739, %v6601, 0
    %6608 = vmatprep.subr.mxu0 0.0
    %6609 = vmatpush1.msra.mxu0 %v6595
    %6610 = vmatprep.subr.mxu0 0.0
    %6611 = vmatpush1.msra.mxu0 0.0
    %6612 = vmatprep.subr.mxu0 0.0
    %6613 = vmatpush1.msra.mxu0 0.0
    %6614 = vmatprep.subr.mxu0 0.0
    %6615 = vmatpush1.msra.mxu0 0.0
    %6616 = vmatprep.subr.mxu0 0.0
    %6617 = vmatpush1.msra.mxu0 0.0
    %6618 = vmatprep.subr.mxu0 0.0
    %6619 = vmatpush1.msra.mxu0 0.0
    %6620 = vmatprep.subr.mxu0 0.0
    %6621 = vmatpush1.msra.mxu0 0.0
    %6622 = vmatprep.subr.mxu0 0.0
    %6623 = vmatpush1.msra.mxu0 0.0
    %6624 = vmatprep.subr.mxu0 0.0
    %6625 = vmatpush1.msra.mxu0 0.0
    %6626 = vmatprep.subr.mxu0 0.0
    %6627 = vmatpush1.msra.mxu0 0.0
    %6628 = vmatprep.subr.mxu0 0.0
    %6629 = vmatpush1.msra.mxu0 0.0
    %6630 = vmatprep.subr.mxu0 0.0
    %6631 = vmatpush1.msra.mxu0 0.0
    %6632 = vmatprep.subr.mxu0 0.0
    %6633 = vmatpush1.msra.mxu0 0.0
    %6634 = vmatprep.subr.mxu0 0.0
    %6635 = vmatpush1.msra.mxu0 0.0
    %6636 = vmatprep.subr.mxu0 0.0
    %6637 = vmatpush1.msra.mxu0 0.0
    %6638 = vmatprep.subr.mxu0 0.0
    %6639 = vmatpush1.msra.mxu0 0.0
    %6640 = vmatprep.subr.mxu0 0.0
    %6641 = vmatpush1.msra.mxu0 0.0
    %6642 = vmatprep.subr.mxu0 0.0
    %6643 = vmatpush1.msra.mxu0 0.0
    %6644 = vmatprep.subr.mxu0 0.0
    %6645 = vmatpush1.msra.mxu0 0.0
    %6646 = vmatprep.subr.mxu0 0.0
    %6647 = vmatpush1.msra.mxu0 0.0
    %6648 = vmatprep.subr.mxu0 0.0
    %6649 = vmatpush1.msra.mxu0 0.0
    %6650 = vmatprep.subr.mxu0 0.0
    %6651 = vmatpush1.msra.mxu0 0.0
    %6652 = vmatprep.subr.mxu0 0.0
    %6653 = vmatpush1.msra.mxu0 0.0
    %6654 = vmatprep.subr.mxu0 0.0
    %6655 = vmatpush1.msra.mxu0 0.0
    %6656 = vmatprep.subr.mxu0 0.0
    %6657 = vmatpush1.msra.mxu0 0.0
    %6658 = vmatprep.subr.mxu0 0.0
    %6659 = vmatpush1.msra.mxu0 0.0
    %6660 = vmatprep.subr.mxu0 0.0
    %6661 = vmatpush1.msra.mxu0 0.0
    %6662 = vmatprep.subr.mxu0 0.0
    %6663 = vmatpush1.msra.mxu0 0.0
    %6664 = vmatprep.subr.mxu0 0.0
    %6665 = vmatpush1.msra.mxu0 0.0
    %6666 = vmatprep.subr.mxu0 0.0
    %6667 = vmatpush1.msra.mxu0 0.0
    %6668 = vmatprep.subr.mxu0 0.0
    %6669 = vmatpush1.msra.mxu0 0.0
    %6670 = vmatprep.subr.mxu0 0.0
    %6671 = vmatpush1.msra.mxu0 0.0
    %6672 = vmatprep.mubr.f32.mxu0 0.0
    %6673 = vmatmul.mubr.f32.gmra.mrb[0].mxu0 %v2264
    %v6674 = vpop.f32.mrb[0].mxu0
    %v6675 = vadd.f32 0.0, %v6674
    %v6676 = vpop.f32.mrb[0].mxu0
    %6677 = vmatprep.mubr.f32.mxu0 0.0
    %6678 = vmatmul.mubr.f32.gmra.mrb[0].mxu0 %v2266
    %v6679 = vpop.f32.mrb[0].mxu0
    %v6680 = vadd.f32 0.0, %v6679
    %v6681 = vpop.f32.mrb[0].mxu0
    %6682 = vmatprep.mubr.f32.mxu0 0.0
    %6683 = vmatmul.mubr.f32.gmra.mrb[0].mxu0 %v2268
    %v6684 = vpop.f32.mrb[0].mxu0
    %v6685 = vadd.f32 0.0, %v6684
    %v6686 = vpop.f32.mrb[0].mxu0
    %6687 = vmatprep.mubr.f32.mxu0 0.0
    %6688 = vmatmul.mubr.f32.gmra.mrb[0].mxu0 %v2270
    %v6689 = vpop.f32.mrb[0].mxu0
    %v6690 = vadd.f32 0.0, %v6689
    %v6691 = vpop.f32.mrb[0].mxu0
    %6692 = vmatprep.mubr.f32.mxu0 0.0
    %6693 = vmatmul.mubr.f32.gmra.mrb[0].mxu0 %v2272
    %v6694 = vpop.f32.mrb[0].mxu0
    %v6695 = vadd.f32 0.0, %v6694
    %v6696 = vpop.f32.mrb[0].mxu0
    %6697 = vmatprep.mubr.f32.mxu0 0.0
    %6698 = vmatmul.mubr.f32.gmra.mrb[0].mxu0 %v2274
    %v6699 = vpop.f32.mrb[0].mxu0
    %v6700 = vadd.f32 0.0, %v6699
    %v6701 = vpop.f32.mrb[0].mxu0
    %6702 = vmatprep.mubr.f32.mxu0 0.0
    %6703 = vmatmul.mubr.f32.gmra.mrb[0].mxu0 %v2276
    %v6704 = vpop.f32.mrb[0].mxu0
    %v6705 = vadd.f32 0.0, %v6704
    %v6706 = vpop.f32.mrb[0].mxu0
    %6707 = vmatprep.mubr.f32.mxu0 0.0
    %6708 = vmatmul.mubr.f32.gmra.mrb[0].mxu0 %v2278
    %v6709 = vpop.f32.mrb[0].mxu0
    %v6710 = vadd.f32 0.0, %v6709
    %v6711 = vpop.f32.mrb[0].mxu0
    %6712 = vmatprep.mubr.f32.mxu0 0.0
    %6713 = vmatmul.mubr.f32.gmra.mrb[0].mxu0 %v2280
    %v6714 = vpop.f32.mrb[0].mxu0
    %v6715 = vadd.f32 0.0, %v6714
    %v6716 = vpop.f32.mrb[0].mxu0
    %6717 = vmatprep.mubr.f32.mxu0 0.0
    %6718 = vmatmul.mubr.f32.gmra.mrb[0].mxu0 %v2282
    %v6719 = vpop.f32.mrb[0].mxu0
    %v6720 = vadd.f32 0.0, %v6719
    %v6721 = vpop.f32.mrb[0].mxu0
    %6722 = vmatprep.mubr.f32.mxu0 0.0
    %6723 = vmatmul.mubr.f32.gmra.mrb[0].mxu0 %v2284
    %v6724 = vpop.f32.mrb[0].mxu0
    %v6725 = vadd.f32 0.0, %v6724
    %v6726 = vpop.f32.mrb[0].mxu0
    %6727 = vmatprep.mubr.f32.mxu0 0.0
    %6728 = vmatmul.mubr.f32.gmra.mrb[0].mxu0 %v3422
    %v6729 = vpop.f32.mrb[0].mxu0
    %v6730 = vadd.f32 0.0, %v6729
    %v6731 = vpop.f32.mrb[0].mxu0
    %6732 = vmatprep.mubr.f32.mxu0 0.0
    %6733 = vmatmul.mubr.f32.gmra.mrb[0].mxu0 %v3424
    %v6734 = vpop.f32.mrb[0].mxu0
    %v6735 = vadd.f32 0.0, %v6734
    %v6736 = vpop.f32.mrb[0].mxu0
    %6737 = vmatprep.mubr.f32.mxu0 0.0
    %6738 = vmatmul.mubr.f32.gmra.mrb[0].mxu0 %v3426
    %v6739 = vpop.f32.mrb[0].mxu0
    %v6740 = vadd.f32 0.0, %v6739
    %v6741 = vpop.f32.mrb[0].mxu0
    %6742 = vmatprep.mubr.f32.mxu0 0.0
    %6743 = vmatmul.mubr.f32.gmra.mrb[0].mxu0 %v4482
    %v6744 = vpop.f32.mrb[0].mxu0
    %v6745 = vadd.f32 0.0, %v6744
    %v6746 = vpop.f32.mrb[0].mxu0
    %6747 = vmatprep.mubr.f32.mxu0 0.0
    %6748 = vmatmul.mubr.f32.gmra.mrb[0].mxu0 %v4484
    %v6749 = vpop.f32.mrb[0].mxu0
    %v6750 = vadd.f32 0.0, %v6749
    %v6751 = vpop.f32.mrb[0].mxu0
    %6752 = vmatprep.mubr.f32.mxu0 0.0
    %6753 = vmatmul.mubr.f32.gmra.mrb[0].mxu0 %v4486
    %v6754 = vpop.f32.mrb[0].mxu0
    %v6755 = vadd.f32 0.0, %v6754
    %v6756 = vpop.f32.mrb[0].mxu0
    %6757 = vmatprep.mubr.f32.mxu0 0.0
    %6758 = vmatmul.mubr.f32.gmra.mrb[0].mxu0 %v5542
    %v6759 = vpop.f32.mrb[0].mxu0
    %v6760 = vadd.f32 0.0, %v6759
    %v6761 = vpop.f32.mrb[0].mxu0
    %6762 = vmatprep.mubr.f32.mxu0 0.0
    %6763 = vmatmul.mubr.f32.gmra.mrb[0].mxu0 %v5544
    %v6764 = vpop.f32.mrb[0].mxu0
    %v6765 = vadd.f32 0.0, %v6764
    %v6766 = vpop.f32.mrb[0].mxu0
    %6767 = vmatprep.mubr.f32.mxu0 0.0
    %6768 = vmatmul.mubr.f32.gmra.mrb[0].mxu0 %v5546
    %v6769 = vpop.f32.mrb[0].mxu0
    %v6770 = vadd.f32 0.0, %v6769
    %v6771 = vpop.f32.mrb[0].mxu0
    %6772 = vmatprep.mubr.f32.mxu0 0.0
    %6773 = vmatmul.mubr.f32.gmra.mrb[0].mxu0 %v6602
    %v6774 = vpop.f32.mrb[0].mxu0
    %v6775 = vpop.f32.mrb[0].mxu0
    %6776 = vmatprep.mubr.f32.mxu0 0.0
    %6777 = vmatmul.mubr.f32.gmra.mrb[0].mxu0 %v6604
    %v6778 = vpop.f32.mrb[0].mxu0
    %v6779 = vadd.f32 0.0, %v6778
    %v6780 = vpop.f32.mrb[0].mxu0
    %6781 = vmatprep.mubr.f32.mxu0 0.0
    %6782 = vmatmul.mubr.f32.gmra.mrb[0].mxu0 %v6606
    %v6783 = vpop.f32.mrb[0].mxu0
    %v6784 = vadd.f32 0.0, %v6783
    %v6785 = vpop.f32.mrb[0].mxu0
    %6786 = vdwg.mxu0
    %v6787 = vadd.f32 %v6572, %v6675
    %v6788 = vadd.f32 %v6573, %v6680
    %v6789 = vadd.f32 %v6574, %v6685
    %v6790 = vadd.f32 %v6575, %v6690
    %v6791 = vadd.f32 %v6576, %v6695
    %v6792 = vadd.f32 %v6577, %v6700
    %v6793 = vadd.f32 %v6578, %v6705
    %v6794 = vadd.f32 %v6579, %v6710
    %v6795 = vadd.f32 %v6580, %v6715
    %v6796 = vadd.f32 %v6581, %v6720
    %v6797 = vadd.f32 %v6582, %v6725
    %v6798 = vadd.f32 %v6583, %v6730
    %v6799 = vadd.f32 %v6584, %v6735
    %v6800 = vadd.f32 %v6585, %v6740
    %v6801 = vadd.f32 %v6586, %v6745
    %v6802 = vadd.f32 %v6587, %v6750
    %v6803 = vadd.f32 %v6588, %v6755
    %v6804 = vadd.f32 %v6589, %v6760
    %v6805 = vadd.f32 %v6590, %v6765
    %v6806 = vadd.f32 %v6591, %v6770
    %v6807 = vadd.f32 %v6592, %v6779
    %v6808 = vadd.f32 %v6593, %v6784
    %s6809 = scalar_lea.vmem %s3, 184
    %v6810 = vld [vmem:[%s6809] sm:$0xff]
    %v6811 = vrot.slane %v1661, 6
    %v6812 = vsel %vm2489, %v5755, %v6811
    %v6813 = vrot.slane %v1662, 6
    %v6814 = vsel %vm2489, %v6811, %v6813
    %v6815 = vrot.slane %v1663, 6
    %v6816 = vsel %vm2489, %v6813, %v6815
    %v6817 = vsel %vm1739, %v6812, 0
    %v6819 = vsel %vm1739, %v6814, 0
    %v6821 = vsel %vm1739, %v6816, 0
    %6823 = vmatprep.subr.mxu0 0.0
    %6824 = vmatpush1.msra.mxu0 %v6810
    %6825 = vmatprep.subr.mxu0 0.0
    %6826 = vmatpush1.msra.mxu0 0.0
    %6827 = vmatprep.subr.mxu0 0.0
    %6828 = vmatpush1.msra.mxu0 0.0
    %6829 = vmatprep.subr.mxu0 0.0
    %6830 = vmatpush1.msra.mxu0 0.0
    %6831 = vmatprep.subr.mxu0 0.0
    %6832 = vmatpush1.msra.mxu0 0.0
    %6833 = vmatprep.subr.mxu0 0.0
    %6834 = vmatpush1.msra.mxu0 0.0
    %6835 = vmatprep.subr.mxu0 0.0
    %6836 = vmatpush1.msra.mxu0 0.0
    %6837 = vmatprep.subr.mxu0 0.0
    %6838 = vmatpush1.msra.mxu0 0.0
    %6839 = vmatprep.subr.mxu0 0.0
    %6840 = vmatpush1.msra.mxu0 0.0
    %6841 = vmatprep.subr.mxu0 0.0
    %6842 = vmatpush1.msra.mxu0 0.0
    %6843 = vmatprep.subr.mxu0 0.0
    %6844 = vmatpush1.msra.mxu0 0.0
    %6845 = vmatprep.subr.mxu0 0.0
    %6846 = vmatpush1.msra.mxu0 0.0
    %6847 = vmatprep.subr.mxu0 0.0
    %6848 = vmatpush1.msra.mxu0 0.0
    %6849 = vmatprep.subr.mxu0 0.0
    %6850 = vmatpush1.msra.mxu0 0.0
    %6851 = vmatprep.subr.mxu0 0.0
    %6852 = vmatpush1.msra.mxu0 0.0
    %6853 = vmatprep.subr.mxu0 0.0
    %6854 = vmatpush1.msra.mxu0 0.0
    %6855 = vmatprep.subr.mxu0 0.0
    %6856 = vmatpush1.msra.mxu0 0.0
    %6857 = vmatprep.subr.mxu0 0.0
    %6858 = vmatpush1.msra.mxu0 0.0
    %6859 = vmatprep.subr.mxu0 0.0
    %6860 = vmatpush1.msra.mxu0 0.0
    %6861 = vmatprep.subr.mxu0 0.0
    %6862 = vmatpush1.msra.mxu0 0.0
    %6863 = vmatprep.subr.mxu0 0.0
    %6864 = vmatpush1.msra.mxu0 0.0
    %6865 = vmatprep.subr.mxu0 0.0
    %6866 = vmatpush1.msra.mxu0 0.0
    %6867 = vmatprep.subr.mxu0 0.0
    %6868 = vmatpush1.msra.mxu0 0.0
    %6869 = vmatprep.subr.mxu0 0.0
    %6870 = vmatpush1.msra.mxu0 0.0
    %6871 = vmatprep.subr.mxu0 0.0
    %6872 = vmatpush1.msra.mxu0 0.0
    %6873 = vmatprep.subr.mxu0 0.0
    %6874 = vmatpush1.msra.mxu0 0.0
    %6875 = vmatprep.subr.mxu0 0.0
    %6876 = vmatpush1.msra.mxu0 0.0
    %6877 = vmatprep.subr.mxu0 0.0
    %6878 = vmatpush1.msra.mxu0 0.0
    %6879 = vmatprep.subr.mxu0 0.0
    %6880 = vmatpush1.msra.mxu0 0.0
    %6881 = vmatprep.subr.mxu0 0.0
    %6882 = vmatpush1.msra.mxu0 0.0
    %6883 = vmatprep.subr.mxu0 0.0
    %6884 = vmatpush1.msra.mxu0 0.0
    %6885 = vmatprep.subr.mxu0 0.0
    %6886 = vmatpush1.msra.mxu0 0.0
    %6887 = vmatprep.mubr.f32.mxu0 0.0
    %6888 = vmatmul.mubr.f32.gmra.mrb[0].mxu0 %v2561
    %v6889 = vpop.f32.mrb[0].mxu0
    %v6890 = vadd.f32 0.0, %v6889
    %v6891 = vpop.f32.mrb[0].mxu0
    %6892 = vmatprep.mubr.f32.mxu0 0.0
    %6893 = vmatmul.mubr.f32.gmra.mrb[0].mxu0 %v2563
    %v6894 = vpop.f32.mrb[0].mxu0
    %v6895 = vadd.f32 0.0, %v6894
    %v6896 = vpop.f32.mrb[0].mxu0
    %6897 = vmatprep.mubr.f32.mxu0 0.0
    %6898 = vmatmul.mubr.f32.gmra.mrb[0].mxu0 %v2565
    %v6899 = vpop.f32.mrb[0].mxu0
    %v6900 = vadd.f32 0.0, %v6899
    %v6901 = vpop.f32.mrb[0].mxu0
    %6902 = vmatprep.mubr.f32.mxu0 0.0
    %6903 = vmatmul.mubr.f32.gmra.mrb[0].mxu0 %v2567
    %v6904 = vpop.f32.mrb[0].mxu0
    %v6905 = vadd.f32 0.0, %v6904
    %v6906 = vpop.f32.mrb[0].mxu0
    %6907 = vmatprep.mubr.f32.mxu0 0.0
    %6908 = vmatmul.mubr.f32.gmra.mrb[0].mxu0 %v2569
    %v6909 = vpop.f32.mrb[0].mxu0
    %v6910 = vadd.f32 0.0, %v6909
    %v6911 = vpop.f32.mrb[0].mxu0
    %6912 = vmatprep.mubr.f32.mxu0 0.0
    %6913 = vmatmul.mubr.f32.gmra.mrb[0].mxu0 %v2571
    %v6914 = vpop.f32.mrb[0].mxu0
    %v6915 = vadd.f32 0.0, %v6914
    %v6916 = vpop.f32.mrb[0].mxu0
    %6917 = vmatprep.mubr.f32.mxu0 0.0
    %6918 = vmatmul.mubr.f32.gmra.mrb[0].mxu0 %v2573
    %v6919 = vpop.f32.mrb[0].mxu0
    %v6920 = vadd.f32 0.0, %v6919
    %v6921 = vpop.f32.mrb[0].mxu0
    %6922 = vmatprep.mubr.f32.mxu0 0.0
    %6923 = vmatmul.mubr.f32.gmra.mrb[0].mxu0 %v2575
    %v6924 = vpop.f32.mrb[0].mxu0
    %v6925 = vadd.f32 0.0, %v6924
    %v6926 = vpop.f32.mrb[0].mxu0
    %6927 = vmatprep.mubr.f32.mxu0 0.0
    %6928 = vmatmul.mubr.f32.gmra.mrb[0].mxu0 %v2577
    %v6929 = vpop.f32.mrb[0].mxu0
    %v6930 = vadd.f32 0.0, %v6929
    %v6931 = vpop.f32.mrb[0].mxu0
    %6932 = vmatprep.mubr.f32.mxu0 0.0
    %6933 = vmatmul.mubr.f32.gmra.mrb[0].mxu0 %v2579
    %v6934 = vpop.f32.mrb[0].mxu0
    %v6935 = vadd.f32 0.0, %v6934
    %v6936 = vpop.f32.mrb[0].mxu0
    %6937 = vmatprep.mubr.f32.mxu0 0.0
    %6938 = vmatmul.mubr.f32.gmra.mrb[0].mxu0 %v2581
    %v6939 = vpop.f32.mrb[0].mxu0
    %v6940 = vadd.f32 0.0, %v6939
    %v6941 = vpop.f32.mrb[0].mxu0
    %6942 = vmatprep.mubr.f32.mxu0 0.0
    %6943 = vmatmul.mubr.f32.gmra.mrb[0].mxu0 %v3637
    %v6944 = vpop.f32.mrb[0].mxu0
    %v6945 = vadd.f32 0.0, %v6944
    %v6946 = vpop.f32.mrb[0].mxu0
    %6947 = vmatprep.mubr.f32.mxu0 0.0
    %6948 = vmatmul.mubr.f32.gmra.mrb[0].mxu0 %v3639
    %v6949 = vpop.f32.mrb[0].mxu0
    %v6950 = vadd.f32 0.0, %v6949
    %v6951 = vpop.f32.mrb[0].mxu0
    %6952 = vmatprep.mubr.f32.mxu0 0.0
    %6953 = vmatmul.mubr.f32.gmra.mrb[0].mxu0 %v3641
    %v6954 = vpop.f32.mrb[0].mxu0
    %v6955 = vadd.f32 0.0, %v6954
    %v6956 = vpop.f32.mrb[0].mxu0
    %6957 = vmatprep.mubr.f32.mxu0 0.0
    %6958 = vmatmul.mubr.f32.gmra.mrb[0].mxu0 %v4697
    %v6959 = vpop.f32.mrb[0].mxu0
    %v6960 = vadd.f32 0.0, %v6959
    %v6961 = vpop.f32.mrb[0].mxu0
    %6962 = vmatprep.mubr.f32.mxu0 0.0
    %6963 = vmatmul.mubr.f32.gmra.mrb[0].mxu0 %v4699
    %v6964 = vpop.f32.mrb[0].mxu0
    %v6965 = vadd.f32 0.0, %v6964
    %v6966 = vpop.f32.mrb[0].mxu0
    %6967 = vmatprep.mubr.f32.mxu0 0.0
    %6968 = vmatmul.mubr.f32.gmra.mrb[0].mxu0 %v4701
    %v6969 = vpop.f32.mrb[0].mxu0
    %v6970 = vadd.f32 0.0, %v6969
    %v6971 = vpop.f32.mrb[0].mxu0
    %6972 = vmatprep.mubr.f32.mxu0 0.0
    %6973 = vmatmul.mubr.f32.gmra.mrb[0].mxu0 %v5757
    %v6974 = vpop.f32.mrb[0].mxu0
    %v6975 = vadd.f32 0.0, %v6974
    %v6976 = vpop.f32.mrb[0].mxu0
    %6977 = vmatprep.mubr.f32.mxu0 0.0
    %6978 = vmatmul.mubr.f32.gmra.mrb[0].mxu0 %v5759
    %v6979 = vpop.f32.mrb[0].mxu0
    %v6980 = vadd.f32 0.0, %v6979
    %v6981 = vpop.f32.mrb[0].mxu0
    %6982 = vmatprep.mubr.f32.mxu0 0.0
    %6983 = vmatmul.mubr.f32.gmra.mrb[0].mxu0 %v5761
    %v6984 = vpop.f32.mrb[0].mxu0
    %v6985 = vadd.f32 0.0, %v6984
    %v6986 = vpop.f32.mrb[0].mxu0
    %6987 = vmatprep.mubr.f32.mxu0 0.0
    %6988 = vmatmul.mubr.f32.gmra.mrb[0].mxu0 %v6817
    %v6989 = vpop.f32.mrb[0].mxu0
    %v6990 = vpop.f32.mrb[0].mxu0
    %6991 = vmatprep.mubr.f32.mxu0 0.0
    %6992 = vmatmul.mubr.f32.gmra.mrb[0].mxu0 %v6819
    %v6993 = vpop.f32.mrb[0].mxu0
    %v6994 = vadd.f32 0.0, %v6993
    %v6995 = vpop.f32.mrb[0].mxu0
    %6996 = vmatprep.mubr.f32.mxu0 0.0
    %6997 = vmatmul.mubr.f32.gmra.mrb[0].mxu0 %v6821
    %v6998 = vpop.f32.mrb[0].mxu0
    %v6999 = vadd.f32 0.0, %v6998
    %v7000 = vpop.f32.mrb[0].mxu0
    %7001 = vdwg.mxu0
    %v7002 = vadd.f32 %v6787, %v6890
    %v7003 = vadd.f32 %v6788, %v6895
    %v7004 = vadd.f32 %v6789, %v6900
    %v7005 = vadd.f32 %v6790, %v6905
    %v7006 = vadd.f32 %v6791, %v6910
    %v7007 = vadd.f32 %v6792, %v6915
    %v7008 = vadd.f32 %v6793, %v6920
    %v7009 = vadd.f32 %v6794, %v6925
    %v7010 = vadd.f32 %v6795, %v6930
    %v7011 = vadd.f32 %v6796, %v6935
    %v7012 = vadd.f32 %v6797, %v6940
    %v7013 = vadd.f32 %v6798, %v6945
    %v7014 = vadd.f32 %v6799, %v6950
    %v7015 = vadd.f32 %v6800, %v6955
    %v7016 = vadd.f32 %v6801, %v6960
    %v7017 = vadd.f32 %v6802, %v6965
    %v7018 = vadd.f32 %v6803, %v6970
    %v7019 = vadd.f32 %v6804, %v6975
    %v7020 = vadd.f32 %v6805, %v6980
    %v7021 = vadd.f32 %v6806, %v6985
    %v7022 = vadd.f32 %v6807, %v6994
    %v7023 = vadd.f32 %v6808, %v6999
    %s7024 = scalar_lea.vmem %s3, 192
    %v7025 = vld [vmem:[%s7024] sm:$0xff]
    %v7026 = vsel %vm1739, %v1663, 0
    %7028 = vmatprep.subr.mxu0 0.0
    %7029 = vmatpush1.msra.mxu0 %v7025
    %7030 = vmatprep.subr.mxu0 0.0
    %7031 = vmatpush1.msra.mxu0 0.0
    %7032 = vmatprep.subr.mxu0 0.0
    %7033 = vmatpush1.msra.mxu0 0.0
    %7034 = vmatprep.subr.mxu0 0.0
    %7035 = vmatpush1.msra.mxu0 0.0
    %7036 = vmatprep.subr.mxu0 0.0
    %7037 = vmatpush1.msra.mxu0 0.0
    %7038 = vmatprep.subr.mxu0 0.0
    %7039 = vmatpush1.msra.mxu0 0.0
    %7040 = vmatprep.subr.mxu0 0.0
    %7041 = vmatpush1.msra.mxu0 0.0
    %7042 = vmatprep.subr.mxu0 0.0
    %7043 = vmatpush1.msra.mxu0 0.0
    %7044 = vmatprep.subr.mxu0 0.0
    %7045 = vmatpush1.msra.mxu0 0.0
    %7046 = vmatprep.subr.mxu0 0.0
    %7047 = vmatpush1.msra.mxu0 0.0
    %7048 = vmatprep.subr.mxu0 0.0
    %7049 = vmatpush1.msra.mxu0 0.0
    %7050 = vmatprep.subr.mxu0 0.0
    %7051 = vmatpush1.msra.mxu0 0.0
    %7052 = vmatprep.subr.mxu0 0.0
    %7053 = vmatpush1.msra.mxu0 0.0
    %7054 = vmatprep.subr.mxu0 0.0
    %7055 = vmatpush1.msra.mxu0 0.0
    %7056 = vmatprep.subr.mxu0 0.0
    %7057 = vmatpush1.msra.mxu0 0.0
    %7058 = vmatprep.subr.mxu0 0.0
    %7059 = vmatpush1.msra.mxu0 0.0
    %7060 = vmatprep.subr.mxu0 0.0
    %7061 = vmatpush1.msra.mxu0 0.0
    %7062 = vmatprep.subr.mxu0 0.0
    %7063 = vmatpush1.msra.mxu0 0.0
    %7064 = vmatprep.subr.mxu0 0.0
    %7065 = vmatpush1.msra.mxu0 0.0
    %7066 = vmatprep.subr.mxu0 0.0
    %7067 = vmatpush1.msra.mxu0 0.0
    %7068 = vmatprep.subr.mxu0 0.0
    %7069 = vmatpush1.msra.mxu0 0.0
    %7070 = vmatprep.subr.mxu0 0.0
    %7071 = vmatpush1.msra.mxu0 0.0
    %7072 = vmatprep.subr.mxu0 0.0
    %7073 = vmatpush1.msra.mxu0 0.0
    %7074 = vmatprep.subr.mxu0 0.0
    %7075 = vmatpush1.msra.mxu0 0.0
    %7076 = vmatprep.subr.mxu0 0.0
    %7077 = vmatpush1.msra.mxu0 0.0
    %7078 = vmatprep.subr.mxu0 0.0
    %7079 = vmatpush1.msra.mxu0 0.0
    %7080 = vmatprep.subr.mxu0 0.0
    %7081 = vmatpush1.msra.mxu0 0.0
    %7082 = vmatprep.subr.mxu0 0.0
    %7083 = vmatpush1.msra.mxu0 0.0
    %7084 = vmatprep.subr.mxu0 0.0
    %7085 = vmatpush1.msra.mxu0 0.0
    %7086 = vmatprep.subr.mxu0 0.0
    %7087 = vmatpush1.msra.mxu0 0.0
    %7088 = vmatprep.subr.mxu0 0.0
    %7089 = vmatpush1.msra.mxu0 0.0
    %7090 = vmatprep.subr.mxu0 0.0
    %7091 = vmatpush1.msra.mxu0 0.0
    %7092 = vmatprep.mubr.f32.mxu0 0.0
    %7093 = vmatmul.mubr.f32.gmra.mrb[0].mxu0 %v1991
    %v7094 = vpop.f32.mrb[0].mxu0
    %v7095 = vadd.f32 0.0, %v7094
    %v7096 = vpop.f32.mrb[0].mxu0
    %7097 = vmatprep.mubr.f32.mxu0 0.0
    %7098 = vmatmul.mubr.f32.gmra.mrb[0].mxu0 %v1993
    %v7099 = vpop.f32.mrb[0].mxu0
    %v7100 = vadd.f32 0.0, %v7099
    %v7101 = vpop.f32.mrb[0].mxu0
    %7102 = vmatprep.mubr.f32.mxu0 0.0
    %7103 = vmatmul.mubr.f32.gmra.mrb[0].mxu0 %v1995
    %v7104 = vpop.f32.mrb[0].mxu0
    %v7105 = vadd.f32 0.0, %v7104
    %v7106 = vpop.f32.mrb[0].mxu0
    %7107 = vmatprep.mubr.f32.mxu0 0.0
    %7108 = vmatmul.mubr.f32.gmra.mrb[0].mxu0 %v1997
    %v7109 = vpop.f32.mrb[0].mxu0
    %v7110 = vadd.f32 0.0, %v7109
    %v7111 = vpop.f32.mrb[0].mxu0
    %7112 = vmatprep.mubr.f32.mxu0 0.0
    %7113 = vmatmul.mubr.f32.gmra.mrb[0].mxu0 %v1999
    %v7114 = vpop.f32.mrb[0].mxu0
    %v7115 = vadd.f32 0.0, %v7114
    %v7116 = vpop.f32.mrb[0].mxu0
    %7117 = vmatprep.mubr.f32.mxu0 0.0
    %7118 = vmatmul.mubr.f32.gmra.mrb[0].mxu0 %v2001
    %v7119 = vpop.f32.mrb[0].mxu0
    %v7120 = vadd.f32 0.0, %v7119
    %v7121 = vpop.f32.mrb[0].mxu0
    %7122 = vmatprep.mubr.f32.mxu0 0.0
    %7123 = vmatmul.mubr.f32.gmra.mrb[0].mxu0 %v2003
    %v7124 = vpop.f32.mrb[0].mxu0
    %v7125 = vadd.f32 0.0, %v7124
    %v7126 = vpop.f32.mrb[0].mxu0
    %7127 = vmatprep.mubr.f32.mxu0 0.0
    %7128 = vmatmul.mubr.f32.gmra.mrb[0].mxu0 %v2005
    %v7129 = vpop.f32.mrb[0].mxu0
    %v7130 = vadd.f32 0.0, %v7129
    %v7131 = vpop.f32.mrb[0].mxu0
    %7132 = vmatprep.mubr.f32.mxu0 0.0
    %7133 = vmatmul.mubr.f32.gmra.mrb[0].mxu0 %v2007
    %v7134 = vpop.f32.mrb[0].mxu0
    %v7135 = vadd.f32 0.0, %v7134
    %v7136 = vpop.f32.mrb[0].mxu0
    %7137 = vmatprep.mubr.f32.mxu0 0.0
    %7138 = vmatmul.mubr.f32.gmra.mrb[0].mxu0 %v2009
    %v7139 = vpop.f32.mrb[0].mxu0
    %v7140 = vadd.f32 0.0, %v7139
    %v7141 = vpop.f32.mrb[0].mxu0
    %7142 = vmatprep.mubr.f32.mxu0 0.0
    %7143 = vmatmul.mubr.f32.gmra.mrb[0].mxu0 %v2786
    %v7144 = vpop.f32.mrb[0].mxu0
    %v7145 = vadd.f32 0.0, %v7144
    %v7146 = vpop.f32.mrb[0].mxu0
    %7147 = vmatprep.mubr.f32.mxu0 0.0
    %7148 = vmatmul.mubr.f32.gmra.mrb[0].mxu0 %v2992
    %v7149 = vpop.f32.mrb[0].mxu0
    %v7150 = vadd.f32 0.0, %v7149
    %v7151 = vpop.f32.mrb[0].mxu0
    %7152 = vmatprep.mubr.f32.mxu0 0.0
    %7153 = vmatmul.mubr.f32.gmra.mrb[0].mxu0 %v2995
    %v7154 = vpop.f32.mrb[0].mxu0
    %v7155 = vadd.f32 0.0, %v7154
    %v7156 = vpop.f32.mrb[0].mxu0
    %7157 = vmatprep.mubr.f32.mxu0 0.0
    %7158 = vmatmul.mubr.f32.gmra.mrb[0].mxu0 %v3846
    %v7159 = vpop.f32.mrb[0].mxu0
    %v7160 = vadd.f32 0.0, %v7159
    %v7161 = vpop.f32.mrb[0].mxu0
    %7162 = vmatprep.mubr.f32.mxu0 0.0
    %7163 = vmatmul.mubr.f32.gmra.mrb[0].mxu0 %v4052
    %v7164 = vpop.f32.mrb[0].mxu0
    %v7165 = vadd.f32 0.0, %v7164
    %v7166 = vpop.f32.mrb[0].mxu0
    %7167 = vmatprep.mubr.f32.mxu0 0.0
    %7168 = vmatmul.mubr.f32.gmra.mrb[0].mxu0 %v4055
    %v7169 = vpop.f32.mrb[0].mxu0
    %v7170 = vadd.f32 0.0, %v7169
    %v7171 = vpop.f32.mrb[0].mxu0
    %7172 = vmatprep.mubr.f32.mxu0 0.0
    %7173 = vmatmul.mubr.f32.gmra.mrb[0].mxu0 %v4906
    %v7174 = vpop.f32.mrb[0].mxu0
    %v7175 = vadd.f32 0.0, %v7174
    %v7176 = vpop.f32.mrb[0].mxu0
    %7177 = vmatprep.mubr.f32.mxu0 0.0
    %7178 = vmatmul.mubr.f32.gmra.mrb[0].mxu0 %v5112
    %v7179 = vpop.f32.mrb[0].mxu0
    %v7180 = vadd.f32 0.0, %v7179
    %v7181 = vpop.f32.mrb[0].mxu0
    %7182 = vmatprep.mubr.f32.mxu0 0.0
    %7183 = vmatmul.mubr.f32.gmra.mrb[0].mxu0 %v5115
    %v7184 = vpop.f32.mrb[0].mxu0
    %v7185 = vadd.f32 0.0, %v7184
    %v7186 = vpop.f32.mrb[0].mxu0
    %7187 = vmatprep.mubr.f32.mxu0 0.0
    %7188 = vmatmul.mubr.f32.gmra.mrb[0].mxu0 %v5966
    %v7189 = vpop.f32.mrb[0].mxu0
    %v7190 = vadd.f32 0.0, %v7189
    %v7191 = vpop.f32.mrb[0].mxu0
    %7192 = vmatprep.mubr.f32.mxu0 0.0
    %7193 = vmatmul.mubr.f32.gmra.mrb[0].mxu0 %v6172
    %v7194 = vpop.f32.mrb[0].mxu0
    %v7195 = vpop.f32.mrb[0].mxu0
    %7196 = vmatprep.mubr.f32.mxu0 0.0
    %7197 = vmatmul.mubr.f32.gmra.mrb[0].mxu0 %v6175
    %v7198 = vpop.f32.mrb[0].mxu0
    %v7199 = vadd.f32 0.0, %v7198
    %v7200 = vpop.f32.mrb[0].mxu0
    %7201 = vmatprep.mubr.f32.mxu0 0.0
    %7202 = vmatmul.mubr.f32.gmra.mrb[0].mxu0 %v7026
    %v7203 = vpop.f32.mrb[0].mxu0
    %v7204 = vadd.f32 0.0, %v7203
    %v7205 = vpop.f32.mrb[0].mxu0
    %7206 = vdwg.mxu0
    %v7207 = vadd.f32 %v7002, %v7095
    %v7208 = vadd.f32 %v7003, %v7100
    %v7209 = vadd.f32 %v7004, %v7105
    %v7210 = vadd.f32 %v7005, %v7110
    %v7211 = vadd.f32 %v7006, %v7115
    %v7212 = vadd.f32 %v7007, %v7120
    %v7213 = vadd.f32 %v7008, %v7125
    %v7214 = vadd.f32 %v7009, %v7130
    %v7215 = vadd.f32 %v7010, %v7135
    %v7216 = vadd.f32 %v7011, %v7140
    %v7217 = vadd.f32 %v7012, %v7145
    %v7218 = vadd.f32 %v7013, %v7150
    %v7219 = vadd.f32 %v7014, %v7155
    %v7220 = vadd.f32 %v7015, %v7160
    %v7221 = vadd.f32 %v7016, %v7165
    %v7222 = vadd.f32 %v7017, %v7170
    %v7223 = vadd.f32 %v7018, %v7175
    %v7224 = vadd.f32 %v7019, %v7180
    %v7225 = vadd.f32 %v7020, %v7185
    %v7226 = vadd.f32 %v7021, %v7190
    %v7227 = vadd.f32 %v7022, %v7199
    %v7228 = vadd.f32 %v7023, %v7204
    %v7229 = vld [vmem:[%s4] sm:$0x1]
    %v7231 = vlaneseq
    %v7232 = vshrl.u32 %v7231, 7
    %v7233 = vsub.s32 0, %v7232
    %v7234 = vrot.slane %v7229, %v7233
    %v7236 = vadd.f32 %v7207, %v7234
    %v7237 = vadd.f32 %v7208, %v7234
    %v7238 = vadd.f32 %v7209, %v7234
    %v7239 = vadd.f32 %v7210, %v7234
    %v7240 = vadd.f32 %v7211, %v7234
    %v7241 = vadd.f32 %v7212, %v7234
    %v7242 = vadd.f32 %v7213, %v7234
    %v7243 = vadd.f32 %v7214, %v7234
    %v7244 = vadd.f32 %v7215, %v7234
    %v7245 = vadd.f32 %v7216, %v7234
    %v7246 = vadd.f32 %v7217, %v7234
    %v7247 = vadd.f32 %v7218, %v7234
    %v7248 = vadd.f32 %v7219, %v7234
    %v7249 = vadd.f32 %v7220, %v7234
    %v7250 = vadd.f32 %v7221, %v7234
    %v7251 = vadd.f32 %v7222, %v7234
    %v7252 = vadd.f32 %v7223, %v7234
    %v7253 = vadd.f32 %v7224, %v7234
    %v7254 = vadd.f32 %v7225, %v7234
    %v7255 = vadd.f32 %v7226, %v7234
    %v7256 = vadd.f32 %v7227, %v7234
    %v7257 = vadd.f32 %v7228, %v7234
    %v7258 = vmax.f32 %v7236, 0.0
    %v7259 = vmax.f32 %v7237, 0.0
    %v7260 = vmax.f32 %v7238, 0.0
    %v7261 = vmax.f32 %v7239, 0.0
    %v7262 = vmax.f32 %v7240, 0.0
    %v7263 = vmax.f32 %v7241, 0.0
    %v7264 = vmax.f32 %v7242, 0.0
    %v7265 = vmax.f32 %v7243, 0.0
    %v7266 = vmax.f32 %v7244, 0.0
    %v7267 = vmax.f32 %v7245, 0.0
    %v7268 = vmax.f32 %v7246, 0.0
    %v7269 = vmax.f32 %v7247, 0.0
    %v7270 = vmax.f32 %v7248, 0.0
    %v7271 = vmax.f32 %v7249, 0.0
    %v7272 = vmax.f32 %v7250, 0.0
    %v7273 = vmax.f32 %v7251, 0.0
    %v7274 = vmax.f32 %v7252, 0.0
    %v7275 = vmax.f32 %v7253, 0.0
    %v7276 = vmax.f32 %v7254, 0.0
    %v7277 = vmax.f32 %v7255, 0.0
    %v7278 = vmax.f32 %v7256, 0.0
    %v7279 = vmax.f32 %v7257, 0.0
    %v7291 = vrot.slane %v7258, 2
    %v7292 = vrot.slane %v7259, 2
    %v7293 = vsel %vm1691, %v7291, %v7292
    %v7294 = vrot.slane %v7260, 2
    %v7295 = vsel %vm1691, %v7292, %v7294
    %v7296 = vrot.slane %v7264, 2
    %v7297 = vrot.slane %v7265, 2
    %v7298 = vsel %vm1691, %v7296, %v7297
    %v7299 = vrot.slane %v7266, 2
    %v7300 = vsel %vm1691, %v7297, %v7299
    %v7301 = vrot.slane %v7270, 2
    %v7302 = vrot.slane %v7271, 2
    %v7303 = vsel %vm1691, %v7301, %v7302
    %v7304 = vrot.slane %v7272, 2
    %v7305 = vsel %vm1691, %v7302, %v7304
    %v7306 = vrot.slane %v7276, 2
    %v7307 = vrot.slane %v7277, 2
    %v7308 = vsel %vm1691, %v7306, %v7307
    %v7317 = vmax.f32 %v7258, %v7293
    %v7318 = vmax.f32 %v7259, %v7295
    %v7319 = vmax.f32 %v7264, %v7298
    %v7320 = vmax.f32 %v7265, %v7300
    %v7321 = vmax.f32 %v7270, %v7303
    %v7322 = vmax.f32 %v7271, %v7305
    %v7323 = vmax.f32 %v7276, %v7308
    %v7324 = vmax.f32 %v7277, %v7307
    %v7336 = vrot.slane %v7261, 2
    %v7337 = vrot.slane %v7262, 2
    %v7338 = vsel %vm1691, %v7336, %v7337
    %v7339 = vrot.slane %v7263, 2
    %v7340 = vsel %vm1691, %v7337, %v7339
    %v7341 = vrot.slane %v7267, 2
    %v7342 = vrot.slane %v7268, 2
    %v7343 = vsel %vm1691, %v7341, %v7342
    %v7344 = vrot.slane %v7269, 2
    %v7345 = vsel %vm1691, %v7342, %v7344
    %v7346 = vrot.slane %v7273, 2
    %v7347 = vrot.slane %v7274, 2
    %v7348 = vsel %vm1691, %v7346, %v7347
    %v7349 = vrot.slane %v7275, 2
    %v7350 = vsel %vm1691, %v7347, %v7349
    %v7351 = vrot.slane %v7278, 2
    %v7352 = vrot.slane %v7279, 2
    %v7353 = vsel %vm1691, %v7351, %v7352
    %v7362 = vmax.f32 %v7261, %v7338
    %v7363 = vmax.f32 %v7262, %v7340
    %v7364 = vmax.f32 %v7267, %v7343
    %v7365 = vmax.f32 %v7268, %v7345
    %v7366 = vmax.f32 %v7273, %v7348
    %v7367 = vmax.f32 %v7274, %v7350
    %v7368 = vmax.f32 %v7278, %v7353
    %v7369 = vmax.f32 %v7279, %v7352
    %v7370 = vmax.f32 %v7317, %v7362
    %v7371 = vmax.f32 %v7318, %v7363
    %v7372 = vmax.f32 %v7319, %v7364
    %v7373 = vmax.f32 %v7320, %v7365
    %v7374 = vmax.f32 %v7321, %v7366
    %v7375 = vmax.f32 %v7322, %v7367
    %v7376 = vmax.f32 %v7323, %v7368
    %v7377 = vmax.f32 %v7324, %v7369
    %v7378 = vld [vmem:[%s5] sm:$0xff]
    %v7379 = vld [vmem:[%s5 + $0x8] sm:$0xff]
    %s7380 = scalar_lea.vmem %s5, 16
    %v7381 = vld [vmem:[%s7380] sm:$0xff]
    %v7382 = vld [vmem:[%s7380 + $0x8] sm:$0xff]
    %v7384 = vrot.slane %v7370, 4
    %vm7385 = vcmask 130048
    %v7386 = vsel %vm7385, %v7384, 0
    %7388 = vmatprep.subr.mxu0 0.0
    %7389 = vmatpush1.msra.mxu0 %v7381
    %7390 = vmatprep.subr.mxu0 0.0
    %7391 = vmatpush1.msra.mxu0 %v7382
    %7392 = vmatprep.subr.mxu0 0.0
    %7393 = vmatpush1.msra.mxu0 0.0
    %7394 = vmatprep.subr.mxu0 0.0
    %7395 = vmatpush1.msra.mxu0 0.0
    %7396 = vmatprep.subr.mxu0 0.0
    %7397 = vmatpush1.msra.mxu0 0.0
    %7398 = vmatprep.subr.mxu0 0.0
    %7399 = vmatpush1.msra.mxu0 0.0
    %7400 = vmatprep.subr.mxu0 0.0
    %7401 = vmatpush1.msra.mxu0 0.0
    %7402 = vmatprep.subr.mxu0 0.0
    %7403 = vmatpush1.msra.mxu0 0.0
    %7404 = vmatprep.subr.mxu0 0.0
    %7405 = vmatpush1.msra.mxu0 0.0
    %7406 = vmatprep.subr.mxu0 0.0
    %7407 = vmatpush1.msra.mxu0 0.0
    %7408 = vmatprep.subr.mxu0 0.0
    %7409 = vmatpush1.msra.mxu0 0.0
    %7410 = vmatprep.subr.mxu0 0.0
    %7411 = vmatpush1.msra.mxu0 0.0
    %7412 = vmatprep.subr.mxu0 0.0
    %7413 = vmatpush1.msra.mxu0 0.0
    %7414 = vmatprep.subr.mxu0 0.0
    %7415 = vmatpush1.msra.mxu0 0.0
    %7416 = vmatprep.subr.mxu0 0.0
    %7417 = vmatpush1.msra.mxu0 0.0
    %7418 = vmatprep.subr.mxu0 0.0
    %7419 = vmatpush1.msra.mxu0 0.0
    %7420 = vmatprep.subr.mxu0 0.0
    %7421 = vmatpush1.msra.mxu0 0.0
    %7422 = vmatprep.subr.mxu0 0.0
    %7423 = vmatpush1.msra.mxu0 0.0
    %7424 = vmatprep.subr.mxu0 0.0
    %7425 = vmatpush1.msra.mxu0 0.0
    %7426 = vmatprep.subr.mxu0 0.0
    %7427 = vmatpush1.msra.mxu0 0.0
    %7428 = vmatprep.subr.mxu0 0.0
    %7429 = vmatpush1.msra.mxu0 0.0
    %7430 = vmatprep.subr.mxu0 0.0
    %7431 = vmatpush1.msra.mxu0 0.0
    %7432 = vmatprep.subr.mxu0 0.0
    %7433 = vmatpush1.msra.mxu0 0.0
    %7434 = vmatprep.subr.mxu0 0.0
    %7435 = vmatpush1.msra.mxu0 0.0
    %7436 = vmatprep.subr.mxu0 0.0
    %7437 = vmatpush1.msra.mxu0 0.0
    %7438 = vmatprep.subr.mxu0 0.0
    %7439 = vmatpush1.msra.mxu0 0.0
    %7440 = vmatprep.subr.mxu0 0.0
    %7441 = vmatpush1.msra.mxu0 0.0
    %7442 = vmatprep.subr.mxu0 0.0
    %7443 = vmatpush1.msra.mxu0 0.0
    %7444 = vmatprep.subr.mxu0 0.0
    %7445 = vmatpush1.msra.mxu0 0.0
    %7446 = vmatprep.subr.mxu0 0.0
    %7447 = vmatpush1.msra.mxu0 0.0
    %7448 = vmatprep.subr.mxu0 0.0
    %7449 = vmatpush1.msra.mxu0 0.0
    %7450 = vmatprep.subr.mxu0 0.0
    %7451 = vmatpush1.msra.mxu0 0.0
    %7452 = vmatprep.mubr.f32.mxu0 0.0
    %7453 = vmatmul.mubr.f32.gmra.mrb[0].mxu0 %v7386
    %v7454 = vpop.f32.mrb[0].mxu0
    %v7455 = vadd.f32 0.0, %v7454
    %v7456 = vpop.f32.mrb[0].mxu0
    %7457 = vdwg.mxu0
    %v7458 = vsel %vm7385, %v7370, 0
    %7460 = vmatprep.subr.mxu0 0.0
    %7461 = vmatpush1.msra.mxu0 %v7378
    %7462 = vmatprep.subr.mxu0 0.0
    %7463 = vmatpush1.msra.mxu0 %v7379
    %7464 = vmatprep.subr.mxu0 0.0
    %7465 = vmatpush1.msra.mxu0 0.0
    %7466 = vmatprep.subr.mxu0 0.0
    %7467 = vmatpush1.msra.mxu0 0.0
    %7468 = vmatprep.subr.mxu0 0.0
    %7469 = vmatpush1.msra.mxu0 0.0
    %7470 = vmatprep.subr.mxu0 0.0
    %7471 = vmatpush1.msra.mxu0 0.0
    %7472 = vmatprep.subr.mxu0 0.0
    %7473 = vmatpush1.msra.mxu0 0.0
    %7474 = vmatprep.subr.mxu0 0.0
    %7475 = vmatpush1.msra.mxu0 0.0
    %7476 = vmatprep.subr.mxu0 0.0
    %7477 = vmatpush1.msra.mxu0 0.0
    %7478 = vmatprep.subr.mxu0 0.0
    %7479 = vmatpush1.msra.mxu0 0.0
    %7480 = vmatprep.subr.mxu0 0.0
    %7481 = vmatpush1.msra.mxu0 0.0
    %7482 = vmatprep.subr.mxu0 0.0
    %7483 = vmatpush1.msra.mxu0 0.0
    %7484 = vmatprep.subr.mxu0 0.0
    %7485 = vmatpush1.msra.mxu0 0.0
    %7486 = vmatprep.subr.mxu0 0.0
    %7487 = vmatpush1.msra.mxu0 0.0
    %7488 = vmatprep.subr.mxu0 0.0
    %7489 = vmatpush1.msra.mxu0 0.0
    %7490 = vmatprep.subr.mxu0 0.0
    %7491 = vmatpush1.msra.mxu0 0.0
    %7492 = vmatprep.subr.mxu0 0.0
    %7493 = vmatpush1.msra.mxu0 0.0
    %7494 = vmatprep.subr.mxu0 0.0
    %7495 = vmatpush1.msra.mxu0 0.0
    %7496 = vmatprep.subr.mxu0 0.0
    %7497 = vmatpush1.msra.mxu0 0.0
    %7498 = vmatprep.subr.mxu0 0.0
    %7499 = vmatpush1.msra.mxu0 0.0
    %7500 = vmatprep.subr.mxu0 0.0
    %7501 = vmatpush1.msra.mxu0 0.0
    %7502 = vmatprep.subr.mxu0 0.0
    %7503 = vmatpush1.msra.mxu0 0.0
    %7504 = vmatprep.subr.mxu0 0.0
    %7505 = vmatpush1.msra.mxu0 0.0
    %7506 = vmatprep.subr.mxu0 0.0
    %7507 = vmatpush1.msra.mxu0 0.0
    %7508 = vmatprep.subr.mxu0 0.0
    %7509 = vmatpush1.msra.mxu0 0.0
    %7510 = vmatprep.subr.mxu0 0.0
    %7511 = vmatpush1.msra.mxu0 0.0
    %7512 = vmatprep.subr.mxu0 0.0
    %7513 = vmatpush1.msra.mxu0 0.0
    %7514 = vmatprep.subr.mxu0 0.0
    %7515 = vmatpush1.msra.mxu0 0.0
    %7516 = vmatprep.subr.mxu0 0.0
    %7517 = vmatpush1.msra.mxu0 0.0
    %7518 = vmatprep.subr.mxu0 0.0
    %7519 = vmatpush1.msra.mxu0 0.0
    %7520 = vmatprep.subr.mxu0 0.0
    %7521 = vmatpush1.msra.mxu0 0.0
    %7522 = vmatprep.subr.mxu0 0.0
    %7523 = vmatpush1.msra.mxu0 0.0
    %7524 = vmatprep.mubr.f32.mxu0 0.0
    %7525 = vmatmul.mubr.f32.gmra.mrb[0].mxu0 %v7458
    %v7526 = vpop.f32.mrb[0].mxu0
    %v7527 = vadd.f32 %v7455, %v7526
    %v7528 = vpop.f32.mrb[0].mxu0
    %7529 = vdwg.mxu0
    %s7530 = scalar_lea.vmem %s5, 32
    %v7531 = vld [vmem:[%s7530] sm:$0xff]
    %v7532 = vld [vmem:[%s7530 + $0x8] sm:$0xff]
    %v7534 = vsel %vm7385, %v7371, 0
    %7536 = vmatprep.subr.mxu0 0.0
    %7537 = vmatpush1.msra.mxu0 %v7531
    %7538 = vmatprep.subr.mxu0 0.0
    %7539 = vmatpush1.msra.mxu0 %v7532
    %7540 = vmatprep.subr.mxu0 0.0
    %7541 = vmatpush1.msra.mxu0 0.0
    %7542 = vmatprep.subr.mxu0 0.0
    %7543 = vmatpush1.msra.mxu0 0.0
    %7544 = vmatprep.subr.mxu0 0.0
    %7545 = vmatpush1.msra.mxu0 0.0
    %7546 = vmatprep.subr.mxu0 0.0
    %7547 = vmatpush1.msra.mxu0 0.0
    %7548 = vmatprep.subr.mxu0 0.0
    %7549 = vmatpush1.msra.mxu0 0.0
    %7550 = vmatprep.subr.mxu0 0.0
    %7551 = vmatpush1.msra.mxu0 0.0
    %7552 = vmatprep.subr.mxu0 0.0
    %7553 = vmatpush1.msra.mxu0 0.0
    %7554 = vmatprep.subr.mxu0 0.0
    %7555 = vmatpush1.msra.mxu0 0.0
    %7556 = vmatprep.subr.mxu0 0.0
    %7557 = vmatpush1.msra.mxu0 0.0
    %7558 = vmatprep.subr.mxu0 0.0
    %7559 = vmatpush1.msra.mxu0 0.0
    %7560 = vmatprep.subr.mxu0 0.0
    %7561 = vmatpush1.msra.mxu0 0.0
    %7562 = vmatprep.subr.mxu0 0.0
    %7563 = vmatpush1.msra.mxu0 0.0
    %7564 = vmatprep.subr.mxu0 0.0
    %7565 = vmatpush1.msra.mxu0 0.0
    %7566 = vmatprep.subr.mxu0 0.0
    %7567 = vmatpush1.msra.mxu0 0.0
    %7568 = vmatprep.subr.mxu0 0.0
    %7569 = vmatpush1.msra.mxu0 0.0
    %7570 = vmatprep.subr.mxu0 0.0
    %7571 = vmatpush1.msra.mxu0 0.0
    %7572 = vmatprep.subr.mxu0 0.0
    %7573 = vmatpush1.msra.mxu0 0.0
    %7574 = vmatprep.subr.mxu0 0.0
    %7575 = vmatpush1.msra.mxu0 0.0
    %7576 = vmatprep.subr.mxu0 0.0
    %7577 = vmatpush1.msra.mxu0 0.0
    %7578 = vmatprep.subr.mxu0 0.0
    %7579 = vmatpush1.msra.mxu0 0.0
    %7580 = vmatprep.subr.mxu0 0.0
    %7581 = vmatpush1.msra.mxu0 0.0
    %7582 = vmatprep.subr.mxu0 0.0
    %7583 = vmatpush1.msra.mxu0 0.0
    %7584 = vmatprep.subr.mxu0 0.0
    %7585 = vmatpush1.msra.mxu0 0.0
    %7586 = vmatprep.subr.mxu0 0.0
    %7587 = vmatpush1.msra.mxu0 0.0
    %7588 = vmatprep.subr.mxu0 0.0
    %7589 = vmatpush1.msra.mxu0 0.0
    %7590 = vmatprep.subr.mxu0 0.0
    %7591 = vmatpush1.msra.mxu0 0.0
    %7592 = vmatprep.subr.mxu0 0.0
    %7593 = vmatpush1.msra.mxu0 0.0
    %7594 = vmatprep.subr.mxu0 0.0
    %7595 = vmatpush1.msra.mxu0 0.0
    %7596 = vmatprep.subr.mxu0 0.0
    %7597 = vmatpush1.msra.mxu0 0.0
    %7598 = vmatprep.subr.mxu0 0.0
    %7599 = vmatpush1.msra.mxu0 0.0
    %7600 = vmatprep.mubr.f32.mxu0 0.0
    %7601 = vmatmul.mubr.f32.gmra.mrb[0].mxu0 %v7534
    %v7602 = vpop.f32.mrb[0].mxu0
    %v7603 = vadd.f32 0.0, %v7602
    %v7604 = vpop.f32.mrb[0].mxu0
    %7605 = vdwg.mxu0
    %v7606 = vadd.f32 %v7527, %v7603
    %s7607 = scalar_lea.vmem %s5, 48
    %v7608 = vld [vmem:[%s7607] sm:$0xff]
    %v7609 = vld [vmem:[%s7607 + $0x8] sm:$0xff]
    %v7610 = vrot.slane %v7371, 4
    %v7611 = vsel %vm7385, %v7610, 0
    %7613 = vmatprep.subr.mxu0 0.0
    %7614 = vmatpush1.msra.mxu0 %v7608
    %7615 = vmatprep.subr.mxu0 0.0
    %7616 = vmatpush1.msra.mxu0 %v7609
    %7617 = vmatprep.subr.mxu0 0.0
    %7618 = vmatpush1.msra.mxu0 0.0
    %7619 = vmatprep.subr.mxu0 0.0
    %7620 = vmatpush1.msra.mxu0 0.0
    %7621 = vmatprep.subr.mxu0 0.0
    %7622 = vmatpush1.msra.mxu0 0.0
    %7623 = vmatprep.subr.mxu0 0.0
    %7624 = vmatpush1.msra.mxu0 0.0
    %7625 = vmatprep.subr.mxu0 0.0
    %7626 = vmatpush1.msra.mxu0 0.0
    %7627 = vmatprep.subr.mxu0 0.0
    %7628 = vmatpush1.msra.mxu0 0.0
    %7629 = vmatprep.subr.mxu0 0.0
    %7630 = vmatpush1.msra.mxu0 0.0
    %7631 = vmatprep.subr.mxu0 0.0
    %7632 = vmatpush1.msra.mxu0 0.0
    %7633 = vmatprep.subr.mxu0 0.0
    %7634 = vmatpush1.msra.mxu0 0.0
    %7635 = vmatprep.subr.mxu0 0.0
    %7636 = vmatpush1.msra.mxu0 0.0
    %7637 = vmatprep.subr.mxu0 0.0
    %7638 = vmatpush1.msra.mxu0 0.0
    %7639 = vmatprep.subr.mxu0 0.0
    %7640 = vmatpush1.msra.mxu0 0.0
    %7641 = vmatprep.subr.mxu0 0.0
    %7642 = vmatpush1.msra.mxu0 0.0
    %7643 = vmatprep.subr.mxu0 0.0
    %7644 = vmatpush1.msra.mxu0 0.0
    %7645 = vmatprep.subr.mxu0 0.0
    %7646 = vmatpush1.msra.mxu0 0.0
    %7647 = vmatprep.subr.mxu0 0.0
    %7648 = vmatpush1.msra.mxu0 0.0
    %7649 = vmatprep.subr.mxu0 0.0
    %7650 = vmatpush1.msra.mxu0 0.0
    %7651 = vmatprep.subr.mxu0 0.0
    %7652 = vmatpush1.msra.mxu0 0.0
    %7653 = vmatprep.subr.mxu0 0.0
    %7654 = vmatpush1.msra.mxu0 0.0
    %7655 = vmatprep.subr.mxu0 0.0
    %7656 = vmatpush1.msra.mxu0 0.0
    %7657 = vmatprep.subr.mxu0 0.0
    %7658 = vmatpush1.msra.mxu0 0.0
    %7659 = vmatprep.subr.mxu0 0.0
    %7660 = vmatpush1.msra.mxu0 0.0
    %7661 = vmatprep.subr.mxu0 0.0
    %7662 = vmatpush1.msra.mxu0 0.0
    %7663 = vmatprep.subr.mxu0 0.0
    %7664 = vmatpush1.msra.mxu0 0.0
    %7665 = vmatprep.subr.mxu0 0.0
    %7666 = vmatpush1.msra.mxu0 0.0
    %7667 = vmatprep.subr.mxu0 0.0
    %7668 = vmatpush1.msra.mxu0 0.0
    %7669 = vmatprep.subr.mxu0 0.0
    %7670 = vmatpush1.msra.mxu0 0.0
    %7671 = vmatprep.subr.mxu0 0.0
    %7672 = vmatpush1.msra.mxu0 0.0
    %7673 = vmatprep.subr.mxu0 0.0
    %7674 = vmatpush1.msra.mxu0 0.0
    %7675 = vmatprep.subr.mxu0 0.0
    %7676 = vmatpush1.msra.mxu0 0.0
    %7677 = vmatprep.mubr.f32.mxu0 0.0
    %7678 = vmatmul.mubr.f32.gmra.mrb[0].mxu0 %v7611
    %v7679 = vpop.f32.mrb[0].mxu0
    %v7680 = vadd.f32 0.0, %v7679
    %v7681 = vpop.f32.mrb[0].mxu0
    %7682 = vdwg.mxu0
    %v7683 = vadd.f32 %v7606, %v7680
    %s7684 = scalar_lea.vmem %s5, 64
    %v7685 = vld [vmem:[%s7684] sm:$0xff]
    %v7686 = vld [vmem:[%s7684 + $0x8] sm:$0xff]
    %v7688 = vsel %vm7385, %v7372, 0
    %7690 = vmatprep.subr.mxu0 0.0
    %7691 = vmatpush1.msra.mxu0 %v7685
    %7692 = vmatprep.subr.mxu0 0.0
    %7693 = vmatpush1.msra.mxu0 %v7686
    %7694 = vmatprep.subr.mxu0 0.0
    %7695 = vmatpush1.msra.mxu0 0.0
    %7696 = vmatprep.subr.mxu0 0.0
    %7697 = vmatpush1.msra.mxu0 0.0
    %7698 = vmatprep.subr.mxu0 0.0
    %7699 = vmatpush1.msra.mxu0 0.0
    %7700 = vmatprep.subr.mxu0 0.0
    %7701 = vmatpush1.msra.mxu0 0.0
    %7702 = vmatprep.subr.mxu0 0.0
    %7703 = vmatpush1.msra.mxu0 0.0
    %7704 = vmatprep.subr.mxu0 0.0
    %7705 = vmatpush1.msra.mxu0 0.0
    %7706 = vmatprep.subr.mxu0 0.0
    %7707 = vmatpush1.msra.mxu0 0.0
    %7708 = vmatprep.subr.mxu0 0.0
    %7709 = vmatpush1.msra.mxu0 0.0
    %7710 = vmatprep.subr.mxu0 0.0
    %7711 = vmatpush1.msra.mxu0 0.0
    %7712 = vmatprep.subr.mxu0 0.0
    %7713 = vmatpush1.msra.mxu0 0.0
    %7714 = vmatprep.subr.mxu0 0.0
    %7715 = vmatpush1.msra.mxu0 0.0
    %7716 = vmatprep.subr.mxu0 0.0
    %7717 = vmatpush1.msra.mxu0 0.0
    %7718 = vmatprep.subr.mxu0 0.0
    %7719 = vmatpush1.msra.mxu0 0.0
    %7720 = vmatprep.subr.mxu0 0.0
    %7721 = vmatpush1.msra.mxu0 0.0
    %7722 = vmatprep.subr.mxu0 0.0
    %7723 = vmatpush1.msra.mxu0 0.0
    %7724 = vmatprep.subr.mxu0 0.0
    %7725 = vmatpush1.msra.mxu0 0.0
    %7726 = vmatprep.subr.mxu0 0.0
    %7727 = vmatpush1.msra.mxu0 0.0
    %7728 = vmatprep.subr.mxu0 0.0
    %7729 = vmatpush1.msra.mxu0 0.0
    %7730 = vmatprep.subr.mxu0 0.0
    %7731 = vmatpush1.msra.mxu0 0.0
    %7732 = vmatprep.subr.mxu0 0.0
    %7733 = vmatpush1.msra.mxu0 0.0
    %7734 = vmatprep.subr.mxu0 0.0
    %7735 = vmatpush1.msra.mxu0 0.0
    %7736 = vmatprep.subr.mxu0 0.0
    %7737 = vmatpush1.msra.mxu0 0.0
    %7738 = vmatprep.subr.mxu0 0.0
    %7739 = vmatpush1.msra.mxu0 0.0
    %7740 = vmatprep.subr.mxu0 0.0
    %7741 = vmatpush1.msra.mxu0 0.0
    %7742 = vmatprep.subr.mxu0 0.0
    %7743 = vmatpush1.msra.mxu0 0.0
    %7744 = vmatprep.subr.mxu0 0.0
    %7745 = vmatpush1.msra.mxu0 0.0
    %7746 = vmatprep.subr.mxu0 0.0
    %7747 = vmatpush1.msra.mxu0 0.0
    %7748 = vmatprep.subr.mxu0 0.0
    %7749 = vmatpush1.msra.mxu0 0.0
    %7750 = vmatprep.subr.mxu0 0.0
    %7751 = vmatpush1.msra.mxu0 0.0
    %7752 = vmatprep.subr.mxu0 0.0
    %7753 = vmatpush1.msra.mxu0 0.0
    %7754 = vmatprep.mubr.f32.mxu0 0.0
    %7755 = vmatmul.mubr.f32.gmra.mrb[0].mxu0 %v7688
    %v7756 = vpop.f32.mrb[0].mxu0
    %v7757 = vadd.f32 0.0, %v7756
    %v7758 = vpop.f32.mrb[0].mxu0
    %7759 = vdwg.mxu0
    %v7760 = vadd.f32 %v7683, %v7757
    %s7761 = scalar_lea.vmem %s5, 80
    %v7762 = vld [vmem:[%s7761] sm:$0xff]
    %v7763 = vld [vmem:[%s7761 + $0x8] sm:$0xff]
    %v7764 = vrot.slane %v7372, 4
    %v7765 = vsel %vm7385, %v7764, 0
    %7767 = vmatprep.subr.mxu0 0.0
    %7768 = vmatpush1.msra.mxu0 %v7762
    %7769 = vmatprep.subr.mxu0 0.0
    %7770 = vmatpush1.msra.mxu0 %v7763
    %7771 = vmatprep.subr.mxu0 0.0
    %7772 = vmatpush1.msra.mxu0 0.0
    %7773 = vmatprep.subr.mxu0 0.0
    %7774 = vmatpush1.msra.mxu0 0.0
    %7775 = vmatprep.subr.mxu0 0.0
    %7776 = vmatpush1.msra.mxu0 0.0
    %7777 = vmatprep.subr.mxu0 0.0
    %7778 = vmatpush1.msra.mxu0 0.0
    %7779 = vmatprep.subr.mxu0 0.0
    %7780 = vmatpush1.msra.mxu0 0.0
    %7781 = vmatprep.subr.mxu0 0.0
    %7782 = vmatpush1.msra.mxu0 0.0
    %7783 = vmatprep.subr.mxu0 0.0
    %7784 = vmatpush1.msra.mxu0 0.0
    %7785 = vmatprep.subr.mxu0 0.0
    %7786 = vmatpush1.msra.mxu0 0.0
    %7787 = vmatprep.subr.mxu0 0.0
    %7788 = vmatpush1.msra.mxu0 0.0
    %7789 = vmatprep.subr.mxu0 0.0
    %7790 = vmatpush1.msra.mxu0 0.0
    %7791 = vmatprep.subr.mxu0 0.0
    %7792 = vmatpush1.msra.mxu0 0.0
    %7793 = vmatprep.subr.mxu0 0.0
    %7794 = vmatpush1.msra.mxu0 0.0
    %7795 = vmatprep.subr.mxu0 0.0
    %7796 = vmatpush1.msra.mxu0 0.0
    %7797 = vmatprep.subr.mxu0 0.0
    %7798 = vmatpush1.msra.mxu0 0.0
    %7799 = vmatprep.subr.mxu0 0.0
    %7800 = vmatpush1.msra.mxu0 0.0
    %7801 = vmatprep.subr.mxu0 0.0
    %7802 = vmatpush1.msra.mxu0 0.0
    %7803 = vmatprep.subr.mxu0 0.0
    %7804 = vmatpush1.msra.mxu0 0.0
    %7805 = vmatprep.subr.mxu0 0.0
    %7806 = vmatpush1.msra.mxu0 0.0
    %7807 = vmatprep.subr.mxu0 0.0
    %7808 = vmatpush1.msra.mxu0 0.0
    %7809 = vmatprep.subr.mxu0 0.0
    %7810 = vmatpush1.msra.mxu0 0.0
    %7811 = vmatprep.subr.mxu0 0.0
    %7812 = vmatpush1.msra.mxu0 0.0
    %7813 = vmatprep.subr.mxu0 0.0
    %7814 = vmatpush1.msra.mxu0 0.0
    %7815 = vmatprep.subr.mxu0 0.0
    %7816 = vmatpush1.msra.mxu0 0.0
    %7817 = vmatprep.subr.mxu0 0.0
    %7818 = vmatpush1.msra.mxu0 0.0
    %7819 = vmatprep.subr.mxu0 0.0
    %7820 = vmatpush1.msra.mxu0 0.0
    %7821 = vmatprep.subr.mxu0 0.0
    %7822 = vmatpush1.msra.mxu0 0.0
    %7823 = vmatprep.subr.mxu0 0.0
    %7824 = vmatpush1.msra.mxu0 0.0
    %7825 = vmatprep.subr.mxu0 0.0
    %7826 = vmatpush1.msra.mxu0 0.0
    %7827 = vmatprep.subr.mxu0 0.0
    %7828 = vmatpush1.msra.mxu0 0.0
    %7829 = vmatprep.subr.mxu0 0.0
    %7830 = vmatpush1.msra.mxu0 0.0
    %7831 = vmatprep.mubr.f32.mxu0 0.0
    %7832 = vmatmul.mubr.f32.gmra.mrb[0].mxu0 %v7765
    %v7833 = vpop.f32.mrb[0].mxu0
    %v7834 = vadd.f32 0.0, %v7833
    %v7835 = vpop.f32.mrb[0].mxu0
    %7836 = vdwg.mxu0
    %v7837 = vadd.f32 %v7760, %v7834
    %s7838 = scalar_lea.vmem %s5, 96
    %v7839 = vld [vmem:[%s7838] sm:$0xff]
    %v7840 = vld [vmem:[%s7838 + $0x8] sm:$0xff]
    %v7842 = vsel %vm7385, %v7373, 0
    %7844 = vmatprep.subr.mxu0 0.0
    %7845 = vmatpush1.msra.mxu0 %v7839
    %7846 = vmatprep.subr.mxu0 0.0
    %7847 = vmatpush1.msra.mxu0 %v7840
    %7848 = vmatprep.subr.mxu0 0.0
    %7849 = vmatpush1.msra.mxu0 0.0
    %7850 = vmatprep.subr.mxu0 0.0
    %7851 = vmatpush1.msra.mxu0 0.0
    %7852 = vmatprep.subr.mxu0 0.0
    %7853 = vmatpush1.msra.mxu0 0.0
    %7854 = vmatprep.subr.mxu0 0.0
    %7855 = vmatpush1.msra.mxu0 0.0
    %7856 = vmatprep.subr.mxu0 0.0
    %7857 = vmatpush1.msra.mxu0 0.0
    %7858 = vmatprep.subr.mxu0 0.0
    %7859 = vmatpush1.msra.mxu0 0.0
    %7860 = vmatprep.subr.mxu0 0.0
    %7861 = vmatpush1.msra.mxu0 0.0
    %7862 = vmatprep.subr.mxu0 0.0
    %7863 = vmatpush1.msra.mxu0 0.0
    %7864 = vmatprep.subr.mxu0 0.0
    %7865 = vmatpush1.msra.mxu0 0.0
    %7866 = vmatprep.subr.mxu0 0.0
    %7867 = vmatpush1.msra.mxu0 0.0
    %7868 = vmatprep.subr.mxu0 0.0
    %7869 = vmatpush1.msra.mxu0 0.0
    %7870 = vmatprep.subr.mxu0 0.0
    %7871 = vmatpush1.msra.mxu0 0.0
    %7872 = vmatprep.subr.mxu0 0.0
    %7873 = vmatpush1.msra.mxu0 0.0
    %7874 = vmatprep.subr.mxu0 0.0
    %7875 = vmatpush1.msra.mxu0 0.0
    %7876 = vmatprep.subr.mxu0 0.0
    %7877 = vmatpush1.msra.mxu0 0.0
    %7878 = vmatprep.subr.mxu0 0.0
    %7879 = vmatpush1.msra.mxu0 0.0
    %7880 = vmatprep.subr.mxu0 0.0
    %7881 = vmatpush1.msra.mxu0 0.0
    %7882 = vmatprep.subr.mxu0 0.0
    %7883 = vmatpush1.msra.mxu0 0.0
    %7884 = vmatprep.subr.mxu0 0.0
    %7885 = vmatpush1.msra.mxu0 0.0
    %7886 = vmatprep.subr.mxu0 0.0
    %7887 = vmatpush1.msra.mxu0 0.0
    %7888 = vmatprep.subr.mxu0 0.0
    %7889 = vmatpush1.msra.mxu0 0.0
    %7890 = vmatprep.subr.mxu0 0.0
    %7891 = vmatpush1.msra.mxu0 0.0
    %7892 = vmatprep.subr.mxu0 0.0
    %7893 = vmatpush1.msra.mxu0 0.0
    %7894 = vmatprep.subr.mxu0 0.0
    %7895 = vmatpush1.msra.mxu0 0.0
    %7896 = vmatprep.subr.mxu0 0.0
    %7897 = vmatpush1.msra.mxu0 0.0
    %7898 = vmatprep.subr.mxu0 0.0
    %7899 = vmatpush1.msra.mxu0 0.0
    %7900 = vmatprep.subr.mxu0 0.0
    %7901 = vmatpush1.msra.mxu0 0.0
    %7902 = vmatprep.subr.mxu0 0.0
    %7903 = vmatpush1.msra.mxu0 0.0
    %7904 = vmatprep.subr.mxu0 0.0
    %7905 = vmatpush1.msra.mxu0 0.0
    %7906 = vmatprep.subr.mxu0 0.0
    %7907 = vmatpush1.msra.mxu0 0.0
    %7908 = vmatprep.mubr.f32.mxu0 0.0
    %7909 = vmatmul.mubr.f32.gmra.mrb[0].mxu0 %v7842
    %v7910 = vpop.f32.mrb[0].mxu0
    %v7911 = vadd.f32 0.0, %v7910
    %v7912 = vpop.f32.mrb[0].mxu0
    %7913 = vdwg.mxu0
    %v7914 = vadd.f32 %v7837, %v7911
    %s7915 = scalar_lea.vmem %s5, 112
    %v7916 = vld [vmem:[%s7915] sm:$0xff]
    %v7917 = vld [vmem:[%s7915 + $0x8] sm:$0xff]
    %v7918 = vrot.slane %v7373, 4
    %v7919 = vsel %vm7385, %v7918, 0
    %7921 = vmatprep.subr.mxu0 0.0
    %7922 = vmatpush1.msra.mxu0 %v7916
    %7923 = vmatprep.subr.mxu0 0.0
    %7924 = vmatpush1.msra.mxu0 %v7917
    %7925 = vmatprep.subr.mxu0 0.0
    %7926 = vmatpush1.msra.mxu0 0.0
    %7927 = vmatprep.subr.mxu0 0.0
    %7928 = vmatpush1.msra.mxu0 0.0
    %7929 = vmatprep.subr.mxu0 0.0
    %7930 = vmatpush1.msra.mxu0 0.0
    %7931 = vmatprep.subr.mxu0 0.0
    %7932 = vmatpush1.msra.mxu0 0.0
    %7933 = vmatprep.subr.mxu0 0.0
    %7934 = vmatpush1.msra.mxu0 0.0
    %7935 = vmatprep.subr.mxu0 0.0
    %7936 = vmatpush1.msra.mxu0 0.0
    %7937 = vmatprep.subr.mxu0 0.0
    %7938 = vmatpush1.msra.mxu0 0.0
    %7939 = vmatprep.subr.mxu0 0.0
    %7940 = vmatpush1.msra.mxu0 0.0
    %7941 = vmatprep.subr.mxu0 0.0
    %7942 = vmatpush1.msra.mxu0 0.0
    %7943 = vmatprep.subr.mxu0 0.0
    %7944 = vmatpush1.msra.mxu0 0.0
    %7945 = vmatprep.subr.mxu0 0.0
    %7946 = vmatpush1.msra.mxu0 0.0
    %7947 = vmatprep.subr.mxu0 0.0
    %7948 = vmatpush1.msra.mxu0 0.0
    %7949 = vmatprep.subr.mxu0 0.0
    %7950 = vmatpush1.msra.mxu0 0.0
    %7951 = vmatprep.subr.mxu0 0.0
    %7952 = vmatpush1.msra.mxu0 0.0
    %7953 = vmatprep.subr.mxu0 0.0
    %7954 = vmatpush1.msra.mxu0 0.0
    %7955 = vmatprep.subr.mxu0 0.0
    %7956 = vmatpush1.msra.mxu0 0.0
    %7957 = vmatprep.subr.mxu0 0.0
    %7958 = vmatpush1.msra.mxu0 0.0
    %7959 = vmatprep.subr.mxu0 0.0
    %7960 = vmatpush1.msra.mxu0 0.0
    %7961 = vmatprep.subr.mxu0 0.0
    %7962 = vmatpush1.msra.mxu0 0.0
    %7963 = vmatprep.subr.mxu0 0.0
    %7964 = vmatpush1.msra.mxu0 0.0
    %7965 = vmatprep.subr.mxu0 0.0
    %7966 = vmatpush1.msra.mxu0 0.0
    %7967 = vmatprep.subr.mxu0 0.0
    %7968 = vmatpush1.msra.mxu0 0.0
    %7969 = vmatprep.subr.mxu0 0.0
    %7970 = vmatpush1.msra.mxu0 0.0
    %7971 = vmatprep.subr.mxu0 0.0
    %7972 = vmatpush1.msra.mxu0 0.0
    %7973 = vmatprep.subr.mxu0 0.0
    %7974 = vmatpush1.msra.mxu0 0.0
    %7975 = vmatprep.subr.mxu0 0.0
    %7976 = vmatpush1.msra.mxu0 0.0
    %7977 = vmatprep.subr.mxu0 0.0
    %7978 = vmatpush1.msra.mxu0 0.0
    %7979 = vmatprep.subr.mxu0 0.0
    %7980 = vmatpush1.msra.mxu0 0.0
    %7981 = vmatprep.subr.mxu0 0.0
    %7982 = vmatpush1.msra.mxu0 0.0
    %7983 = vmatprep.subr.mxu0 0.0
    %7984 = vmatpush1.msra.mxu0 0.0
    %7985 = vmatprep.mubr.f32.mxu0 0.0
    %7986 = vmatmul.mubr.f32.gmra.mrb[0].mxu0 %v7919
    %v7987 = vpop.f32.mrb[0].mxu0
    %v7988 = vadd.f32 0.0, %v7987
    %v7989 = vpop.f32.mrb[0].mxu0
    %7990 = vdwg.mxu0
    %v7991 = vadd.f32 %v7914, %v7988
    %s7992 = scalar_lea.vmem %s5, 128
    %v7993 = vld [vmem:[%s7992] sm:$0xff]
    %v7994 = vld [vmem:[%s7992 + $0x8] sm:$0xff]
    %v7996 = vsel %vm7385, %v7374, 0
    %7998 = vmatprep.subr.mxu0 0.0
    %7999 = vmatpush1.msra.mxu0 %v7993
    %8000 = vmatprep.subr.mxu0 0.0
    %8001 = vmatpush1.msra.mxu0 %v7994
    %8002 = vmatprep.subr.mxu0 0.0
    %8003 = vmatpush1.msra.mxu0 0.0
    %8004 = vmatprep.subr.mxu0 0.0
    %8005 = vmatpush1.msra.mxu0 0.0
    %8006 = vmatprep.subr.mxu0 0.0
    %8007 = vmatpush1.msra.mxu0 0.0
    %8008 = vmatprep.subr.mxu0 0.0
    %8009 = vmatpush1.msra.mxu0 0.0
    %8010 = vmatprep.subr.mxu0 0.0
    %8011 = vmatpush1.msra.mxu0 0.0
    %8012 = vmatprep.subr.mxu0 0.0
    %8013 = vmatpush1.msra.mxu0 0.0
    %8014 = vmatprep.subr.mxu0 0.0
    %8015 = vmatpush1.msra.mxu0 0.0
    %8016 = vmatprep.subr.mxu0 0.0
    %8017 = vmatpush1.msra.mxu0 0.0
    %8018 = vmatprep.subr.mxu0 0.0
    %8019 = vmatpush1.msra.mxu0 0.0
    %8020 = vmatprep.subr.mxu0 0.0
    %8021 = vmatpush1.msra.mxu0 0.0
    %8022 = vmatprep.subr.mxu0 0.0
    %8023 = vmatpush1.msra.mxu0 0.0
    %8024 = vmatprep.subr.mxu0 0.0
    %8025 = vmatpush1.msra.mxu0 0.0
    %8026 = vmatprep.subr.mxu0 0.0
    %8027 = vmatpush1.msra.mxu0 0.0
    %8028 = vmatprep.subr.mxu0 0.0
    %8029 = vmatpush1.msra.mxu0 0.0
    %8030 = vmatprep.subr.mxu0 0.0
    %8031 = vmatpush1.msra.mxu0 0.0
    %8032 = vmatprep.subr.mxu0 0.0
    %8033 = vmatpush1.msra.mxu0 0.0
    %8034 = vmatprep.subr.mxu0 0.0
    %8035 = vmatpush1.msra.mxu0 0.0
    %8036 = vmatprep.subr.mxu0 0.0
    %8037 = vmatpush1.msra.mxu0 0.0
    %8038 = vmatprep.subr.mxu0 0.0
    %8039 = vmatpush1.msra.mxu0 0.0
    %8040 = vmatprep.subr.mxu0 0.0
    %8041 = vmatpush1.msra.mxu0 0.0
    %8042 = vmatprep.subr.mxu0 0.0
    %8043 = vmatpush1.msra.mxu0 0.0
    %8044 = vmatprep.subr.mxu0 0.0
    %8045 = vmatpush1.msra.mxu0 0.0
    %8046 = vmatprep.subr.mxu0 0.0
    %8047 = vmatpush1.msra.mxu0 0.0
    %8048 = vmatprep.subr.mxu0 0.0
    %8049 = vmatpush1.msra.mxu0 0.0
    %8050 = vmatprep.subr.mxu0 0.0
    %8051 = vmatpush1.msra.mxu0 0.0
    %8052 = vmatprep.subr.mxu0 0.0
    %8053 = vmatpush1.msra.mxu0 0.0
    %8054 = vmatprep.subr.mxu0 0.0
    %8055 = vmatpush1.msra.mxu0 0.0
    %8056 = vmatprep.subr.mxu0 0.0
    %8057 = vmatpush1.msra.mxu0 0.0
    %8058 = vmatprep.subr.mxu0 0.0
    %8059 = vmatpush1.msra.mxu0 0.0
    %8060 = vmatprep.subr.mxu0 0.0
    %8061 = vmatpush1.msra.mxu0 0.0
    %8062 = vmatprep.mubr.f32.mxu0 0.0
    %8063 = vmatmul.mubr.f32.gmra.mrb[0].mxu0 %v7996
    %v8064 = vpop.f32.mrb[0].mxu0
    %v8065 = vadd.f32 0.0, %v8064
    %v8066 = vpop.f32.mrb[0].mxu0
    %8067 = vdwg.mxu0
    %v8068 = vadd.f32 %v7991, %v8065
    %s8069 = scalar_lea.vmem %s5, 144
    %v8070 = vld [vmem:[%s8069] sm:$0xff]
    %v8071 = vld [vmem:[%s8069 + $0x8] sm:$0xff]
    %v8072 = vrot.slane %v7374, 4
    %v8073 = vsel %vm7385, %v8072, 0
    %8075 = vmatprep.subr.mxu0 0.0
    %8076 = vmatpush1.msra.mxu0 %v8070
    %8077 = vmatprep.subr.mxu0 0.0
    %8078 = vmatpush1.msra.mxu0 %v8071
    %8079 = vmatprep.subr.mxu0 0.0
    %8080 = vmatpush1.msra.mxu0 0.0
    %8081 = vmatprep.subr.mxu0 0.0
    %8082 = vmatpush1.msra.mxu0 0.0
    %8083 = vmatprep.subr.mxu0 0.0
    %8084 = vmatpush1.msra.mxu0 0.0
    %8085 = vmatprep.subr.mxu0 0.0
    %8086 = vmatpush1.msra.mxu0 0.0
    %8087 = vmatprep.subr.mxu0 0.0
    %8088 = vmatpush1.msra.mxu0 0.0
    %8089 = vmatprep.subr.mxu0 0.0
    %8090 = vmatpush1.msra.mxu0 0.0
    %8091 = vmatprep.subr.mxu0 0.0
    %8092 = vmatpush1.msra.mxu0 0.0
    %8093 = vmatprep.subr.mxu0 0.0
    %8094 = vmatpush1.msra.mxu0 0.0
    %8095 = vmatprep.subr.mxu0 0.0
    %8096 = vmatpush1.msra.mxu0 0.0
    %8097 = vmatprep.subr.mxu0 0.0
    %8098 = vmatpush1.msra.mxu0 0.0
    %8099 = vmatprep.subr.mxu0 0.0
    %8100 = vmatpush1.msra.mxu0 0.0
    %8101 = vmatprep.subr.mxu0 0.0
    %8102 = vmatpush1.msra.mxu0 0.0
    %8103 = vmatprep.subr.mxu0 0.0
    %8104 = vmatpush1.msra.mxu0 0.0
    %8105 = vmatprep.subr.mxu0 0.0
    %8106 = vmatpush1.msra.mxu0 0.0
    %8107 = vmatprep.subr.mxu0 0.0
    %8108 = vmatpush1.msra.mxu0 0.0
    %8109 = vmatprep.subr.mxu0 0.0
    %8110 = vmatpush1.msra.mxu0 0.0
    %8111 = vmatprep.subr.mxu0 0.0
    %8112 = vmatpush1.msra.mxu0 0.0
    %8113 = vmatprep.subr.mxu0 0.0
    %8114 = vmatpush1.msra.mxu0 0.0
    %8115 = vmatprep.subr.mxu0 0.0
    %8116 = vmatpush1.msra.mxu0 0.0
    %8117 = vmatprep.subr.mxu0 0.0
    %8118 = vmatpush1.msra.mxu0 0.0
    %8119 = vmatprep.subr.mxu0 0.0
    %8120 = vmatpush1.msra.mxu0 0.0
    %8121 = vmatprep.subr.mxu0 0.0
    %8122 = vmatpush1.msra.mxu0 0.0
    %8123 = vmatprep.subr.mxu0 0.0
    %8124 = vmatpush1.msra.mxu0 0.0
    %8125 = vmatprep.subr.mxu0 0.0
    %8126 = vmatpush1.msra.mxu0 0.0
    %8127 = vmatprep.subr.mxu0 0.0
    %8128 = vmatpush1.msra.mxu0 0.0
    %8129 = vmatprep.subr.mxu0 0.0
    %8130 = vmatpush1.msra.mxu0 0.0
    %8131 = vmatprep.subr.mxu0 0.0
    %8132 = vmatpush1.msra.mxu0 0.0
    %8133 = vmatprep.subr.mxu0 0.0
    %8134 = vmatpush1.msra.mxu0 0.0
    %8135 = vmatprep.subr.mxu0 0.0
    %8136 = vmatpush1.msra.mxu0 0.0
    %8137 = vmatprep.subr.mxu0 0.0
    %8138 = vmatpush1.msra.mxu0 0.0
    %8139 = vmatprep.mubr.f32.mxu0 0.0
    %8140 = vmatmul.mubr.f32.gmra.mrb[0].mxu0 %v8073
    %v8141 = vpop.f32.mrb[0].mxu0
    %v8142 = vadd.f32 0.0, %v8141
    %v8143 = vpop.f32.mrb[0].mxu0
    %8144 = vdwg.mxu0
    %v8145 = vadd.f32 %v8068, %v8142
    %s8146 = scalar_lea.vmem %s5, 160
    %v8147 = vld [vmem:[%s8146] sm:$0xff]
    %v8148 = vld [vmem:[%s8146 + $0x8] sm:$0xff]
    %v8150 = vsel %vm7385, %v7375, 0
    %8152 = vmatprep.subr.mxu0 0.0
    %8153 = vmatpush1.msra.mxu0 %v8147
    %8154 = vmatprep.subr.mxu0 0.0
    %8155 = vmatpush1.msra.mxu0 %v8148
    %8156 = vmatprep.subr.mxu0 0.0
    %8157 = vmatpush1.msra.mxu0 0.0
    %8158 = vmatprep.subr.mxu0 0.0
    %8159 = vmatpush1.msra.mxu0 0.0
    %8160 = vmatprep.subr.mxu0 0.0
    %8161 = vmatpush1.msra.mxu0 0.0
    %8162 = vmatprep.subr.mxu0 0.0
    %8163 = vmatpush1.msra.mxu0 0.0
    %8164 = vmatprep.subr.mxu0 0.0
    %8165 = vmatpush1.msra.mxu0 0.0
    %8166 = vmatprep.subr.mxu0 0.0
    %8167 = vmatpush1.msra.mxu0 0.0
    %8168 = vmatprep.subr.mxu0 0.0
    %8169 = vmatpush1.msra.mxu0 0.0
    %8170 = vmatprep.subr.mxu0 0.0
    %8171 = vmatpush1.msra.mxu0 0.0
    %8172 = vmatprep.subr.mxu0 0.0
    %8173 = vmatpush1.msra.mxu0 0.0
    %8174 = vmatprep.subr.mxu0 0.0
    %8175 = vmatpush1.msra.mxu0 0.0
    %8176 = vmatprep.subr.mxu0 0.0
    %8177 = vmatpush1.msra.mxu0 0.0
    %8178 = vmatprep.subr.mxu0 0.0
    %8179 = vmatpush1.msra.mxu0 0.0
    %8180 = vmatprep.subr.mxu0 0.0
    %8181 = vmatpush1.msra.mxu0 0.0
    %8182 = vmatprep.subr.mxu0 0.0
    %8183 = vmatpush1.msra.mxu0 0.0
    %8184 = vmatprep.subr.mxu0 0.0
    %8185 = vmatpush1.msra.mxu0 0.0
    %8186 = vmatprep.subr.mxu0 0.0
    %8187 = vmatpush1.msra.mxu0 0.0
    %8188 = vmatprep.subr.mxu0 0.0
    %8189 = vmatpush1.msra.mxu0 0.0
    %8190 = vmatprep.subr.mxu0 0.0
    %8191 = vmatpush1.msra.mxu0 0.0
    %8192 = vmatprep.subr.mxu0 0.0
    %8193 = vmatpush1.msra.mxu0 0.0
    %8194 = vmatprep.subr.mxu0 0.0
    %8195 = vmatpush1.msra.mxu0 0.0
    %8196 = vmatprep.subr.mxu0 0.0
    %8197 = vmatpush1.msra.mxu0 0.0
    %8198 = vmatprep.subr.mxu0 0.0
    %8199 = vmatpush1.msra.mxu0 0.0
    %8200 = vmatprep.subr.mxu0 0.0
    %8201 = vmatpush1.msra.mxu0 0.0
    %8202 = vmatprep.subr.mxu0 0.0
    %8203 = vmatpush1.msra.mxu0 0.0
    %8204 = vmatprep.subr.mxu0 0.0
    %8205 = vmatpush1.msra.mxu0 0.0
    %8206 = vmatprep.subr.mxu0 0.0
    %8207 = vmatpush1.msra.mxu0 0.0
    %8208 = vmatprep.subr.mxu0 0.0
    %8209 = vmatpush1.msra.mxu0 0.0
    %8210 = vmatprep.subr.mxu0 0.0
    %8211 = vmatpush1.msra.mxu0 0.0
    %8212 = vmatprep.subr.mxu0 0.0
    %8213 = vmatpush1.msra.mxu0 0.0
    %8214 = vmatprep.subr.mxu0 0.0
    %8215 = vmatpush1.msra.mxu0 0.0
    %8216 = vmatprep.mubr.f32.mxu0 0.0
    %8217 = vmatmul.mubr.f32.gmra.mrb[0].mxu0 %v8150
    %v8218 = vpop.f32.mrb[0].mxu0
    %v8219 = vadd.f32 0.0, %v8218
    %v8220 = vpop.f32.mrb[0].mxu0
    %8221 = vdwg.mxu0
    %v8222 = vadd.f32 %v8145, %v8219
    %s8223 = scalar_lea.vmem %s5, 176
    %v8224 = vld [vmem:[%s8223] sm:$0xff]
    %v8225 = vld [vmem:[%s8223 + $0x8] sm:$0xff]
    %v8226 = vrot.slane %v7375, 4
    %v8227 = vsel %vm7385, %v8226, 0
    %8229 = vmatprep.subr.mxu0 0.0
    %8230 = vmatpush1.msra.mxu0 %v8224
    %8231 = vmatprep.subr.mxu0 0.0
    %8232 = vmatpush1.msra.mxu0 %v8225
    %8233 = vmatprep.subr.mxu0 0.0
    %8234 = vmatpush1.msra.mxu0 0.0
    %8235 = vmatprep.subr.mxu0 0.0
    %8236 = vmatpush1.msra.mxu0 0.0
    %8237 = vmatprep.subr.mxu0 0.0
    %8238 = vmatpush1.msra.mxu0 0.0
    %8239 = vmatprep.subr.mxu0 0.0
    %8240 = vmatpush1.msra.mxu0 0.0
    %8241 = vmatprep.subr.mxu0 0.0
    %8242 = vmatpush1.msra.mxu0 0.0
    %8243 = vmatprep.subr.mxu0 0.0
    %8244 = vmatpush1.msra.mxu0 0.0
    %8245 = vmatprep.subr.mxu0 0.0
    %8246 = vmatpush1.msra.mxu0 0.0
    %8247 = vmatprep.subr.mxu0 0.0
    %8248 = vmatpush1.msra.mxu0 0.0
    %8249 = vmatprep.subr.mxu0 0.0
    %8250 = vmatpush1.msra.mxu0 0.0
    %8251 = vmatprep.subr.mxu0 0.0
    %8252 = vmatpush1.msra.mxu0 0.0
    %8253 = vmatprep.subr.mxu0 0.0
    %8254 = vmatpush1.msra.mxu0 0.0
    %8255 = vmatprep.subr.mxu0 0.0
    %8256 = vmatpush1.msra.mxu0 0.0
    %8257 = vmatprep.subr.mxu0 0.0
    %8258 = vmatpush1.msra.mxu0 0.0
    %8259 = vmatprep.subr.mxu0 0.0
    %8260 = vmatpush1.msra.mxu0 0.0
    %8261 = vmatprep.subr.mxu0 0.0
    %8262 = vmatpush1.msra.mxu0 0.0
    %8263 = vmatprep.subr.mxu0 0.0
    %8264 = vmatpush1.msra.mxu0 0.0
    %8265 = vmatprep.subr.mxu0 0.0
    %8266 = vmatpush1.msra.mxu0 0.0
    %8267 = vmatprep.subr.mxu0 0.0
    %8268 = vmatpush1.msra.mxu0 0.0
    %8269 = vmatprep.subr.mxu0 0.0
    %8270 = vmatpush1.msra.mxu0 0.0
    %8271 = vmatprep.subr.mxu0 0.0
    %8272 = vmatpush1.msra.mxu0 0.0
    %8273 = vmatprep.subr.mxu0 0.0
    %8274 = vmatpush1.msra.mxu0 0.0
    %8275 = vmatprep.subr.mxu0 0.0
    %8276 = vmatpush1.msra.mxu0 0.0
    %8277 = vmatprep.subr.mxu0 0.0
    %8278 = vmatpush1.msra.mxu0 0.0
    %8279 = vmatprep.subr.mxu0 0.0
    %8280 = vmatpush1.msra.mxu0 0.0
    %8281 = vmatprep.subr.mxu0 0.0
    %8282 = vmatpush1.msra.mxu0 0.0
    %8283 = vmatprep.subr.mxu0 0.0
    %8284 = vmatpush1.msra.mxu0 0.0
    %8285 = vmatprep.subr.mxu0 0.0
    %8286 = vmatpush1.msra.mxu0 0.0
    %8287 = vmatprep.subr.mxu0 0.0
    %8288 = vmatpush1.msra.mxu0 0.0
    %8289 = vmatprep.subr.mxu0 0.0
    %8290 = vmatpush1.msra.mxu0 0.0
    %8291 = vmatprep.subr.mxu0 0.0
    %8292 = vmatpush1.msra.mxu0 0.0
    %8293 = vmatprep.mubr.f32.mxu0 0.0
    %8294 = vmatmul.mubr.f32.gmra.mrb[0].mxu0 %v8227
    %v8295 = vpop.f32.mrb[0].mxu0
    %v8296 = vadd.f32 0.0, %v8295
    %v8297 = vpop.f32.mrb[0].mxu0
    %8298 = vdwg.mxu0
    %v8299 = vadd.f32 %v8222, %v8296
    %s8300 = scalar_lea.vmem %s5, 192
    %v8301 = vld [vmem:[%s8300] sm:$0xff]
    %v8302 = vld [vmem:[%s8300 + $0x8] sm:$0xff]
    %v8304 = vsel %vm7385, %v7376, 0
    %8306 = vmatprep.subr.mxu0 0.0
    %8307 = vmatpush1.msra.mxu0 %v8301
    %8308 = vmatprep.subr.mxu0 0.0
    %8309 = vmatpush1.msra.mxu0 %v8302
    %8310 = vmatprep.subr.mxu0 0.0
    %8311 = vmatpush1.msra.mxu0 0.0
    %8312 = vmatprep.subr.mxu0 0.0
    %8313 = vmatpush1.msra.mxu0 0.0
    %8314 = vmatprep.subr.mxu0 0.0
    %8315 = vmatpush1.msra.mxu0 0.0
    %8316 = vmatprep.subr.mxu0 0.0
    %8317 = vmatpush1.msra.mxu0 0.0
    %8318 = vmatprep.subr.mxu0 0.0
    %8319 = vmatpush1.msra.mxu0 0.0
    %8320 = vmatprep.subr.mxu0 0.0
    %8321 = vmatpush1.msra.mxu0 0.0
    %8322 = vmatprep.subr.mxu0 0.0
    %8323 = vmatpush1.msra.mxu0 0.0
    %8324 = vmatprep.subr.mxu0 0.0
    %8325 = vmatpush1.msra.mxu0 0.0
    %8326 = vmatprep.subr.mxu0 0.0
    %8327 = vmatpush1.msra.mxu0 0.0
    %8328 = vmatprep.subr.mxu0 0.0
    %8329 = vmatpush1.msra.mxu0 0.0
    %8330 = vmatprep.subr.mxu0 0.0
    %8331 = vmatpush1.msra.mxu0 0.0
    %8332 = vmatprep.subr.mxu0 0.0
    %8333 = vmatpush1.msra.mxu0 0.0
    %8334 = vmatprep.subr.mxu0 0.0
    %8335 = vmatpush1.msra.mxu0 0.0
    %8336 = vmatprep.subr.mxu0 0.0
    %8337 = vmatpush1.msra.mxu0 0.0
    %8338 = vmatprep.subr.mxu0 0.0
    %8339 = vmatpush1.msra.mxu0 0.0
    %8340 = vmatprep.subr.mxu0 0.0
    %8341 = vmatpush1.msra.mxu0 0.0
    %8342 = vmatprep.subr.mxu0 0.0
    %8343 = vmatpush1.msra.mxu0 0.0
    %8344 = vmatprep.subr.mxu0 0.0
    %8345 = vmatpush1.msra.mxu0 0.0
    %8346 = vmatprep.subr.mxu0 0.0
    %8347 = vmatpush1.msra.mxu0 0.0
    %8348 = vmatprep.subr.mxu0 0.0
    %8349 = vmatpush1.msra.mxu0 0.0
    %8350 = vmatprep.subr.mxu0 0.0
    %8351 = vmatpush1.msra.mxu0 0.0
    %8352 = vmatprep.subr.mxu0 0.0
    %8353 = vmatpush1.msra.mxu0 0.0
    %8354 = vmatprep.subr.mxu0 0.0
    %8355 = vmatpush1.msra.mxu0 0.0
    %8356 = vmatprep.subr.mxu0 0.0
    %8357 = vmatpush1.msra.mxu0 0.0
    %8358 = vmatprep.subr.mxu0 0.0
    %8359 = vmatpush1.msra.mxu0 0.0
    %8360 = vmatprep.subr.mxu0 0.0
    %8361 = vmatpush1.msra.mxu0 0.0
    %8362 = vmatprep.subr.mxu0 0.0
    %8363 = vmatpush1.msra.mxu0 0.0
    %8364 = vmatprep.subr.mxu0 0.0
    %8365 = vmatpush1.msra.mxu0 0.0
    %8366 = vmatprep.subr.mxu0 0.0
    %8367 = vmatpush1.msra.mxu0 0.0
    %8368 = vmatprep.subr.mxu0 0.0
    %8369 = vmatpush1.msra.mxu0 0.0
    %8370 = vmatprep.mubr.f32.mxu0 0.0
    %8371 = vmatmul.mubr.f32.gmra.mrb[0].mxu0 %v8304
    %v8372 = vpop.f32.mrb[0].mxu0
    %v8373 = vadd.f32 0.0, %v8372
    %v8374 = vpop.f32.mrb[0].mxu0
    %8375 = vdwg.mxu0
    %v8376 = vadd.f32 %v8299, %v8373
    %s8377 = scalar_lea.vmem %s5, 208
    %v8378 = vld [vmem:[%s8377] sm:$0xff]
    %v8379 = vld [vmem:[%s8377 + $0x8] sm:$0xff]
    %v8380 = vrot.slane %v7376, 4
    %v8381 = vsel %vm7385, %v8380, 0
    %8383 = vmatprep.subr.mxu0 0.0
    %8384 = vmatpush1.msra.mxu0 %v8378
    %8385 = vmatprep.subr.mxu0 0.0
    %8386 = vmatpush1.msra.mxu0 %v8379
    %8387 = vmatprep.subr.mxu0 0.0
    %8388 = vmatpush1.msra.mxu0 0.0
    %8389 = vmatprep.subr.mxu0 0.0
    %8390 = vmatpush1.msra.mxu0 0.0
    %8391 = vmatprep.subr.mxu0 0.0
    %8392 = vmatpush1.msra.mxu0 0.0
    %8393 = vmatprep.subr.mxu0 0.0
    %8394 = vmatpush1.msra.mxu0 0.0
    %8395 = vmatprep.subr.mxu0 0.0
    %8396 = vmatpush1.msra.mxu0 0.0
    %8397 = vmatprep.subr.mxu0 0.0
    %8398 = vmatpush1.msra.mxu0 0.0
    %8399 = vmatprep.subr.mxu0 0.0
    %8400 = vmatpush1.msra.mxu0 0.0
    %8401 = vmatprep.subr.mxu0 0.0
    %8402 = vmatpush1.msra.mxu0 0.0
    %8403 = vmatprep.subr.mxu0 0.0
    %8404 = vmatpush1.msra.mxu0 0.0
    %8405 = vmatprep.subr.mxu0 0.0
    %8406 = vmatpush1.msra.mxu0 0.0
    %8407 = vmatprep.subr.mxu0 0.0
    %8408 = vmatpush1.msra.mxu0 0.0
    %8409 = vmatprep.subr.mxu0 0.0
    %8410 = vmatpush1.msra.mxu0 0.0
    %8411 = vmatprep.subr.mxu0 0.0
    %8412 = vmatpush1.msra.mxu0 0.0
    %8413 = vmatprep.subr.mxu0 0.0
    %8414 = vmatpush1.msra.mxu0 0.0
    %8415 = vmatprep.subr.mxu0 0.0
    %8416 = vmatpush1.msra.mxu0 0.0
    %8417 = vmatprep.subr.mxu0 0.0
    %8418 = vmatpush1.msra.mxu0 0.0
    %8419 = vmatprep.subr.mxu0 0.0
    %8420 = vmatpush1.msra.mxu0 0.0
    %8421 = vmatprep.subr.mxu0 0.0
    %8422 = vmatpush1.msra.mxu0 0.0
    %8423 = vmatprep.subr.mxu0 0.0
    %8424 = vmatpush1.msra.mxu0 0.0
    %8425 = vmatprep.subr.mxu0 0.0
    %8426 = vmatpush1.msra.mxu0 0.0
    %8427 = vmatprep.subr.mxu0 0.0
    %8428 = vmatpush1.msra.mxu0 0.0
    %8429 = vmatprep.subr.mxu0 0.0
    %8430 = vmatpush1.msra.mxu0 0.0
    %8431 = vmatprep.subr.mxu0 0.0
    %8432 = vmatpush1.msra.mxu0 0.0
    %8433 = vmatprep.subr.mxu0 0.0
    %8434 = vmatpush1.msra.mxu0 0.0
    %8435 = vmatprep.subr.mxu0 0.0
    %8436 = vmatpush1.msra.mxu0 0.0
    %8437 = vmatprep.subr.mxu0 0.0
    %8438 = vmatpush1.msra.mxu0 0.0
    %8439 = vmatprep.subr.mxu0 0.0
    %8440 = vmatpush1.msra.mxu0 0.0
    %8441 = vmatprep.subr.mxu0 0.0
    %8442 = vmatpush1.msra.mxu0 0.0
    %8443 = vmatprep.subr.mxu0 0.0
    %8444 = vmatpush1.msra.mxu0 0.0
    %8445 = vmatprep.subr.mxu0 0.0
    %8446 = vmatpush1.msra.mxu0 0.0
    %8447 = vmatprep.mubr.f32.mxu0 0.0
    %8448 = vmatmul.mubr.f32.gmra.mrb[0].mxu0 %v8381
    %v8449 = vpop.f32.mrb[0].mxu0
    %v8450 = vadd.f32 0.0, %v8449
    %v8451 = vpop.f32.mrb[0].mxu0
    %8452 = vdwg.mxu0
    %v8453 = vadd.f32 %v8376, %v8450
    %s8454 = scalar_lea.vmem %s5, 224
    %v8455 = vld [vmem:[%s8454] sm:$0xff]
    %v8456 = vld [vmem:[%s8454 + $0x8] sm:$0xff]
    %v8458 = vsel %vm7385, %v7377, 0
    %8460 = vmatprep.subr.mxu0 0.0
    %8461 = vmatpush1.msra.mxu0 %v8455
    %8462 = vmatprep.subr.mxu0 0.0
    %8463 = vmatpush1.msra.mxu0 %v8456
    %8464 = vmatprep.subr.mxu0 0.0
    %8465 = vmatpush1.msra.mxu0 0.0
    %8466 = vmatprep.subr.mxu0 0.0
    %8467 = vmatpush1.msra.mxu0 0.0
    %8468 = vmatprep.subr.mxu0 0.0
    %8469 = vmatpush1.msra.mxu0 0.0
    %8470 = vmatprep.subr.mxu0 0.0
    %8471 = vmatpush1.msra.mxu0 0.0
    %8472 = vmatprep.subr.mxu0 0.0
    %8473 = vmatpush1.msra.mxu0 0.0
    %8474 = vmatprep.subr.mxu0 0.0
    %8475 = vmatpush1.msra.mxu0 0.0
    %8476 = vmatprep.subr.mxu0 0.0
    %8477 = vmatpush1.msra.mxu0 0.0
    %8478 = vmatprep.subr.mxu0 0.0
    %8479 = vmatpush1.msra.mxu0 0.0
    %8480 = vmatprep.subr.mxu0 0.0
    %8481 = vmatpush1.msra.mxu0 0.0
    %8482 = vmatprep.subr.mxu0 0.0
    %8483 = vmatpush1.msra.mxu0 0.0
    %8484 = vmatprep.subr.mxu0 0.0
    %8485 = vmatpush1.msra.mxu0 0.0
    %8486 = vmatprep.subr.mxu0 0.0
    %8487 = vmatpush1.msra.mxu0 0.0
    %8488 = vmatprep.subr.mxu0 0.0
    %8489 = vmatpush1.msra.mxu0 0.0
    %8490 = vmatprep.subr.mxu0 0.0
    %8491 = vmatpush1.msra.mxu0 0.0
    %8492 = vmatprep.subr.mxu0 0.0
    %8493 = vmatpush1.msra.mxu0 0.0
    %8494 = vmatprep.subr.mxu0 0.0
    %8495 = vmatpush1.msra.mxu0 0.0
    %8496 = vmatprep.subr.mxu0 0.0
    %8497 = vmatpush1.msra.mxu0 0.0
    %8498 = vmatprep.subr.mxu0 0.0
    %8499 = vmatpush1.msra.mxu0 0.0
    %8500 = vmatprep.subr.mxu0 0.0
    %8501 = vmatpush1.msra.mxu0 0.0
    %8502 = vmatprep.subr.mxu0 0.0
    %8503 = vmatpush1.msra.mxu0 0.0
    %8504 = vmatprep.subr.mxu0 0.0
    %8505 = vmatpush1.msra.mxu0 0.0
    %8506 = vmatprep.subr.mxu0 0.0
    %8507 = vmatpush1.msra.mxu0 0.0
    %8508 = vmatprep.subr.mxu0 0.0
    %8509 = vmatpush1.msra.mxu0 0.0
    %8510 = vmatprep.subr.mxu0 0.0
    %8511 = vmatpush1.msra.mxu0 0.0
    %8512 = vmatprep.subr.mxu0 0.0
    %8513 = vmatpush1.msra.mxu0 0.0
    %8514 = vmatprep.subr.mxu0 0.0
    %8515 = vmatpush1.msra.mxu0 0.0
    %8516 = vmatprep.subr.mxu0 0.0
    %8517 = vmatpush1.msra.mxu0 0.0
    %8518 = vmatprep.subr.mxu0 0.0
    %8519 = vmatpush1.msra.mxu0 0.0
    %8520 = vmatprep.subr.mxu0 0.0
    %8521 = vmatpush1.msra.mxu0 0.0
    %8522 = vmatprep.subr.mxu0 0.0
    %8523 = vmatpush1.msra.mxu0 0.0
    %8524 = vmatprep.mubr.f32.mxu0 0.0
    %8525 = vmatmul.mubr.f32.gmra.mrb[0].mxu0 %v8458
    %v8526 = vpop.f32.mrb[0].mxu0
    %v8527 = vadd.f32 0.0, %v8526
    %v8528 = vpop.f32.mrb[0].mxu0
    %8529 = vdwg.mxu0
    %v8530 = vadd.f32 %v8453, %v8527
    %s8531 = scalar_lea.vmem %s5, 240
    %v8532 = vld [vmem:[%s8531] sm:$0xff]
    %v8533 = vld [vmem:[%s8531 + $0x8] sm:$0xff]
    %v8534 = vrot.slane %v7377, 4
    %v8535 = vsel %vm7385, %v8534, 0
    %8537 = vmatprep.subr.mxu0 0.0
    %8538 = vmatpush1.msra.mxu0 %v8532
    %8539 = vmatprep.subr.mxu0 0.0
    %8540 = vmatpush1.msra.mxu0 %v8533
    %8541 = vmatprep.subr.mxu0 0.0
    %8542 = vmatpush1.msra.mxu0 0.0
    %8543 = vmatprep.subr.mxu0 0.0
    %8544 = vmatpush1.msra.mxu0 0.0
    %8545 = vmatprep.subr.mxu0 0.0
    %8546 = vmatpush1.msra.mxu0 0.0
    %8547 = vmatprep.subr.mxu0 0.0
    %8548 = vmatpush1.msra.mxu0 0.0
    %8549 = vmatprep.subr.mxu0 0.0
    %8550 = vmatpush1.msra.mxu0 0.0
    %8551 = vmatprep.subr.mxu0 0.0
    %8552 = vmatpush1.msra.mxu0 0.0
    %8553 = vmatprep.subr.mxu0 0.0
    %8554 = vmatpush1.msra.mxu0 0.0
    %8555 = vmatprep.subr.mxu0 0.0
    %8556 = vmatpush1.msra.mxu0 0.0
    %8557 = vmatprep.subr.mxu0 0.0
    %8558 = vmatpush1.msra.mxu0 0.0
    %8559 = vmatprep.subr.mxu0 0.0
    %8560 = vmatpush1.msra.mxu0 0.0
    %8561 = vmatprep.subr.mxu0 0.0
    %8562 = vmatpush1.msra.mxu0 0.0
    %8563 = vmatprep.subr.mxu0 0.0
    %8564 = vmatpush1.msra.mxu0 0.0
    %8565 = vmatprep.subr.mxu0 0.0
    %8566 = vmatpush1.msra.mxu0 0.0
    %8567 = vmatprep.subr.mxu0 0.0
    %8568 = vmatpush1.msra.mxu0 0.0
    %8569 = vmatprep.subr.mxu0 0.0
    %8570 = vmatpush1.msra.mxu0 0.0
    %8571 = vmatprep.subr.mxu0 0.0
    %8572 = vmatpush1.msra.mxu0 0.0
    %8573 = vmatprep.subr.mxu0 0.0
    %8574 = vmatpush1.msra.mxu0 0.0
    %8575 = vmatprep.subr.mxu0 0.0
    %8576 = vmatpush1.msra.mxu0 0.0
    %8577 = vmatprep.subr.mxu0 0.0
    %8578 = vmatpush1.msra.mxu0 0.0
    %8579 = vmatprep.subr.mxu0 0.0
    %8580 = vmatpush1.msra.mxu0 0.0
    %8581 = vmatprep.subr.mxu0 0.0
    %8582 = vmatpush1.msra.mxu0 0.0
    %8583 = vmatprep.subr.mxu0 0.0
    %8584 = vmatpush1.msra.mxu0 0.0
    %8585 = vmatprep.subr.mxu0 0.0
    %8586 = vmatpush1.msra.mxu0 0.0
    %8587 = vmatprep.subr.mxu0 0.0
    %8588 = vmatpush1.msra.mxu0 0.0
    %8589 = vmatprep.subr.mxu0 0.0
    %8590 = vmatpush1.msra.mxu0 0.0
    %8591 = vmatprep.subr.mxu0 0.0
    %8592 = vmatpush1.msra.mxu0 0.0
    %8593 = vmatprep.subr.mxu0 0.0
    %8594 = vmatpush1.msra.mxu0 0.0
    %8595 = vmatprep.subr.mxu0 0.0
    %8596 = vmatpush1.msra.mxu0 0.0
    %8597 = vmatprep.subr.mxu0 0.0
    %8598 = vmatpush1.msra.mxu0 0.0
    %8599 = vmatprep.subr.mxu0 0.0
    %8600 = vmatpush1.msra.mxu0 0.0
    %8601 = vmatprep.mubr.f32.mxu0 0.0
    %8602 = vmatmul.mubr.f32.gmra.mrb[0].mxu0 %v8535
    %v8603 = vpop.f32.mrb[0].mxu0
    %v8604 = vadd.f32 0.0, %v8603
    %v8605 = vpop.f32.mrb[0].mxu0
    %8606 = vdwg.mxu0
    %v8607 = vadd.f32 %v8530, %v8604
    %v8608 = vld [vmem:[%s6] sm:$0x1]
    %v8610 = vlaneseq
    %v8611 = vshrl.u32 %v8610, 7
    %v8612 = vsub.s32 0, %v8611
    %v8613 = vrot.slane %v8608, %v8612
    %v8615 = vadd.f32 %v8607, %v8613
    %v8616 = vmax.f32 %v8615, 0.0
    %v8617 = vld [vmem:[%s7] sm:$0xff]
    %v8618 = vld [vmem:[%s7 + $0x8] sm:$0xff]
    %v8619 = vld [vmem:[%s7 + $0x10] sm:$0xff]
    %v8620 = vld [vmem:[%s7 + $0x18] sm:$0xff]
    %v8621 = vld [vmem:[%s7 + $0x20] sm:$0xff]
    %v8622 = vld [vmem:[%s7 + $0x28] sm:$0xff]
    %v8623 = vld [vmem:[%s7 + $0x30] sm:$0xff]
    %v8624 = vld [vmem:[%s7 + $0x38] sm:$0xff]
    %v8625 = vld [vmem:[%s7 + $0x40] sm:$0xff]
    %v8626 = vld [vmem:[%s7 + $0x48] sm:$0xff]
    %v8627 = vld [vmem:[%s7 + $0x50] sm:$0xff]
    %v8628 = vld [vmem:[%s7 + $0x58] sm:$0xff]
    %v8629 = vld [vmem:[%s7 + $0x60] sm:$0xff]
    %v8630 = vld [vmem:[%s7 + $0x68] sm:$0xff]
    %v8631 = vld [vmem:[%s7 + $0x70] sm:$0xff]
    %v8632 = vld [vmem:[%s7 + $0x78] sm:$0xff]
    %v8633 = vld [vmem:[%s8] sm:$0x1]
    %v8635 = vlaneseq
    %v8636 = vshrl.u32 %v8635, 7
    %v8637 = vsub.s32 0, %v8636
    %v8638 = vrot.slane %v8633, %v8637
    %8640 = vmatprep.subr.mxu0 0.0
    %8641 = vmatpush1.msra.mxu0 %v8617
    %8642 = vmatprep.subr.mxu0 0.0
    %8643 = vmatpush1.msra.mxu0 %v8618
    %8644 = vmatprep.subr.mxu0 0.0
    %8645 = vmatpush1.msra.mxu0 %v8619
    %8646 = vmatprep.subr.mxu0 0.0
    %8647 = vmatpush1.msra.mxu0 %v8620
    %8648 = vmatprep.subr.mxu0 0.0
    %8649 = vmatpush1.msra.mxu0 %v8621
    %8650 = vmatprep.subr.mxu0 0.0
    %8651 = vmatpush1.msra.mxu0 %v8622
    %8652 = vmatprep.subr.mxu0 0.0
    %8653 = vmatpush1.msra.mxu0 %v8623
    %8654 = vmatprep.subr.mxu0 0.0
    %8655 = vmatpush1.msra.mxu0 %v8624
    %8656 = vmatprep.subr.mxu0 0.0
    %8657 = vmatpush1.msra.mxu0 %v8625
    %8658 = vmatprep.subr.mxu0 0.0
    %8659 = vmatpush1.msra.mxu0 %v8626
    %8660 = vmatprep.subr.mxu0 0.0
    %8661 = vmatpush1.msra.mxu0 %v8627
    %8662 = vmatprep.subr.mxu0 0.0
    %8663 = vmatpush1.msra.mxu0 %v8628
    %8664 = vmatprep.subr.mxu0 0.0
    %8665 = vmatpush1.msra.mxu0 %v8629
    %8666 = vmatprep.subr.mxu0 0.0
    %8667 = vmatpush1.msra.mxu0 %v8630
    %8668 = vmatprep.subr.mxu0 0.0
    %8669 = vmatpush1.msra.mxu0 %v8631
    %8670 = vmatprep.subr.mxu0 0.0
    %8671 = vmatpush1.msra.mxu0 %v8632
    %8672 = vmatprep.subr.mxu0 0.0
    %8673 = vmatpush1.msra.mxu0 0.0
    %8674 = vmatprep.subr.mxu0 0.0
    %8675 = vmatpush1.msra.mxu0 0.0
    %8676 = vmatprep.subr.mxu0 0.0
    %8677 = vmatpush1.msra.mxu0 0.0
    %8678 = vmatprep.subr.mxu0 0.0
    %8679 = vmatpush1.msra.mxu0 0.0
    %8680 = vmatprep.subr.mxu0 0.0
    %8681 = vmatpush1.msra.mxu0 0.0
    %8682 = vmatprep.subr.mxu0 0.0
    %8683 = vmatpush1.msra.mxu0 0.0
    %8684 = vmatprep.subr.mxu0 0.0
    %8685 = vmatpush1.msra.mxu0 0.0
    %8686 = vmatprep.subr.mxu0 0.0
    %8687 = vmatpush1.msra.mxu0 0.0
    %8688 = vmatprep.subr.mxu0 0.0
    %8689 = vmatpush1.msra.mxu0 0.0
    %8690 = vmatprep.subr.mxu0 0.0
    %8691 = vmatpush1.msra.mxu0 0.0
    %8692 = vmatprep.subr.mxu0 0.0
    %8693 = vmatpush1.msra.mxu0 0.0
    %8694 = vmatprep.subr.mxu0 0.0
    %8695 = vmatpush1.msra.mxu0 0.0
    %8696 = vmatprep.subr.mxu0 0.0
    %8697 = vmatpush1.msra.mxu0 0.0
    %8698 = vmatprep.subr.mxu0 0.0
    %8699 = vmatpush1.msra.mxu0 0.0
    %8700 = vmatprep.subr.mxu0 0.0
    %8701 = vmatpush1.msra.mxu0 0.0
    %8702 = vmatprep.subr.mxu0 0.0
    %8703 = vmatpush1.msra.mxu0 0.0
    %8704 = vmatprep.mubr.f32.mxu0 0.0
    %8705 = vmatmul.mubr.f32.gmra.mrb[0].mxu0 %v8616
    %v8706 = vpop.f32.mrb[0].mxu0
    %v8707 = vadd.f32 %v8638, %v8706
    %v8708 = vpop.f32.mrb[0].mxu0
    %8709 = vdwg.mxu0
    %v8710 = vmax.f32 %v8707, 0.0
    %v8711 = vld [vmem:[%s9] sm:$0xff]
    %v8712 = vld [vmem:[%s9 + $0x8] sm:$0xff]
    %v8713 = vld [vmem:[%s9 + $0x10] sm:$0xff]
    %v8714 = vld [vmem:[%s9 + $0x18] sm:$0xff]
    %v8715 = vld [vmem:[%s9 + $0x20] sm:$0xff]
    %v8716 = vld [vmem:[%s9 + $0x28] sm:$0xff]
    %v8717 = vld [vmem:[%s9 + $0x30] sm:$0xff]
    %v8718 = vld [vmem:[%s9 + $0x38] sm:$0xff]
    %v8719 = vld [vmem:[%s9 + $0x40] sm:$0xff]
    %v8720 = vld [vmem:[%s9 + $0x48] sm:$0xff]
    %v8721 = vld [vmem:[%s9 + $0x50] sm:$0xff]
    %v8722 = vld [vmem:[%s9 + $0x58] sm:$0xff]
    %v8723 = vld [vmem:[%s9 + $0x60] sm:$0xff]
    %v8724 = vld [vmem:[%s9 + $0x68] sm:$0xff]
    %v8725 = vld [vmem:[%s9 + $0x70] sm:$0xff]
    %v8726 = vld [vmem:[%s9 + $0x78] sm:$0xff]
    %v8727 = vld [vmem:[%s10] sm:$0x1]
    %v8729 = vlaneseq
    %v8730 = vshrl.u32 %v8729, 7
    %v8731 = vsub.s32 0, %v8730
    %v8732 = vrot.slane %v8727, %v8731
    %8734 = vmatprep.subr.mxu0 0.0
    %8735 = vmatpush1.msra.mxu0 %v8711
    %8736 = vmatprep.subr.mxu0 0.0
    %8737 = vmatpush1.msra.mxu0 %v8712
    %8738 = vmatprep.subr.mxu0 0.0
    %8739 = vmatpush1.msra.mxu0 %v8713
    %8740 = vmatprep.subr.mxu0 0.0
    %8741 = vmatpush1.msra.mxu0 %v8714
    %8742 = vmatprep.subr.mxu0 0.0
    %8743 = vmatpush1.msra.mxu0 %v8715
    %8744 = vmatprep.subr.mxu0 0.0
    %8745 = vmatpush1.msra.mxu0 %v8716
    %8746 = vmatprep.subr.mxu0 0.0
    %8747 = vmatpush1.msra.mxu0 %v8717
    %8748 = vmatprep.subr.mxu0 0.0
    %8749 = vmatpush1.msra.mxu0 %v8718
    %8750 = vmatprep.subr.mxu0 0.0
    %8751 = vmatpush1.msra.mxu0 %v8719
    %8752 = vmatprep.subr.mxu0 0.0
    %8753 = vmatpush1.msra.mxu0 %v8720
    %8754 = vmatprep.subr.mxu0 0.0
    %8755 = vmatpush1.msra.mxu0 %v8721
    %8756 = vmatprep.subr.mxu0 0.0
    %8757 = vmatpush1.msra.mxu0 %v8722
    %8758 = vmatprep.subr.mxu0 0.0
    %8759 = vmatpush1.msra.mxu0 %v8723
    %8760 = vmatprep.subr.mxu0 0.0
    %8761 = vmatpush1.msra.mxu0 %v8724
    %8762 = vmatprep.subr.mxu0 0.0
    %8763 = vmatpush1.msra.mxu0 %v8725
    %8764 = vmatprep.subr.mxu0 0.0
    %8765 = vmatpush1.msra.mxu0 %v8726
    %8766 = vmatprep.subr.mxu0 0.0
    %8767 = vmatpush1.msra.mxu0 0.0
    %8768 = vmatprep.subr.mxu0 0.0
    %8769 = vmatpush1.msra.mxu0 0.0
    %8770 = vmatprep.subr.mxu0 0.0
    %8771 = vmatpush1.msra.mxu0 0.0
    %8772 = vmatprep.subr.mxu0 0.0
    %8773 = vmatpush1.msra.mxu0 0.0
    %8774 = vmatprep.subr.mxu0 0.0
    %8775 = vmatpush1.msra.mxu0 0.0
    %8776 = vmatprep.subr.mxu0 0.0
    %8777 = vmatpush1.msra.mxu0 0.0
    %8778 = vmatprep.subr.mxu0 0.0
    %8779 = vmatpush1.msra.mxu0 0.0
    %8780 = vmatprep.subr.mxu0 0.0
    %8781 = vmatpush1.msra.mxu0 0.0
    %8782 = vmatprep.subr.mxu0 0.0
    %8783 = vmatpush1.msra.mxu0 0.0
    %8784 = vmatprep.subr.mxu0 0.0
    %8785 = vmatpush1.msra.mxu0 0.0
    %8786 = vmatprep.subr.mxu0 0.0
    %8787 = vmatpush1.msra.mxu0 0.0
    %8788 = vmatprep.subr.mxu0 0.0
    %8789 = vmatpush1.msra.mxu0 0.0
    %8790 = vmatprep.subr.mxu0 0.0
    %8791 = vmatpush1.msra.mxu0 0.0
    %8792 = vmatprep.subr.mxu0 0.0
    %8793 = vmatpush1.msra.mxu0 0.0
    %8794 = vmatprep.subr.mxu0 0.0
    %8795 = vmatpush1.msra.mxu0 0.0
    %8796 = vmatprep.subr.mxu0 0.0
    %8797 = vmatpush1.msra.mxu0 0.0
    %8798 = vmatprep.mubr.f32.mxu0 0.0
    %8799 = vmatmul.mubr.f32.gmra.mrb[0].mxu0 %v8710
    %v8800 = vpop.f32.mrb[0].mxu0
    %v8801 = vadd.f32 %v8732, %v8800
    %v8802 = vpop.f32.mrb[0].mxu0
    %8803 = vdwg.mxu0
    %v8804 = vmax.f32 %v8801, 0.0
    %8805 = vst [vmem:[#allocation2] sm:$0x3] %v8804
    // Predicated region
    $region46: #{inequality_model_forward.1} parent=1 // pred_check
      _
    $region47: #{inequality_model_forward.1} parent=1 // pred_check_branch
      %8807 = sbr.rel (0) target = $region49
    $region48: #{inequality_model_forward.1} parent=1 // pred_region
      %s8809 = ssub.s32 32, 32
      %8810 = vsyncadd [#allocation3], %s8809
      %s8812 = sshll.u32 [#allocation2], 4
      %s8813 = int_to_ptr.vmem [resolvable:$true] %s8812
      %8815 = dma.vmem_to_hbm [thread:$0]  %s8813, 32, %s11, [#allocation3]
    $region49: #{inequality_model_forward.1} parent=1 // pred_fallthru
      _
    // Predicated region
    $region50: #{inequality_model_forward.1} parent=1 // pred_check
      _
    $region51: #{inequality_model_forward.1} parent=1 // pred_check_branch
      %8817 = sbr.rel (0) target = $region53
    $region52: #{inequality_model_forward.1} parent=1 // pred_region
      %8818 = dma.done [#allocation3], 32
    $region53: #{inequality_model_forward.1} parent=1 // pred_fallthru
      _
    %8819 = vsyncpa [#allocation3], 1

</llo_original>
